<compile_context>
chip_gen: v6e
topology: v6e:2x2x1
jax: 0.10.0
libtpu: 0.0.40
codegen_flags: <defaults>
</compile_context>

<pallas_src>
from functools import partial

import jax
import jax.numpy as jnp
from jax.experimental import pallas as pl
from jax.experimental.pallas import tpu as pltpu

H1, H2, H3_RAW, H3 = 256, 512, 2046, 2048  # hidden sizes; 2046 padded to 2048


def _round_up(x, m):
    return (x + m - 1) // m * m


# ----------------------------------------------------------------------------
# One-time capability / hardware probes (kept out of the hot path).
# ----------------------------------------------------------------------------

_PIPELINE_MODE_OK = {}


def _buffered_supported(depth):
    """One-time check that this Pallas build accepts pipeline_mode=pl.Buffered(depth)."""
    if depth not in _PIPELINE_MODE_OK:
        try:
            def _copy_k(x_ref, o_ref):
                o_ref[...] = x_ref[...] * 1.0

            if depth == 1:
                imap = lambda i: (0, 0)          # mirrors usage: constant-index weights
                xshape = (8, 128)
            else:
                imap = lambda i: (i, 0)          # mirrors usage: streamed weight tiles
                xshape = (32, 128)
            fn = pl.pallas_call(
                _copy_k,
                out_shape=jax.ShapeDtypeStruct((32, 128), jnp.float32),
                grid_spec=pltpu.PrefetchScalarGridSpec(
                    num_scalar_prefetch=0,
                    grid=(4,),
                    in_specs=[pl.BlockSpec((8, 128), imap,
                                           pipeline_mode=pl.Buffered(depth))],
                    out_specs=pl.BlockSpec((8, 128), lambda i: (i, 0)),
                ),
            )
            jax.block_until_ready(fn(jnp.zeros(xshape, jnp.float32)))
            _PIPELINE_MODE_OK[depth] = True
        except Exception:
            _PIPELINE_MODE_OK[depth] = False
    return _PIPELINE_MODE_OK[depth]


_GEN_CONFIG = None


def _gen_config():
    """Per-TPU-generation tiling/buffering config, derived once."""
    global _GEN_CONFIG
    if _GEN_CONFIG is None:
        vmem = None
        try:
            vmem = int(pltpu.get_tpu_info().vmem_capacity_bytes)
        except Exception:
            vmem = None
        if vmem is None:
            try:
                kind = jax.devices()[0].device_kind.lower()
                if ("v4" in kind) or ("v5" in kind) or ("v6" in kind):
                    vmem = 128 * 1024 * 1024
                else:
                    vmem = 64 * 1024 * 1024      # conservative (v7x-class)
            except Exception:
                vmem = 64 * 1024 * 1024
        big = vmem >= 100 * 1024 * 1024
        _GEN_CONFIG = {
            # Deeper w4 pipe / bigger batch tile only where 128 MiB VMEM exists.
            "w4_buffers": 3 if big else 2,
            "vmem_limit": (80 if big else 40) * 1024 * 1024,
            "block_m_cap": 512 if big else 256,
        }
    return _GEN_CONFIG


# ----------------------------------------------------------------------------
# Kernels
# ----------------------------------------------------------------------------

def _hidden_kernel(x_ref, w1_ref, b1_ref, w2_ref, b2_ref, w3_ref, b3_ref, h3_ref):
    """de_fc1..de_fc3: (Linear + folded eval-BN + ReLU) x 3 for one batch tile."""
    h = jnp.dot(x_ref[...].astype(jnp.bfloat16), w1_ref[...],
                preferred_element_type=jnp.float32) + b1_ref[...]
    h = jnp.maximum(h, 0.0)
    h = jnp.dot(h.astype(jnp.bfloat16), w2_ref[...],
                preferred_element_type=jnp.float32) + b2_ref[...]
    h = jnp.maximum(h, 0.0)
    h = jnp.dot(h.astype(jnp.bfloat16), w3_ref[...],
                preferred_element_type=jnp.float32) + b3_ref[...]
    h = jnp.maximum(h, 0.0)
    h3_ref[...] = h.astype(jnp.bfloat16)


def _fc4_kernel(h3_ref, w4_ref, b4_ref, out_ref):
    """de_fc4: one (batch tile, N tile) of Linear(2048_pad, n_pad)."""
    out = jnp.dot(h3_ref[...], w4_ref[0],
                  preferred_element_type=jnp.float32) + b4_ref[0]
    out_ref[...] = out.astype(out_ref.dtype)


# ----------------------------------------------------------------------------
# Jitted forward
# ----------------------------------------------------------------------------

@partial(jax.jit, static_argnames=("block_m", "block_n", "n_out", "out_dtype",
                                   "w4_buffers", "vmem_limit",
                                   "buffered1_ok", "buffered_w4_ok"))
def _forward_impl(x, w1, b1, w2, b2, w3, b3, w4t, b4t, *,
                  block_m, block_n, n_out, out_dtype,
                  w4_buffers, vmem_limit, buffered1_ok, buffered_w4_ok):
    B, feat = x.shape
    b_pad = _round_up(B, block_m)
    if b_pad != B:
        x = jnp.pad(x, ((0, b_pad - B), (0, 0)))

    n_tiles = w4t.shape[0]
    n_pad = n_tiles * block_n
    b_tiles = b_pad // block_m

    def const_spec(shape):
        kwargs = {}
        if buffered1_ok:
            # Constant index map -> double buffering is pure VMEM waste.
            kwargs["pipeline_mode"] = pl.Buffered(1)
        return pl.BlockSpec(shape, lambda i: (0,) * len(shape), **kwargs)

    # ---- Call A: de_fc1..de_fc3 -> h3 (bf16), tiny relative to layer 4 ----
    hidden_flops = 2 * b_pad * (feat * H1 + H1 * H2 + H2 * H3)
    hidden_bytes = (b_pad * feat * 4 + b_pad * H3 * 2
                    + 2 * (feat * H1 + H1 * H2 + H2 * H3)
                    + 4 * (H1 + H2 + H3))
    h3 = pl.pallas_call(
        _hidden_kernel,
        out_shape=jax.ShapeDtypeStruct((b_pad, H3), jnp.bfloat16),
        grid_spec=pltpu.PrefetchScalarGridSpec(
            num_scalar_prefetch=0,
            grid=(b_tiles,),
            in_specs=[
                pl.BlockSpec((block_m, feat), lambda i: (i, 0)),
                const_spec((feat, H1)), const_spec((1, H1)),
                const_spec((H1, H2)), const_spec((1, H2)),
                const_spec((H2, H3)), const_spec((1, H3)),
            ],
            out_specs=pl.BlockSpec((block_m, H3), lambda i: (i, 0)),
        ),
        compiler_params=pltpu.CompilerParams(
            dimension_semantics=("parallel",),
            vmem_limit_bytes=vmem_limit,
        ),
        cost_estimate=pl.CostEstimate(flops=hidden_flops, transcendentals=0,
                                      bytes_accessed=hidden_bytes),
    )(x, w1, b1, w2, b2, w3, b3)

    # ---- Call B: de_fc4. N tiles OUTER so each contiguous pre-tiled w4 block
    # stays VMEM-resident across all batch tiles (w4 streamed exactly once).
    # Both axes "parallel": h3 is an input, so v7x megacore can split N. ----
    w4_kwargs = {}
    if w4_buffers != 2 and buffered_w4_ok:
        w4_kwargs["pipeline_mode"] = pl.Buffered(w4_buffers)

    out_itemsize = jnp.dtype(out_dtype).itemsize
    fc4_flops = 2 * b_pad * H3 * n_pad
    fc4_bytes = (n_pad * H3 * 2 + b_pad * H3 * 2 + n_pad * 4
                 + b_pad * n_pad * out_itemsize)

    out = pl.pallas_call(
        _fc4_kernel,
        out_shape=jax.ShapeDtypeStruct((b_pad, n_pad), out_dtype),
        grid_spec=pltpu.PrefetchScalarGridSpec(
            num_scalar_prefetch=0,
            grid=(n_tiles, b_tiles),
            in_specs=[
                pl.BlockSpec((block_m, H3), lambda j, i: (i, 0)),          # h3
                pl.BlockSpec((1, H3, block_n), lambda j, i: (j, 0, 0),     # w4 tile
                             **w4_kwargs),
                pl.BlockSpec((1, 1, block_n), lambda j, i: (j, 0, 0)),     # b4 tile
            ],
            out_specs=pl.BlockSpec((block_m, block_n), lambda j, i: (i, j)),
        ),
        compiler_params=pltpu.CompilerParams(
            dimension_semantics=("parallel", "parallel"),
            vmem_limit_bytes=vmem_limit,
        ),
        cost_estimate=pl.CostEstimate(flops=fc4_flops, transcendentals=0,
                                      bytes_accessed=fc4_bytes),
    )(h3, w4t, b4t)

    return out[:B, :n_out]


def dae_decoder_forward(x, params, *, out_dtype=jnp.float32):
    """x: (B, feature_size) f32; params: output of prepare_params.

    out_dtype may be set to jnp.bfloat16 to halve output writeback traffic if
    the consumer tolerates it (default f32 matches the PyTorch module).
    """
    B, _ = x.shape
    cfg = _gen_config()
    block_m = min(cfg["block_m_cap"], _round_up(B, 8))
    buffered_w4_ok = (_buffered_supported(cfg["w4_buffers"])
                      if cfg["w4_buffers"] != 2 else False)
    return _forward_impl(
        x,
        params["w1"], params["b1"], params["w2"], params["b2"],
        params["w3"], params["b3"], params["w4"], params["b4"],
        block_m=block_m,
        block_n=int(params["block_n"]),
        n_out=int(params["n_out"]),
        out_dtype=out_dtype,
        w4_buffers=cfg["w4_buffers"],
        vmem_limit=cfg["vmem_limit"],
        buffered1_ok=_buffered_supported(1),
        buffered_w4_ok=buffered_w4_ok,
    )


# ----------------------------------------------------------------------------
# Host-side parameter preparation
# ----------------------------------------------------------------------------

def _pick_block_n(in_channel):
    if in_channel >= 4096:
        return 2048
    if in_channel >= 2048:
        return 1024
    n128 = _round_up(in_channel, 128)
    return max(128, _round_up(n128 // 2, 128))   # keep >=2 N tiles when possible


def init_raw_params(key, feature_size, in_channel):
    """Synthetic Linear + eval-mode BatchNorm parameters (nontrivial BN stats)."""
    dims = [feature_size, H1, H2, H3_RAW, in_channel]
    keys = iter(jax.random.split(key, 20))
    raw = {}
    for li in range(4):
        fi, fo = dims[li], dims[li + 1]
        raw[f"w{li + 1}"] = jax.random.normal(next(keys), (fi, fo), jnp.float32) * 0.02
        raw[f"b{li + 1}"] = jax.random.normal(next(keys), (1, fo), jnp.float32) * 0.01
        if li < 3:  # BN on the first three blocks only
            raw[f"gamma{li + 1}"] = 1.0 + 0.1 * jax.random.normal(next(keys), (1, fo), jnp.float32)
            raw[f"beta{li + 1}"] = 0.05 * jax.random.normal(next(keys), (1, fo), jnp.float32)
            raw[f"mean{li + 1}"] = 0.05 * jax.random.normal(next(keys), (1, fo), jnp.float32)
            raw[f"var{li + 1}"] = 1.0 + 0.1 * jax.random.uniform(next(keys), (1, fo), jnp.float32)
    return raw


def prepare_params(raw, in_channel, *, block_n=None, eps=1e-5):
    """Fold eval-mode BN into the Linears, pad 2046->2048 and N->multiple of
    block_n, pre-tile w4/b4 into contiguous (n_tiles, 2048, block_n) blocks,
    and cast weights to bf16 (biases stay f32 for the f32 epilogue)."""
    if block_n is None:
        block_n = _pick_block_n(in_channel)

    p = {}
    for li in range(1, 5):
        w = raw[f"w{li}"]
        b = raw[f"b{li}"]
        if li < 4:  # eval-mode BatchNorm1d folded in
            s = raw[f"gamma{li}"] / jnp.sqrt(raw[f"var{li}"] + eps)
            t = raw[f"beta{li}"] - raw[f"mean{li}"] * s
            w = w * s            # per-output-column scale
            b = b * s + t
        p[f"w{li}"] = w
        p[f"b{li}"] = b

    pad3 = H3 - H3_RAW
    p["w3"] = jnp.pad(p["w3"], ((0, 0), (0, pad3)))
    p["b3"] = jnp.pad(p["b3"], ((0, 0), (0, pad3)))
    w4 = jnp.pad(p["w4"], ((0, pad3), (0, 0)))

    n_pad = _round_up(in_channel, block_n)
    n_tiles = n_pad // block_n
    w4 = jnp.pad(w4, ((0, 0), (0, n_pad - in_channel)))
    b4 = jnp.pad(p["b4"], ((0, 0), (0, n_pad - in_channel)))

    # Pre-tile so each streamed N tile is one contiguous chunk in HBM.
    p["w4"] = jnp.transpose(w4.reshape(H3, n_tiles, block_n), (1, 0, 2))
    p["b4"] = jnp.transpose(b4.reshape(1, n_tiles, block_n), (1, 0, 2))

    for li in range(1, 5):
        p[f"w{li}"] = p[f"w{li}"].astype(jnp.bfloat16)

    p["n_out"] = in_channel
    p["block_n"] = block_n
    return p


def _reference_forward(x, p, in_channel):
    """Pure-JAX reference using the same folded/padded/tiled bf16 params."""
    h = x
    for li in range(1, 4):
        h = jnp.dot(h.astype(jnp.bfloat16), p[f"w{li}"],
                    preferred_element_type=jnp.float32) + p[f"b{li}"]
        h = jnp.maximum(h, 0.0)
    n_tiles, _, block_n = p["w4"].shape
    w4 = jnp.transpose(p["w4"], (1, 0, 2)).reshape(H3, n_tiles * block_n)
    b4 = jnp.transpose(p["b4"], (1, 0, 2)).reshape(1, n_tiles * block_n)
    out = jnp.dot(h.astype(jnp.bfloat16), w4,
                  preferred_element_type=jnp.float32) + b4
    return out[:, :in_channel]


if __name__ == "__main__":
    # Small shapes consistent with the module: batch=16, feature_size=32,
    # in_channel=1024 (default 10240 shrunk to keep the demo small). The
    # auto-picked block_n=512 gives 2 N tiles, exercising the streamed layer-4
    # grid axis; at the real in_channel=10240 block_n=2048 is used.
    batch = 16
    feature_size = 32
    in_channel = 1024

    key = jax.random.PRNGKey(0)
    k_x, k_p = jax.random.split(key)
    x = jax.random.normal(k_x, (batch, feature_size), jnp.float32)

    raw = init_raw_params(k_p, feature_size, in_channel)
    params = prepare_params(raw, in_channel)

    # TODO(synk): Dropout(0.2) is identity in inference mode; train-mode dropout
    # and batch-statistic BatchNorm are not reproduced here.
    # TODO(synk): optional int8 (v5e/v6e) / fp8 (v7x) w4 quantization path for
    # the bandwidth-bound layer 4 is not implemented.
    out = jax.block_until_ready(dae_decoder_forward(x, params))

    ref = _reference_forward(x, params, in_channel)
    assert out.shape == (batch, in_channel)
    max_err = float(jnp.max(jnp.abs(out - ref)))
    assert jnp.allclose(out, ref, atol=2e-3, rtol=2e-2), max_err
    print("KERNEL_OK")
</pallas_src>

<mosaic_0001>
module attributes {stable_mosaic.version = 11 : i64} {
  func.func @_copy_k(%arg0: i32, %arg1: memref<8x128xf32, #tpu.memory_space<vmem>>, %arg2: memref<8x128xf32, #tpu.memory_space<vmem>>) attributes {dimension_semantics = [#tpu.dimension_semantics<arbitrary>], iteration_bounds = array<i64: 4>, scalar_prefetch = 0 : i64, scratch_operands = 0 : i64, tpu.core_type = #tpu.core_type<tc>, window_params = [{pipeline_mode = #tpu.pipeline_mode<synchronous>, transform_indices = @transform_0, window_bounds = array<i64: 8, 128>}, {transform_indices = @transform_1, window_bounds = array<i64: 8, 128>}]} {
    %c0 = arith.constant 0 : index
    %c0_0 = arith.constant 0 : index
    %0 = vector.load %arg1[%c0, %c0_0] : memref<8x128xf32, #tpu.memory_space<vmem>>, vector<8x128xf32>
    %cst = arith.constant 1.000000e+00 : f32
    %1 = vector.broadcast %cst : f32 to vector<8x128xf32>
    %2 = arith.mulf %0, %1 : vector<8x128xf32>
    %c0_1 = arith.constant 0 : index
    %c0_2 = arith.constant 0 : index
    %3 = vector.load %arg2[%c0_1, %c0_2] : memref<8x128xf32, #tpu.memory_space<vmem>>, vector<8x128xf32>
    tpu.vector_store %arg2[%c0_1, %c0_2], %2 {strides = array<i32>} : memref<8x128xf32, #tpu.memory_space<vmem>>, vector<8x128xf32>,
    return
  }
  func.func @transform_0(%arg0: i32) -> (i32, i32) {
    %c0_i32 = arith.constant 0 : i32
    %c0_i32_0 = arith.constant 0 : i32
    %c0_i32_1 = arith.constant 0 : i32
    return %c0_i32, %c0_i32_0 : i32, i32
  }
  func.func @transform_1(%arg0: i32) -> (i32, i32) {
    %c0_i32 = arith.constant 0 : i32
    %c0_i32_0 = arith.constant 0 : i32
    return %arg0, %c0_i32 : i32, i32
  }
}

module attributes {stable_mosaic.version = 11 : i64} {
  func.func @_fc4_kernel(%arg0: i32, %arg1: i32, %arg2: memref<16x2048xbf16, #tpu.memory_space<vmem>>, %arg3: memref<1x2048x512xbf16, #tpu.memory_space<vmem>>, %arg4: memref<1x1x512xf32, #tpu.memory_space<vmem>>, %arg5: memref<16x512xf32, #tpu.memory_space<vmem>>) attributes {dimension_semantics = [#tpu.dimension_semantics<parallel>, #tpu.dimension_semantics<parallel>], iteration_bounds = array<i64: 2, 1>, scalar_prefetch = 0 : i64, scratch_operands = 0 : i64, tpu.core_type = #tpu.core_type<tc>, window_params = [{transform_indices = @transform_0, window_bounds = array<i64: 16, 2048>}, {transform_indices = @transform_1, window_bounds = array<i64: 1, 2048, 512>}, {transform_indices = @transform_2, window_bounds = array<i64: 1, 1, 512>}, {transform_indices = @transform_3, window_bounds = array<i64: 16, 512>}]} {
    %c0 = arith.constant 0 : index
    %c0_0 = arith.constant 0 : index
    %0 = vector.load %arg2[%c0, %c0_0] : memref<16x2048xbf16, #tpu.memory_space<vmem>>, vector<16x2048xbf16>
    %c0_1 = arith.constant 0 : index
    %c0_2 = arith.constant 0 : index
    %c0_3 = arith.constant 0 : index
    %1 = vector.load %arg3[%c0_1, %c0_2, %c0_3] : memref<1x2048x512xbf16, #tpu.memory_space<vmem>>, vector<1x2048x512xbf16>
    %2 = vector.shape_cast %1 : vector<1x2048x512xbf16> to vector<2048x512xbf16>
    %cst = arith.constant dense<0.000000e+00> : vector<16x512xf32>
    %3 = tpu.matmul %0, %2, %cst {dimension_numbers = #tpu.dot_dimension_numbers<[1], [0], [0], [1], [0, 0, 1, 1], [], []>} : vector<16x2048xbf16>, vector<2048x512xbf16>, vector<16x512xf32> -> vector<16x512xf32>
    %c0_4 = arith.constant 0 : index
    %c0_5 = arith.constant 0 : index
    %c0_6 = arith.constant 0 : index
    %4 = vector.load %arg4[%c0_4, %c0_5, %c0_6] : memref<1x1x512xf32, #tpu.memory_space<vmem>>, vector<1x1x512xf32>
    %5 = vector.shape_cast %4 : vector<1x1x512xf32> to vector<1x512xf32>
    %6 = vector.broadcast %5 : vector<1x512xf32> to vector<16x512xf32>
    %7 = arith.addf %3, %6 : vector<16x512xf32>
    %c0_7 = arith.constant 0 : index
    %c0_8 = arith.constant 0 : index
    %8 = vector.load %arg5[%c0_7, %c0_8] : memref<16x512xf32, #tpu.memory_space<vmem>>, vector<16x512xf32>
    tpu.vector_store %arg5[%c0_7, %c0_8], %7 {strides = array<i32>} : memref<16x512xf32, #tpu.memory_space<vmem>>, vector<16x512xf32>,
    return
  }
  func.func @transform_0(%arg0: i32, %arg1: i32) -> (i32, i32) {
    %c0_i32 = arith.constant 0 : i32
    %c0_i32_0 = arith.constant 0 : i32
    return %arg1, %c0_i32 : i32, i32
  }
  func.func @transform_1(%arg0: i32, %arg1: i32) -> (i32, i32, i32) {
    %c0_i32 = arith.constant 0 : i32
    %c0_i32_0 = arith.constant 0 : i32
    %c0_i32_1 = arith.constant 0 : i32
    return %arg0, %c0_i32, %c0_i32_0 : i32, i32, i32
  }
  func.func @transform_2(%arg0: i32, %arg1: i32) -> (i32, i32, i32) {
    %c0_i32 = arith.constant 0 : i32
    %c0_i32_0 = arith.constant 0 : i32
    %c0_i32_1 = arith.constant 0 : i32
    return %arg0, %c0_i32, %c0_i32_0 : i32, i32, i32
  }
  func.func @transform_3(%arg0: i32, %arg1: i32) -> (i32, i32) {
    %c0_i32 = arith.constant 0 : i32
    return %arg1, %arg0 : i32, i32
  }
}

module attributes {stable_mosaic.version = 11 : i64} {
  func.func @_hidden_kernel(%arg0: i32, %arg1: memref<16x32xf32, #tpu.memory_space<vmem>>, %arg2: memref<32x256xbf16, #tpu.memory_space<vmem>>, %arg3: memref<1x256xf32, #tpu.memory_space<vmem>>, %arg4: memref<256x512xbf16, #tpu.memory_space<vmem>>, %arg5: memref<1x512xf32, #tpu.memory_space<vmem>>, %arg6: memref<512x2048xbf16, #tpu.memory_space<vmem>>, %arg7: memref<1x2048xf32, #tpu.memory_space<vmem>>, %arg8: memref<16x2048xbf16, #tpu.memory_space<vmem>>) attributes {dimension_semantics = [#tpu.dimension_semantics<parallel>], iteration_bounds = array<i64: 1>, scalar_prefetch = 0 : i64, scratch_operands = 0 : i64, tpu.core_type = #tpu.core_type<tc>, window_params = [{transform_indices = @transform_0, window_bounds = array<i64: 16, 32>}, {pipeline_mode = #tpu.pipeline_mode<synchronous>, transform_indices = @transform_1, window_bounds = array<i64: 32, 256>}, {pipeline_mode = #tpu.pipeline_mode<synchronous>, transform_indices = @transform_2, window_bounds = array<i64: 1, 256>}, {pipeline_mode = #tpu.pipeline_mode<synchronous>, transform_indices = @transform_3, window_bounds = array<i64: 256, 512>}, {pipeline_mode = #tpu.pipeline_mode<synchronous>, transform_indices = @transform_4, window_bounds = array<i64: 1, 512>}, {pipeline_mode = #tpu.pipeline_mode<synchronous>, transform_indices = @transform_5, window_bounds = array<i64: 512, 2048>}, {pipeline_mode = #tpu.pipeline_mode<synchronous>, transform_indices = @transform_6, window_bounds = array<i64: 1, 2048>}, {transform_indices = @transform_7, window_bounds = array<i64: 16, 2048>}]} {
    %c0 = arith.constant 0 : index
    %c0_0 = arith.constant 0 : index
    %0 = vector.load %arg1[%c0, %c0_0] : memref<16x32xf32, #tpu.memory_space<vmem>>, vector<16x32xf32>
    %1 = arith.truncf %0 : vector<16x32xf32> to vector<16x32xbf16>
    %c0_1 = arith.constant 0 : index
    %c0_2 = arith.constant 0 : index
    %2 = vector.load %arg2[%c0_1, %c0_2] : memref<32x256xbf16, #tpu.memory_space<vmem>>, vector<32x256xbf16>
    %cst = arith.constant dense<0.000000e+00> : vector<16x256xf32>
    %3 = tpu.matmul %1, %2, %cst {dimension_numbers = #tpu.dot_dimension_numbers<[1], [0], [0], [1], [0, 0, 1, 1], [], []>} : vector<16x32xbf16>, vector<32x256xbf16>, vector<16x256xf32> -> vector<16x256xf32>
    %c0_3 = arith.constant 0 : index
    %c0_4 = arith.constant 0 : index
    %4 = vector.load %arg3[%c0_3, %c0_4] : memref<1x256xf32, #tpu.memory_space<vmem>>, vector<1x256xf32>
    %5 = vector.broadcast %4 : vector<1x256xf32> to vector<16x256xf32>
    %6 = arith.addf %3, %5 : vector<16x256xf32>
    %cst_5 = arith.constant 0.000000e+00 : f32
    %7 = vector.broadcast %cst_5 : f32 to vector<16x256xf32>
    %8 = arith.maximumf %6, %7 : vector<16x256xf32>
    %9 = arith.truncf %8 : vector<16x256xf32> to vector<16x256xbf16>
    %c0_6 = arith.constant 0 : index
    %c0_7 = arith.constant 0 : index
    %10 = vector.load %arg4[%c0_6, %c0_7] : memref<256x512xbf16, #tpu.memory_space<vmem>>, vector<256x512xbf16>
    %cst_8 = arith.constant dense<0.000000e+00> : vector<16x512xf32>
    %11 = tpu.matmul %9, %10, %cst_8 {dimension_numbers = #tpu.dot_dimension_numbers<[1], [0], [0], [1], [0, 0, 1, 1], [], []>} : vector<16x256xbf16>, vector<256x512xbf16>, vector<16x512xf32> -> vector<16x512xf32>
    %c0_9 = arith.constant 0 : index
    %c0_10 = arith.constant 0 : index
    %12 = vector.load %arg5[%c0_9, %c0_10] : memref<1x512xf32, #tpu.memory_space<vmem>>, vector<1x512xf32>
    %13 = vector.broadcast %12 : vector<1x512xf32> to vector<16x512xf32>
    %14 = arith.addf %11, %13 : vector<16x512xf32>
    %cst_11 = arith.constant 0.000000e+00 : f32
    %15 = vector.broadcast %cst_11 : f32 to vector<16x512xf32>
    %16 = arith.maximumf %14, %15 : vector<16x512xf32>
    %17 = arith.truncf %16 : vector<16x512xf32> to vector<16x512xbf16>
    %c0_12 = arith.constant 0 : index
    %c0_13 = arith.constant 0 : index
    %18 = vector.load %arg6[%c0_12, %c0_13] : memref<512x2048xbf16, #tpu.memory_space<vmem>>, vector<512x2048xbf16>
    %cst_14 = arith.constant dense<0.000000e+00> : vector<16x2048xf32>
    %19 = tpu.matmul %17, %18, %cst_14 {dimension_numbers = #tpu.dot_dimension_numbers<[1], [0], [0], [1], [0, 0, 1, 1], [], []>} : vector<16x512xbf16>, vector<512x2048xbf16>, vector<16x2048xf32> -> vector<16x2048xf32>
    %c0_15 = arith.constant 0 : index
    %c0_16 = arith.constant 0 : index
    %20 = vector.load %arg7[%c0_15, %c0_16] : memref<1x2048xf32, #tpu.memory_space<vmem>>, vector<1x2048xf32>
    %21 = vector.broadcast %20 : vector<1x2048xf32> to vector<16x2048xf32>
    %22 = arith.addf %19, %21 : vector<16x2048xf32>
    %cst_17 = arith.constant 0.000000e+00 : f32
    %23 = vector.broadcast %cst_17 : f32 to vector<16x2048xf32>
    %24 = arith.maximumf %22, %23 : vector<16x2048xf32>
    %25 = arith.truncf %24 : vector<16x2048xf32> to vector<16x2048xbf16>
    %c0_18 = arith.constant 0 : index
    %c0_19 = arith.constant 0 : index
    %26 = vector.load %arg8[%c0_18, %c0_19] : memref<16x2048xbf16, #tpu.memory_space<vmem>>, vector<16x2048xbf16>
    tpu.vector_store %arg8[%c0_18, %c0_19], %25 {strides = array<i32>} : memref<16x2048xbf16, #tpu.memory_space<vmem>>, vector<16x2048xbf16>,
    return
  }
  func.func @transform_0(%arg0: i32) -> (i32, i32) {
    %c0_i32 = arith.constant 0 : i32
    %c0_i32_0 = arith.constant 0 : i32
    return %arg0, %c0_i32 : i32, i32
  }
  func.func @transform_1(%arg0: i32) -> (i32, i32) {
    %c0_i32 = arith.constant 0 : i32
    %c0_i32_0 = arith.constant 0 : i32
    %c0_i32_1 = arith.constant 0 : i32
    return %c0_i32, %c0_i32_0 : i32, i32
  }
  func.func @transform_2(%arg0: i32) -> (i32, i32) {
    %c0_i32 = arith.constant 0 : i32
    %c0_i32_0 = arith.constant 0 : i32
    %c0_i32_1 = arith.constant 0 : i32
    return %c0_i32, %c0_i32_0 : i32, i32
  }
  func.func @transform_3(%arg0: i32) -> (i32, i32) {
    %c0_i32 = arith.constant 0 : i32
    %c0_i32_0 = arith.constant 0 : i32
    %c0_i32_1 = arith.constant 0 : i32
    return %c0_i32, %c0_i32_0 : i32, i32
  }
  func.func @transform_4(%arg0: i32) -> (i32, i32) {
    %c0_i32 = arith.constant 0 : i32
    %c0_i32_0 = arith.constant 0 : i32
    %c0_i32_1 = arith.constant 0 : i32
    return %c0_i32, %c0_i32_0 : i32, i32
  }
  func.func @transform_5(%arg0: i32) -> (i32, i32) {
    %c0_i32 = arith.constant 0 : i32
    %c0_i32_0 = arith.constant 0 : i32
    %c0_i32_1 = arith.constant 0 : i32
    return %c0_i32, %c0_i32_0 : i32, i32
  }
  func.func @transform_6(%arg0: i32) -> (i32, i32) {
    %c0_i32 = arith.constant 0 : i32
    %c0_i32_0 = arith.constant 0 : i32
    %c0_i32_1 = arith.constant 0 : i32
    return %c0_i32, %c0_i32_0 : i32, i32
  }
  func.func @transform_7(%arg0: i32) -> (i32, i32) {
    %c0_i32 = arith.constant 0 : i32
    %c0_i32_0 = arith.constant 0 : i32
    return %arg0, %c0_i32 : i32, i32
  }
}

</mosaic_0001>

<llo_original>
// kernel: tpu_custom_call.1
$region0: #{tpu_custom_call.1}
  #allocation0 [shape = 'u32[]', space=smem, size = 0x4, offset = 0x4, fixed_abs, tag = 'smem constant byte address 0x4 - core index']
  #allocation1 [shape = 'u32[144,128]{1,0:T(1,128)}', space=vmem, size = 0x12000, scoped, tag = 'internal scratch']
  %s0 = inlined_call_operand.hbm [shape: f32[8,128], index: 0, kind: input, shape index: {}]
  %s1 = inlined_call_operand.hbm [shape: f32[32,128], index: 1, kind: output, shape index: {}]
  %s2 = sld [smem:[#allocation0]]
  $region41: #{tpu_custom_call.1} parent=0
    _
  %s4 = ssub.s32 1, %s2
  %s5 = scalar_select 0, %s4, %s2
  $region1: #{tpu_custom_call.1} parent=0
    #allocation2 [shape = 'u8[4096]{0}', space=vmem, size = 0x1000, scoped, tag = 'input window, operand 0, single buffered']
    #allocation3 [shape = 's32[2]{0}', space=sflag, size = 0x8, scoped, tag = 'scoped memory for tpu_custom_call.1']
    #allocation4 [shape = 's32[2]{0}', space=sflag, size = 0x8, scoped, tag = 'scoped memory for tpu_custom_call.1']
    #allocation5 [shape = 'u8[8192]{0}', space=vmem, size = 0x2000, scoped, tag = 'output window, operand 0']
    %6 = vsyncpa [#allocation3], 0
    %7 = vsyncpa [#allocation4], 0
    %s8 = scalar_lea.sflag [#allocation4], 1
    %9 = vsyncpa %s8, 0
    loop: start=0, step=1, limit=6
    $region2: #{tpu_custom_call.1} parent=1 // loop_pre_header
      _
    $region3: #{tpu_custom_call.1} parent=1 // loop_header
      %s11 = sphi 0, %s15
      %p12 = scmp.ge.s32.totalorder %s11, 6
      %s19 = sphi 0, %s19
      %s21 = sphi 0, %s19
      %s22 = sphi 0, %s21
      %s36 = sphi 0, %s22
      %s42 = sphi 0, %s44
      %s45 = sphi 0, %s42
      %s46 = sphi 0, %s45
      %s62 = sphi 0, %s46
    $region4: #{tpu_custom_call.1} parent=1 // loop_header_branch
      %14 = sbr.rel (%p12) target = $region8
    $region5: #{tpu_custom_call.1} parent=1 // loop_body
      %s16 = ssub.s32 %s11, 1
      %s17 = ssub.s32 %s11, 2
      %s18 = sadd.s32 %s11, 1
      %s20 = sadd.s32 %s19, 1
      %p23 = scmp.eq.s32.totalorder %s11, 3
      %p24 = scmp.ne.s32.totalorder %s19, %s21
      %p25 = scmp.eq.s32.totalorder %s11, 0
      %p26 = por %p24, %p25
      %p27 = scmp.ne.s32.totalorder %s19, %s21
      %p28 = scmp.eq.s32.totalorder %s16, 3
      %p29 = por %p27, %p28
      %p30 = scmp.ne.s32.totalorder %s21, %s22
      %p31 = scmp.eq.s32.totalorder %s16, 0
      %p32 = por %p30, %p31
      %p33 = scmp.ne.s32.totalorder %s21, %s22
      %p34 = scmp.eq.s32.totalorder %s17, 3
      %p35 = por %p33, %p34
      %p37 = scmp.ne.s32.totalorder %s22, %s36
      %p38 = scmp.eq.s32.totalorder %s17, 0
      %p39 = por %p37, %p38
      %s40 = ssub.s32 %s11, %s18
      %p41 = scmp.eq.s32.totalorder %s40, 0
      %s43 = sadd.s32 %s42, 1
      %s44 = scalar_select %p41, %s42, %s43
      %p47 = pneg %p41
      %p48 = scmp.eq.s32.totalorder %s11, 3
      %p49 = por %p47, %p48
      %p50 = scmp.ne.s32.totalorder %s42, %s45
      %p51 = scmp.eq.s32.totalorder %s11, 0
      %p52 = por %p50, %p51
      %p53 = scmp.ne.s32.totalorder %s42, %s45
      %p54 = scmp.eq.s32.totalorder %s16, 3
      %p55 = por %p53, %p54
      %p56 = scmp.ne.s32.totalorder %s45, %s46
      %p57 = scmp.eq.s32.totalorder %s16, 0
      %p58 = por %p56, %p57
      %p59 = scmp.ne.s32.totalorder %s45, %s46
      %p60 = scmp.eq.s32.totalorder %s17, 3
      %p61 = por %p59, %p60
      %p63 = scmp.ne.s32.totalorder %s46, %s62
      %p64 = scmp.eq.s32.totalorder %s17, 0
      %p65 = por %p63, %p64
      %p66 = scmp.le.s32.totalorder 1, %s11
      %p67 = scmp.lt.s32.totalorder %s11, 5
      %p68 = pnand %p66, %p67
      %p69 = pneg %p68
      // Predicated region
      $region9: #{tpu_custom_call.1} parent=5 // pred_check
        _
      $region10: #{tpu_custom_call.1} parent=5 // pred_check_branch
        %71 = sbr.rel (%p68) target = $region12
      $region11: #{tpu_custom_call.1} parent=5 // pred_region
        %s72 = ssub.s32 %s11, 1
        // Predicated region
        $region13: #{tpu_custom_call.1} parent=11 // pred_check
          %p73 = pneg %p32
        $region14: #{tpu_custom_call.1} parent=11 // pred_check_branch
          %75 = sbr.rel (%p73) target = $region16
        $region15: #{tpu_custom_call.1} parent=11 // pred_region
          %s77 = ssub.s32 128, 128
          %78 = vsyncadd [#allocation3], %s77
          %s80 = sshll.u32 [#allocation2], 4
          %s81 = int_to_ptr.vmem [resolvable:$true] %s80
          %83 = dma.hbm_to_vmem [thread:$0]  %s0, 128, %s81, [#allocation3]
        $region16: #{tpu_custom_call.1} parent=11 // pred_fallthru
          _
      $region12: #{tpu_custom_call.1} parent=5 // pred_fallthru
        _
      %p84 = scmp.lt.s32.totalorder %s11, 4
      // Predicated region
      $region17: #{tpu_custom_call.1} parent=5 // pred_check
        %p85 = pneg %p84
      $region18: #{tpu_custom_call.1} parent=5 // pred_check_branch
        %87 = sbr.rel (%p85) target = $region20
      $region19: #{tpu_custom_call.1} parent=5 // pred_region
        _
      $region20: #{tpu_custom_call.1} parent=5 // pred_fallthru
        _
      %p88 = scmp.le.s32.totalorder 1, %s11
      %p89 = scmp.lt.s32.totalorder %s11, 5
      %p90 = pnand %p88, %p89
      %p91 = pneg %p90
      // Predicated region
      $region21: #{tpu_custom_call.1} parent=5 // pred_check
        _
      $region22: #{tpu_custom_call.1} parent=5 // pred_check_branch
        %93 = sbr.rel (%p90) target = $region24
      $region23: #{tpu_custom_call.1} parent=5 // pred_region
        %s94 = ssub.s32 %s11, 1
        // Predicated region
        $region25: #{tpu_custom_call.1} parent=23 // pred_check
          %p95 = pneg %p32
        $region26: #{tpu_custom_call.1} parent=23 // pred_check_branch
          %97 = sbr.rel (%p95) target = $region28
        $region27: #{tpu_custom_call.1} parent=23 // pred_region
          %98 = dma.done [#allocation3], 128
        $region28: #{tpu_custom_call.1} parent=23 // pred_fallthru
          _
        %p99 = pneg %p32
        %p100 = pneg %p29
        %p101 = pneg %p58
        %p102 = pneg %p55
        %s103 = sand.u32 %s45, 1
        %s104 = scalar_lea.sflag [#allocation4], %s103
        %s105 = sand.u32 %s45, 1
        %s106 = smul.addr %s105, 8
        %s107 = scalar_lea.vmem [#allocation5], %s106
        %v108 = vld [vmem:[#allocation2] sm:$0xff]
        %109 = vst [vmem:[%s107] sm:$0xff] %v108
        %s110 = sand.u32 %s45, 1
        %s111 = scalar_lea.sflag [#allocation4], %s110
        %s112 = sand.u32 %s45, 1
        %s113 = smul.addr %s112, 8
        %s114 = scalar_lea.vmem [#allocation5], %s113
        // Predicated region
        $region29: #{tpu_custom_call.1} parent=23 // pred_check
          %p115 = pneg %p55
        $region30: #{tpu_custom_call.1} parent=23 // pred_check_branch
          %117 = sbr.rel (%p115) target = $region32
        $region31: #{tpu_custom_call.1} parent=23 // pred_region
          %s119 = ssub.s32 128, 128
          %120 = vsyncadd %s111, %s119
          %s121 = smul.addr %s16, 128
          %s122 = scalar_lea.hbm %s1, %s121
          %s124 = sshll.u32 %s114, 4
          %s125 = int_to_ptr.vmem [resolvable:$true] %s124
          %127 = dma.vmem_to_hbm [thread:$0]  %s125, 128, %s122, %s111
        $region32: #{tpu_custom_call.1} parent=23 // pred_fallthru
          _
      $region24: #{tpu_custom_call.1} parent=5 // pred_fallthru
        _
      %p128 = scmp.le.s32.totalorder 2, %s11
      // Predicated region
      $region33: #{tpu_custom_call.1} parent=5 // pred_check
        %p129 = pneg %p128
      $region34: #{tpu_custom_call.1} parent=5 // pred_check_branch
        %131 = sbr.rel (%p129) target = $region36
      $region35: #{tpu_custom_call.1} parent=5 // pred_region
        %s132 = ssub.s32 %s11, 2
        // Predicated region
        $region37: #{tpu_custom_call.1} parent=35 // pred_check
          %p133 = pneg %p61
        $region38: #{tpu_custom_call.1} parent=35 // pred_check_branch
          %135 = sbr.rel (%p133) target = $region40
        $region39: #{tpu_custom_call.1} parent=35 // pred_region
          %s136 = sand.u32 %s46, 1
          %s137 = scalar_lea.sflag [#allocation4], %s136
          %s138 = sand.u32 %s46, 1
          %s139 = smul.addr %s138, 8
          %s140 = scalar_lea.vmem [#allocation5], %s139
          %141 = dma.done %s137, 128
        $region40: #{tpu_custom_call.1} parent=35 // pred_fallthru
          _
      $region36: #{tpu_custom_call.1} parent=5 // pred_fallthru
        _
    $region6: #{tpu_custom_call.1} parent=1 // loop_footer
      %s15 = sadd.s32 1, %s11
    $region7: #{tpu_custom_call.1} parent=1 // loop_footer_branch
      %10 = sbr.rel target = $region3
    $region8: #{tpu_custom_call.1} parent=1 // loop_exit
      _
    %142 = vsyncpa [#allocation3], 1
    %s143 = scalar_lea.sflag [#allocation3], 1
    %144 = vsyncpa %s143, 1
    %145 = vsyncpa [#allocation4], 1
    %s146 = scalar_lea.sflag [#allocation4], 1
    %147 = vsyncpa %s146, 1

// kernel: _forward_impl.3
$region0: #{_forward_impl.3}
  #allocation0 [shape = 'u32[]', space=smem, size = 0x4, offset = 0x4, fixed_abs, tag = 'smem constant byte address 0x4 - core index']
  #allocation1 [shape = 'u32[144,128]{1,0:T(1,128)}', space=vmem, size = 0x12000, scoped, tag = 'internal scratch']
  %s0 = inlined_call_operand.vmem [shape: bf16[16,2048], index: 0, kind: input, shape index: {}]
  %s1 = inlined_call_operand.hbm [shape: bf16[2,2048,512], index: 1, kind: input, shape index: {}]
  %s2 = inlined_call_operand.hbm [shape: f32[2,1,512], index: 2, kind: input, shape index: {}]
  %s3 = inlined_call_operand.hbm [shape: f32[16,1024], index: 3, kind: output, shape index: {}]
  %s4 = sld [smem:[#allocation0]]
  $region53: #{_forward_impl.3} parent=0
    _
  %s6 = ssub.s32 1, %s4
  %s7 = scalar_select 0, %s6, %s4
  $region1: #{_forward_impl.3} parent=0
    #allocation2 [shape = 'u8[4194304]{0}', space=vmem, size = 0x400000, scoped, tag = 'input window, operand 1']
    #allocation3 [shape = 's32[2]{0}', space=sflag, size = 0x8, scoped, tag = 'scoped memory for _forward_impl.3']
    #allocation4 [shape = 's32[2]{0}', space=sflag, size = 0x8, scoped, tag = 'scoped memory for _forward_impl.3']
    #allocation5 [shape = 'u8[4096]{0}', space=vmem, size = 0x1000, scoped, tag = 'input window, operand 2']
    #allocation6 [shape = 's32[2]{0}', space=sflag, size = 0x8, scoped, tag = 'scoped memory for _forward_impl.3']
    #allocation7 [shape = 'u8[65536]{0}', space=vmem, size = 0x10000, scoped, tag = 'output window, operand 0']
    %8 = vsyncpa [#allocation3], 0
    %s9 = scalar_lea.sflag [#allocation3], 1
    %10 = vsyncpa %s9, 0
    %11 = vsyncpa [#allocation6], 0
    %s12 = scalar_lea.sflag [#allocation6], 1
    %13 = vsyncpa %s12, 0
    %14 = vsyncpa [#allocation4], 0
    %s15 = scalar_lea.sflag [#allocation4], 1
    %16 = vsyncpa %s15, 0
    loop: start=0, step=1, limit=4
    $region2: #{_forward_impl.3} parent=1 // loop_pre_header
      _
    $region3: #{_forward_impl.3} parent=1 // loop_header
      %s18 = sphi 0, %s22
      %p19 = scmp.ge.s32.totalorder %s18, 4
      %s25 = sphi 0, %s37
      %s26 = sphi 0, %s33
      %s27 = sphi 0, %s25
      %s28 = sphi 0, %s26
      %s29 = sphi 0, %s27
      %s30 = sphi 0, %s28
      %s40 = sphi 0, %s42
      %s43 = sphi 0, %s40
      %s44 = sphi 0, %s43
      %s60 = sphi 0, %s44
      %s66 = sphi 0, %s68
      %s69 = sphi 0, %s66
      %s70 = sphi 0, %s69
      %s86 = sphi 0, %s70
      %s92 = sphi 0, %s94
      %s95 = sphi 0, %s92
      %s96 = sphi 0, %s95
      %s112 = sphi 0, %s96
      %s120 = sphi 0, %s122
      %s123 = sphi 0, %s120
      %s124 = sphi 0, %s123
      %s140 = sphi 0, %s124
    $region4: #{_forward_impl.3} parent=1 // loop_header_branch
      %21 = sbr.rel (%p19) target = $region8
    $region5: #{_forward_impl.3} parent=1 // loop_body
      %s23 = ssub.s32 %s18, 1
      %s24 = ssub.s32 %s18, 2
      %s31 = sadd.s32 1, %s26
      %p32 = scmp.ge.s32.totalorder %s31, 1
      %s33 = scalar_select %p32, 0, %s31
      %s34 = sadd.s32 1, %s25
      %s35 = scalar_select %p32, %s34, %s25
      %p36 = scmp.ge.s32.totalorder %s35, 2
      %s37 = scalar_select %p36, 0, %s35
      %s38 = ssub.s32 %s26, %s33
      %p39 = scmp.eq.s32.totalorder %s38, 0
      %s41 = sadd.s32 %s40, 1
      %s42 = scalar_select %p39, %s40, %s41
      %p45 = pneg %p39
      %p46 = scmp.eq.s32.totalorder %s18, 1
      %p47 = por %p45, %p46
      %p48 = scmp.ne.s32.totalorder %s40, %s43
      %p49 = scmp.eq.s32.totalorder %s18, 0
      %p50 = por %p48, %p49
      %p51 = scmp.ne.s32.totalorder %s40, %s43
      %p52 = scmp.eq.s32.totalorder %s23, 1
      %p53 = por %p51, %p52
      %p54 = scmp.ne.s32.totalorder %s43, %s44
      %p55 = scmp.eq.s32.totalorder %s23, 0
      %p56 = por %p54, %p55
      %p57 = scmp.ne.s32.totalorder %s43, %s44
      %p58 = scmp.eq.s32.totalorder %s24, 1
      %p59 = por %p57, %p58
      %p61 = scmp.ne.s32.totalorder %s44, %s60
      %p62 = scmp.eq.s32.totalorder %s24, 0
      %p63 = por %p61, %p62
      %s64 = ssub.s32 %s25, %s37
      %p65 = scmp.eq.s32.totalorder %s64, 0
      %s67 = sadd.s32 %s66, 1
      %s68 = scalar_select %p65, %s66, %s67
      %p71 = pneg %p65
      %p72 = scmp.eq.s32.totalorder %s18, 1
      %p73 = por %p71, %p72
      %p74 = scmp.ne.s32.totalorder %s66, %s69
      %p75 = scmp.eq.s32.totalorder %s18, 0
      %p76 = por %p74, %p75
      %p77 = scmp.ne.s32.totalorder %s66, %s69
      %p78 = scmp.eq.s32.totalorder %s23, 1
      %p79 = por %p77, %p78
      %p80 = scmp.ne.s32.totalorder %s69, %s70
      %p81 = scmp.eq.s32.totalorder %s23, 0
      %p82 = por %p80, %p81
      %p83 = scmp.ne.s32.totalorder %s69, %s70
      %p84 = scmp.eq.s32.totalorder %s24, 1
      %p85 = por %p83, %p84
      %p87 = scmp.ne.s32.totalorder %s70, %s86
      %p88 = scmp.eq.s32.totalorder %s24, 0
      %p89 = por %p87, %p88
      %s90 = ssub.s32 %s25, %s37
      %p91 = scmp.eq.s32.totalorder %s90, 0
      %s93 = sadd.s32 %s92, 1
      %s94 = scalar_select %p91, %s92, %s93
      %p97 = pneg %p91
      %p98 = scmp.eq.s32.totalorder %s18, 1
      %p99 = por %p97, %p98
      %p100 = scmp.ne.s32.totalorder %s92, %s95
      %p101 = scmp.eq.s32.totalorder %s18, 0
      %p102 = por %p100, %p101
      %p103 = scmp.ne.s32.totalorder %s92, %s95
      %p104 = scmp.eq.s32.totalorder %s23, 1
      %p105 = por %p103, %p104
      %p106 = scmp.ne.s32.totalorder %s95, %s96
      %p107 = scmp.eq.s32.totalorder %s23, 0
      %p108 = por %p106, %p107
      %p109 = scmp.ne.s32.totalorder %s95, %s96
      %p110 = scmp.eq.s32.totalorder %s24, 1
      %p111 = por %p109, %p110
      %p113 = scmp.ne.s32.totalorder %s96, %s112
      %p114 = scmp.eq.s32.totalorder %s24, 0
      %p115 = por %p113, %p114
      %s116 = ssub.s32 %s26, %s33
      %s117 = ssub.s32 %s25, %s37
      %s118 = sor.u32 %s116, %s117
      %p119 = scmp.eq.s32.totalorder %s118, 0
      %s121 = sadd.s32 %s120, 1
      %s122 = scalar_select %p119, %s120, %s121
      %p125 = pneg %p119
      %p126 = scmp.eq.s32.totalorder %s18, 1
      %p127 = por %p125, %p126
      %p128 = scmp.ne.s32.totalorder %s120, %s123
      %p129 = scmp.eq.s32.totalorder %s18, 0
      %p130 = por %p128, %p129
      %p131 = scmp.ne.s32.totalorder %s120, %s123
      %p132 = scmp.eq.s32.totalorder %s23, 1
      %p133 = por %p131, %p132
      %p134 = scmp.ne.s32.totalorder %s123, %s124
      %p135 = scmp.eq.s32.totalorder %s23, 0
      %p136 = por %p134, %p135
      %p137 = scmp.ne.s32.totalorder %s123, %s124
      %p138 = scmp.eq.s32.totalorder %s24, 1
      %p139 = por %p137, %p138
      %p141 = scmp.ne.s32.totalorder %s124, %s140
      %p142 = scmp.eq.s32.totalorder %s24, 0
      %p143 = por %p141, %p142
      %p144 = scmp.le.s32.totalorder 1, %s18
      %p145 = scmp.lt.s32.totalorder %s18, 3
      %p146 = pnand %p144, %p145
      %p147 = pneg %p146
      // Predicated region
      $region9: #{_forward_impl.3} parent=5 // pred_check
        _
      $region10: #{_forward_impl.3} parent=5 // pred_check_branch
        %149 = sbr.rel (%p146) target = $region12
      $region11: #{_forward_impl.3} parent=5 // pred_region
        %s150 = ssub.s32 %s18, 1
        // Predicated region
        $region13: #{_forward_impl.3} parent=11 // pred_check
          %p151 = pneg %p56
        $region14: #{_forward_impl.3} parent=11 // pred_check_branch
          %153 = sbr.rel (%p151) target = $region16
        $region15: #{_forward_impl.3} parent=11 // pred_region
          %s154 = smul.u32 2, %s28
          %p155 = scmp.lt.s32.totalorder %s154, 1
          %s156 = scalar_select %p155, %s154, 1
          %s157 = smul.addr %s156, 16
          %s158 = smul.addr %s157, 4
          %s159 = scalar_lea.vmem %s0, %s158
          %s160 = smul.u32 2, %s28
        $region16: #{_forward_impl.3} parent=11 // pred_fallthru
          _
      $region12: #{_forward_impl.3} parent=5 // pred_fallthru
        _
      %p161 = scmp.lt.s32.totalorder %s18, 2
      // Predicated region
      $region17: #{_forward_impl.3} parent=5 // pred_check
        %p162 = pneg %p161
      $region18: #{_forward_impl.3} parent=5 // pred_check_branch
        %164 = sbr.rel (%p162) target = $region20
      $region19: #{_forward_impl.3} parent=5 // pred_region
        // Predicated region
        $region21: #{_forward_impl.3} parent=19 // pred_check
          %p165 = pneg %p76
        $region22: #{_forward_impl.3} parent=19 // pred_check_branch
          %167 = sbr.rel (%p165) target = $region24
        $region23: #{_forward_impl.3} parent=19 // pred_region
          %s168 = sand.u32 %s66, 1
          %s169 = scalar_lea.sflag [#allocation3], %s168
          %s170 = sand.u32 %s66, 1
          %s171 = smul.addr %s170, 4096
          %s172 = scalar_lea.vmem [#allocation2], %s171
          %s174 = ssub.s32 65536, 65536
          %175 = vsyncadd %s169, %s174
          %s176 = smul.addr %s25, 1024
          %s177 = smul.addr %s176, 64
          %s178 = scalar_lea.hbm %s1, %s177
          %s179 = sshll.u32 %s172, 4
          %s180 = int_to_ptr.vmem [resolvable:$true] %s179
          %185 = dma.hbm_to_vmem [thread:$0]  %s178, 65536, %s180, %s169, 256, 256, 16
        $region24: #{_forward_impl.3} parent=19 // pred_fallthru
          _
        // Predicated region
        $region25: #{_forward_impl.3} parent=19 // pred_check
          %p186 = pneg %p102
        $region26: #{_forward_impl.3} parent=19 // pred_check_branch
          %188 = sbr.rel (%p186) target = $region28
        $region27: #{_forward_impl.3} parent=19 // pred_region
          %s189 = sand.u32 %s92, 1
          %s190 = scalar_lea.sflag [#allocation6], %s189
          %s191 = sand.u32 %s92, 1
          %s192 = smul.addr %s191, 4
          %s193 = scalar_lea.vmem [#allocation5], %s192
          %s195 = ssub.s32 64, 64
          %196 = vsyncadd %s190, %s195
          %s197 = smul.addr %s25, 4
          %s198 = smul.addr %s197, 16
          %s199 = scalar_lea.hbm %s2, %s198
          %s201 = sshll.u32 %s193, 4
          %s202 = int_to_ptr.vmem [resolvable:$true] %s201
          %204 = dma.hbm_to_vmem [thread:$0]  %s199, 64, %s202, %s190
        $region28: #{_forward_impl.3} parent=19 // pred_fallthru
          _
      $region20: #{_forward_impl.3} parent=5 // pred_fallthru
        _
      %p205 = scmp.le.s32.totalorder 1, %s18
      %p206 = scmp.lt.s32.totalorder %s18, 3
      %p207 = pnand %p205, %p206
      %p208 = pneg %p207
      // Predicated region
      $region29: #{_forward_impl.3} parent=5 // pred_check
        _
      $region30: #{_forward_impl.3} parent=5 // pred_check_branch
        %210 = sbr.rel (%p207) target = $region32
      $region31: #{_forward_impl.3} parent=5 // pred_region
        %s211 = ssub.s32 %s18, 1
        %s212 = sand.u32 %s69, 1
        %s213 = scalar_lea.sflag [#allocation3], %s212
        %s214 = sand.u32 %s69, 1
        %s215 = smul.addr %s214, 4096
        %s216 = scalar_lea.vmem [#allocation2], %s215
        // Predicated region
        $region33: #{_forward_impl.3} parent=31 // pred_check
          %p217 = pneg %p82
        $region34: #{_forward_impl.3} parent=31 // pred_check_branch
          %219 = sbr.rel (%p217) target = $region36
        $region35: #{_forward_impl.3} parent=31 // pred_region
          %220 = dma.done %s213, 65536
        $region36: #{_forward_impl.3} parent=31 // pred_fallthru
          _
        %s221 = sand.u32 %s95, 1
        %s222 = scalar_lea.sflag [#allocation6], %s221
        %s223 = sand.u32 %s95, 1
        %s224 = smul.addr %s223, 4
        %s225 = scalar_lea.vmem [#allocation5], %s224
        // Predicated region
        $region37: #{_forward_impl.3} parent=31 // pred_check
          %p226 = pneg %p108
        $region38: #{_forward_impl.3} parent=31 // pred_check_branch
          %228 = sbr.rel (%p226) target = $region40
        $region39: #{_forward_impl.3} parent=31 // pred_region
          %229 = dma.done %s222, 64
        $region40: #{_forward_impl.3} parent=31 // pred_fallthru
          _
        %s230 = smul.u32 2, %s28
        %p231 = scmp.lt.s32.totalorder %s230, 1
        %s232 = scalar_select %p231, %s230, 1
        %s233 = smul.addr %s232, 16
        %s234 = smul.addr %s233, 4
        %s235 = scalar_lea.vmem %s0, %s234
        %p236 = pneg %p56
        %p237 = pneg %p53
        %s238 = sand.u32 %s69, 1
        %s239 = scalar_lea.sflag [#allocation3], %s238
        %s240 = sand.u32 %s69, 1
        %s241 = smul.addr %s240, 4096
        %s242 = scalar_lea.vmem [#allocation2], %s241
        %p243 = pneg %p82
        %p244 = pneg %p79
        %s245 = sand.u32 %s95, 1
        %s246 = scalar_lea.sflag [#allocation6], %s245
        %s247 = sand.u32 %s95, 1
        %s248 = smul.addr %s247, 4
        %s249 = scalar_lea.vmem [#allocation5], %s248
        %p250 = pneg %p108
        %p251 = pneg %p105
        %p252 = pneg %p136
        %p253 = pneg %p133
        %s254 = sand.u32 %s123, 1
        %s255 = scalar_lea.sflag [#allocation4], %s254
        %s256 = sand.u32 %s123, 1
        %s257 = smul.addr %s256, 64
        %s258 = scalar_lea.vmem [#allocation7], %s257
        %s259 = smul.u32 2, %s28
        %p260 = scmp.lt.s32.totalorder %s259, 1
        %s261 = scalar_select %p260, %s259, 1
        %s262 = smul.addr %s261, 16
        %s263 = smul.addr %s262, 4
        %s264 = scalar_lea.vmem %s0, %s263
        %s265 = smul.u32 2, %s28
        %s266 = smul.u32 2, %s28
        %s267 = smul.u32 4, %s27
        %v268 = vld [vmem:[%s264] sm:$0xff]
        %v269 = vld [vmem:[%s264 + $0x8] sm:$0xff]
        %v270 = vld [vmem:[%s264 + $0x10] sm:$0xff]
        %v271 = vld [vmem:[%s264 + $0x18] sm:$0xff]
        %v272 = vld [vmem:[%s264 + $0x20] sm:$0xff]
        %v273 = vld [vmem:[%s264 + $0x28] sm:$0xff]
        %v274 = vld [vmem:[%s264 + $0x30] sm:$0xff]
        %v275 = vld [vmem:[%s264 + $0x38] sm:$0xff]
        %v276 = vld [vmem:[%s264 + $0x40] sm:$0xff]
        %v277 = vld [vmem:[%s264 + $0x48] sm:$0xff]
        %v278 = vld [vmem:[%s264 + $0x50] sm:$0xff]
        %v279 = vld [vmem:[%s264 + $0x58] sm:$0xff]
        %v280 = vld [vmem:[%s264 + $0x60] sm:$0xff]
        %v281 = vld [vmem:[%s264 + $0x68] sm:$0xff]
        %v282 = vld [vmem:[%s264 + $0x70] sm:$0xff]
        %v283 = vld [vmem:[%s264 + $0x78] sm:$0xff]
        %v284 = vld [vmem:[%s216] sm:$0xff]
        %v285 = vld [vmem:[%s216 + $0x8] sm:$0xff]
        %v286 = vld [vmem:[%s216 + $0x10] sm:$0xff]
        %v287 = vld [vmem:[%s216 + $0x18] sm:$0xff]
        %v288 = vld [vmem:[%s216 + $0x20] sm:$0xff]
        %v289 = vld [vmem:[%s216 + $0x28] sm:$0xff]
        %v290 = vld [vmem:[%s216 + $0x30] sm:$0xff]
        %v291 = vld [vmem:[%s216 + $0x38] sm:$0xff]
        %v292 = vld [vmem:[%s216 + $0x40] sm:$0xff]
        %v293 = vld [vmem:[%s216 + $0x48] sm:$0xff]
        %v294 = vld [vmem:[%s216 + $0x50] sm:$0xff]
        %v295 = vld [vmem:[%s216 + $0x58] sm:$0xff]
        %v296 = vld [vmem:[%s216 + $0x60] sm:$0xff]
        %v297 = vld [vmem:[%s216 + $0x68] sm:$0xff]
        %v298 = vld [vmem:[%s216 + $0x70] sm:$0xff]
        %v299 = vld [vmem:[%s216 + $0x78] sm:$0xff]
        %v300 = vld [vmem:[%s216 + $0x80] sm:$0xff]
        %v301 = vld [vmem:[%s216 + $0x88] sm:$0xff]
        %v302 = vld [vmem:[%s216 + $0x90] sm:$0xff]
        %v303 = vld [vmem:[%s216 + $0x98] sm:$0xff]
        %v304 = vld [vmem:[%s216 + $0xa0] sm:$0xff]
        %v305 = vld [vmem:[%s216 + $0xa8] sm:$0xff]
        %v306 = vld [vmem:[%s216 + $0xb0] sm:$0xff]
        %v307 = vld [vmem:[%s216 + $0xb8] sm:$0xff]
        %v308 = vld [vmem:[%s216 + $0xc0] sm:$0xff]
        %v309 = vld [vmem:[%s216 + $0xc8] sm:$0xff]
        %v310 = vld [vmem:[%s216 + $0xd0] sm:$0xff]
        %v311 = vld [vmem:[%s216 + $0xd8] sm:$0xff]
        %v312 = vld [vmem:[%s216 + $0xe0] sm:$0xff]
        %v313 = vld [vmem:[%s216 + $0xe8] sm:$0xff]
        %v314 = vld [vmem:[%s216 + $0xf0] sm:$0xff]
        %v315 = vld [vmem:[%s216 + $0xf8] sm:$0xff]
        %v316 = vld [vmem:[%s216 + $0x100] sm:$0xff]
        %v317 = vld [vmem:[%s216 + $0x108] sm:$0xff]
        %v318 = vld [vmem:[%s216 + $0x110] sm:$0xff]
        %v319 = vld [vmem:[%s216 + $0x118] sm:$0xff]
        %v320 = vld [vmem:[%s216 + $0x120] sm:$0xff]
        %v321 = vld [vmem:[%s216 + $0x128] sm:$0xff]
        %v322 = vld [vmem:[%s216 + $0x130] sm:$0xff]
        %v323 = vld [vmem:[%s216 + $0x138] sm:$0xff]
        %v324 = vld [vmem:[%s216 + $0x140] sm:$0xff]
        %v325 = vld [vmem:[%s216 + $0x148] sm:$0xff]
        %v326 = vld [vmem:[%s216 + $0x150] sm:$0xff]
        %v327 = vld [vmem:[%s216 + $0x158] sm:$0xff]
        %v328 = vld [vmem:[%s216 + $0x160] sm:$0xff]
        %v329 = vld [vmem:[%s216 + $0x168] sm:$0xff]
        %v330 = vld [vmem:[%s216 + $0x170] sm:$0xff]
        %v331 = vld [vmem:[%s216 + $0x178] sm:$0xff]
        %v332 = vld [vmem:[%s216 + $0x180] sm:$0xff]
        %v333 = vld [vmem:[%s216 + $0x188] sm:$0xff]
        %v334 = vld [vmem:[%s216 + $0x190] sm:$0xff]
        %v335 = vld [vmem:[%s216 + $0x198] sm:$0xff]
        %v336 = vld [vmem:[%s216 + $0x1a0] sm:$0xff]
        %v337 = vld [vmem:[%s216 + $0x1a8] sm:$0xff]
        %v338 = vld [vmem:[%s216 + $0x1b0] sm:$0xff]
        %v339 = vld [vmem:[%s216 + $0x1b8] sm:$0xff]
        %v340 = vld [vmem:[%s216 + $0x1c0] sm:$0xff]
        %v341 = vld [vmem:[%s216 + $0x1c8] sm:$0xff]
        %v342 = vld [vmem:[%s216 + $0x1d0] sm:$0xff]
        %v343 = vld [vmem:[%s216 + $0x1d8] sm:$0xff]
        %v344 = vld [vmem:[%s216 + $0x1e0] sm:$0xff]
        %v345 = vld [vmem:[%s216 + $0x1e8] sm:$0xff]
        %v346 = vld [vmem:[%s216 + $0x1f0] sm:$0xff]
        %v347 = vld [vmem:[%s216 + $0x1f8] sm:$0xff]
        %v348 = vld [vmem:[%s216 + $0x200] sm:$0xff]
        %v349 = vld [vmem:[%s216 + $0x208] sm:$0xff]
        %v350 = vld [vmem:[%s216 + $0x210] sm:$0xff]
        %v351 = vld [vmem:[%s216 + $0x218] sm:$0xff]
        %v352 = vld [vmem:[%s216 + $0x220] sm:$0xff]
        %v353 = vld [vmem:[%s216 + $0x228] sm:$0xff]
        %v354 = vld [vmem:[%s216 + $0x230] sm:$0xff]
        %v355 = vld [vmem:[%s216 + $0x238] sm:$0xff]
        %v356 = vld [vmem:[%s216 + $0x240] sm:$0xff]
        %v357 = vld [vmem:[%s216 + $0x248] sm:$0xff]
        %v358 = vld [vmem:[%s216 + $0x250] sm:$0xff]
        %v359 = vld [vmem:[%s216 + $0x258] sm:$0xff]
        %v360 = vld [vmem:[%s216 + $0x260] sm:$0xff]
        %v361 = vld [vmem:[%s216 + $0x268] sm:$0xff]
        %v362 = vld [vmem:[%s216 + $0x270] sm:$0xff]
        %v363 = vld [vmem:[%s216 + $0x278] sm:$0xff]
        %v364 = vld [vmem:[%s216 + $0x280] sm:$0xff]
        %v365 = vld [vmem:[%s216 + $0x288] sm:$0xff]
        %v366 = vld [vmem:[%s216 + $0x290] sm:$0xff]
        %v367 = vld [vmem:[%s216 + $0x298] sm:$0xff]
        %v368 = vld [vmem:[%s216 + $0x2a0] sm:$0xff]
        %v369 = vld [vmem:[%s216 + $0x2a8] sm:$0xff]
        %v370 = vld [vmem:[%s216 + $0x2b0] sm:$0xff]
        %v371 = vld [vmem:[%s216 + $0x2b8] sm:$0xff]
        %v372 = vld [vmem:[%s216 + $0x2c0] sm:$0xff]
        %v373 = vld [vmem:[%s216 + $0x2c8] sm:$0xff]
        %v374 = vld [vmem:[%s216 + $0x2d0] sm:$0xff]
        %v375 = vld [vmem:[%s216 + $0x2d8] sm:$0xff]
        %v376 = vld [vmem:[%s216 + $0x2e0] sm:$0xff]
        %v377 = vld [vmem:[%s216 + $0x2e8] sm:$0xff]
        %v378 = vld [vmem:[%s216 + $0x2f0] sm:$0xff]
        %v379 = vld [vmem:[%s216 + $0x2f8] sm:$0xff]
        %v380 = vld [vmem:[%s216 + $0x300] sm:$0xff]
        %v381 = vld [vmem:[%s216 + $0x308] sm:$0xff]
        %v382 = vld [vmem:[%s216 + $0x310] sm:$0xff]
        %v383 = vld [vmem:[%s216 + $0x318] sm:$0xff]
        %v384 = vld [vmem:[%s216 + $0x320] sm:$0xff]
        %v385 = vld [vmem:[%s216 + $0x328] sm:$0xff]
        %v386 = vld [vmem:[%s216 + $0x330] sm:$0xff]
        %v387 = vld [vmem:[%s216 + $0x338] sm:$0xff]
        %v388 = vld [vmem:[%s216 + $0x340] sm:$0xff]
        %v389 = vld [vmem:[%s216 + $0x348] sm:$0xff]
        %v390 = vld [vmem:[%s216 + $0x350] sm:$0xff]
        %v391 = vld [vmem:[%s216 + $0x358] sm:$0xff]
        %v392 = vld [vmem:[%s216 + $0x360] sm:$0xff]
        %v393 = vld [vmem:[%s216 + $0x368] sm:$0xff]
        %v394 = vld [vmem:[%s216 + $0x370] sm:$0xff]
        %v395 = vld [vmem:[%s216 + $0x378] sm:$0xff]
        %v396 = vld [vmem:[%s216 + $0x380] sm:$0xff]
        %v397 = vld [vmem:[%s216 + $0x388] sm:$0xff]
        %v398 = vld [vmem:[%s216 + $0x390] sm:$0xff]
        %v399 = vld [vmem:[%s216 + $0x398] sm:$0xff]
        %v400 = vld [vmem:[%s216 + $0x3a0] sm:$0xff]
        %v401 = vld [vmem:[%s216 + $0x3a8] sm:$0xff]
        %v402 = vld [vmem:[%s216 + $0x3b0] sm:$0xff]
        %v403 = vld [vmem:[%s216 + $0x3b8] sm:$0xff]
        %v404 = vld [vmem:[%s216 + $0x3c0] sm:$0xff]
        %v405 = vld [vmem:[%s216 + $0x3c8] sm:$0xff]
        %v406 = vld [vmem:[%s216 + $0x3d0] sm:$0xff]
        %v407 = vld [vmem:[%s216 + $0x3d8] sm:$0xff]
        %v408 = vld [vmem:[%s216 + $0x3e0] sm:$0xff]
        %v409 = vld [vmem:[%s216 + $0x3e8] sm:$0xff]
        %v410 = vld [vmem:[%s216 + $0x3f0] sm:$0xff]
        %v411 = vld [vmem:[%s216 + $0x3f8] sm:$0xff]
        %v412 = vld [vmem:[%s216 + $0x400] sm:$0xff]
        %v413 = vld [vmem:[%s216 + $0x408] sm:$0xff]
        %v414 = vld [vmem:[%s216 + $0x410] sm:$0xff]
        %v415 = vld [vmem:[%s216 + $0x418] sm:$0xff]
        %v416 = vld [vmem:[%s216 + $0x420] sm:$0xff]
        %v417 = vld [vmem:[%s216 + $0x428] sm:$0xff]
        %v418 = vld [vmem:[%s216 + $0x430] sm:$0xff]
        %v419 = vld [vmem:[%s216 + $0x438] sm:$0xff]
        %v420 = vld [vmem:[%s216 + $0x440] sm:$0xff]
        %v421 = vld [vmem:[%s216 + $0x448] sm:$0xff]
        %v422 = vld [vmem:[%s216 + $0x450] sm:$0xff]
        %v423 = vld [vmem:[%s216 + $0x458] sm:$0xff]
        %v424 = vld [vmem:[%s216 + $0x460] sm:$0xff]
        %v425 = vld [vmem:[%s216 + $0x468] sm:$0xff]
        %v426 = vld [vmem:[%s216 + $0x470] sm:$0xff]
        %v427 = vld [vmem:[%s216 + $0x478] sm:$0xff]
        %v428 = vld [vmem:[%s216 + $0x480] sm:$0xff]
        %v429 = vld [vmem:[%s216 + $0x488] sm:$0xff]
        %v430 = vld [vmem:[%s216 + $0x490] sm:$0xff]
        %v431 = vld [vmem:[%s216 + $0x498] sm:$0xff]
        %v432 = vld [vmem:[%s216 + $0x4a0] sm:$0xff]
        %v433 = vld [vmem:[%s216 + $0x4a8] sm:$0xff]
        %v434 = vld [vmem:[%s216 + $0x4b0] sm:$0xff]
        %v435 = vld [vmem:[%s216 + $0x4b8] sm:$0xff]
        %v436 = vld [vmem:[%s216 + $0x4c0] sm:$0xff]
        %v437 = vld [vmem:[%s216 + $0x4c8] sm:$0xff]
        %v438 = vld [vmem:[%s216 + $0x4d0] sm:$0xff]
        %v439 = vld [vmem:[%s216 + $0x4d8] sm:$0xff]
        %v440 = vld [vmem:[%s216 + $0x4e0] sm:$0xff]
        %v441 = vld [vmem:[%s216 + $0x4e8] sm:$0xff]
        %v442 = vld [vmem:[%s216 + $0x4f0] sm:$0xff]
        %v443 = vld [vmem:[%s216 + $0x4f8] sm:$0xff]
        %v444 = vld [vmem:[%s216 + $0x500] sm:$0xff]
        %v445 = vld [vmem:[%s216 + $0x508] sm:$0xff]
        %v446 = vld [vmem:[%s216 + $0x510] sm:$0xff]
        %v447 = vld [vmem:[%s216 + $0x518] sm:$0xff]
        %v448 = vld [vmem:[%s216 + $0x520] sm:$0xff]
        %v449 = vld [vmem:[%s216 + $0x528] sm:$0xff]
        %v450 = vld [vmem:[%s216 + $0x530] sm:$0xff]
        %v451 = vld [vmem:[%s216 + $0x538] sm:$0xff]
        %v452 = vld [vmem:[%s216 + $0x540] sm:$0xff]
        %v453 = vld [vmem:[%s216 + $0x548] sm:$0xff]
        %v454 = vld [vmem:[%s216 + $0x550] sm:$0xff]
        %v455 = vld [vmem:[%s216 + $0x558] sm:$0xff]
        %v456 = vld [vmem:[%s216 + $0x560] sm:$0xff]
        %v457 = vld [vmem:[%s216 + $0x568] sm:$0xff]
        %v458 = vld [vmem:[%s216 + $0x570] sm:$0xff]
        %v459 = vld [vmem:[%s216 + $0x578] sm:$0xff]
        %v460 = vld [vmem:[%s216 + $0x580] sm:$0xff]
        %v461 = vld [vmem:[%s216 + $0x588] sm:$0xff]
        %v462 = vld [vmem:[%s216 + $0x590] sm:$0xff]
        %v463 = vld [vmem:[%s216 + $0x598] sm:$0xff]
        %v464 = vld [vmem:[%s216 + $0x5a0] sm:$0xff]
        %v465 = vld [vmem:[%s216 + $0x5a8] sm:$0xff]
        %v466 = vld [vmem:[%s216 + $0x5b0] sm:$0xff]
        %v467 = vld [vmem:[%s216 + $0x5b8] sm:$0xff]
        %v468 = vld [vmem:[%s216 + $0x5c0] sm:$0xff]
        %v469 = vld [vmem:[%s216 + $0x5c8] sm:$0xff]
        %v470 = vld [vmem:[%s216 + $0x5d0] sm:$0xff]
        %v471 = vld [vmem:[%s216 + $0x5d8] sm:$0xff]
        %v472 = vld [vmem:[%s216 + $0x5e0] sm:$0xff]
        %v473 = vld [vmem:[%s216 + $0x5e8] sm:$0xff]
        %v474 = vld [vmem:[%s216 + $0x5f0] sm:$0xff]
        %v475 = vld [vmem:[%s216 + $0x5f8] sm:$0xff]
        %v476 = vld [vmem:[%s216 + $0x600] sm:$0xff]
        %v477 = vld [vmem:[%s216 + $0x608] sm:$0xff]
        %v478 = vld [vmem:[%s216 + $0x610] sm:$0xff]
        %v479 = vld [vmem:[%s216 + $0x618] sm:$0xff]
        %v480 = vld [vmem:[%s216 + $0x620] sm:$0xff]
        %v481 = vld [vmem:[%s216 + $0x628] sm:$0xff]
        %v482 = vld [vmem:[%s216 + $0x630] sm:$0xff]
        %v483 = vld [vmem:[%s216 + $0x638] sm:$0xff]
        %v484 = vld [vmem:[%s216 + $0x640] sm:$0xff]
        %v485 = vld [vmem:[%s216 + $0x648] sm:$0xff]
        %v486 = vld [vmem:[%s216 + $0x650] sm:$0xff]
        %v487 = vld [vmem:[%s216 + $0x658] sm:$0xff]
        %v488 = vld [vmem:[%s216 + $0x660] sm:$0xff]
        %v489 = vld [vmem:[%s216 + $0x668] sm:$0xff]
        %v490 = vld [vmem:[%s216 + $0x670] sm:$0xff]
        %v491 = vld [vmem:[%s216 + $0x678] sm:$0xff]
        %v492 = vld [vmem:[%s216 + $0x680] sm:$0xff]
        %v493 = vld [vmem:[%s216 + $0x688] sm:$0xff]
        %v494 = vld [vmem:[%s216 + $0x690] sm:$0xff]
        %v495 = vld [vmem:[%s216 + $0x698] sm:$0xff]
        %v496 = vld [vmem:[%s216 + $0x6a0] sm:$0xff]
        %v497 = vld [vmem:[%s216 + $0x6a8] sm:$0xff]
        %v498 = vld [vmem:[%s216 + $0x6b0] sm:$0xff]
        %v499 = vld [vmem:[%s216 + $0x6b8] sm:$0xff]
        %v500 = vld [vmem:[%s216 + $0x6c0] sm:$0xff]
        %v501 = vld [vmem:[%s216 + $0x6c8] sm:$0xff]
        %v502 = vld [vmem:[%s216 + $0x6d0] sm:$0xff]
        %v503 = vld [vmem:[%s216 + $0x6d8] sm:$0xff]
        %v504 = vld [vmem:[%s216 + $0x6e0] sm:$0xff]
        %v505 = vld [vmem:[%s216 + $0x6e8] sm:$0xff]
        %v506 = vld [vmem:[%s216 + $0x6f0] sm:$0xff]
        %v507 = vld [vmem:[%s216 + $0x6f8] sm:$0xff]
        %v508 = vld [vmem:[%s216 + $0x700] sm:$0xff]
        %v509 = vld [vmem:[%s216 + $0x708] sm:$0xff]
        %v510 = vld [vmem:[%s216 + $0x710] sm:$0xff]
        %v511 = vld [vmem:[%s216 + $0x718] sm:$0xff]
        %v512 = vld [vmem:[%s216 + $0x720] sm:$0xff]
        %v513 = vld [vmem:[%s216 + $0x728] sm:$0xff]
        %v514 = vld [vmem:[%s216 + $0x730] sm:$0xff]
        %v515 = vld [vmem:[%s216 + $0x738] sm:$0xff]
        %v516 = vld [vmem:[%s216 + $0x740] sm:$0xff]
        %v517 = vld [vmem:[%s216 + $0x748] sm:$0xff]
        %v518 = vld [vmem:[%s216 + $0x750] sm:$0xff]
        %v519 = vld [vmem:[%s216 + $0x758] sm:$0xff]
        %v520 = vld [vmem:[%s216 + $0x760] sm:$0xff]
        %v521 = vld [vmem:[%s216 + $0x768] sm:$0xff]
        %v522 = vld [vmem:[%s216 + $0x770] sm:$0xff]
        %v523 = vld [vmem:[%s216 + $0x778] sm:$0xff]
        %v524 = vld [vmem:[%s216 + $0x780] sm:$0xff]
        %v525 = vld [vmem:[%s216 + $0x788] sm:$0xff]
        %v526 = vld [vmem:[%s216 + $0x790] sm:$0xff]
        %v527 = vld [vmem:[%s216 + $0x798] sm:$0xff]
        %v528 = vld [vmem:[%s216 + $0x7a0] sm:$0xff]
        %v529 = vld [vmem:[%s216 + $0x7a8] sm:$0xff]
        %v530 = vld [vmem:[%s216 + $0x7b0] sm:$0xff]
        %v531 = vld [vmem:[%s216 + $0x7b8] sm:$0xff]
        %v532 = vld [vmem:[%s216 + $0x7c0] sm:$0xff]
        %v533 = vld [vmem:[%s216 + $0x7c8] sm:$0xff]
        %v534 = vld [vmem:[%s216 + $0x7d0] sm:$0xff]
        %v535 = vld [vmem:[%s216 + $0x7d8] sm:$0xff]
        %v536 = vld [vmem:[%s216 + $0x7e0] sm:$0xff]
        %v537 = vld [vmem:[%s216 + $0x7e8] sm:$0xff]
        %v538 = vld [vmem:[%s216 + $0x7f0] sm:$0xff]
        %v539 = vld [vmem:[%s216 + $0x7f8] sm:$0xff]
        %v540 = vld [vmem:[%s216 + $0x800] sm:$0xff]
        %v541 = vld [vmem:[%s216 + $0x808] sm:$0xff]
        %v542 = vld [vmem:[%s216 + $0x810] sm:$0xff]
        %v543 = vld [vmem:[%s216 + $0x818] sm:$0xff]
        %v544 = vld [vmem:[%s216 + $0x820] sm:$0xff]
        %v545 = vld [vmem:[%s216 + $0x828] sm:$0xff]
        %v546 = vld [vmem:[%s216 + $0x830] sm:$0xff]
        %v547 = vld [vmem:[%s216 + $0x838] sm:$0xff]
        %v548 = vld [vmem:[%s216 + $0x840] sm:$0xff]
        %v549 = vld [vmem:[%s216 + $0x848] sm:$0xff]
        %v550 = vld [vmem:[%s216 + $0x850] sm:$0xff]
        %v551 = vld [vmem:[%s216 + $0x858] sm:$0xff]
        %v552 = vld [vmem:[%s216 + $0x860] sm:$0xff]
        %v553 = vld [vmem:[%s216 + $0x868] sm:$0xff]
        %v554 = vld [vmem:[%s216 + $0x870] sm:$0xff]
        %v555 = vld [vmem:[%s216 + $0x878] sm:$0xff]
        %v556 = vld [vmem:[%s216 + $0x880] sm:$0xff]
        %v557 = vld [vmem:[%s216 + $0x888] sm:$0xff]
        %v558 = vld [vmem:[%s216 + $0x890] sm:$0xff]
        %v559 = vld [vmem:[%s216 + $0x898] sm:$0xff]
        %v560 = vld [vmem:[%s216 + $0x8a0] sm:$0xff]
        %v561 = vld [vmem:[%s216 + $0x8a8] sm:$0xff]
        %v562 = vld [vmem:[%s216 + $0x8b0] sm:$0xff]
        %v563 = vld [vmem:[%s216 + $0x8b8] sm:$0xff]
        %v564 = vld [vmem:[%s216 + $0x8c0] sm:$0xff]
        %v565 = vld [vmem:[%s216 + $0x8c8] sm:$0xff]
        %v566 = vld [vmem:[%s216 + $0x8d0] sm:$0xff]
        %v567 = vld [vmem:[%s216 + $0x8d8] sm:$0xff]
        %v568 = vld [vmem:[%s216 + $0x8e0] sm:$0xff]
        %v569 = vld [vmem:[%s216 + $0x8e8] sm:$0xff]
        %v570 = vld [vmem:[%s216 + $0x8f0] sm:$0xff]
        %v571 = vld [vmem:[%s216 + $0x8f8] sm:$0xff]
        %v572 = vld [vmem:[%s216 + $0x900] sm:$0xff]
        %v573 = vld [vmem:[%s216 + $0x908] sm:$0xff]
        %v574 = vld [vmem:[%s216 + $0x910] sm:$0xff]
        %v575 = vld [vmem:[%s216 + $0x918] sm:$0xff]
        %v576 = vld [vmem:[%s216 + $0x920] sm:$0xff]
        %v577 = vld [vmem:[%s216 + $0x928] sm:$0xff]
        %v578 = vld [vmem:[%s216 + $0x930] sm:$0xff]
        %v579 = vld [vmem:[%s216 + $0x938] sm:$0xff]
        %v580 = vld [vmem:[%s216 + $0x940] sm:$0xff]
        %v581 = vld [vmem:[%s216 + $0x948] sm:$0xff]
        %v582 = vld [vmem:[%s216 + $0x950] sm:$0xff]
        %v583 = vld [vmem:[%s216 + $0x958] sm:$0xff]
        %v584 = vld [vmem:[%s216 + $0x960] sm:$0xff]
        %v585 = vld [vmem:[%s216 + $0x968] sm:$0xff]
        %v586 = vld [vmem:[%s216 + $0x970] sm:$0xff]
        %v587 = vld [vmem:[%s216 + $0x978] sm:$0xff]
        %v588 = vld [vmem:[%s216 + $0x980] sm:$0xff]
        %v589 = vld [vmem:[%s216 + $0x988] sm:$0xff]
        %v590 = vld [vmem:[%s216 + $0x990] sm:$0xff]
        %v591 = vld [vmem:[%s216 + $0x998] sm:$0xff]
        %v592 = vld [vmem:[%s216 + $0x9a0] sm:$0xff]
        %v593 = vld [vmem:[%s216 + $0x9a8] sm:$0xff]
        %v594 = vld [vmem:[%s216 + $0x9b0] sm:$0xff]
        %v595 = vld [vmem:[%s216 + $0x9b8] sm:$0xff]
        %v596 = vld [vmem:[%s216 + $0x9c0] sm:$0xff]
        %v597 = vld [vmem:[%s216 + $0x9c8] sm:$0xff]
        %v598 = vld [vmem:[%s216 + $0x9d0] sm:$0xff]
        %v599 = vld [vmem:[%s216 + $0x9d8] sm:$0xff]
        %v600 = vld [vmem:[%s216 + $0x9e0] sm:$0xff]
        %v601 = vld [vmem:[%s216 + $0x9e8] sm:$0xff]
        %v602 = vld [vmem:[%s216 + $0x9f0] sm:$0xff]
        %v603 = vld [vmem:[%s216 + $0x9f8] sm:$0xff]
        %v604 = vld [vmem:[%s216 + $0xa00] sm:$0xff]
        %v605 = vld [vmem:[%s216 + $0xa08] sm:$0xff]
        %v606 = vld [vmem:[%s216 + $0xa10] sm:$0xff]
        %v607 = vld [vmem:[%s216 + $0xa18] sm:$0xff]
        %v608 = vld [vmem:[%s216 + $0xa20] sm:$0xff]
        %v609 = vld [vmem:[%s216 + $0xa28] sm:$0xff]
        %v610 = vld [vmem:[%s216 + $0xa30] sm:$0xff]
        %v611 = vld [vmem:[%s216 + $0xa38] sm:$0xff]
        %v612 = vld [vmem:[%s216 + $0xa40] sm:$0xff]
        %v613 = vld [vmem:[%s216 + $0xa48] sm:$0xff]
        %v614 = vld [vmem:[%s216 + $0xa50] sm:$0xff]
        %v615 = vld [vmem:[%s216 + $0xa58] sm:$0xff]
        %v616 = vld [vmem:[%s216 + $0xa60] sm:$0xff]
        %v617 = vld [vmem:[%s216 + $0xa68] sm:$0xff]
        %v618 = vld [vmem:[%s216 + $0xa70] sm:$0xff]
        %v619 = vld [vmem:[%s216 + $0xa78] sm:$0xff]
        %v620 = vld [vmem:[%s216 + $0xa80] sm:$0xff]
        %v621 = vld [vmem:[%s216 + $0xa88] sm:$0xff]
        %v622 = vld [vmem:[%s216 + $0xa90] sm:$0xff]
        %v623 = vld [vmem:[%s216 + $0xa98] sm:$0xff]
        %v624 = vld [vmem:[%s216 + $0xaa0] sm:$0xff]
        %v625 = vld [vmem:[%s216 + $0xaa8] sm:$0xff]
        %v626 = vld [vmem:[%s216 + $0xab0] sm:$0xff]
        %v627 = vld [vmem:[%s216 + $0xab8] sm:$0xff]
        %v628 = vld [vmem:[%s216 + $0xac0] sm:$0xff]
        %v629 = vld [vmem:[%s216 + $0xac8] sm:$0xff]
        %v630 = vld [vmem:[%s216 + $0xad0] sm:$0xff]
        %v631 = vld [vmem:[%s216 + $0xad8] sm:$0xff]
        %v632 = vld [vmem:[%s216 + $0xae0] sm:$0xff]
        %v633 = vld [vmem:[%s216 + $0xae8] sm:$0xff]
        %v634 = vld [vmem:[%s216 + $0xaf0] sm:$0xff]
        %v635 = vld [vmem:[%s216 + $0xaf8] sm:$0xff]
        %v636 = vld [vmem:[%s216 + $0xb00] sm:$0xff]
        %v637 = vld [vmem:[%s216 + $0xb08] sm:$0xff]
        %v638 = vld [vmem:[%s216 + $0xb10] sm:$0xff]
        %v639 = vld [vmem:[%s216 + $0xb18] sm:$0xff]
        %v640 = vld [vmem:[%s216 + $0xb20] sm:$0xff]
        %v641 = vld [vmem:[%s216 + $0xb28] sm:$0xff]
        %v642 = vld [vmem:[%s216 + $0xb30] sm:$0xff]
        %v643 = vld [vmem:[%s216 + $0xb38] sm:$0xff]
        %v644 = vld [vmem:[%s216 + $0xb40] sm:$0xff]
        %v645 = vld [vmem:[%s216 + $0xb48] sm:$0xff]
        %v646 = vld [vmem:[%s216 + $0xb50] sm:$0xff]
        %v647 = vld [vmem:[%s216 + $0xb58] sm:$0xff]
        %v648 = vld [vmem:[%s216 + $0xb60] sm:$0xff]
        %v649 = vld [vmem:[%s216 + $0xb68] sm:$0xff]
        %v650 = vld [vmem:[%s216 + $0xb70] sm:$0xff]
        %v651 = vld [vmem:[%s216 + $0xb78] sm:$0xff]
        %v652 = vld [vmem:[%s216 + $0xb80] sm:$0xff]
        %v653 = vld [vmem:[%s216 + $0xb88] sm:$0xff]
        %v654 = vld [vmem:[%s216 + $0xb90] sm:$0xff]
        %v655 = vld [vmem:[%s216 + $0xb98] sm:$0xff]
        %v656 = vld [vmem:[%s216 + $0xba0] sm:$0xff]
        %v657 = vld [vmem:[%s216 + $0xba8] sm:$0xff]
        %v658 = vld [vmem:[%s216 + $0xbb0] sm:$0xff]
        %v659 = vld [vmem:[%s216 + $0xbb8] sm:$0xff]
        %v660 = vld [vmem:[%s216 + $0xbc0] sm:$0xff]
        %v661 = vld [vmem:[%s216 + $0xbc8] sm:$0xff]
        %v662 = vld [vmem:[%s216 + $0xbd0] sm:$0xff]
        %v663 = vld [vmem:[%s216 + $0xbd8] sm:$0xff]
        %v664 = vld [vmem:[%s216 + $0xbe0] sm:$0xff]
        %v665 = vld [vmem:[%s216 + $0xbe8] sm:$0xff]
        %v666 = vld [vmem:[%s216 + $0xbf0] sm:$0xff]
        %v667 = vld [vmem:[%s216 + $0xbf8] sm:$0xff]
        %v668 = vld [vmem:[%s216 + $0xc00] sm:$0xff]
        %v669 = vld [vmem:[%s216 + $0xc08] sm:$0xff]
        %v670 = vld [vmem:[%s216 + $0xc10] sm:$0xff]
        %v671 = vld [vmem:[%s216 + $0xc18] sm:$0xff]
        %v672 = vld [vmem:[%s216 + $0xc20] sm:$0xff]
        %v673 = vld [vmem:[%s216 + $0xc28] sm:$0xff]
        %v674 = vld [vmem:[%s216 + $0xc30] sm:$0xff]
        %v675 = vld [vmem:[%s216 + $0xc38] sm:$0xff]
        %v676 = vld [vmem:[%s216 + $0xc40] sm:$0xff]
        %v677 = vld [vmem:[%s216 + $0xc48] sm:$0xff]
        %v678 = vld [vmem:[%s216 + $0xc50] sm:$0xff]
        %v679 = vld [vmem:[%s216 + $0xc58] sm:$0xff]
        %v680 = vld [vmem:[%s216 + $0xc60] sm:$0xff]
        %v681 = vld [vmem:[%s216 + $0xc68] sm:$0xff]
        %v682 = vld [vmem:[%s216 + $0xc70] sm:$0xff]
        %v683 = vld [vmem:[%s216 + $0xc78] sm:$0xff]
        %v684 = vld [vmem:[%s216 + $0xc80] sm:$0xff]
        %v685 = vld [vmem:[%s216 + $0xc88] sm:$0xff]
        %v686 = vld [vmem:[%s216 + $0xc90] sm:$0xff]
        %v687 = vld [vmem:[%s216 + $0xc98] sm:$0xff]
        %v688 = vld [vmem:[%s216 + $0xca0] sm:$0xff]
        %v689 = vld [vmem:[%s216 + $0xca8] sm:$0xff]
        %v690 = vld [vmem:[%s216 + $0xcb0] sm:$0xff]
        %v691 = vld [vmem:[%s216 + $0xcb8] sm:$0xff]
        %v692 = vld [vmem:[%s216 + $0xcc0] sm:$0xff]
        %v693 = vld [vmem:[%s216 + $0xcc8] sm:$0xff]
        %v694 = vld [vmem:[%s216 + $0xcd0] sm:$0xff]
        %v695 = vld [vmem:[%s216 + $0xcd8] sm:$0xff]
        %v696 = vld [vmem:[%s216 + $0xce0] sm:$0xff]
        %v697 = vld [vmem:[%s216 + $0xce8] sm:$0xff]
        %v698 = vld [vmem:[%s216 + $0xcf0] sm:$0xff]
        %v699 = vld [vmem:[%s216 + $0xcf8] sm:$0xff]
        %v700 = vld [vmem:[%s216 + $0xd00] sm:$0xff]
        %v701 = vld [vmem:[%s216 + $0xd08] sm:$0xff]
        %v702 = vld [vmem:[%s216 + $0xd10] sm:$0xff]
        %v703 = vld [vmem:[%s216 + $0xd18] sm:$0xff]
        %v704 = vld [vmem:[%s216 + $0xd20] sm:$0xff]
        %v705 = vld [vmem:[%s216 + $0xd28] sm:$0xff]
        %v706 = vld [vmem:[%s216 + $0xd30] sm:$0xff]
        %v707 = vld [vmem:[%s216 + $0xd38] sm:$0xff]
        %v708 = vld [vmem:[%s216 + $0xd40] sm:$0xff]
        %v709 = vld [vmem:[%s216 + $0xd48] sm:$0xff]
        %v710 = vld [vmem:[%s216 + $0xd50] sm:$0xff]
        %v711 = vld [vmem:[%s216 + $0xd58] sm:$0xff]
        %v712 = vld [vmem:[%s216 + $0xd60] sm:$0xff]
        %v713 = vld [vmem:[%s216 + $0xd68] sm:$0xff]
        %v714 = vld [vmem:[%s216 + $0xd70] sm:$0xff]
        %v715 = vld [vmem:[%s216 + $0xd78] sm:$0xff]
        %v716 = vld [vmem:[%s216 + $0xd80] sm:$0xff]
        %v717 = vld [vmem:[%s216 + $0xd88] sm:$0xff]
        %v718 = vld [vmem:[%s216 + $0xd90] sm:$0xff]
        %v719 = vld [vmem:[%s216 + $0xd98] sm:$0xff]
        %v720 = vld [vmem:[%s216 + $0xda0] sm:$0xff]
        %v721 = vld [vmem:[%s216 + $0xda8] sm:$0xff]
        %v722 = vld [vmem:[%s216 + $0xdb0] sm:$0xff]
        %v723 = vld [vmem:[%s216 + $0xdb8] sm:$0xff]
        %v724 = vld [vmem:[%s216 + $0xdc0] sm:$0xff]
        %v725 = vld [vmem:[%s216 + $0xdc8] sm:$0xff]
        %v726 = vld [vmem:[%s216 + $0xdd0] sm:$0xff]
        %v727 = vld [vmem:[%s216 + $0xdd8] sm:$0xff]
        %v728 = vld [vmem:[%s216 + $0xde0] sm:$0xff]
        %v729 = vld [vmem:[%s216 + $0xde8] sm:$0xff]
        %v730 = vld [vmem:[%s216 + $0xdf0] sm:$0xff]
        %v731 = vld [vmem:[%s216 + $0xdf8] sm:$0xff]
        %v732 = vld [vmem:[%s216 + $0xe00] sm:$0xff]
        %v733 = vld [vmem:[%s216 + $0xe08] sm:$0xff]
        %v734 = vld [vmem:[%s216 + $0xe10] sm:$0xff]
        %v735 = vld [vmem:[%s216 + $0xe18] sm:$0xff]
        %v736 = vld [vmem:[%s216 + $0xe20] sm:$0xff]
        %v737 = vld [vmem:[%s216 + $0xe28] sm:$0xff]
        %v738 = vld [vmem:[%s216 + $0xe30] sm:$0xff]
        %v739 = vld [vmem:[%s216 + $0xe38] sm:$0xff]
        %v740 = vld [vmem:[%s216 + $0xe40] sm:$0xff]
        %v741 = vld [vmem:[%s216 + $0xe48] sm:$0xff]
        %v742 = vld [vmem:[%s216 + $0xe50] sm:$0xff]
        %v743 = vld [vmem:[%s216 + $0xe58] sm:$0xff]
        %v744 = vld [vmem:[%s216 + $0xe60] sm:$0xff]
        %v745 = vld [vmem:[%s216 + $0xe68] sm:$0xff]
        %v746 = vld [vmem:[%s216 + $0xe70] sm:$0xff]
        %v747 = vld [vmem:[%s216 + $0xe78] sm:$0xff]
        %v748 = vld [vmem:[%s216 + $0xe80] sm:$0xff]
        %v749 = vld [vmem:[%s216 + $0xe88] sm:$0xff]
        %v750 = vld [vmem:[%s216 + $0xe90] sm:$0xff]
        %v751 = vld [vmem:[%s216 + $0xe98] sm:$0xff]
        %v752 = vld [vmem:[%s216 + $0xea0] sm:$0xff]
        %v753 = vld [vmem:[%s216 + $0xea8] sm:$0xff]
        %v754 = vld [vmem:[%s216 + $0xeb0] sm:$0xff]
        %v755 = vld [vmem:[%s216 + $0xeb8] sm:$0xff]
        %v756 = vld [vmem:[%s216 + $0xec0] sm:$0xff]
        %v757 = vld [vmem:[%s216 + $0xec8] sm:$0xff]
        %v758 = vld [vmem:[%s216 + $0xed0] sm:$0xff]
        %v759 = vld [vmem:[%s216 + $0xed8] sm:$0xff]
        %v760 = vld [vmem:[%s216 + $0xee0] sm:$0xff]
        %v761 = vld [vmem:[%s216 + $0xee8] sm:$0xff]
        %v762 = vld [vmem:[%s216 + $0xef0] sm:$0xff]
        %v763 = vld [vmem:[%s216 + $0xef8] sm:$0xff]
        %v764 = vld [vmem:[%s216 + $0xf00] sm:$0xff]
        %v765 = vld [vmem:[%s216 + $0xf08] sm:$0xff]
        %v766 = vld [vmem:[%s216 + $0xf10] sm:$0xff]
        %v767 = vld [vmem:[%s216 + $0xf18] sm:$0xff]
        %v768 = vld [vmem:[%s216 + $0xf20] sm:$0xff]
        %v769 = vld [vmem:[%s216 + $0xf28] sm:$0xff]
        %v770 = vld [vmem:[%s216 + $0xf30] sm:$0xff]
        %v771 = vld [vmem:[%s216 + $0xf38] sm:$0xff]
        %v772 = vld [vmem:[%s216 + $0xf40] sm:$0xff]
        %v773 = vld [vmem:[%s216 + $0xf48] sm:$0xff]
        %v774 = vld [vmem:[%s216 + $0xf50] sm:$0xff]
        %v775 = vld [vmem:[%s216 + $0xf58] sm:$0xff]
        %v776 = vld [vmem:[%s216 + $0xf60] sm:$0xff]
        %v777 = vld [vmem:[%s216 + $0xf68] sm:$0xff]
        %v778 = vld [vmem:[%s216 + $0xf70] sm:$0xff]
        %v779 = vld [vmem:[%s216 + $0xf78] sm:$0xff]
        %v780 = vld [vmem:[%s216 + $0xf80] sm:$0xff]
        %v781 = vld [vmem:[%s216 + $0xf88] sm:$0xff]
        %v782 = vld [vmem:[%s216 + $0xf90] sm:$0xff]
        %v783 = vld [vmem:[%s216 + $0xf98] sm:$0xff]
        %v784 = vld [vmem:[%s216 + $0xfa0] sm:$0xff]
        %v785 = vld [vmem:[%s216 + $0xfa8] sm:$0xff]
        %v786 = vld [vmem:[%s216 + $0xfb0] sm:$0xff]
        %v787 = vld [vmem:[%s216 + $0xfb8] sm:$0xff]
        %v788 = vld [vmem:[%s216 + $0xfc0] sm:$0xff]
        %v789 = vld [vmem:[%s216 + $0xfc8] sm:$0xff]
        %v790 = vld [vmem:[%s216 + $0xfd0] sm:$0xff]
        %v791 = vld [vmem:[%s216 + $0xfd8] sm:$0xff]
        %v792 = vld [vmem:[%s216 + $0xfe0] sm:$0xff]
        %v793 = vld [vmem:[%s216 + $0xfe8] sm:$0xff]
        %v794 = vld [vmem:[%s216 + $0xff0] sm:$0xff]
        %v795 = vld [vmem:[%s216 + $0xff8] sm:$0xff]
        %v796 = vld [vmem:[%s225] sm:$0xf]
        %v798 = vlaneseq
        %v799 = vshrl.u32 %v798, 7
        %v800 = vsub.s32 0, %v799
        %v801 = vrot.slane %v796, %v800
        %v802 = vlaneseq
        %v803 = vshrl.u32 %v802, 7
        %v804 = vsub.s32 1, %v803
        %v805 = vrot.slane %v796, %v804
        %v806 = vlaneseq
        %v807 = vshrl.u32 %v806, 7
        %v808 = vsub.s32 2, %v807
        %v809 = vrot.slane %v796, %v808
        %v810 = vlaneseq
        %v811 = vshrl.u32 %v810, 7
        %v812 = vsub.s32 3, %v811
        %v813 = vrot.slane %v796, %v812
        %v834 = vunpack.c.l.b16 %v268
        %v835 = vunpack.c.h.b16 %v268
        %v836 = vunpack.c.l.b16 %v269
        %v837 = vunpack.c.h.b16 %v269
        %v838 = vunpack.c.l.b16 %v270
        %v839 = vunpack.c.h.b16 %v270
        %v840 = vunpack.c.l.b16 %v271
        %v841 = vunpack.c.h.b16 %v271
        %v842 = vunpack.c.l.b16 %v272
        %v843 = vunpack.c.h.b16 %v272
        %v844 = vunpack.c.l.b16 %v273
        %v845 = vunpack.c.h.b16 %v273
        %v846 = vunpack.c.l.b16 %v274
        %v847 = vunpack.c.h.b16 %v274
        %v848 = vunpack.c.l.b16 %v275
        %v849 = vunpack.c.h.b16 %v275
        %v850 = vunpack.c.l.b16 %v276
        %v851 = vunpack.c.h.b16 %v276
        %v852 = vunpack.c.l.b16 %v277
        %v853 = vunpack.c.h.b16 %v277
        %v854 = vunpack.c.l.b16 %v278
        %v855 = vunpack.c.h.b16 %v278
        %v856 = vunpack.c.l.b16 %v279
        %v857 = vunpack.c.h.b16 %v279
        %v858 = vunpack.c.l.b16 %v280
        %v859 = vunpack.c.h.b16 %v280
        %v860 = vunpack.c.l.b16 %v281
        %v861 = vunpack.c.h.b16 %v281
        %v862 = vunpack.c.l.b16 %v282
        %v863 = vunpack.c.h.b16 %v282
        %v864 = vunpack.c.l.b16 %v283
        %v865 = vunpack.c.h.b16 %v283
        %v866 = vpack.c.b16 %v850, %v834
        %v867 = vpack.c.b16 %v851, %v835
        %v868 = vpack.c.b16 %v852, %v836
        %v869 = vpack.c.b16 %v853, %v837
        %v870 = vpack.c.b16 %v854, %v838
        %v871 = vpack.c.b16 %v855, %v839
        %v872 = vpack.c.b16 %v856, %v840
        %v873 = vpack.c.b16 %v857, %v841
        %v874 = vpack.c.b16 %v858, %v842
        %v875 = vpack.c.b16 %v859, %v843
        %v876 = vpack.c.b16 %v860, %v844
        %v877 = vpack.c.b16 %v861, %v845
        %v878 = vpack.c.b16 %v862, %v846
        %v879 = vpack.c.b16 %v863, %v847
        %v880 = vpack.c.b16 %v864, %v848
        %v881 = vpack.c.b16 %v865, %v849
        %v1410 = vunpack.c.l.b16 %v284
        %v1411 = vunpack.c.h.b16 %v284
        %v1412 = vunpack.c.l.b16 %v285
        %v1413 = vunpack.c.h.b16 %v285
        %v1414 = vunpack.c.l.b16 %v286
        %v1415 = vunpack.c.h.b16 %v286
        %v1416 = vunpack.c.l.b16 %v287
        %v1417 = vunpack.c.h.b16 %v287
        %v1418 = vunpack.c.l.b16 %v288
        %v1419 = vunpack.c.h.b16 %v288
        %v1420 = vunpack.c.l.b16 %v289
        %v1421 = vunpack.c.h.b16 %v289
        %v1422 = vunpack.c.l.b16 %v290
        %v1423 = vunpack.c.h.b16 %v290
        %v1424 = vunpack.c.l.b16 %v291
        %v1425 = vunpack.c.h.b16 %v291
        %v1426 = vunpack.c.l.b16 %v292
        %v1427 = vunpack.c.h.b16 %v292
        %v1428 = vunpack.c.l.b16 %v293
        %v1429 = vunpack.c.h.b16 %v293
        %v1430 = vunpack.c.l.b16 %v294
        %v1431 = vunpack.c.h.b16 %v294
        %v1432 = vunpack.c.l.b16 %v295
        %v1433 = vunpack.c.h.b16 %v295
        %v1434 = vunpack.c.l.b16 %v296
        %v1435 = vunpack.c.h.b16 %v296
        %v1436 = vunpack.c.l.b16 %v297
        %v1437 = vunpack.c.h.b16 %v297
        %v1438 = vunpack.c.l.b16 %v298
        %v1439 = vunpack.c.h.b16 %v298
        %v1440 = vunpack.c.l.b16 %v299
        %v1441 = vunpack.c.h.b16 %v299
        %v1442 = vunpack.c.l.b16 %v300
        %v1443 = vunpack.c.h.b16 %v300
        %v1444 = vunpack.c.l.b16 %v301
        %v1445 = vunpack.c.h.b16 %v301
        %v1446 = vunpack.c.l.b16 %v302
        %v1447 = vunpack.c.h.b16 %v302
        %v1448 = vunpack.c.l.b16 %v303
        %v1449 = vunpack.c.h.b16 %v303
        %v1450 = vunpack.c.l.b16 %v304
        %v1451 = vunpack.c.h.b16 %v304
        %v1452 = vunpack.c.l.b16 %v305
        %v1453 = vunpack.c.h.b16 %v305
        %v1454 = vunpack.c.l.b16 %v306
        %v1455 = vunpack.c.h.b16 %v306
        %v1456 = vunpack.c.l.b16 %v307
        %v1457 = vunpack.c.h.b16 %v307
        %v1458 = vunpack.c.l.b16 %v308
        %v1459 = vunpack.c.h.b16 %v308
        %v1460 = vunpack.c.l.b16 %v309
        %v1461 = vunpack.c.h.b16 %v309
        %v1462 = vunpack.c.l.b16 %v310
        %v1463 = vunpack.c.h.b16 %v310
        %v1464 = vunpack.c.l.b16 %v311
        %v1465 = vunpack.c.h.b16 %v311
        %v1466 = vunpack.c.l.b16 %v312
        %v1467 = vunpack.c.h.b16 %v312
        %v1468 = vunpack.c.l.b16 %v313
        %v1469 = vunpack.c.h.b16 %v313
        %v1470 = vunpack.c.l.b16 %v314
        %v1471 = vunpack.c.h.b16 %v314
        %v1472 = vunpack.c.l.b16 %v315
        %v1473 = vunpack.c.h.b16 %v315
        %v1474 = vunpack.c.l.b16 %v316
        %v1475 = vunpack.c.h.b16 %v316
        %v1476 = vunpack.c.l.b16 %v317
        %v1477 = vunpack.c.h.b16 %v317
        %v1478 = vunpack.c.l.b16 %v318
        %v1479 = vunpack.c.h.b16 %v318
        %v1480 = vunpack.c.l.b16 %v319
        %v1481 = vunpack.c.h.b16 %v319
        %v1482 = vunpack.c.l.b16 %v320
        %v1483 = vunpack.c.h.b16 %v320
        %v1484 = vunpack.c.l.b16 %v321
        %v1485 = vunpack.c.h.b16 %v321
        %v1486 = vunpack.c.l.b16 %v322
        %v1487 = vunpack.c.h.b16 %v322
        %v1488 = vunpack.c.l.b16 %v323
        %v1489 = vunpack.c.h.b16 %v323
        %v1490 = vunpack.c.l.b16 %v324
        %v1491 = vunpack.c.h.b16 %v324
        %v1492 = vunpack.c.l.b16 %v325
        %v1493 = vunpack.c.h.b16 %v325
        %v1494 = vunpack.c.l.b16 %v326
        %v1495 = vunpack.c.h.b16 %v326
        %v1496 = vunpack.c.l.b16 %v327
        %v1497 = vunpack.c.h.b16 %v327
        %v1498 = vunpack.c.l.b16 %v328
        %v1499 = vunpack.c.h.b16 %v328
        %v1500 = vunpack.c.l.b16 %v329
        %v1501 = vunpack.c.h.b16 %v329
        %v1502 = vunpack.c.l.b16 %v330
        %v1503 = vunpack.c.h.b16 %v330
        %v1504 = vunpack.c.l.b16 %v331
        %v1505 = vunpack.c.h.b16 %v331
        %v1506 = vunpack.c.l.b16 %v332
        %v1507 = vunpack.c.h.b16 %v332
        %v1508 = vunpack.c.l.b16 %v333
        %v1509 = vunpack.c.h.b16 %v333
        %v1510 = vunpack.c.l.b16 %v334
        %v1511 = vunpack.c.h.b16 %v334
        %v1512 = vunpack.c.l.b16 %v335
        %v1513 = vunpack.c.h.b16 %v335
        %v1514 = vunpack.c.l.b16 %v336
        %v1515 = vunpack.c.h.b16 %v336
        %v1516 = vunpack.c.l.b16 %v337
        %v1517 = vunpack.c.h.b16 %v337
        %v1518 = vunpack.c.l.b16 %v338
        %v1519 = vunpack.c.h.b16 %v338
        %v1520 = vunpack.c.l.b16 %v339
        %v1521 = vunpack.c.h.b16 %v339
        %v1522 = vunpack.c.l.b16 %v340
        %v1523 = vunpack.c.h.b16 %v340
        %v1524 = vunpack.c.l.b16 %v341
        %v1525 = vunpack.c.h.b16 %v341
        %v1526 = vunpack.c.l.b16 %v342
        %v1527 = vunpack.c.h.b16 %v342
        %v1528 = vunpack.c.l.b16 %v343
        %v1529 = vunpack.c.h.b16 %v343
        %v1530 = vunpack.c.l.b16 %v344
        %v1531 = vunpack.c.h.b16 %v344
        %v1532 = vunpack.c.l.b16 %v345
        %v1533 = vunpack.c.h.b16 %v345
        %v1534 = vunpack.c.l.b16 %v346
        %v1535 = vunpack.c.h.b16 %v346
        %v1536 = vunpack.c.l.b16 %v347
        %v1537 = vunpack.c.h.b16 %v347
        %v1538 = vunpack.c.l.b16 %v348
        %v1539 = vunpack.c.h.b16 %v348
        %v1540 = vunpack.c.l.b16 %v349
        %v1541 = vunpack.c.h.b16 %v349
        %v1542 = vunpack.c.l.b16 %v350
        %v1543 = vunpack.c.h.b16 %v350
        %v1544 = vunpack.c.l.b16 %v351
        %v1545 = vunpack.c.h.b16 %v351
        %v1546 = vunpack.c.l.b16 %v352
        %v1547 = vunpack.c.h.b16 %v352
        %v1548 = vunpack.c.l.b16 %v353
        %v1549 = vunpack.c.h.b16 %v353
        %v1550 = vunpack.c.l.b16 %v354
        %v1551 = vunpack.c.h.b16 %v354
        %v1552 = vunpack.c.l.b16 %v355
        %v1553 = vunpack.c.h.b16 %v355
        %v1554 = vunpack.c.l.b16 %v356
        %v1555 = vunpack.c.h.b16 %v356
        %v1556 = vunpack.c.l.b16 %v357
        %v1557 = vunpack.c.h.b16 %v357
        %v1558 = vunpack.c.l.b16 %v358
        %v1559 = vunpack.c.h.b16 %v358
        %v1560 = vunpack.c.l.b16 %v359
        %v1561 = vunpack.c.h.b16 %v359
        %v1562 = vunpack.c.l.b16 %v360
        %v1563 = vunpack.c.h.b16 %v360
        %v1564 = vunpack.c.l.b16 %v361
        %v1565 = vunpack.c.h.b16 %v361
        %v1566 = vunpack.c.l.b16 %v362
        %v1567 = vunpack.c.h.b16 %v362
        %v1568 = vunpack.c.l.b16 %v363
        %v1569 = vunpack.c.h.b16 %v363
        %v1570 = vunpack.c.l.b16 %v364
        %v1571 = vunpack.c.h.b16 %v364
        %v1572 = vunpack.c.l.b16 %v365
        %v1573 = vunpack.c.h.b16 %v365
        %v1574 = vunpack.c.l.b16 %v366
        %v1575 = vunpack.c.h.b16 %v366
        %v1576 = vunpack.c.l.b16 %v367
        %v1577 = vunpack.c.h.b16 %v367
        %v1578 = vunpack.c.l.b16 %v368
        %v1579 = vunpack.c.h.b16 %v368
        %v1580 = vunpack.c.l.b16 %v369
        %v1581 = vunpack.c.h.b16 %v369
        %v1582 = vunpack.c.l.b16 %v370
        %v1583 = vunpack.c.h.b16 %v370
        %v1584 = vunpack.c.l.b16 %v371
        %v1585 = vunpack.c.h.b16 %v371
        %v1586 = vunpack.c.l.b16 %v372
        %v1587 = vunpack.c.h.b16 %v372
        %v1588 = vunpack.c.l.b16 %v373
        %v1589 = vunpack.c.h.b16 %v373
        %v1590 = vunpack.c.l.b16 %v374
        %v1591 = vunpack.c.h.b16 %v374
        %v1592 = vunpack.c.l.b16 %v375
        %v1593 = vunpack.c.h.b16 %v375
        %v1594 = vunpack.c.l.b16 %v376
        %v1595 = vunpack.c.h.b16 %v376
        %v1596 = vunpack.c.l.b16 %v377
        %v1597 = vunpack.c.h.b16 %v377
        %v1598 = vunpack.c.l.b16 %v378
        %v1599 = vunpack.c.h.b16 %v378
        %v1600 = vunpack.c.l.b16 %v379
        %v1601 = vunpack.c.h.b16 %v379
        %v1602 = vunpack.c.l.b16 %v380
        %v1603 = vunpack.c.h.b16 %v380
        %v1604 = vunpack.c.l.b16 %v381
        %v1605 = vunpack.c.h.b16 %v381
        %v1606 = vunpack.c.l.b16 %v382
        %v1607 = vunpack.c.h.b16 %v382
        %v1608 = vunpack.c.l.b16 %v383
        %v1609 = vunpack.c.h.b16 %v383
        %v1610 = vunpack.c.l.b16 %v384
        %v1611 = vunpack.c.h.b16 %v384
        %v1612 = vunpack.c.l.b16 %v385
        %v1613 = vunpack.c.h.b16 %v385
        %v1614 = vunpack.c.l.b16 %v386
        %v1615 = vunpack.c.h.b16 %v386
        %v1616 = vunpack.c.l.b16 %v387
        %v1617 = vunpack.c.h.b16 %v387
        %v1618 = vunpack.c.l.b16 %v388
        %v1619 = vunpack.c.h.b16 %v388
        %v1620 = vunpack.c.l.b16 %v389
        %v1621 = vunpack.c.h.b16 %v389
        %v1622 = vunpack.c.l.b16 %v390
        %v1623 = vunpack.c.h.b16 %v390
        %v1624 = vunpack.c.l.b16 %v391
        %v1625 = vunpack.c.h.b16 %v391
        %v1626 = vunpack.c.l.b16 %v392
        %v1627 = vunpack.c.h.b16 %v392
        %v1628 = vunpack.c.l.b16 %v393
        %v1629 = vunpack.c.h.b16 %v393
        %v1630 = vunpack.c.l.b16 %v394
        %v1631 = vunpack.c.h.b16 %v394
        %v1632 = vunpack.c.l.b16 %v395
        %v1633 = vunpack.c.h.b16 %v395
        %v1634 = vunpack.c.l.b16 %v396
        %v1635 = vunpack.c.h.b16 %v396
        %v1636 = vunpack.c.l.b16 %v397
        %v1637 = vunpack.c.h.b16 %v397
        %v1638 = vunpack.c.l.b16 %v398
        %v1639 = vunpack.c.h.b16 %v398
        %v1640 = vunpack.c.l.b16 %v399
        %v1641 = vunpack.c.h.b16 %v399
        %v1642 = vunpack.c.l.b16 %v400
        %v1643 = vunpack.c.h.b16 %v400
        %v1644 = vunpack.c.l.b16 %v401
        %v1645 = vunpack.c.h.b16 %v401
        %v1646 = vunpack.c.l.b16 %v402
        %v1647 = vunpack.c.h.b16 %v402
        %v1648 = vunpack.c.l.b16 %v403
        %v1649 = vunpack.c.h.b16 %v403
        %v1650 = vunpack.c.l.b16 %v404
        %v1651 = vunpack.c.h.b16 %v404
        %v1652 = vunpack.c.l.b16 %v405
        %v1653 = vunpack.c.h.b16 %v405
        %v1654 = vunpack.c.l.b16 %v406
        %v1655 = vunpack.c.h.b16 %v406
        %v1656 = vunpack.c.l.b16 %v407
        %v1657 = vunpack.c.h.b16 %v407
        %v1658 = vunpack.c.l.b16 %v408
        %v1659 = vunpack.c.h.b16 %v408
        %v1660 = vunpack.c.l.b16 %v409
        %v1661 = vunpack.c.h.b16 %v409
        %v1662 = vunpack.c.l.b16 %v410
        %v1663 = vunpack.c.h.b16 %v410
        %v1664 = vunpack.c.l.b16 %v411
        %v1665 = vunpack.c.h.b16 %v411
        %v1666 = vunpack.c.l.b16 %v412
        %v1667 = vunpack.c.h.b16 %v412
        %v1668 = vunpack.c.l.b16 %v413
        %v1669 = vunpack.c.h.b16 %v413
        %v1670 = vunpack.c.l.b16 %v414
        %v1671 = vunpack.c.h.b16 %v414
        %v1672 = vunpack.c.l.b16 %v415
        %v1673 = vunpack.c.h.b16 %v415
        %v1674 = vunpack.c.l.b16 %v416
        %v1675 = vunpack.c.h.b16 %v416
        %v1676 = vunpack.c.l.b16 %v417
        %v1677 = vunpack.c.h.b16 %v417
        %v1678 = vunpack.c.l.b16 %v418
        %v1679 = vunpack.c.h.b16 %v418
        %v1680 = vunpack.c.l.b16 %v419
        %v1681 = vunpack.c.h.b16 %v419
        %v1682 = vunpack.c.l.b16 %v420
        %v1683 = vunpack.c.h.b16 %v420
        %v1684 = vunpack.c.l.b16 %v421
        %v1685 = vunpack.c.h.b16 %v421
        %v1686 = vunpack.c.l.b16 %v422
        %v1687 = vunpack.c.h.b16 %v422
        %v1688 = vunpack.c.l.b16 %v423
        %v1689 = vunpack.c.h.b16 %v423
        %v1690 = vunpack.c.l.b16 %v424
        %v1691 = vunpack.c.h.b16 %v424
        %v1692 = vunpack.c.l.b16 %v425
        %v1693 = vunpack.c.h.b16 %v425
        %v1694 = vunpack.c.l.b16 %v426
        %v1695 = vunpack.c.h.b16 %v426
        %v1696 = vunpack.c.l.b16 %v427
        %v1697 = vunpack.c.h.b16 %v427
        %v1698 = vunpack.c.l.b16 %v428
        %v1699 = vunpack.c.h.b16 %v428
        %v1700 = vunpack.c.l.b16 %v429
        %v1701 = vunpack.c.h.b16 %v429
        %v1702 = vunpack.c.l.b16 %v430
        %v1703 = vunpack.c.h.b16 %v430
        %v1704 = vunpack.c.l.b16 %v431
        %v1705 = vunpack.c.h.b16 %v431
        %v1706 = vunpack.c.l.b16 %v432
        %v1707 = vunpack.c.h.b16 %v432
        %v1708 = vunpack.c.l.b16 %v433
        %v1709 = vunpack.c.h.b16 %v433
        %v1710 = vunpack.c.l.b16 %v434
        %v1711 = vunpack.c.h.b16 %v434
        %v1712 = vunpack.c.l.b16 %v435
        %v1713 = vunpack.c.h.b16 %v435
        %v1714 = vunpack.c.l.b16 %v436
        %v1715 = vunpack.c.h.b16 %v436
        %v1716 = vunpack.c.l.b16 %v437
        %v1717 = vunpack.c.h.b16 %v437
        %v1718 = vunpack.c.l.b16 %v438
        %v1719 = vunpack.c.h.b16 %v438
        %v1720 = vunpack.c.l.b16 %v439
        %v1721 = vunpack.c.h.b16 %v439
        %v1722 = vunpack.c.l.b16 %v440
        %v1723 = vunpack.c.h.b16 %v440
        %v1724 = vunpack.c.l.b16 %v441
        %v1725 = vunpack.c.h.b16 %v441
        %v1726 = vunpack.c.l.b16 %v442
        %v1727 = vunpack.c.h.b16 %v442
        %v1728 = vunpack.c.l.b16 %v443
        %v1729 = vunpack.c.h.b16 %v443
        %v1730 = vunpack.c.l.b16 %v444
        %v1731 = vunpack.c.h.b16 %v444
        %v1732 = vunpack.c.l.b16 %v445
        %v1733 = vunpack.c.h.b16 %v445
        %v1734 = vunpack.c.l.b16 %v446
        %v1735 = vunpack.c.h.b16 %v446
        %v1736 = vunpack.c.l.b16 %v447
        %v1737 = vunpack.c.h.b16 %v447
        %v1738 = vunpack.c.l.b16 %v448
        %v1739 = vunpack.c.h.b16 %v448
        %v1740 = vunpack.c.l.b16 %v449
        %v1741 = vunpack.c.h.b16 %v449
        %v1742 = vunpack.c.l.b16 %v450
        %v1743 = vunpack.c.h.b16 %v450
        %v1744 = vunpack.c.l.b16 %v451
        %v1745 = vunpack.c.h.b16 %v451
        %v1746 = vunpack.c.l.b16 %v452
        %v1747 = vunpack.c.h.b16 %v452
        %v1748 = vunpack.c.l.b16 %v453
        %v1749 = vunpack.c.h.b16 %v453
        %v1750 = vunpack.c.l.b16 %v454
        %v1751 = vunpack.c.h.b16 %v454
        %v1752 = vunpack.c.l.b16 %v455
        %v1753 = vunpack.c.h.b16 %v455
        %v1754 = vunpack.c.l.b16 %v456
        %v1755 = vunpack.c.h.b16 %v456
        %v1756 = vunpack.c.l.b16 %v457
        %v1757 = vunpack.c.h.b16 %v457
        %v1758 = vunpack.c.l.b16 %v458
        %v1759 = vunpack.c.h.b16 %v458
        %v1760 = vunpack.c.l.b16 %v459
        %v1761 = vunpack.c.h.b16 %v459
        %v1762 = vunpack.c.l.b16 %v460
        %v1763 = vunpack.c.h.b16 %v460
        %v1764 = vunpack.c.l.b16 %v461
        %v1765 = vunpack.c.h.b16 %v461
        %v1766 = vunpack.c.l.b16 %v462
        %v1767 = vunpack.c.h.b16 %v462
        %v1768 = vunpack.c.l.b16 %v463
        %v1769 = vunpack.c.h.b16 %v463
        %v1770 = vunpack.c.l.b16 %v464
        %v1771 = vunpack.c.h.b16 %v464
        %v1772 = vunpack.c.l.b16 %v465
        %v1773 = vunpack.c.h.b16 %v465
        %v1774 = vunpack.c.l.b16 %v466
        %v1775 = vunpack.c.h.b16 %v466
        %v1776 = vunpack.c.l.b16 %v467
        %v1777 = vunpack.c.h.b16 %v467
        %v1778 = vunpack.c.l.b16 %v468
        %v1779 = vunpack.c.h.b16 %v468
        %v1780 = vunpack.c.l.b16 %v469
        %v1781 = vunpack.c.h.b16 %v469
        %v1782 = vunpack.c.l.b16 %v470
        %v1783 = vunpack.c.h.b16 %v470
        %v1784 = vunpack.c.l.b16 %v471
        %v1785 = vunpack.c.h.b16 %v471
        %v1786 = vunpack.c.l.b16 %v472
        %v1787 = vunpack.c.h.b16 %v472
        %v1788 = vunpack.c.l.b16 %v473
        %v1789 = vunpack.c.h.b16 %v473
        %v1790 = vunpack.c.l.b16 %v474
        %v1791 = vunpack.c.h.b16 %v474
        %v1792 = vunpack.c.l.b16 %v475
        %v1793 = vunpack.c.h.b16 %v475
        %v1794 = vunpack.c.l.b16 %v476
        %v1795 = vunpack.c.h.b16 %v476
        %v1796 = vunpack.c.l.b16 %v477
        %v1797 = vunpack.c.h.b16 %v477
        %v1798 = vunpack.c.l.b16 %v478
        %v1799 = vunpack.c.h.b16 %v478
        %v1800 = vunpack.c.l.b16 %v479
        %v1801 = vunpack.c.h.b16 %v479
        %v1802 = vunpack.c.l.b16 %v480
        %v1803 = vunpack.c.h.b16 %v480
        %v1804 = vunpack.c.l.b16 %v481
        %v1805 = vunpack.c.h.b16 %v481
        %v1806 = vunpack.c.l.b16 %v482
        %v1807 = vunpack.c.h.b16 %v482
        %v1808 = vunpack.c.l.b16 %v483
        %v1809 = vunpack.c.h.b16 %v483
        %v1810 = vunpack.c.l.b16 %v484
        %v1811 = vunpack.c.h.b16 %v484
        %v1812 = vunpack.c.l.b16 %v485
        %v1813 = vunpack.c.h.b16 %v485
        %v1814 = vunpack.c.l.b16 %v486
        %v1815 = vunpack.c.h.b16 %v486
        %v1816 = vunpack.c.l.b16 %v487
        %v1817 = vunpack.c.h.b16 %v487
        %v1818 = vunpack.c.l.b16 %v488
        %v1819 = vunpack.c.h.b16 %v488
        %v1820 = vunpack.c.l.b16 %v489
        %v1821 = vunpack.c.h.b16 %v489
        %v1822 = vunpack.c.l.b16 %v490
        %v1823 = vunpack.c.h.b16 %v490
        %v1824 = vunpack.c.l.b16 %v491
        %v1825 = vunpack.c.h.b16 %v491
        %v1826 = vunpack.c.l.b16 %v492
        %v1827 = vunpack.c.h.b16 %v492
        %v1828 = vunpack.c.l.b16 %v493
        %v1829 = vunpack.c.h.b16 %v493
        %v1830 = vunpack.c.l.b16 %v494
        %v1831 = vunpack.c.h.b16 %v494
        %v1832 = vunpack.c.l.b16 %v495
        %v1833 = vunpack.c.h.b16 %v495
        %v1834 = vunpack.c.l.b16 %v496
        %v1835 = vunpack.c.h.b16 %v496
        %v1836 = vunpack.c.l.b16 %v497
        %v1837 = vunpack.c.h.b16 %v497
        %v1838 = vunpack.c.l.b16 %v498
        %v1839 = vunpack.c.h.b16 %v498
        %v1840 = vunpack.c.l.b16 %v499
        %v1841 = vunpack.c.h.b16 %v499
        %v1842 = vunpack.c.l.b16 %v500
        %v1843 = vunpack.c.h.b16 %v500
        %v1844 = vunpack.c.l.b16 %v501
        %v1845 = vunpack.c.h.b16 %v501
        %v1846 = vunpack.c.l.b16 %v502
        %v1847 = vunpack.c.h.b16 %v502
        %v1848 = vunpack.c.l.b16 %v503
        %v1849 = vunpack.c.h.b16 %v503
        %v1850 = vunpack.c.l.b16 %v504
        %v1851 = vunpack.c.h.b16 %v504
        %v1852 = vunpack.c.l.b16 %v505
        %v1853 = vunpack.c.h.b16 %v505
        %v1854 = vunpack.c.l.b16 %v506
        %v1855 = vunpack.c.h.b16 %v506
        %v1856 = vunpack.c.l.b16 %v507
        %v1857 = vunpack.c.h.b16 %v507
        %v1858 = vunpack.c.l.b16 %v508
        %v1859 = vunpack.c.h.b16 %v508
        %v1860 = vunpack.c.l.b16 %v509
        %v1861 = vunpack.c.h.b16 %v509
        %v1862 = vunpack.c.l.b16 %v510
        %v1863 = vunpack.c.h.b16 %v510
        %v1864 = vunpack.c.l.b16 %v511
        %v1865 = vunpack.c.h.b16 %v511
        %v1866 = vunpack.c.l.b16 %v512
        %v1867 = vunpack.c.h.b16 %v512
        %v1868 = vunpack.c.l.b16 %v513
        %v1869 = vunpack.c.h.b16 %v513
        %v1870 = vunpack.c.l.b16 %v514
        %v1871 = vunpack.c.h.b16 %v514
        %v1872 = vunpack.c.l.b16 %v515
        %v1873 = vunpack.c.h.b16 %v515
        %v1874 = vunpack.c.l.b16 %v516
        %v1875 = vunpack.c.h.b16 %v516
        %v1876 = vunpack.c.l.b16 %v517
        %v1877 = vunpack.c.h.b16 %v517
        %v1878 = vunpack.c.l.b16 %v518
        %v1879 = vunpack.c.h.b16 %v518
        %v1880 = vunpack.c.l.b16 %v519
        %v1881 = vunpack.c.h.b16 %v519
        %v1882 = vunpack.c.l.b16 %v520
        %v1883 = vunpack.c.h.b16 %v520
        %v1884 = vunpack.c.l.b16 %v521
        %v1885 = vunpack.c.h.b16 %v521
        %v1886 = vunpack.c.l.b16 %v522
        %v1887 = vunpack.c.h.b16 %v522
        %v1888 = vunpack.c.l.b16 %v523
        %v1889 = vunpack.c.h.b16 %v523
        %v1890 = vunpack.c.l.b16 %v524
        %v1891 = vunpack.c.h.b16 %v524
        %v1892 = vunpack.c.l.b16 %v525
        %v1893 = vunpack.c.h.b16 %v525
        %v1894 = vunpack.c.l.b16 %v526
        %v1895 = vunpack.c.h.b16 %v526
        %v1896 = vunpack.c.l.b16 %v527
        %v1897 = vunpack.c.h.b16 %v527
        %v1898 = vunpack.c.l.b16 %v528
        %v1899 = vunpack.c.h.b16 %v528
        %v1900 = vunpack.c.l.b16 %v529
        %v1901 = vunpack.c.h.b16 %v529
        %v1902 = vunpack.c.l.b16 %v530
        %v1903 = vunpack.c.h.b16 %v530
        %v1904 = vunpack.c.l.b16 %v531
        %v1905 = vunpack.c.h.b16 %v531
        %v1906 = vunpack.c.l.b16 %v532
        %v1907 = vunpack.c.h.b16 %v532
        %v1908 = vunpack.c.l.b16 %v533
        %v1909 = vunpack.c.h.b16 %v533
        %v1910 = vunpack.c.l.b16 %v534
        %v1911 = vunpack.c.h.b16 %v534
        %v1912 = vunpack.c.l.b16 %v535
        %v1913 = vunpack.c.h.b16 %v535
        %v1914 = vunpack.c.l.b16 %v536
        %v1915 = vunpack.c.h.b16 %v536
        %v1916 = vunpack.c.l.b16 %v537
        %v1917 = vunpack.c.h.b16 %v537
        %v1918 = vunpack.c.l.b16 %v538
        %v1919 = vunpack.c.h.b16 %v538
        %v1920 = vunpack.c.l.b16 %v539
        %v1921 = vunpack.c.h.b16 %v539
        %v1922 = vunpack.c.l.b16 %v540
        %v1923 = vunpack.c.h.b16 %v540
        %v1924 = vunpack.c.l.b16 %v541
        %v1925 = vunpack.c.h.b16 %v541
        %v1926 = vunpack.c.l.b16 %v542
        %v1927 = vunpack.c.h.b16 %v542
        %v1928 = vunpack.c.l.b16 %v543
        %v1929 = vunpack.c.h.b16 %v543
        %v1930 = vunpack.c.l.b16 %v544
        %v1931 = vunpack.c.h.b16 %v544
        %v1932 = vunpack.c.l.b16 %v545
        %v1933 = vunpack.c.h.b16 %v545
        %v1934 = vunpack.c.l.b16 %v546
        %v1935 = vunpack.c.h.b16 %v546
        %v1936 = vunpack.c.l.b16 %v547
        %v1937 = vunpack.c.h.b16 %v547
        %v1938 = vunpack.c.l.b16 %v548
        %v1939 = vunpack.c.h.b16 %v548
        %v1940 = vunpack.c.l.b16 %v549
        %v1941 = vunpack.c.h.b16 %v549
        %v1942 = vunpack.c.l.b16 %v550
        %v1943 = vunpack.c.h.b16 %v550
        %v1944 = vunpack.c.l.b16 %v551
        %v1945 = vunpack.c.h.b16 %v551
        %v1946 = vunpack.c.l.b16 %v552
        %v1947 = vunpack.c.h.b16 %v552
        %v1948 = vunpack.c.l.b16 %v553
        %v1949 = vunpack.c.h.b16 %v553
        %v1950 = vunpack.c.l.b16 %v554
        %v1951 = vunpack.c.h.b16 %v554
        %v1952 = vunpack.c.l.b16 %v555
        %v1953 = vunpack.c.h.b16 %v555
        %v1954 = vunpack.c.l.b16 %v556
        %v1955 = vunpack.c.h.b16 %v556
        %v1956 = vunpack.c.l.b16 %v557
        %v1957 = vunpack.c.h.b16 %v557
        %v1958 = vunpack.c.l.b16 %v558
        %v1959 = vunpack.c.h.b16 %v558
        %v1960 = vunpack.c.l.b16 %v559
        %v1961 = vunpack.c.h.b16 %v559
        %v1962 = vunpack.c.l.b16 %v560
        %v1963 = vunpack.c.h.b16 %v560
        %v1964 = vunpack.c.l.b16 %v561
        %v1965 = vunpack.c.h.b16 %v561
        %v1966 = vunpack.c.l.b16 %v562
        %v1967 = vunpack.c.h.b16 %v562
        %v1968 = vunpack.c.l.b16 %v563
        %v1969 = vunpack.c.h.b16 %v563
        %v1970 = vunpack.c.l.b16 %v564
        %v1971 = vunpack.c.h.b16 %v564
        %v1972 = vunpack.c.l.b16 %v565
        %v1973 = vunpack.c.h.b16 %v565
        %v1974 = vunpack.c.l.b16 %v566
        %v1975 = vunpack.c.h.b16 %v566
        %v1976 = vunpack.c.l.b16 %v567
        %v1977 = vunpack.c.h.b16 %v567
        %v1978 = vunpack.c.l.b16 %v568
        %v1979 = vunpack.c.h.b16 %v568
        %v1980 = vunpack.c.l.b16 %v569
        %v1981 = vunpack.c.h.b16 %v569
        %v1982 = vunpack.c.l.b16 %v570
        %v1983 = vunpack.c.h.b16 %v570
        %v1984 = vunpack.c.l.b16 %v571
        %v1985 = vunpack.c.h.b16 %v571
        %v1986 = vunpack.c.l.b16 %v572
        %v1987 = vunpack.c.h.b16 %v572
        %v1988 = vunpack.c.l.b16 %v573
        %v1989 = vunpack.c.h.b16 %v573
        %v1990 = vunpack.c.l.b16 %v574
        %v1991 = vunpack.c.h.b16 %v574
        %v1992 = vunpack.c.l.b16 %v575
        %v1993 = vunpack.c.h.b16 %v575
        %v1994 = vunpack.c.l.b16 %v576
        %v1995 = vunpack.c.h.b16 %v576
        %v1996 = vunpack.c.l.b16 %v577
        %v1997 = vunpack.c.h.b16 %v577
        %v1998 = vunpack.c.l.b16 %v578
        %v1999 = vunpack.c.h.b16 %v578
        %v2000 = vunpack.c.l.b16 %v579
        %v2001 = vunpack.c.h.b16 %v579
        %v2002 = vunpack.c.l.b16 %v580
        %v2003 = vunpack.c.h.b16 %v580
        %v2004 = vunpack.c.l.b16 %v581
        %v2005 = vunpack.c.h.b16 %v581
        %v2006 = vunpack.c.l.b16 %v582
        %v2007 = vunpack.c.h.b16 %v582
        %v2008 = vunpack.c.l.b16 %v583
        %v2009 = vunpack.c.h.b16 %v583
        %v2010 = vunpack.c.l.b16 %v584
        %v2011 = vunpack.c.h.b16 %v584
        %v2012 = vunpack.c.l.b16 %v585
        %v2013 = vunpack.c.h.b16 %v585
        %v2014 = vunpack.c.l.b16 %v586
        %v2015 = vunpack.c.h.b16 %v586
        %v2016 = vunpack.c.l.b16 %v587
        %v2017 = vunpack.c.h.b16 %v587
        %v2018 = vunpack.c.l.b16 %v588
        %v2019 = vunpack.c.h.b16 %v588
        %v2020 = vunpack.c.l.b16 %v589
        %v2021 = vunpack.c.h.b16 %v589
        %v2022 = vunpack.c.l.b16 %v590
        %v2023 = vunpack.c.h.b16 %v590
        %v2024 = vunpack.c.l.b16 %v591
        %v2025 = vunpack.c.h.b16 %v591
        %v2026 = vunpack.c.l.b16 %v592
        %v2027 = vunpack.c.h.b16 %v592
        %v2028 = vunpack.c.l.b16 %v593
        %v2029 = vunpack.c.h.b16 %v593
        %v2030 = vunpack.c.l.b16 %v594
        %v2031 = vunpack.c.h.b16 %v594
        %v2032 = vunpack.c.l.b16 %v595
        %v2033 = vunpack.c.h.b16 %v595
        %v2034 = vunpack.c.l.b16 %v596
        %v2035 = vunpack.c.h.b16 %v596
        %v2036 = vunpack.c.l.b16 %v597
        %v2037 = vunpack.c.h.b16 %v597
        %v2038 = vunpack.c.l.b16 %v598
        %v2039 = vunpack.c.h.b16 %v598
        %v2040 = vunpack.c.l.b16 %v599
        %v2041 = vunpack.c.h.b16 %v599
        %v2042 = vunpack.c.l.b16 %v600
        %v2043 = vunpack.c.h.b16 %v600
        %v2044 = vunpack.c.l.b16 %v601
        %v2045 = vunpack.c.h.b16 %v601
        %v2046 = vunpack.c.l.b16 %v602
        %v2047 = vunpack.c.h.b16 %v602
        %v2048 = vunpack.c.l.b16 %v603
        %v2049 = vunpack.c.h.b16 %v603
        %v2050 = vunpack.c.l.b16 %v604
        %v2051 = vunpack.c.h.b16 %v604
        %v2052 = vunpack.c.l.b16 %v605
        %v2053 = vunpack.c.h.b16 %v605
        %v2054 = vunpack.c.l.b16 %v606
        %v2055 = vunpack.c.h.b16 %v606
        %v2056 = vunpack.c.l.b16 %v607
        %v2057 = vunpack.c.h.b16 %v607
        %v2058 = vunpack.c.l.b16 %v608
        %v2059 = vunpack.c.h.b16 %v608
        %v2060 = vunpack.c.l.b16 %v609
        %v2061 = vunpack.c.h.b16 %v609
        %v2062 = vunpack.c.l.b16 %v610
        %v2063 = vunpack.c.h.b16 %v610
        %v2064 = vunpack.c.l.b16 %v611
        %v2065 = vunpack.c.h.b16 %v611
        %v2066 = vunpack.c.l.b16 %v612
        %v2067 = vunpack.c.h.b16 %v612
        %v2068 = vunpack.c.l.b16 %v613
        %v2069 = vunpack.c.h.b16 %v613
        %v2070 = vunpack.c.l.b16 %v614
        %v2071 = vunpack.c.h.b16 %v614
        %v2072 = vunpack.c.l.b16 %v615
        %v2073 = vunpack.c.h.b16 %v615
        %v2074 = vunpack.c.l.b16 %v616
        %v2075 = vunpack.c.h.b16 %v616
        %v2076 = vunpack.c.l.b16 %v617
        %v2077 = vunpack.c.h.b16 %v617
        %v2078 = vunpack.c.l.b16 %v618
        %v2079 = vunpack.c.h.b16 %v618
        %v2080 = vunpack.c.l.b16 %v619
        %v2081 = vunpack.c.h.b16 %v619
        %v2082 = vunpack.c.l.b16 %v620
        %v2083 = vunpack.c.h.b16 %v620
        %v2084 = vunpack.c.l.b16 %v621
        %v2085 = vunpack.c.h.b16 %v621
        %v2086 = vunpack.c.l.b16 %v622
        %v2087 = vunpack.c.h.b16 %v622
        %v2088 = vunpack.c.l.b16 %v623
        %v2089 = vunpack.c.h.b16 %v623
        %v2090 = vunpack.c.l.b16 %v624
        %v2091 = vunpack.c.h.b16 %v624
        %v2092 = vunpack.c.l.b16 %v625
        %v2093 = vunpack.c.h.b16 %v625
        %v2094 = vunpack.c.l.b16 %v626
        %v2095 = vunpack.c.h.b16 %v626
        %v2096 = vunpack.c.l.b16 %v627
        %v2097 = vunpack.c.h.b16 %v627
        %v2098 = vunpack.c.l.b16 %v628
        %v2099 = vunpack.c.h.b16 %v628
        %v2100 = vunpack.c.l.b16 %v629
        %v2101 = vunpack.c.h.b16 %v629
        %v2102 = vunpack.c.l.b16 %v630
        %v2103 = vunpack.c.h.b16 %v630
        %v2104 = vunpack.c.l.b16 %v631
        %v2105 = vunpack.c.h.b16 %v631
        %v2106 = vunpack.c.l.b16 %v632
        %v2107 = vunpack.c.h.b16 %v632
        %v2108 = vunpack.c.l.b16 %v633
        %v2109 = vunpack.c.h.b16 %v633
        %v2110 = vunpack.c.l.b16 %v634
        %v2111 = vunpack.c.h.b16 %v634
        %v2112 = vunpack.c.l.b16 %v635
        %v2113 = vunpack.c.h.b16 %v635
        %v2114 = vunpack.c.l.b16 %v636
        %v2115 = vunpack.c.h.b16 %v636
        %v2116 = vunpack.c.l.b16 %v637
        %v2117 = vunpack.c.h.b16 %v637
        %v2118 = vunpack.c.l.b16 %v638
        %v2119 = vunpack.c.h.b16 %v638
        %v2120 = vunpack.c.l.b16 %v639
        %v2121 = vunpack.c.h.b16 %v639
        %v2122 = vunpack.c.l.b16 %v640
        %v2123 = vunpack.c.h.b16 %v640
        %v2124 = vunpack.c.l.b16 %v641
        %v2125 = vunpack.c.h.b16 %v641
        %v2126 = vunpack.c.l.b16 %v642
        %v2127 = vunpack.c.h.b16 %v642
        %v2128 = vunpack.c.l.b16 %v643
        %v2129 = vunpack.c.h.b16 %v643
        %v2130 = vunpack.c.l.b16 %v644
        %v2131 = vunpack.c.h.b16 %v644
        %v2132 = vunpack.c.l.b16 %v645
        %v2133 = vunpack.c.h.b16 %v645
        %v2134 = vunpack.c.l.b16 %v646
        %v2135 = vunpack.c.h.b16 %v646
        %v2136 = vunpack.c.l.b16 %v647
        %v2137 = vunpack.c.h.b16 %v647
        %v2138 = vunpack.c.l.b16 %v648
        %v2139 = vunpack.c.h.b16 %v648
        %v2140 = vunpack.c.l.b16 %v649
        %v2141 = vunpack.c.h.b16 %v649
        %v2142 = vunpack.c.l.b16 %v650
        %v2143 = vunpack.c.h.b16 %v650
        %v2144 = vunpack.c.l.b16 %v651
        %v2145 = vunpack.c.h.b16 %v651
        %v2146 = vunpack.c.l.b16 %v652
        %v2147 = vunpack.c.h.b16 %v652
        %v2148 = vunpack.c.l.b16 %v653
        %v2149 = vunpack.c.h.b16 %v653
        %v2150 = vunpack.c.l.b16 %v654
        %v2151 = vunpack.c.h.b16 %v654
        %v2152 = vunpack.c.l.b16 %v655
        %v2153 = vunpack.c.h.b16 %v655
        %v2154 = vunpack.c.l.b16 %v656
        %v2155 = vunpack.c.h.b16 %v656
        %v2156 = vunpack.c.l.b16 %v657
        %v2157 = vunpack.c.h.b16 %v657
        %v2158 = vunpack.c.l.b16 %v658
        %v2159 = vunpack.c.h.b16 %v658
        %v2160 = vunpack.c.l.b16 %v659
        %v2161 = vunpack.c.h.b16 %v659
        %v2162 = vunpack.c.l.b16 %v660
        %v2163 = vunpack.c.h.b16 %v660
        %v2164 = vunpack.c.l.b16 %v661
        %v2165 = vunpack.c.h.b16 %v661
        %v2166 = vunpack.c.l.b16 %v662
        %v2167 = vunpack.c.h.b16 %v662
        %v2168 = vunpack.c.l.b16 %v663
        %v2169 = vunpack.c.h.b16 %v663
        %v2170 = vunpack.c.l.b16 %v664
        %v2171 = vunpack.c.h.b16 %v664
        %v2172 = vunpack.c.l.b16 %v665
        %v2173 = vunpack.c.h.b16 %v665
        %v2174 = vunpack.c.l.b16 %v666
        %v2175 = vunpack.c.h.b16 %v666
        %v2176 = vunpack.c.l.b16 %v667
        %v2177 = vunpack.c.h.b16 %v667
        %v2178 = vunpack.c.l.b16 %v668
        %v2179 = vunpack.c.h.b16 %v668
        %v2180 = vunpack.c.l.b16 %v669
        %v2181 = vunpack.c.h.b16 %v669
        %v2182 = vunpack.c.l.b16 %v670
        %v2183 = vunpack.c.h.b16 %v670
        %v2184 = vunpack.c.l.b16 %v671
        %v2185 = vunpack.c.h.b16 %v671
        %v2186 = vunpack.c.l.b16 %v672
        %v2187 = vunpack.c.h.b16 %v672
        %v2188 = vunpack.c.l.b16 %v673
        %v2189 = vunpack.c.h.b16 %v673
        %v2190 = vunpack.c.l.b16 %v674
        %v2191 = vunpack.c.h.b16 %v674
        %v2192 = vunpack.c.l.b16 %v675
        %v2193 = vunpack.c.h.b16 %v675
        %v2194 = vunpack.c.l.b16 %v676
        %v2195 = vunpack.c.h.b16 %v676
        %v2196 = vunpack.c.l.b16 %v677
        %v2197 = vunpack.c.h.b16 %v677
        %v2198 = vunpack.c.l.b16 %v678
        %v2199 = vunpack.c.h.b16 %v678
        %v2200 = vunpack.c.l.b16 %v679
        %v2201 = vunpack.c.h.b16 %v679
        %v2202 = vunpack.c.l.b16 %v680
        %v2203 = vunpack.c.h.b16 %v680
        %v2204 = vunpack.c.l.b16 %v681
        %v2205 = vunpack.c.h.b16 %v681
        %v2206 = vunpack.c.l.b16 %v682
        %v2207 = vunpack.c.h.b16 %v682
        %v2208 = vunpack.c.l.b16 %v683
        %v2209 = vunpack.c.h.b16 %v683
        %v2210 = vunpack.c.l.b16 %v684
        %v2211 = vunpack.c.h.b16 %v684
        %v2212 = vunpack.c.l.b16 %v685
        %v2213 = vunpack.c.h.b16 %v685
        %v2214 = vunpack.c.l.b16 %v686
        %v2215 = vunpack.c.h.b16 %v686
        %v2216 = vunpack.c.l.b16 %v687
        %v2217 = vunpack.c.h.b16 %v687
        %v2218 = vunpack.c.l.b16 %v688
        %v2219 = vunpack.c.h.b16 %v688
        %v2220 = vunpack.c.l.b16 %v689
        %v2221 = vunpack.c.h.b16 %v689
        %v2222 = vunpack.c.l.b16 %v690
        %v2223 = vunpack.c.h.b16 %v690
        %v2224 = vunpack.c.l.b16 %v691
        %v2225 = vunpack.c.h.b16 %v691
        %v2226 = vunpack.c.l.b16 %v692
        %v2227 = vunpack.c.h.b16 %v692
        %v2228 = vunpack.c.l.b16 %v693
        %v2229 = vunpack.c.h.b16 %v693
        %v2230 = vunpack.c.l.b16 %v694
        %v2231 = vunpack.c.h.b16 %v694
        %v2232 = vunpack.c.l.b16 %v695
        %v2233 = vunpack.c.h.b16 %v695
        %v2234 = vunpack.c.l.b16 %v696
        %v2235 = vunpack.c.h.b16 %v696
        %v2236 = vunpack.c.l.b16 %v697
        %v2237 = vunpack.c.h.b16 %v697
        %v2238 = vunpack.c.l.b16 %v698
        %v2239 = vunpack.c.h.b16 %v698
        %v2240 = vunpack.c.l.b16 %v699
        %v2241 = vunpack.c.h.b16 %v699
        %v2242 = vunpack.c.l.b16 %v700
        %v2243 = vunpack.c.h.b16 %v700
        %v2244 = vunpack.c.l.b16 %v701
        %v2245 = vunpack.c.h.b16 %v701
        %v2246 = vunpack.c.l.b16 %v702
        %v2247 = vunpack.c.h.b16 %v702
        %v2248 = vunpack.c.l.b16 %v703
        %v2249 = vunpack.c.h.b16 %v703
        %v2250 = vunpack.c.l.b16 %v704
        %v2251 = vunpack.c.h.b16 %v704
        %v2252 = vunpack.c.l.b16 %v705
        %v2253 = vunpack.c.h.b16 %v705
        %v2254 = vunpack.c.l.b16 %v706
        %v2255 = vunpack.c.h.b16 %v706
        %v2256 = vunpack.c.l.b16 %v707
        %v2257 = vunpack.c.h.b16 %v707
        %v2258 = vunpack.c.l.b16 %v708
        %v2259 = vunpack.c.h.b16 %v708
        %v2260 = vunpack.c.l.b16 %v709
        %v2261 = vunpack.c.h.b16 %v709
        %v2262 = vunpack.c.l.b16 %v710
        %v2263 = vunpack.c.h.b16 %v710
        %v2264 = vunpack.c.l.b16 %v711
        %v2265 = vunpack.c.h.b16 %v711
        %v2266 = vunpack.c.l.b16 %v712
        %v2267 = vunpack.c.h.b16 %v712
        %v2268 = vunpack.c.l.b16 %v713
        %v2269 = vunpack.c.h.b16 %v713
        %v2270 = vunpack.c.l.b16 %v714
        %v2271 = vunpack.c.h.b16 %v714
        %v2272 = vunpack.c.l.b16 %v715
        %v2273 = vunpack.c.h.b16 %v715
        %v2274 = vunpack.c.l.b16 %v716
        %v2275 = vunpack.c.h.b16 %v716
        %v2276 = vunpack.c.l.b16 %v717
        %v2277 = vunpack.c.h.b16 %v717
        %v2278 = vunpack.c.l.b16 %v718
        %v2279 = vunpack.c.h.b16 %v718
        %v2280 = vunpack.c.l.b16 %v719
        %v2281 = vunpack.c.h.b16 %v719
        %v2282 = vunpack.c.l.b16 %v720
        %v2283 = vunpack.c.h.b16 %v720
        %v2284 = vunpack.c.l.b16 %v721
        %v2285 = vunpack.c.h.b16 %v721
        %v2286 = vunpack.c.l.b16 %v722
        %v2287 = vunpack.c.h.b16 %v722
        %v2288 = vunpack.c.l.b16 %v723
        %v2289 = vunpack.c.h.b16 %v723
        %v2290 = vunpack.c.l.b16 %v724
        %v2291 = vunpack.c.h.b16 %v724
        %v2292 = vunpack.c.l.b16 %v725
        %v2293 = vunpack.c.h.b16 %v725
        %v2294 = vunpack.c.l.b16 %v726
        %v2295 = vunpack.c.h.b16 %v726
        %v2296 = vunpack.c.l.b16 %v727
        %v2297 = vunpack.c.h.b16 %v727
        %v2298 = vunpack.c.l.b16 %v728
        %v2299 = vunpack.c.h.b16 %v728
        %v2300 = vunpack.c.l.b16 %v729
        %v2301 = vunpack.c.h.b16 %v729
        %v2302 = vunpack.c.l.b16 %v730
        %v2303 = vunpack.c.h.b16 %v730
        %v2304 = vunpack.c.l.b16 %v731
        %v2305 = vunpack.c.h.b16 %v731
        %v2306 = vunpack.c.l.b16 %v732
        %v2307 = vunpack.c.h.b16 %v732
        %v2308 = vunpack.c.l.b16 %v733
        %v2309 = vunpack.c.h.b16 %v733
        %v2310 = vunpack.c.l.b16 %v734
        %v2311 = vunpack.c.h.b16 %v734
        %v2312 = vunpack.c.l.b16 %v735
        %v2313 = vunpack.c.h.b16 %v735
        %v2314 = vunpack.c.l.b16 %v736
        %v2315 = vunpack.c.h.b16 %v736
        %v2316 = vunpack.c.l.b16 %v737
        %v2317 = vunpack.c.h.b16 %v737
        %v2318 = vunpack.c.l.b16 %v738
        %v2319 = vunpack.c.h.b16 %v738
        %v2320 = vunpack.c.l.b16 %v739
        %v2321 = vunpack.c.h.b16 %v739
        %v2322 = vunpack.c.l.b16 %v740
        %v2323 = vunpack.c.h.b16 %v740
        %v2324 = vunpack.c.l.b16 %v741
        %v2325 = vunpack.c.h.b16 %v741
        %v2326 = vunpack.c.l.b16 %v742
        %v2327 = vunpack.c.h.b16 %v742
        %v2328 = vunpack.c.l.b16 %v743
        %v2329 = vunpack.c.h.b16 %v743
        %v2330 = vunpack.c.l.b16 %v744
        %v2331 = vunpack.c.h.b16 %v744
        %v2332 = vunpack.c.l.b16 %v745
        %v2333 = vunpack.c.h.b16 %v745
        %v2334 = vunpack.c.l.b16 %v746
        %v2335 = vunpack.c.h.b16 %v746
        %v2336 = vunpack.c.l.b16 %v747
        %v2337 = vunpack.c.h.b16 %v747
        %v2338 = vunpack.c.l.b16 %v748
        %v2339 = vunpack.c.h.b16 %v748
        %v2340 = vunpack.c.l.b16 %v749
        %v2341 = vunpack.c.h.b16 %v749
        %v2342 = vunpack.c.l.b16 %v750
        %v2343 = vunpack.c.h.b16 %v750
        %v2344 = vunpack.c.l.b16 %v751
        %v2345 = vunpack.c.h.b16 %v751
        %v2346 = vunpack.c.l.b16 %v752
        %v2347 = vunpack.c.h.b16 %v752
        %v2348 = vunpack.c.l.b16 %v753
        %v2349 = vunpack.c.h.b16 %v753
        %v2350 = vunpack.c.l.b16 %v754
        %v2351 = vunpack.c.h.b16 %v754
        %v2352 = vunpack.c.l.b16 %v755
        %v2353 = vunpack.c.h.b16 %v755
        %v2354 = vunpack.c.l.b16 %v756
        %v2355 = vunpack.c.h.b16 %v756
        %v2356 = vunpack.c.l.b16 %v757
        %v2357 = vunpack.c.h.b16 %v757
        %v2358 = vunpack.c.l.b16 %v758
        %v2359 = vunpack.c.h.b16 %v758
        %v2360 = vunpack.c.l.b16 %v759
        %v2361 = vunpack.c.h.b16 %v759
        %v2362 = vunpack.c.l.b16 %v760
        %v2363 = vunpack.c.h.b16 %v760
        %v2364 = vunpack.c.l.b16 %v761
        %v2365 = vunpack.c.h.b16 %v761
        %v2366 = vunpack.c.l.b16 %v762
        %v2367 = vunpack.c.h.b16 %v762
        %v2368 = vunpack.c.l.b16 %v763
        %v2369 = vunpack.c.h.b16 %v763
        %v2370 = vunpack.c.l.b16 %v764
        %v2371 = vunpack.c.h.b16 %v764
        %v2372 = vunpack.c.l.b16 %v765
        %v2373 = vunpack.c.h.b16 %v765
        %v2374 = vunpack.c.l.b16 %v766
        %v2375 = vunpack.c.h.b16 %v766
        %v2376 = vunpack.c.l.b16 %v767
        %v2377 = vunpack.c.h.b16 %v767
        %v2378 = vunpack.c.l.b16 %v768
        %v2379 = vunpack.c.h.b16 %v768
        %v2380 = vunpack.c.l.b16 %v769
        %v2381 = vunpack.c.h.b16 %v769
        %v2382 = vunpack.c.l.b16 %v770
        %v2383 = vunpack.c.h.b16 %v770
        %v2384 = vunpack.c.l.b16 %v771
        %v2385 = vunpack.c.h.b16 %v771
        %v2386 = vunpack.c.l.b16 %v772
        %v2387 = vunpack.c.h.b16 %v772
        %v2388 = vunpack.c.l.b16 %v773
        %v2389 = vunpack.c.h.b16 %v773
        %v2390 = vunpack.c.l.b16 %v774
        %v2391 = vunpack.c.h.b16 %v774
        %v2392 = vunpack.c.l.b16 %v775
        %v2393 = vunpack.c.h.b16 %v775
        %v2394 = vunpack.c.l.b16 %v776
        %v2395 = vunpack.c.h.b16 %v776
        %v2396 = vunpack.c.l.b16 %v777
        %v2397 = vunpack.c.h.b16 %v777
        %v2398 = vunpack.c.l.b16 %v778
        %v2399 = vunpack.c.h.b16 %v778
        %v2400 = vunpack.c.l.b16 %v779
        %v2401 = vunpack.c.h.b16 %v779
        %v2402 = vunpack.c.l.b16 %v780
        %v2403 = vunpack.c.h.b16 %v780
        %v2404 = vunpack.c.l.b16 %v781
        %v2405 = vunpack.c.h.b16 %v781
        %v2406 = vunpack.c.l.b16 %v782
        %v2407 = vunpack.c.h.b16 %v782
        %v2408 = vunpack.c.l.b16 %v783
        %v2409 = vunpack.c.h.b16 %v783
        %v2410 = vunpack.c.l.b16 %v784
        %v2411 = vunpack.c.h.b16 %v784
        %v2412 = vunpack.c.l.b16 %v785
        %v2413 = vunpack.c.h.b16 %v785
        %v2414 = vunpack.c.l.b16 %v786
        %v2415 = vunpack.c.h.b16 %v786
        %v2416 = vunpack.c.l.b16 %v787
        %v2417 = vunpack.c.h.b16 %v787
        %v2418 = vunpack.c.l.b16 %v788
        %v2419 = vunpack.c.h.b16 %v788
        %v2420 = vunpack.c.l.b16 %v789
        %v2421 = vunpack.c.h.b16 %v789
        %v2422 = vunpack.c.l.b16 %v790
        %v2423 = vunpack.c.h.b16 %v790
        %v2424 = vunpack.c.l.b16 %v791
        %v2425 = vunpack.c.h.b16 %v791
        %v2426 = vunpack.c.l.b16 %v792
        %v2427 = vunpack.c.h.b16 %v792
        %v2428 = vunpack.c.l.b16 %v793
        %v2429 = vunpack.c.h.b16 %v793
        %v2430 = vunpack.c.l.b16 %v794
        %v2431 = vunpack.c.h.b16 %v794
        %v2432 = vunpack.c.l.b16 %v795
        %v2433 = vunpack.c.h.b16 %v795
        %v2434 = vpack.c.b16 %v1414, %v1410
        %v2435 = vpack.c.b16 %v1415, %v1411
        %v2436 = vpack.c.b16 %v1416, %v1412
        %v2437 = vpack.c.b16 %v1417, %v1413
        %v2438 = vpack.c.b16 %v1422, %v1418
        %v2439 = vpack.c.b16 %v1423, %v1419
        %v2440 = vpack.c.b16 %v1424, %v1420
        %v2441 = vpack.c.b16 %v1425, %v1421
        %v2442 = vpack.c.b16 %v1430, %v1426
        %v2443 = vpack.c.b16 %v1431, %v1427
        %v2444 = vpack.c.b16 %v1432, %v1428
        %v2445 = vpack.c.b16 %v1433, %v1429
        %v2446 = vpack.c.b16 %v1438, %v1434
        %v2447 = vpack.c.b16 %v1439, %v1435
        %v2448 = vpack.c.b16 %v1440, %v1436
        %v2449 = vpack.c.b16 %v1441, %v1437
        %v2450 = vpack.c.b16 %v1446, %v1442
        %v2451 = vpack.c.b16 %v1447, %v1443
        %v2452 = vpack.c.b16 %v1448, %v1444
        %v2453 = vpack.c.b16 %v1449, %v1445
        %v2454 = vpack.c.b16 %v1454, %v1450
        %v2455 = vpack.c.b16 %v1455, %v1451
        %v2456 = vpack.c.b16 %v1456, %v1452
        %v2457 = vpack.c.b16 %v1457, %v1453
        %v2458 = vpack.c.b16 %v1462, %v1458
        %v2459 = vpack.c.b16 %v1463, %v1459
        %v2460 = vpack.c.b16 %v1464, %v1460
        %v2461 = vpack.c.b16 %v1465, %v1461
        %v2462 = vpack.c.b16 %v1470, %v1466
        %v2463 = vpack.c.b16 %v1471, %v1467
        %v2464 = vpack.c.b16 %v1472, %v1468
        %v2465 = vpack.c.b16 %v1473, %v1469
        %v2466 = vpack.c.b16 %v1478, %v1474
        %v2467 = vpack.c.b16 %v1479, %v1475
        %v2468 = vpack.c.b16 %v1480, %v1476
        %v2469 = vpack.c.b16 %v1481, %v1477
        %v2470 = vpack.c.b16 %v1486, %v1482
        %v2471 = vpack.c.b16 %v1487, %v1483
        %v2472 = vpack.c.b16 %v1488, %v1484
        %v2473 = vpack.c.b16 %v1489, %v1485
        %v2474 = vpack.c.b16 %v1494, %v1490
        %v2475 = vpack.c.b16 %v1495, %v1491
        %v2476 = vpack.c.b16 %v1496, %v1492
        %v2477 = vpack.c.b16 %v1497, %v1493
        %v2478 = vpack.c.b16 %v1502, %v1498
        %v2479 = vpack.c.b16 %v1503, %v1499
        %v2480 = vpack.c.b16 %v1504, %v1500
        %v2481 = vpack.c.b16 %v1505, %v1501
        %v2482 = vpack.c.b16 %v1510, %v1506
        %v2483 = vpack.c.b16 %v1511, %v1507
        %v2484 = vpack.c.b16 %v1512, %v1508
        %v2485 = vpack.c.b16 %v1513, %v1509
        %v2486 = vpack.c.b16 %v1518, %v1514
        %v2487 = vpack.c.b16 %v1519, %v1515
        %v2488 = vpack.c.b16 %v1520, %v1516
        %v2489 = vpack.c.b16 %v1521, %v1517
        %v2490 = vpack.c.b16 %v1526, %v1522
        %v2491 = vpack.c.b16 %v1527, %v1523
        %v2492 = vpack.c.b16 %v1528, %v1524
        %v2493 = vpack.c.b16 %v1529, %v1525
        %v2494 = vpack.c.b16 %v1534, %v1530
        %v2495 = vpack.c.b16 %v1535, %v1531
        %v2496 = vpack.c.b16 %v1536, %v1532
        %v2497 = vpack.c.b16 %v1537, %v1533
        %v2498 = vpack.c.b16 %v1542, %v1538
        %v2499 = vpack.c.b16 %v1543, %v1539
        %v2500 = vpack.c.b16 %v1544, %v1540
        %v2501 = vpack.c.b16 %v1545, %v1541
        %v2502 = vpack.c.b16 %v1550, %v1546
        %v2503 = vpack.c.b16 %v1551, %v1547
        %v2504 = vpack.c.b16 %v1552, %v1548
        %v2505 = vpack.c.b16 %v1553, %v1549
        %v2506 = vpack.c.b16 %v1558, %v1554
        %v2507 = vpack.c.b16 %v1559, %v1555
        %v2508 = vpack.c.b16 %v1560, %v1556
        %v2509 = vpack.c.b16 %v1561, %v1557
        %v2510 = vpack.c.b16 %v1566, %v1562
        %v2511 = vpack.c.b16 %v1567, %v1563
        %v2512 = vpack.c.b16 %v1568, %v1564
        %v2513 = vpack.c.b16 %v1569, %v1565
        %v2514 = vpack.c.b16 %v1574, %v1570
        %v2515 = vpack.c.b16 %v1575, %v1571
        %v2516 = vpack.c.b16 %v1576, %v1572
        %v2517 = vpack.c.b16 %v1577, %v1573
        %v2518 = vpack.c.b16 %v1582, %v1578
        %v2519 = vpack.c.b16 %v1583, %v1579
        %v2520 = vpack.c.b16 %v1584, %v1580
        %v2521 = vpack.c.b16 %v1585, %v1581
        %v2522 = vpack.c.b16 %v1590, %v1586
        %v2523 = vpack.c.b16 %v1591, %v1587
        %v2524 = vpack.c.b16 %v1592, %v1588
        %v2525 = vpack.c.b16 %v1593, %v1589
        %v2526 = vpack.c.b16 %v1598, %v1594
        %v2527 = vpack.c.b16 %v1599, %v1595
        %v2528 = vpack.c.b16 %v1600, %v1596
        %v2529 = vpack.c.b16 %v1601, %v1597
        %v2530 = vpack.c.b16 %v1606, %v1602
        %v2531 = vpack.c.b16 %v1607, %v1603
        %v2532 = vpack.c.b16 %v1608, %v1604
        %v2533 = vpack.c.b16 %v1609, %v1605
        %v2534 = vpack.c.b16 %v1614, %v1610
        %v2535 = vpack.c.b16 %v1615, %v1611
        %v2536 = vpack.c.b16 %v1616, %v1612
        %v2537 = vpack.c.b16 %v1617, %v1613
        %v2538 = vpack.c.b16 %v1622, %v1618
        %v2539 = vpack.c.b16 %v1623, %v1619
        %v2540 = vpack.c.b16 %v1624, %v1620
        %v2541 = vpack.c.b16 %v1625, %v1621
        %v2542 = vpack.c.b16 %v1630, %v1626
        %v2543 = vpack.c.b16 %v1631, %v1627
        %v2544 = vpack.c.b16 %v1632, %v1628
        %v2545 = vpack.c.b16 %v1633, %v1629
        %v2546 = vpack.c.b16 %v1638, %v1634
        %v2547 = vpack.c.b16 %v1639, %v1635
        %v2548 = vpack.c.b16 %v1640, %v1636
        %v2549 = vpack.c.b16 %v1641, %v1637
        %v2550 = vpack.c.b16 %v1646, %v1642
        %v2551 = vpack.c.b16 %v1647, %v1643
        %v2552 = vpack.c.b16 %v1648, %v1644
        %v2553 = vpack.c.b16 %v1649, %v1645
        %v2554 = vpack.c.b16 %v1654, %v1650
        %v2555 = vpack.c.b16 %v1655, %v1651
        %v2556 = vpack.c.b16 %v1656, %v1652
        %v2557 = vpack.c.b16 %v1657, %v1653
        %v2558 = vpack.c.b16 %v1662, %v1658
        %v2559 = vpack.c.b16 %v1663, %v1659
        %v2560 = vpack.c.b16 %v1664, %v1660
        %v2561 = vpack.c.b16 %v1665, %v1661
        %v2562 = vpack.c.b16 %v1670, %v1666
        %v2563 = vpack.c.b16 %v1671, %v1667
        %v2564 = vpack.c.b16 %v1672, %v1668
        %v2565 = vpack.c.b16 %v1673, %v1669
        %v2566 = vpack.c.b16 %v1678, %v1674
        %v2567 = vpack.c.b16 %v1679, %v1675
        %v2568 = vpack.c.b16 %v1680, %v1676
        %v2569 = vpack.c.b16 %v1681, %v1677
        %v2570 = vpack.c.b16 %v1686, %v1682
        %v2571 = vpack.c.b16 %v1687, %v1683
        %v2572 = vpack.c.b16 %v1688, %v1684
        %v2573 = vpack.c.b16 %v1689, %v1685
        %v2574 = vpack.c.b16 %v1694, %v1690
        %v2575 = vpack.c.b16 %v1695, %v1691
        %v2576 = vpack.c.b16 %v1696, %v1692
        %v2577 = vpack.c.b16 %v1697, %v1693
        %v2578 = vpack.c.b16 %v1702, %v1698
        %v2579 = vpack.c.b16 %v1703, %v1699
        %v2580 = vpack.c.b16 %v1704, %v1700
        %v2581 = vpack.c.b16 %v1705, %v1701
        %v2582 = vpack.c.b16 %v1710, %v1706
        %v2583 = vpack.c.b16 %v1711, %v1707
        %v2584 = vpack.c.b16 %v1712, %v1708
        %v2585 = vpack.c.b16 %v1713, %v1709
        %v2586 = vpack.c.b16 %v1718, %v1714
        %v2587 = vpack.c.b16 %v1719, %v1715
        %v2588 = vpack.c.b16 %v1720, %v1716
        %v2589 = vpack.c.b16 %v1721, %v1717
        %v2590 = vpack.c.b16 %v1726, %v1722
        %v2591 = vpack.c.b16 %v1727, %v1723
        %v2592 = vpack.c.b16 %v1728, %v1724
        %v2593 = vpack.c.b16 %v1729, %v1725
        %v2594 = vpack.c.b16 %v1734, %v1730
        %v2595 = vpack.c.b16 %v1735, %v1731
        %v2596 = vpack.c.b16 %v1736, %v1732
        %v2597 = vpack.c.b16 %v1737, %v1733
        %v2598 = vpack.c.b16 %v1742, %v1738
        %v2599 = vpack.c.b16 %v1743, %v1739
        %v2600 = vpack.c.b16 %v1744, %v1740
        %v2601 = vpack.c.b16 %v1745, %v1741
        %v2602 = vpack.c.b16 %v1750, %v1746
        %v2603 = vpack.c.b16 %v1751, %v1747
        %v2604 = vpack.c.b16 %v1752, %v1748
        %v2605 = vpack.c.b16 %v1753, %v1749
        %v2606 = vpack.c.b16 %v1758, %v1754
        %v2607 = vpack.c.b16 %v1759, %v1755
        %v2608 = vpack.c.b16 %v1760, %v1756
        %v2609 = vpack.c.b16 %v1761, %v1757
        %v2610 = vpack.c.b16 %v1766, %v1762
        %v2611 = vpack.c.b16 %v1767, %v1763
        %v2612 = vpack.c.b16 %v1768, %v1764
        %v2613 = vpack.c.b16 %v1769, %v1765
        %v2614 = vpack.c.b16 %v1774, %v1770
        %v2615 = vpack.c.b16 %v1775, %v1771
        %v2616 = vpack.c.b16 %v1776, %v1772
        %v2617 = vpack.c.b16 %v1777, %v1773
        %v2618 = vpack.c.b16 %v1782, %v1778
        %v2619 = vpack.c.b16 %v1783, %v1779
        %v2620 = vpack.c.b16 %v1784, %v1780
        %v2621 = vpack.c.b16 %v1785, %v1781
        %v2622 = vpack.c.b16 %v1790, %v1786
        %v2623 = vpack.c.b16 %v1791, %v1787
        %v2624 = vpack.c.b16 %v1792, %v1788
        %v2625 = vpack.c.b16 %v1793, %v1789
        %v2626 = vpack.c.b16 %v1798, %v1794
        %v2627 = vpack.c.b16 %v1799, %v1795
        %v2628 = vpack.c.b16 %v1800, %v1796
        %v2629 = vpack.c.b16 %v1801, %v1797
        %v2630 = vpack.c.b16 %v1806, %v1802
        %v2631 = vpack.c.b16 %v1807, %v1803
        %v2632 = vpack.c.b16 %v1808, %v1804
        %v2633 = vpack.c.b16 %v1809, %v1805
        %v2634 = vpack.c.b16 %v1814, %v1810
        %v2635 = vpack.c.b16 %v1815, %v1811
        %v2636 = vpack.c.b16 %v1816, %v1812
        %v2637 = vpack.c.b16 %v1817, %v1813
        %v2638 = vpack.c.b16 %v1822, %v1818
        %v2639 = vpack.c.b16 %v1823, %v1819
        %v2640 = vpack.c.b16 %v1824, %v1820
        %v2641 = vpack.c.b16 %v1825, %v1821
        %v2642 = vpack.c.b16 %v1830, %v1826
        %v2643 = vpack.c.b16 %v1831, %v1827
        %v2644 = vpack.c.b16 %v1832, %v1828
        %v2645 = vpack.c.b16 %v1833, %v1829
        %v2646 = vpack.c.b16 %v1838, %v1834
        %v2647 = vpack.c.b16 %v1839, %v1835
        %v2648 = vpack.c.b16 %v1840, %v1836
        %v2649 = vpack.c.b16 %v1841, %v1837
        %v2650 = vpack.c.b16 %v1846, %v1842
        %v2651 = vpack.c.b16 %v1847, %v1843
        %v2652 = vpack.c.b16 %v1848, %v1844
        %v2653 = vpack.c.b16 %v1849, %v1845
        %v2654 = vpack.c.b16 %v1854, %v1850
        %v2655 = vpack.c.b16 %v1855, %v1851
        %v2656 = vpack.c.b16 %v1856, %v1852
        %v2657 = vpack.c.b16 %v1857, %v1853
        %v2658 = vpack.c.b16 %v1862, %v1858
        %v2659 = vpack.c.b16 %v1863, %v1859
        %v2660 = vpack.c.b16 %v1864, %v1860
        %v2661 = vpack.c.b16 %v1865, %v1861
        %v2662 = vpack.c.b16 %v1870, %v1866
        %v2663 = vpack.c.b16 %v1871, %v1867
        %v2664 = vpack.c.b16 %v1872, %v1868
        %v2665 = vpack.c.b16 %v1873, %v1869
        %v2666 = vpack.c.b16 %v1878, %v1874
        %v2667 = vpack.c.b16 %v1879, %v1875
        %v2668 = vpack.c.b16 %v1880, %v1876
        %v2669 = vpack.c.b16 %v1881, %v1877
        %v2670 = vpack.c.b16 %v1886, %v1882
        %v2671 = vpack.c.b16 %v1887, %v1883
        %v2672 = vpack.c.b16 %v1888, %v1884
        %v2673 = vpack.c.b16 %v1889, %v1885
        %v2674 = vpack.c.b16 %v1894, %v1890
        %v2675 = vpack.c.b16 %v1895, %v1891
        %v2676 = vpack.c.b16 %v1896, %v1892
        %v2677 = vpack.c.b16 %v1897, %v1893
        %v2678 = vpack.c.b16 %v1902, %v1898
        %v2679 = vpack.c.b16 %v1903, %v1899
        %v2680 = vpack.c.b16 %v1904, %v1900
        %v2681 = vpack.c.b16 %v1905, %v1901
        %v2682 = vpack.c.b16 %v1910, %v1906
        %v2683 = vpack.c.b16 %v1911, %v1907
        %v2684 = vpack.c.b16 %v1912, %v1908
        %v2685 = vpack.c.b16 %v1913, %v1909
        %v2686 = vpack.c.b16 %v1918, %v1914
        %v2687 = vpack.c.b16 %v1919, %v1915
        %v2688 = vpack.c.b16 %v1920, %v1916
        %v2689 = vpack.c.b16 %v1921, %v1917
        %v2690 = vpack.c.b16 %v1926, %v1922
        %v2691 = vpack.c.b16 %v1927, %v1923
        %v2692 = vpack.c.b16 %v1928, %v1924
        %v2693 = vpack.c.b16 %v1929, %v1925
        %v2694 = vpack.c.b16 %v1934, %v1930
        %v2695 = vpack.c.b16 %v1935, %v1931
        %v2696 = vpack.c.b16 %v1936, %v1932
        %v2697 = vpack.c.b16 %v1937, %v1933
        %v2698 = vpack.c.b16 %v1942, %v1938
        %v2699 = vpack.c.b16 %v1943, %v1939
        %v2700 = vpack.c.b16 %v1944, %v1940
        %v2701 = vpack.c.b16 %v1945, %v1941
        %v2702 = vpack.c.b16 %v1950, %v1946
        %v2703 = vpack.c.b16 %v1951, %v1947
        %v2704 = vpack.c.b16 %v1952, %v1948
        %v2705 = vpack.c.b16 %v1953, %v1949
        %v2706 = vpack.c.b16 %v1958, %v1954
        %v2707 = vpack.c.b16 %v1959, %v1955
        %v2708 = vpack.c.b16 %v1960, %v1956
        %v2709 = vpack.c.b16 %v1961, %v1957
        %v2710 = vpack.c.b16 %v1966, %v1962
        %v2711 = vpack.c.b16 %v1967, %v1963
        %v2712 = vpack.c.b16 %v1968, %v1964
        %v2713 = vpack.c.b16 %v1969, %v1965
        %v2714 = vpack.c.b16 %v1974, %v1970
        %v2715 = vpack.c.b16 %v1975, %v1971
        %v2716 = vpack.c.b16 %v1976, %v1972
        %v2717 = vpack.c.b16 %v1977, %v1973
        %v2718 = vpack.c.b16 %v1982, %v1978
        %v2719 = vpack.c.b16 %v1983, %v1979
        %v2720 = vpack.c.b16 %v1984, %v1980
        %v2721 = vpack.c.b16 %v1985, %v1981
        %v2722 = vpack.c.b16 %v1990, %v1986
        %v2723 = vpack.c.b16 %v1991, %v1987
        %v2724 = vpack.c.b16 %v1992, %v1988
        %v2725 = vpack.c.b16 %v1993, %v1989
        %v2726 = vpack.c.b16 %v1998, %v1994
        %v2727 = vpack.c.b16 %v1999, %v1995
        %v2728 = vpack.c.b16 %v2000, %v1996
        %v2729 = vpack.c.b16 %v2001, %v1997
        %v2730 = vpack.c.b16 %v2006, %v2002
        %v2731 = vpack.c.b16 %v2007, %v2003
        %v2732 = vpack.c.b16 %v2008, %v2004
        %v2733 = vpack.c.b16 %v2009, %v2005
        %v2734 = vpack.c.b16 %v2014, %v2010
        %v2735 = vpack.c.b16 %v2015, %v2011
        %v2736 = vpack.c.b16 %v2016, %v2012
        %v2737 = vpack.c.b16 %v2017, %v2013
        %v2738 = vpack.c.b16 %v2022, %v2018
        %v2739 = vpack.c.b16 %v2023, %v2019
        %v2740 = vpack.c.b16 %v2024, %v2020
        %v2741 = vpack.c.b16 %v2025, %v2021
        %v2742 = vpack.c.b16 %v2030, %v2026
        %v2743 = vpack.c.b16 %v2031, %v2027
        %v2744 = vpack.c.b16 %v2032, %v2028
        %v2745 = vpack.c.b16 %v2033, %v2029
        %v2746 = vpack.c.b16 %v2038, %v2034
        %v2747 = vpack.c.b16 %v2039, %v2035
        %v2748 = vpack.c.b16 %v2040, %v2036
        %v2749 = vpack.c.b16 %v2041, %v2037
        %v2750 = vpack.c.b16 %v2046, %v2042
        %v2751 = vpack.c.b16 %v2047, %v2043
        %v2752 = vpack.c.b16 %v2048, %v2044
        %v2753 = vpack.c.b16 %v2049, %v2045
        %v2754 = vpack.c.b16 %v2054, %v2050
        %v2755 = vpack.c.b16 %v2055, %v2051
        %v2756 = vpack.c.b16 %v2056, %v2052
        %v2757 = vpack.c.b16 %v2057, %v2053
        %v2758 = vpack.c.b16 %v2062, %v2058
        %v2759 = vpack.c.b16 %v2063, %v2059
        %v2760 = vpack.c.b16 %v2064, %v2060
        %v2761 = vpack.c.b16 %v2065, %v2061
        %v2762 = vpack.c.b16 %v2070, %v2066
        %v2763 = vpack.c.b16 %v2071, %v2067
        %v2764 = vpack.c.b16 %v2072, %v2068
        %v2765 = vpack.c.b16 %v2073, %v2069
        %v2766 = vpack.c.b16 %v2078, %v2074
        %v2767 = vpack.c.b16 %v2079, %v2075
        %v2768 = vpack.c.b16 %v2080, %v2076
        %v2769 = vpack.c.b16 %v2081, %v2077
        %v2770 = vpack.c.b16 %v2086, %v2082
        %v2771 = vpack.c.b16 %v2087, %v2083
        %v2772 = vpack.c.b16 %v2088, %v2084
        %v2773 = vpack.c.b16 %v2089, %v2085
        %v2774 = vpack.c.b16 %v2094, %v2090
        %v2775 = vpack.c.b16 %v2095, %v2091
        %v2776 = vpack.c.b16 %v2096, %v2092
        %v2777 = vpack.c.b16 %v2097, %v2093
        %v2778 = vpack.c.b16 %v2102, %v2098
        %v2779 = vpack.c.b16 %v2103, %v2099
        %v2780 = vpack.c.b16 %v2104, %v2100
        %v2781 = vpack.c.b16 %v2105, %v2101
        %v2782 = vpack.c.b16 %v2110, %v2106
        %v2783 = vpack.c.b16 %v2111, %v2107
        %v2784 = vpack.c.b16 %v2112, %v2108
        %v2785 = vpack.c.b16 %v2113, %v2109
        %v2786 = vpack.c.b16 %v2118, %v2114
        %v2787 = vpack.c.b16 %v2119, %v2115
        %v2788 = vpack.c.b16 %v2120, %v2116
        %v2789 = vpack.c.b16 %v2121, %v2117
        %v2790 = vpack.c.b16 %v2126, %v2122
        %v2791 = vpack.c.b16 %v2127, %v2123
        %v2792 = vpack.c.b16 %v2128, %v2124
        %v2793 = vpack.c.b16 %v2129, %v2125
        %v2794 = vpack.c.b16 %v2134, %v2130
        %v2795 = vpack.c.b16 %v2135, %v2131
        %v2796 = vpack.c.b16 %v2136, %v2132
        %v2797 = vpack.c.b16 %v2137, %v2133
        %v2798 = vpack.c.b16 %v2142, %v2138
        %v2799 = vpack.c.b16 %v2143, %v2139
        %v2800 = vpack.c.b16 %v2144, %v2140
        %v2801 = vpack.c.b16 %v2145, %v2141
        %v2802 = vpack.c.b16 %v2150, %v2146
        %v2803 = vpack.c.b16 %v2151, %v2147
        %v2804 = vpack.c.b16 %v2152, %v2148
        %v2805 = vpack.c.b16 %v2153, %v2149
        %v2806 = vpack.c.b16 %v2158, %v2154
        %v2807 = vpack.c.b16 %v2159, %v2155
        %v2808 = vpack.c.b16 %v2160, %v2156
        %v2809 = vpack.c.b16 %v2161, %v2157
        %v2810 = vpack.c.b16 %v2166, %v2162
        %v2811 = vpack.c.b16 %v2167, %v2163
        %v2812 = vpack.c.b16 %v2168, %v2164
        %v2813 = vpack.c.b16 %v2169, %v2165
        %v2814 = vpack.c.b16 %v2174, %v2170
        %v2815 = vpack.c.b16 %v2175, %v2171
        %v2816 = vpack.c.b16 %v2176, %v2172
        %v2817 = vpack.c.b16 %v2177, %v2173
        %v2818 = vpack.c.b16 %v2182, %v2178
        %v2819 = vpack.c.b16 %v2183, %v2179
        %v2820 = vpack.c.b16 %v2184, %v2180
        %v2821 = vpack.c.b16 %v2185, %v2181
        %v2822 = vpack.c.b16 %v2190, %v2186
        %v2823 = vpack.c.b16 %v2191, %v2187
        %v2824 = vpack.c.b16 %v2192, %v2188
        %v2825 = vpack.c.b16 %v2193, %v2189
        %v2826 = vpack.c.b16 %v2198, %v2194
        %v2827 = vpack.c.b16 %v2199, %v2195
        %v2828 = vpack.c.b16 %v2200, %v2196
        %v2829 = vpack.c.b16 %v2201, %v2197
        %v2830 = vpack.c.b16 %v2206, %v2202
        %v2831 = vpack.c.b16 %v2207, %v2203
        %v2832 = vpack.c.b16 %v2208, %v2204
        %v2833 = vpack.c.b16 %v2209, %v2205
        %v2834 = vpack.c.b16 %v2214, %v2210
        %v2835 = vpack.c.b16 %v2215, %v2211
        %v2836 = vpack.c.b16 %v2216, %v2212
        %v2837 = vpack.c.b16 %v2217, %v2213
        %v2838 = vpack.c.b16 %v2222, %v2218
        %v2839 = vpack.c.b16 %v2223, %v2219
        %v2840 = vpack.c.b16 %v2224, %v2220
        %v2841 = vpack.c.b16 %v2225, %v2221
        %v2842 = vpack.c.b16 %v2230, %v2226
        %v2843 = vpack.c.b16 %v2231, %v2227
        %v2844 = vpack.c.b16 %v2232, %v2228
        %v2845 = vpack.c.b16 %v2233, %v2229
        %v2846 = vpack.c.b16 %v2238, %v2234
        %v2847 = vpack.c.b16 %v2239, %v2235
        %v2848 = vpack.c.b16 %v2240, %v2236
        %v2849 = vpack.c.b16 %v2241, %v2237
        %v2850 = vpack.c.b16 %v2246, %v2242
        %v2851 = vpack.c.b16 %v2247, %v2243
        %v2852 = vpack.c.b16 %v2248, %v2244
        %v2853 = vpack.c.b16 %v2249, %v2245
        %v2854 = vpack.c.b16 %v2254, %v2250
        %v2855 = vpack.c.b16 %v2255, %v2251
        %v2856 = vpack.c.b16 %v2256, %v2252
        %v2857 = vpack.c.b16 %v2257, %v2253
        %v2858 = vpack.c.b16 %v2262, %v2258
        %v2859 = vpack.c.b16 %v2263, %v2259
        %v2860 = vpack.c.b16 %v2264, %v2260
        %v2861 = vpack.c.b16 %v2265, %v2261
        %v2862 = vpack.c.b16 %v2270, %v2266
        %v2863 = vpack.c.b16 %v2271, %v2267
        %v2864 = vpack.c.b16 %v2272, %v2268
        %v2865 = vpack.c.b16 %v2273, %v2269
        %v2866 = vpack.c.b16 %v2278, %v2274
        %v2867 = vpack.c.b16 %v2279, %v2275
        %v2868 = vpack.c.b16 %v2280, %v2276
        %v2869 = vpack.c.b16 %v2281, %v2277
        %v2870 = vpack.c.b16 %v2286, %v2282
        %v2871 = vpack.c.b16 %v2287, %v2283
        %v2872 = vpack.c.b16 %v2288, %v2284
        %v2873 = vpack.c.b16 %v2289, %v2285
        %v2874 = vpack.c.b16 %v2294, %v2290
        %v2875 = vpack.c.b16 %v2295, %v2291
        %v2876 = vpack.c.b16 %v2296, %v2292
        %v2877 = vpack.c.b16 %v2297, %v2293
        %v2878 = vpack.c.b16 %v2302, %v2298
        %v2879 = vpack.c.b16 %v2303, %v2299
        %v2880 = vpack.c.b16 %v2304, %v2300
        %v2881 = vpack.c.b16 %v2305, %v2301
        %v2882 = vpack.c.b16 %v2310, %v2306
        %v2883 = vpack.c.b16 %v2311, %v2307
        %v2884 = vpack.c.b16 %v2312, %v2308
        %v2885 = vpack.c.b16 %v2313, %v2309
        %v2886 = vpack.c.b16 %v2318, %v2314
        %v2887 = vpack.c.b16 %v2319, %v2315
        %v2888 = vpack.c.b16 %v2320, %v2316
        %v2889 = vpack.c.b16 %v2321, %v2317
        %v2890 = vpack.c.b16 %v2326, %v2322
        %v2891 = vpack.c.b16 %v2327, %v2323
        %v2892 = vpack.c.b16 %v2328, %v2324
        %v2893 = vpack.c.b16 %v2329, %v2325
        %v2894 = vpack.c.b16 %v2334, %v2330
        %v2895 = vpack.c.b16 %v2335, %v2331
        %v2896 = vpack.c.b16 %v2336, %v2332
        %v2897 = vpack.c.b16 %v2337, %v2333
        %v2898 = vpack.c.b16 %v2342, %v2338
        %v2899 = vpack.c.b16 %v2343, %v2339
        %v2900 = vpack.c.b16 %v2344, %v2340
        %v2901 = vpack.c.b16 %v2345, %v2341
        %v2902 = vpack.c.b16 %v2350, %v2346
        %v2903 = vpack.c.b16 %v2351, %v2347
        %v2904 = vpack.c.b16 %v2352, %v2348
        %v2905 = vpack.c.b16 %v2353, %v2349
        %v2906 = vpack.c.b16 %v2358, %v2354
        %v2907 = vpack.c.b16 %v2359, %v2355
        %v2908 = vpack.c.b16 %v2360, %v2356
        %v2909 = vpack.c.b16 %v2361, %v2357
        %v2910 = vpack.c.b16 %v2366, %v2362
        %v2911 = vpack.c.b16 %v2367, %v2363
        %v2912 = vpack.c.b16 %v2368, %v2364
        %v2913 = vpack.c.b16 %v2369, %v2365
        %v2914 = vpack.c.b16 %v2374, %v2370
        %v2915 = vpack.c.b16 %v2375, %v2371
        %v2916 = vpack.c.b16 %v2376, %v2372
        %v2917 = vpack.c.b16 %v2377, %v2373
        %v2918 = vpack.c.b16 %v2382, %v2378
        %v2919 = vpack.c.b16 %v2383, %v2379
        %v2920 = vpack.c.b16 %v2384, %v2380
        %v2921 = vpack.c.b16 %v2385, %v2381
        %v2922 = vpack.c.b16 %v2390, %v2386
        %v2923 = vpack.c.b16 %v2391, %v2387
        %v2924 = vpack.c.b16 %v2392, %v2388
        %v2925 = vpack.c.b16 %v2393, %v2389
        %v2926 = vpack.c.b16 %v2398, %v2394
        %v2927 = vpack.c.b16 %v2399, %v2395
        %v2928 = vpack.c.b16 %v2400, %v2396
        %v2929 = vpack.c.b16 %v2401, %v2397
        %v2930 = vpack.c.b16 %v2406, %v2402
        %v2931 = vpack.c.b16 %v2407, %v2403
        %v2932 = vpack.c.b16 %v2408, %v2404
        %v2933 = vpack.c.b16 %v2409, %v2405
        %v2934 = vpack.c.b16 %v2414, %v2410
        %v2935 = vpack.c.b16 %v2415, %v2411
        %v2936 = vpack.c.b16 %v2416, %v2412
        %v2937 = vpack.c.b16 %v2417, %v2413
        %v2938 = vpack.c.b16 %v2422, %v2418
        %v2939 = vpack.c.b16 %v2423, %v2419
        %v2940 = vpack.c.b16 %v2424, %v2420
        %v2941 = vpack.c.b16 %v2425, %v2421
        %v2942 = vpack.c.b16 %v2430, %v2426
        %v2943 = vpack.c.b16 %v2431, %v2427
        %v2944 = vpack.c.b16 %v2432, %v2428
        %v2945 = vpack.c.b16 %v2433, %v2429
        %3458 = vmatprep.subr.bf16.mxu0 %v2463
        %3459 = vmatpush1.bf16.msra.mxu0 %v2462
        %3460 = vmatprep.subr.bf16.mxu0 %v2459
        %3461 = vmatpush1.bf16.msra.mxu0 %v2458
        %3462 = vmatprep.subr.bf16.mxu0 %v2455
        %3463 = vmatpush1.bf16.msra.mxu0 %v2454
        %3464 = vmatprep.subr.bf16.mxu0 %v2451
        %3465 = vmatpush1.bf16.msra.mxu0 %v2450
        %3466 = vmatprep.subr.bf16.mxu0 %v2447
        %3467 = vmatpush1.bf16.msra.mxu0 %v2446
        %3468 = vmatprep.subr.bf16.mxu0 %v2443
        %3469 = vmatpush1.bf16.msra.mxu0 %v2442
        %3470 = vmatprep.subr.bf16.mxu0 %v2439
        %3471 = vmatpush1.bf16.msra.mxu0 %v2438
        %3472 = vmatprep.subr.bf16.mxu0 %v2435
        %3473 = vmatpush1.bf16.msra.mxu0 %v2434
        %3474 = vmatprep.subr.bf16.mxu0 %v2495
        %3475 = vmatpush2.bf16.msra.mxu0 %v2494
        %3476 = vmatprep.subr.bf16.mxu0 %v2491
        %3477 = vmatpush2.bf16.msra.mxu0 %v2490
        %3478 = vmatprep.subr.bf16.mxu0 %v2487
        %3479 = vmatpush2.bf16.msra.mxu0 %v2486
        %3480 = vmatprep.subr.bf16.mxu0 %v2483
        %3481 = vmatpush2.bf16.msra.mxu0 %v2482
        %3482 = vmatprep.subr.bf16.mxu0 %v2479
        %3483 = vmatpush2.bf16.msra.mxu0 %v2478
        %3484 = vmatprep.subr.bf16.mxu0 %v2475
        %3485 = vmatpush2.bf16.msra.mxu0 %v2474
        %3486 = vmatprep.subr.bf16.mxu0 %v2471
        %3487 = vmatpush2.bf16.msra.mxu0 %v2470
        %3488 = vmatprep.subr.bf16.mxu0 %v2467
        %3489 = vmatpush2.bf16.msra.mxu0 %v2466
        %3490 = vmatprep.mubr.bf16.mxu0 %v867
        %3491 = vmatmul.mubr.bf16.gmra.mxu0 %v866
        %v3492 = vpop.f32.mrf.mxu0
        %v3493 = vadd.f32 %v801, %v3492
        %v3494 = vpop.f32.mrf.mxu0
        %v3495 = vadd.f32 %v805, %v3494
        %v3496 = vpop.f32.mrf.mxu0
        %v3497 = vadd.f32 %v801, %v3496
        %v3498 = vpop.f32.mrf.mxu0
        %v3499 = vadd.f32 %v805, %v3498
        %3500 = vdwg.mxu0
        %3501 = vmatprep.subr.bf16.mxu0 %v2527
        %3502 = vmatpush1.bf16.msra.mxu0 %v2526
        %3503 = vmatprep.subr.bf16.mxu0 %v2523
        %3504 = vmatpush1.bf16.msra.mxu0 %v2522
        %3505 = vmatprep.subr.bf16.mxu0 %v2519
        %3506 = vmatpush1.bf16.msra.mxu0 %v2518
        %3507 = vmatprep.subr.bf16.mxu0 %v2515
        %3508 = vmatpush1.bf16.msra.mxu0 %v2514
        %3509 = vmatprep.subr.bf16.mxu0 %v2511
        %3510 = vmatpush1.bf16.msra.mxu0 %v2510
        %3511 = vmatprep.subr.bf16.mxu0 %v2507
        %3512 = vmatpush1.bf16.msra.mxu0 %v2506
        %3513 = vmatprep.subr.bf16.mxu0 %v2503
        %3514 = vmatpush1.bf16.msra.mxu0 %v2502
        %3515 = vmatprep.subr.bf16.mxu0 %v2499
        %3516 = vmatpush1.bf16.msra.mxu0 %v2498
        %3517 = vmatprep.subr.bf16.mxu0 %v2559
        %3518 = vmatpush2.bf16.msra.mxu0 %v2558
        %3519 = vmatprep.subr.bf16.mxu0 %v2555
        %3520 = vmatpush2.bf16.msra.mxu0 %v2554
        %3521 = vmatprep.subr.bf16.mxu0 %v2551
        %3522 = vmatpush2.bf16.msra.mxu0 %v2550
        %3523 = vmatprep.subr.bf16.mxu0 %v2547
        %3524 = vmatpush2.bf16.msra.mxu0 %v2546
        %3525 = vmatprep.subr.bf16.mxu0 %v2543
        %3526 = vmatpush2.bf16.msra.mxu0 %v2542
        %3527 = vmatprep.subr.bf16.mxu0 %v2539
        %3528 = vmatpush2.bf16.msra.mxu0 %v2538
        %3529 = vmatprep.subr.bf16.mxu0 %v2535
        %3530 = vmatpush2.bf16.msra.mxu0 %v2534
        %3531 = vmatprep.subr.bf16.mxu0 %v2531
        %3532 = vmatpush2.bf16.msra.mxu0 %v2530
        %3533 = vmatprep.mubr.bf16.mxu0 %v869
        %3534 = vmatmul.mubr.bf16.gmra.mxu0 %v868
        %v3535 = vpop.f32.mrf.mxu0
        %v3536 = vadd.f32 %v3493, %v3535
        %v3537 = vpop.f32.mrf.mxu0
        %v3538 = vadd.f32 %v3495, %v3537
        %v3539 = vpop.f32.mrf.mxu0
        %v3540 = vadd.f32 %v3497, %v3539
        %v3541 = vpop.f32.mrf.mxu0
        %v3542 = vadd.f32 %v3499, %v3541
        %3543 = vdwg.mxu0
        %3544 = vmatprep.subr.bf16.mxu0 %v2591
        %3545 = vmatpush1.bf16.msra.mxu0 %v2590
        %3546 = vmatprep.subr.bf16.mxu0 %v2587
        %3547 = vmatpush1.bf16.msra.mxu0 %v2586
        %3548 = vmatprep.subr.bf16.mxu0 %v2583
        %3549 = vmatpush1.bf16.msra.mxu0 %v2582
        %3550 = vmatprep.subr.bf16.mxu0 %v2579
        %3551 = vmatpush1.bf16.msra.mxu0 %v2578
        %3552 = vmatprep.subr.bf16.mxu0 %v2575
        %3553 = vmatpush1.bf16.msra.mxu0 %v2574
        %3554 = vmatprep.subr.bf16.mxu0 %v2571
        %3555 = vmatpush1.bf16.msra.mxu0 %v2570
        %3556 = vmatprep.subr.bf16.mxu0 %v2567
        %3557 = vmatpush1.bf16.msra.mxu0 %v2566
        %3558 = vmatprep.subr.bf16.mxu0 %v2563
        %3559 = vmatpush1.bf16.msra.mxu0 %v2562
        %3560 = vmatprep.subr.bf16.mxu0 %v2623
        %3561 = vmatpush2.bf16.msra.mxu0 %v2622
        %3562 = vmatprep.subr.bf16.mxu0 %v2619
        %3563 = vmatpush2.bf16.msra.mxu0 %v2618
        %3564 = vmatprep.subr.bf16.mxu0 %v2615
        %3565 = vmatpush2.bf16.msra.mxu0 %v2614
        %3566 = vmatprep.subr.bf16.mxu0 %v2611
        %3567 = vmatpush2.bf16.msra.mxu0 %v2610
        %3568 = vmatprep.subr.bf16.mxu0 %v2607
        %3569 = vmatpush2.bf16.msra.mxu0 %v2606
        %3570 = vmatprep.subr.bf16.mxu0 %v2603
        %3571 = vmatpush2.bf16.msra.mxu0 %v2602
        %3572 = vmatprep.subr.bf16.mxu0 %v2599
        %3573 = vmatpush2.bf16.msra.mxu0 %v2598
        %3574 = vmatprep.subr.bf16.mxu0 %v2595
        %3575 = vmatpush2.bf16.msra.mxu0 %v2594
        %3576 = vmatprep.mubr.bf16.mxu0 %v871
        %3577 = vmatmul.mubr.bf16.gmra.mxu0 %v870
        %v3578 = vpop.f32.mrf.mxu0
        %v3579 = vadd.f32 %v3536, %v3578
        %v3580 = vpop.f32.mrf.mxu0
        %v3581 = vadd.f32 %v3538, %v3580
        %v3582 = vpop.f32.mrf.mxu0
        %v3583 = vadd.f32 %v3540, %v3582
        %v3584 = vpop.f32.mrf.mxu0
        %v3585 = vadd.f32 %v3542, %v3584
        %3586 = vdwg.mxu0
        %3587 = vmatprep.subr.bf16.mxu0 %v2655
        %3588 = vmatpush1.bf16.msra.mxu0 %v2654
        %3589 = vmatprep.subr.bf16.mxu0 %v2651
        %3590 = vmatpush1.bf16.msra.mxu0 %v2650
        %3591 = vmatprep.subr.bf16.mxu0 %v2647
        %3592 = vmatpush1.bf16.msra.mxu0 %v2646
        %3593 = vmatprep.subr.bf16.mxu0 %v2643
        %3594 = vmatpush1.bf16.msra.mxu0 %v2642
        %3595 = vmatprep.subr.bf16.mxu0 %v2639
        %3596 = vmatpush1.bf16.msra.mxu0 %v2638
        %3597 = vmatprep.subr.bf16.mxu0 %v2635
        %3598 = vmatpush1.bf16.msra.mxu0 %v2634
        %3599 = vmatprep.subr.bf16.mxu0 %v2631
        %3600 = vmatpush1.bf16.msra.mxu0 %v2630
        %3601 = vmatprep.subr.bf16.mxu0 %v2627
        %3602 = vmatpush1.bf16.msra.mxu0 %v2626
        %3603 = vmatprep.subr.bf16.mxu0 %v2687
        %3604 = vmatpush2.bf16.msra.mxu0 %v2686
        %3605 = vmatprep.subr.bf16.mxu0 %v2683
        %3606 = vmatpush2.bf16.msra.mxu0 %v2682
        %3607 = vmatprep.subr.bf16.mxu0 %v2679
        %3608 = vmatpush2.bf16.msra.mxu0 %v2678
        %3609 = vmatprep.subr.bf16.mxu0 %v2675
        %3610 = vmatpush2.bf16.msra.mxu0 %v2674
        %3611 = vmatprep.subr.bf16.mxu0 %v2671
        %3612 = vmatpush2.bf16.msra.mxu0 %v2670
        %3613 = vmatprep.subr.bf16.mxu0 %v2667
        %3614 = vmatpush2.bf16.msra.mxu0 %v2666
        %3615 = vmatprep.subr.bf16.mxu0 %v2663
        %3616 = vmatpush2.bf16.msra.mxu0 %v2662
        %3617 = vmatprep.subr.bf16.mxu0 %v2659
        %3618 = vmatpush2.bf16.msra.mxu0 %v2658
        %3619 = vmatprep.mubr.bf16.mxu0 %v873
        %3620 = vmatmul.mubr.bf16.gmra.mxu0 %v872
        %v3621 = vpop.f32.mrf.mxu0
        %v3622 = vadd.f32 %v3579, %v3621
        %v3623 = vpop.f32.mrf.mxu0
        %v3624 = vadd.f32 %v3581, %v3623
        %v3625 = vpop.f32.mrf.mxu0
        %v3626 = vadd.f32 %v3583, %v3625
        %v3627 = vpop.f32.mrf.mxu0
        %v3628 = vadd.f32 %v3585, %v3627
        %3629 = vdwg.mxu0
        %3630 = vmatprep.subr.bf16.mxu0 %v2719
        %3631 = vmatpush1.bf16.msra.mxu0 %v2718
        %3632 = vmatprep.subr.bf16.mxu0 %v2715
        %3633 = vmatpush1.bf16.msra.mxu0 %v2714
        %3634 = vmatprep.subr.bf16.mxu0 %v2711
        %3635 = vmatpush1.bf16.msra.mxu0 %v2710
        %3636 = vmatprep.subr.bf16.mxu0 %v2707
        %3637 = vmatpush1.bf16.msra.mxu0 %v2706
        %3638 = vmatprep.subr.bf16.mxu0 %v2703
        %3639 = vmatpush1.bf16.msra.mxu0 %v2702
        %3640 = vmatprep.subr.bf16.mxu0 %v2699
        %3641 = vmatpush1.bf16.msra.mxu0 %v2698
        %3642 = vmatprep.subr.bf16.mxu0 %v2695
        %3643 = vmatpush1.bf16.msra.mxu0 %v2694
        %3644 = vmatprep.subr.bf16.mxu0 %v2691
        %3645 = vmatpush1.bf16.msra.mxu0 %v2690
        %3646 = vmatprep.subr.bf16.mxu0 %v2751
        %3647 = vmatpush2.bf16.msra.mxu0 %v2750
        %3648 = vmatprep.subr.bf16.mxu0 %v2747
        %3649 = vmatpush2.bf16.msra.mxu0 %v2746
        %3650 = vmatprep.subr.bf16.mxu0 %v2743
        %3651 = vmatpush2.bf16.msra.mxu0 %v2742
        %3652 = vmatprep.subr.bf16.mxu0 %v2739
        %3653 = vmatpush2.bf16.msra.mxu0 %v2738
        %3654 = vmatprep.subr.bf16.mxu0 %v2735
        %3655 = vmatpush2.bf16.msra.mxu0 %v2734
        %3656 = vmatprep.subr.bf16.mxu0 %v2731
        %3657 = vmatpush2.bf16.msra.mxu0 %v2730
        %3658 = vmatprep.subr.bf16.mxu0 %v2727
        %3659 = vmatpush2.bf16.msra.mxu0 %v2726
        %3660 = vmatprep.subr.bf16.mxu0 %v2723
        %3661 = vmatpush2.bf16.msra.mxu0 %v2722
        %3662 = vmatprep.mubr.bf16.mxu0 %v875
        %3663 = vmatmul.mubr.bf16.gmra.mxu0 %v874
        %v3664 = vpop.f32.mrf.mxu0
        %v3665 = vadd.f32 %v3622, %v3664
        %v3666 = vpop.f32.mrf.mxu0
        %v3667 = vadd.f32 %v3624, %v3666
        %v3668 = vpop.f32.mrf.mxu0
        %v3669 = vadd.f32 %v3626, %v3668
        %v3670 = vpop.f32.mrf.mxu0
        %v3671 = vadd.f32 %v3628, %v3670
        %3672 = vdwg.mxu0
        %3673 = vmatprep.subr.bf16.mxu0 %v2783
        %3674 = vmatpush1.bf16.msra.mxu0 %v2782
        %3675 = vmatprep.subr.bf16.mxu0 %v2779
        %3676 = vmatpush1.bf16.msra.mxu0 %v2778
        %3677 = vmatprep.subr.bf16.mxu0 %v2775
        %3678 = vmatpush1.bf16.msra.mxu0 %v2774
        %3679 = vmatprep.subr.bf16.mxu0 %v2771
        %3680 = vmatpush1.bf16.msra.mxu0 %v2770
        %3681 = vmatprep.subr.bf16.mxu0 %v2767
        %3682 = vmatpush1.bf16.msra.mxu0 %v2766
        %3683 = vmatprep.subr.bf16.mxu0 %v2763
        %3684 = vmatpush1.bf16.msra.mxu0 %v2762
        %3685 = vmatprep.subr.bf16.mxu0 %v2759
        %3686 = vmatpush1.bf16.msra.mxu0 %v2758
        %3687 = vmatprep.subr.bf16.mxu0 %v2755
        %3688 = vmatpush1.bf16.msra.mxu0 %v2754
        %3689 = vmatprep.subr.bf16.mxu0 %v2815
        %3690 = vmatpush2.bf16.msra.mxu0 %v2814
        %3691 = vmatprep.subr.bf16.mxu0 %v2811
        %3692 = vmatpush2.bf16.msra.mxu0 %v2810
        %3693 = vmatprep.subr.bf16.mxu0 %v2807
        %3694 = vmatpush2.bf16.msra.mxu0 %v2806
        %3695 = vmatprep.subr.bf16.mxu0 %v2803
        %3696 = vmatpush2.bf16.msra.mxu0 %v2802
        %3697 = vmatprep.subr.bf16.mxu0 %v2799
        %3698 = vmatpush2.bf16.msra.mxu0 %v2798
        %3699 = vmatprep.subr.bf16.mxu0 %v2795
        %3700 = vmatpush2.bf16.msra.mxu0 %v2794
        %3701 = vmatprep.subr.bf16.mxu0 %v2791
        %3702 = vmatpush2.bf16.msra.mxu0 %v2790
        %3703 = vmatprep.subr.bf16.mxu0 %v2787
        %3704 = vmatpush2.bf16.msra.mxu0 %v2786
        %3705 = vmatprep.mubr.bf16.mxu0 %v877
        %3706 = vmatmul.mubr.bf16.gmra.mxu0 %v876
        %v3707 = vpop.f32.mrf.mxu0
        %v3708 = vadd.f32 %v3665, %v3707
        %v3709 = vpop.f32.mrf.mxu0
        %v3710 = vadd.f32 %v3667, %v3709
        %v3711 = vpop.f32.mrf.mxu0
        %v3712 = vadd.f32 %v3669, %v3711
        %v3713 = vpop.f32.mrf.mxu0
        %v3714 = vadd.f32 %v3671, %v3713
        %3715 = vdwg.mxu0
        %3716 = vmatprep.subr.bf16.mxu0 %v2847
        %3717 = vmatpush1.bf16.msra.mxu0 %v2846
        %3718 = vmatprep.subr.bf16.mxu0 %v2843
        %3719 = vmatpush1.bf16.msra.mxu0 %v2842
        %3720 = vmatprep.subr.bf16.mxu0 %v2839
        %3721 = vmatpush1.bf16.msra.mxu0 %v2838
        %3722 = vmatprep.subr.bf16.mxu0 %v2835
        %3723 = vmatpush1.bf16.msra.mxu0 %v2834
        %3724 = vmatprep.subr.bf16.mxu0 %v2831
        %3725 = vmatpush1.bf16.msra.mxu0 %v2830
        %3726 = vmatprep.subr.bf16.mxu0 %v2827
        %3727 = vmatpush1.bf16.msra.mxu0 %v2826
        %3728 = vmatprep.subr.bf16.mxu0 %v2823
        %3729 = vmatpush1.bf16.msra.mxu0 %v2822
        %3730 = vmatprep.subr.bf16.mxu0 %v2819
        %3731 = vmatpush1.bf16.msra.mxu0 %v2818
        %3732 = vmatprep.subr.bf16.mxu0 %v2879
        %3733 = vmatpush2.bf16.msra.mxu0 %v2878
        %3734 = vmatprep.subr.bf16.mxu0 %v2875
        %3735 = vmatpush2.bf16.msra.mxu0 %v2874
        %3736 = vmatprep.subr.bf16.mxu0 %v2871
        %3737 = vmatpush2.bf16.msra.mxu0 %v2870
        %3738 = vmatprep.subr.bf16.mxu0 %v2867
        %3739 = vmatpush2.bf16.msra.mxu0 %v2866
        %3740 = vmatprep.subr.bf16.mxu0 %v2863
        %3741 = vmatpush2.bf16.msra.mxu0 %v2862
        %3742 = vmatprep.subr.bf16.mxu0 %v2859
        %3743 = vmatpush2.bf16.msra.mxu0 %v2858
        %3744 = vmatprep.subr.bf16.mxu0 %v2855
        %3745 = vmatpush2.bf16.msra.mxu0 %v2854
        %3746 = vmatprep.subr.bf16.mxu0 %v2851
        %3747 = vmatpush2.bf16.msra.mxu0 %v2850
        %3748 = vmatprep.mubr.bf16.mxu0 %v879
        %3749 = vmatmul.mubr.bf16.gmra.mxu0 %v878
        %v3750 = vpop.f32.mrf.mxu0
        %v3751 = vadd.f32 %v3708, %v3750
        %v3752 = vpop.f32.mrf.mxu0
        %v3753 = vadd.f32 %v3710, %v3752
        %v3754 = vpop.f32.mrf.mxu0
        %v3755 = vadd.f32 %v3712, %v3754
        %v3756 = vpop.f32.mrf.mxu0
        %v3757 = vadd.f32 %v3714, %v3756
        %3758 = vdwg.mxu0
        %3759 = vmatprep.subr.bf16.mxu0 %v2911
        %3760 = vmatpush1.bf16.msra.mxu0 %v2910
        %3761 = vmatprep.subr.bf16.mxu0 %v2907
        %3762 = vmatpush1.bf16.msra.mxu0 %v2906
        %3763 = vmatprep.subr.bf16.mxu0 %v2903
        %3764 = vmatpush1.bf16.msra.mxu0 %v2902
        %3765 = vmatprep.subr.bf16.mxu0 %v2899
        %3766 = vmatpush1.bf16.msra.mxu0 %v2898
        %3767 = vmatprep.subr.bf16.mxu0 %v2895
        %3768 = vmatpush1.bf16.msra.mxu0 %v2894
        %3769 = vmatprep.subr.bf16.mxu0 %v2891
        %3770 = vmatpush1.bf16.msra.mxu0 %v2890
        %3771 = vmatprep.subr.bf16.mxu0 %v2887
        %3772 = vmatpush1.bf16.msra.mxu0 %v2886
        %3773 = vmatprep.subr.bf16.mxu0 %v2883
        %3774 = vmatpush1.bf16.msra.mxu0 %v2882
        %3775 = vmatprep.subr.bf16.mxu0 %v2943
        %3776 = vmatpush2.bf16.msra.mxu0 %v2942
        %3777 = vmatprep.subr.bf16.mxu0 %v2939
        %3778 = vmatpush2.bf16.msra.mxu0 %v2938
        %3779 = vmatprep.subr.bf16.mxu0 %v2935
        %3780 = vmatpush2.bf16.msra.mxu0 %v2934
        %3781 = vmatprep.subr.bf16.mxu0 %v2931
        %3782 = vmatpush2.bf16.msra.mxu0 %v2930
        %3783 = vmatprep.subr.bf16.mxu0 %v2927
        %3784 = vmatpush2.bf16.msra.mxu0 %v2926
        %3785 = vmatprep.subr.bf16.mxu0 %v2923
        %3786 = vmatpush2.bf16.msra.mxu0 %v2922
        %3787 = vmatprep.subr.bf16.mxu0 %v2919
        %3788 = vmatpush2.bf16.msra.mxu0 %v2918
        %3789 = vmatprep.subr.bf16.mxu0 %v2915
        %3790 = vmatpush2.bf16.msra.mxu0 %v2914
        %3791 = vmatprep.mubr.bf16.mxu0 %v881
        %3792 = vmatmul.mubr.bf16.gmra.mxu0 %v880
        %v3793 = vpop.f32.mrf.mxu0
        %v3794 = vadd.f32 %v3751, %v3793
        %v3795 = vpop.f32.mrf.mxu0
        %v3796 = vadd.f32 %v3753, %v3795
        %v3797 = vpop.f32.mrf.mxu0
        %v3798 = vadd.f32 %v3755, %v3797
        %v3799 = vpop.f32.mrf.mxu0
        %v3800 = vadd.f32 %v3757, %v3799
        %3801 = vdwg.mxu0
        %3802 = vmatprep.subr.bf16.mxu0 %v2465
        %3803 = vmatpush1.bf16.msra.mxu0 %v2464
        %3804 = vmatprep.subr.bf16.mxu0 %v2461
        %3805 = vmatpush1.bf16.msra.mxu0 %v2460
        %3806 = vmatprep.subr.bf16.mxu0 %v2457
        %3807 = vmatpush1.bf16.msra.mxu0 %v2456
        %3808 = vmatprep.subr.bf16.mxu0 %v2453
        %3809 = vmatpush1.bf16.msra.mxu0 %v2452
        %3810 = vmatprep.subr.bf16.mxu0 %v2449
        %3811 = vmatpush1.bf16.msra.mxu0 %v2448
        %3812 = vmatprep.subr.bf16.mxu0 %v2445
        %3813 = vmatpush1.bf16.msra.mxu0 %v2444
        %3814 = vmatprep.subr.bf16.mxu0 %v2441
        %3815 = vmatpush1.bf16.msra.mxu0 %v2440
        %3816 = vmatprep.subr.bf16.mxu0 %v2437
        %3817 = vmatpush1.bf16.msra.mxu0 %v2436
        %3818 = vmatprep.subr.bf16.mxu0 %v2497
        %3819 = vmatpush2.bf16.msra.mxu0 %v2496
        %3820 = vmatprep.subr.bf16.mxu0 %v2493
        %3821 = vmatpush2.bf16.msra.mxu0 %v2492
        %3822 = vmatprep.subr.bf16.mxu0 %v2489
        %3823 = vmatpush2.bf16.msra.mxu0 %v2488
        %3824 = vmatprep.subr.bf16.mxu0 %v2485
        %3825 = vmatpush2.bf16.msra.mxu0 %v2484
        %3826 = vmatprep.subr.bf16.mxu0 %v2481
        %3827 = vmatpush2.bf16.msra.mxu0 %v2480
        %3828 = vmatprep.subr.bf16.mxu0 %v2477
        %3829 = vmatpush2.bf16.msra.mxu0 %v2476
        %3830 = vmatprep.subr.bf16.mxu0 %v2473
        %3831 = vmatpush2.bf16.msra.mxu0 %v2472
        %3832 = vmatprep.subr.bf16.mxu0 %v2469
        %3833 = vmatpush2.bf16.msra.mxu0 %v2468
        %3834 = vmatprep.mubr.bf16.mxu0 %v867
        %3835 = vmatmul.mubr.bf16.gmra.mxu0 %v866
        %v3836 = vpop.f32.mrf.mxu0
        %v3837 = vadd.f32 %v809, %v3836
        %v3838 = vpop.f32.mrf.mxu0
        %v3839 = vadd.f32 %v813, %v3838
        %v3840 = vpop.f32.mrf.mxu0
        %v3841 = vadd.f32 %v809, %v3840
        %v3842 = vpop.f32.mrf.mxu0
        %v3843 = vadd.f32 %v813, %v3842
        %3844 = vdwg.mxu0
        %3845 = vmatprep.subr.bf16.mxu0 %v2529
        %3846 = vmatpush1.bf16.msra.mxu0 %v2528
        %3847 = vmatprep.subr.bf16.mxu0 %v2525
        %3848 = vmatpush1.bf16.msra.mxu0 %v2524
        %3849 = vmatprep.subr.bf16.mxu0 %v2521
        %3850 = vmatpush1.bf16.msra.mxu0 %v2520
        %3851 = vmatprep.subr.bf16.mxu0 %v2517
        %3852 = vmatpush1.bf16.msra.mxu0 %v2516
        %3853 = vmatprep.subr.bf16.mxu0 %v2513
        %3854 = vmatpush1.bf16.msra.mxu0 %v2512
        %3855 = vmatprep.subr.bf16.mxu0 %v2509
        %3856 = vmatpush1.bf16.msra.mxu0 %v2508
        %3857 = vmatprep.subr.bf16.mxu0 %v2505
        %3858 = vmatpush1.bf16.msra.mxu0 %v2504
        %3859 = vmatprep.subr.bf16.mxu0 %v2501
        %3860 = vmatpush1.bf16.msra.mxu0 %v2500
        %3861 = vmatprep.subr.bf16.mxu0 %v2561
        %3862 = vmatpush2.bf16.msra.mxu0 %v2560
        %3863 = vmatprep.subr.bf16.mxu0 %v2557
        %3864 = vmatpush2.bf16.msra.mxu0 %v2556
        %3865 = vmatprep.subr.bf16.mxu0 %v2553
        %3866 = vmatpush2.bf16.msra.mxu0 %v2552
        %3867 = vmatprep.subr.bf16.mxu0 %v2549
        %3868 = vmatpush2.bf16.msra.mxu0 %v2548
        %3869 = vmatprep.subr.bf16.mxu0 %v2545
        %3870 = vmatpush2.bf16.msra.mxu0 %v2544
        %3871 = vmatprep.subr.bf16.mxu0 %v2541
        %3872 = vmatpush2.bf16.msra.mxu0 %v2540
        %3873 = vmatprep.subr.bf16.mxu0 %v2537
        %3874 = vmatpush2.bf16.msra.mxu0 %v2536
        %3875 = vmatprep.subr.bf16.mxu0 %v2533
        %3876 = vmatpush2.bf16.msra.mxu0 %v2532
        %3877 = vmatprep.mubr.bf16.mxu0 %v869
        %3878 = vmatmul.mubr.bf16.gmra.mxu0 %v868
        %v3879 = vpop.f32.mrf.mxu0
        %v3880 = vadd.f32 %v3837, %v3879
        %v3881 = vpop.f32.mrf.mxu0
        %v3882 = vadd.f32 %v3839, %v3881
        %v3883 = vpop.f32.mrf.mxu0
        %v3884 = vadd.f32 %v3841, %v3883
        %v3885 = vpop.f32.mrf.mxu0
        %v3886 = vadd.f32 %v3843, %v3885
        %3887 = vdwg.mxu0
        %3888 = vmatprep.subr.bf16.mxu0 %v2593
        %3889 = vmatpush1.bf16.msra.mxu0 %v2592
        %3890 = vmatprep.subr.bf16.mxu0 %v2589
        %3891 = vmatpush1.bf16.msra.mxu0 %v2588
        %3892 = vmatprep.subr.bf16.mxu0 %v2585
        %3893 = vmatpush1.bf16.msra.mxu0 %v2584
        %3894 = vmatprep.subr.bf16.mxu0 %v2581
        %3895 = vmatpush1.bf16.msra.mxu0 %v2580
        %3896 = vmatprep.subr.bf16.mxu0 %v2577
        %3897 = vmatpush1.bf16.msra.mxu0 %v2576
        %3898 = vmatprep.subr.bf16.mxu0 %v2573
        %3899 = vmatpush1.bf16.msra.mxu0 %v2572
        %3900 = vmatprep.subr.bf16.mxu0 %v2569
        %3901 = vmatpush1.bf16.msra.mxu0 %v2568
        %3902 = vmatprep.subr.bf16.mxu0 %v2565
        %3903 = vmatpush1.bf16.msra.mxu0 %v2564
        %3904 = vmatprep.subr.bf16.mxu0 %v2625
        %3905 = vmatpush2.bf16.msra.mxu0 %v2624
        %3906 = vmatprep.subr.bf16.mxu0 %v2621
        %3907 = vmatpush2.bf16.msra.mxu0 %v2620
        %3908 = vmatprep.subr.bf16.mxu0 %v2617
        %3909 = vmatpush2.bf16.msra.mxu0 %v2616
        %3910 = vmatprep.subr.bf16.mxu0 %v2613
        %3911 = vmatpush2.bf16.msra.mxu0 %v2612
        %3912 = vmatprep.subr.bf16.mxu0 %v2609
        %3913 = vmatpush2.bf16.msra.mxu0 %v2608
        %3914 = vmatprep.subr.bf16.mxu0 %v2605
        %3915 = vmatpush2.bf16.msra.mxu0 %v2604
        %3916 = vmatprep.subr.bf16.mxu0 %v2601
        %3917 = vmatpush2.bf16.msra.mxu0 %v2600
        %3918 = vmatprep.subr.bf16.mxu0 %v2597
        %3919 = vmatpush2.bf16.msra.mxu0 %v2596
        %3920 = vmatprep.mubr.bf16.mxu0 %v871
        %3921 = vmatmul.mubr.bf16.gmra.mxu0 %v870
        %v3922 = vpop.f32.mrf.mxu0
        %v3923 = vadd.f32 %v3880, %v3922
        %v3924 = vpop.f32.mrf.mxu0
        %v3925 = vadd.f32 %v3882, %v3924
        %v3926 = vpop.f32.mrf.mxu0
        %v3927 = vadd.f32 %v3884, %v3926
        %v3928 = vpop.f32.mrf.mxu0
        %v3929 = vadd.f32 %v3886, %v3928
        %3930 = vdwg.mxu0
        %3931 = vmatprep.subr.bf16.mxu0 %v2657
        %3932 = vmatpush1.bf16.msra.mxu0 %v2656
        %3933 = vmatprep.subr.bf16.mxu0 %v2653
        %3934 = vmatpush1.bf16.msra.mxu0 %v2652
        %3935 = vmatprep.subr.bf16.mxu0 %v2649
        %3936 = vmatpush1.bf16.msra.mxu0 %v2648
        %3937 = vmatprep.subr.bf16.mxu0 %v2645
        %3938 = vmatpush1.bf16.msra.mxu0 %v2644
        %3939 = vmatprep.subr.bf16.mxu0 %v2641
        %3940 = vmatpush1.bf16.msra.mxu0 %v2640
        %3941 = vmatprep.subr.bf16.mxu0 %v2637
        %3942 = vmatpush1.bf16.msra.mxu0 %v2636
        %3943 = vmatprep.subr.bf16.mxu0 %v2633
        %3944 = vmatpush1.bf16.msra.mxu0 %v2632
        %3945 = vmatprep.subr.bf16.mxu0 %v2629
        %3946 = vmatpush1.bf16.msra.mxu0 %v2628
        %3947 = vmatprep.subr.bf16.mxu0 %v2689
        %3948 = vmatpush2.bf16.msra.mxu0 %v2688
        %3949 = vmatprep.subr.bf16.mxu0 %v2685
        %3950 = vmatpush2.bf16.msra.mxu0 %v2684
        %3951 = vmatprep.subr.bf16.mxu0 %v2681
        %3952 = vmatpush2.bf16.msra.mxu0 %v2680
        %3953 = vmatprep.subr.bf16.mxu0 %v2677
        %3954 = vmatpush2.bf16.msra.mxu0 %v2676
        %3955 = vmatprep.subr.bf16.mxu0 %v2673
        %3956 = vmatpush2.bf16.msra.mxu0 %v2672
        %3957 = vmatprep.subr.bf16.mxu0 %v2669
        %3958 = vmatpush2.bf16.msra.mxu0 %v2668
        %3959 = vmatprep.subr.bf16.mxu0 %v2665
        %3960 = vmatpush2.bf16.msra.mxu0 %v2664
        %3961 = vmatprep.subr.bf16.mxu0 %v2661
        %3962 = vmatpush2.bf16.msra.mxu0 %v2660
        %3963 = vmatprep.mubr.bf16.mxu0 %v873
        %3964 = vmatmul.mubr.bf16.gmra.mxu0 %v872
        %v3965 = vpop.f32.mrf.mxu0
        %v3966 = vadd.f32 %v3923, %v3965
        %v3967 = vpop.f32.mrf.mxu0
        %v3968 = vadd.f32 %v3925, %v3967
        %v3969 = vpop.f32.mrf.mxu0
        %v3970 = vadd.f32 %v3927, %v3969
        %v3971 = vpop.f32.mrf.mxu0
        %v3972 = vadd.f32 %v3929, %v3971
        %3973 = vdwg.mxu0
        %3974 = vmatprep.subr.bf16.mxu0 %v2721
        %3975 = vmatpush1.bf16.msra.mxu0 %v2720
        %3976 = vmatprep.subr.bf16.mxu0 %v2717
        %3977 = vmatpush1.bf16.msra.mxu0 %v2716
        %3978 = vmatprep.subr.bf16.mxu0 %v2713
        %3979 = vmatpush1.bf16.msra.mxu0 %v2712
        %3980 = vmatprep.subr.bf16.mxu0 %v2709
        %3981 = vmatpush1.bf16.msra.mxu0 %v2708
        %3982 = vmatprep.subr.bf16.mxu0 %v2705
        %3983 = vmatpush1.bf16.msra.mxu0 %v2704
        %3984 = vmatprep.subr.bf16.mxu0 %v2701
        %3985 = vmatpush1.bf16.msra.mxu0 %v2700
        %3986 = vmatprep.subr.bf16.mxu0 %v2697
        %3987 = vmatpush1.bf16.msra.mxu0 %v2696
        %3988 = vmatprep.subr.bf16.mxu0 %v2693
        %3989 = vmatpush1.bf16.msra.mxu0 %v2692
        %3990 = vmatprep.subr.bf16.mxu0 %v2753
        %3991 = vmatpush2.bf16.msra.mxu0 %v2752
        %3992 = vmatprep.subr.bf16.mxu0 %v2749
        %3993 = vmatpush2.bf16.msra.mxu0 %v2748
        %3994 = vmatprep.subr.bf16.mxu0 %v2745
        %3995 = vmatpush2.bf16.msra.mxu0 %v2744
        %3996 = vmatprep.subr.bf16.mxu0 %v2741
        %3997 = vmatpush2.bf16.msra.mxu0 %v2740
        %3998 = vmatprep.subr.bf16.mxu0 %v2737
        %3999 = vmatpush2.bf16.msra.mxu0 %v2736
        %4000 = vmatprep.subr.bf16.mxu0 %v2733
        %4001 = vmatpush2.bf16.msra.mxu0 %v2732
        %4002 = vmatprep.subr.bf16.mxu0 %v2729
        %4003 = vmatpush2.bf16.msra.mxu0 %v2728
        %4004 = vmatprep.subr.bf16.mxu0 %v2725
        %4005 = vmatpush2.bf16.msra.mxu0 %v2724
        %4006 = vmatprep.mubr.bf16.mxu0 %v875
        %4007 = vmatmul.mubr.bf16.gmra.mxu0 %v874
        %v4008 = vpop.f32.mrf.mxu0
        %v4009 = vadd.f32 %v3966, %v4008
        %v4010 = vpop.f32.mrf.mxu0
        %v4011 = vadd.f32 %v3968, %v4010
        %v4012 = vpop.f32.mrf.mxu0
        %v4013 = vadd.f32 %v3970, %v4012
        %v4014 = vpop.f32.mrf.mxu0
        %v4015 = vadd.f32 %v3972, %v4014
        %4016 = vdwg.mxu0
        %4017 = vmatprep.subr.bf16.mxu0 %v2785
        %4018 = vmatpush1.bf16.msra.mxu0 %v2784
        %4019 = vmatprep.subr.bf16.mxu0 %v2781
        %4020 = vmatpush1.bf16.msra.mxu0 %v2780
        %4021 = vmatprep.subr.bf16.mxu0 %v2777
        %4022 = vmatpush1.bf16.msra.mxu0 %v2776
        %4023 = vmatprep.subr.bf16.mxu0 %v2773
        %4024 = vmatpush1.bf16.msra.mxu0 %v2772
        %4025 = vmatprep.subr.bf16.mxu0 %v2769
        %4026 = vmatpush1.bf16.msra.mxu0 %v2768
        %4027 = vmatprep.subr.bf16.mxu0 %v2765
        %4028 = vmatpush1.bf16.msra.mxu0 %v2764
        %4029 = vmatprep.subr.bf16.mxu0 %v2761
        %4030 = vmatpush1.bf16.msra.mxu0 %v2760
        %4031 = vmatprep.subr.bf16.mxu0 %v2757
        %4032 = vmatpush1.bf16.msra.mxu0 %v2756
        %4033 = vmatprep.subr.bf16.mxu0 %v2817
        %4034 = vmatpush2.bf16.msra.mxu0 %v2816
        %4035 = vmatprep.subr.bf16.mxu0 %v2813
        %4036 = vmatpush2.bf16.msra.mxu0 %v2812
        %4037 = vmatprep.subr.bf16.mxu0 %v2809
        %4038 = vmatpush2.bf16.msra.mxu0 %v2808
        %4039 = vmatprep.subr.bf16.mxu0 %v2805
        %4040 = vmatpush2.bf16.msra.mxu0 %v2804
        %4041 = vmatprep.subr.bf16.mxu0 %v2801
        %4042 = vmatpush2.bf16.msra.mxu0 %v2800
        %4043 = vmatprep.subr.bf16.mxu0 %v2797
        %4044 = vmatpush2.bf16.msra.mxu0 %v2796
        %4045 = vmatprep.subr.bf16.mxu0 %v2793
        %4046 = vmatpush2.bf16.msra.mxu0 %v2792
        %4047 = vmatprep.subr.bf16.mxu0 %v2789
        %4048 = vmatpush2.bf16.msra.mxu0 %v2788
        %4049 = vmatprep.mubr.bf16.mxu0 %v877
        %4050 = vmatmul.mubr.bf16.gmra.mxu0 %v876
        %v4051 = vpop.f32.mrf.mxu0
        %v4052 = vadd.f32 %v4009, %v4051
        %v4053 = vpop.f32.mrf.mxu0
        %v4054 = vadd.f32 %v4011, %v4053
        %v4055 = vpop.f32.mrf.mxu0
        %v4056 = vadd.f32 %v4013, %v4055
        %v4057 = vpop.f32.mrf.mxu0
        %v4058 = vadd.f32 %v4015, %v4057
        %4059 = vdwg.mxu0
        %4060 = vmatprep.subr.bf16.mxu0 %v2849
        %4061 = vmatpush1.bf16.msra.mxu0 %v2848
        %4062 = vmatprep.subr.bf16.mxu0 %v2845
        %4063 = vmatpush1.bf16.msra.mxu0 %v2844
        %4064 = vmatprep.subr.bf16.mxu0 %v2841
        %4065 = vmatpush1.bf16.msra.mxu0 %v2840
        %4066 = vmatprep.subr.bf16.mxu0 %v2837
        %4067 = vmatpush1.bf16.msra.mxu0 %v2836
        %4068 = vmatprep.subr.bf16.mxu0 %v2833
        %4069 = vmatpush1.bf16.msra.mxu0 %v2832
        %4070 = vmatprep.subr.bf16.mxu0 %v2829
        %4071 = vmatpush1.bf16.msra.mxu0 %v2828
        %4072 = vmatprep.subr.bf16.mxu0 %v2825
        %4073 = vmatpush1.bf16.msra.mxu0 %v2824
        %4074 = vmatprep.subr.bf16.mxu0 %v2821
        %4075 = vmatpush1.bf16.msra.mxu0 %v2820
        %4076 = vmatprep.subr.bf16.mxu0 %v2881
        %4077 = vmatpush2.bf16.msra.mxu0 %v2880
        %4078 = vmatprep.subr.bf16.mxu0 %v2877
        %4079 = vmatpush2.bf16.msra.mxu0 %v2876
        %4080 = vmatprep.subr.bf16.mxu0 %v2873
        %4081 = vmatpush2.bf16.msra.mxu0 %v2872
        %4082 = vmatprep.subr.bf16.mxu0 %v2869
        %4083 = vmatpush2.bf16.msra.mxu0 %v2868
        %4084 = vmatprep.subr.bf16.mxu0 %v2865
        %4085 = vmatpush2.bf16.msra.mxu0 %v2864
        %4086 = vmatprep.subr.bf16.mxu0 %v2861
        %4087 = vmatpush2.bf16.msra.mxu0 %v2860
        %4088 = vmatprep.subr.bf16.mxu0 %v2857
        %4089 = vmatpush2.bf16.msra.mxu0 %v2856
        %4090 = vmatprep.subr.bf16.mxu0 %v2853
        %4091 = vmatpush2.bf16.msra.mxu0 %v2852
        %4092 = vmatprep.mubr.bf16.mxu0 %v879
        %4093 = vmatmul.mubr.bf16.gmra.mxu0 %v878
        %v4094 = vpop.f32.mrf.mxu0
        %v4095 = vadd.f32 %v4052, %v4094
        %v4096 = vpop.f32.mrf.mxu0
        %v4097 = vadd.f32 %v4054, %v4096
        %v4098 = vpop.f32.mrf.mxu0
        %v4099 = vadd.f32 %v4056, %v4098
        %v4100 = vpop.f32.mrf.mxu0
        %v4101 = vadd.f32 %v4058, %v4100
        %4102 = vdwg.mxu0
        %4103 = vmatprep.subr.bf16.mxu0 %v2913
        %4104 = vmatpush1.bf16.msra.mxu0 %v2912
        %4105 = vmatprep.subr.bf16.mxu0 %v2909
        %4106 = vmatpush1.bf16.msra.mxu0 %v2908
        %4107 = vmatprep.subr.bf16.mxu0 %v2905
        %4108 = vmatpush1.bf16.msra.mxu0 %v2904
        %4109 = vmatprep.subr.bf16.mxu0 %v2901
        %4110 = vmatpush1.bf16.msra.mxu0 %v2900
        %4111 = vmatprep.subr.bf16.mxu0 %v2897
        %4112 = vmatpush1.bf16.msra.mxu0 %v2896
        %4113 = vmatprep.subr.bf16.mxu0 %v2893
        %4114 = vmatpush1.bf16.msra.mxu0 %v2892
        %4115 = vmatprep.subr.bf16.mxu0 %v2889
        %4116 = vmatpush1.bf16.msra.mxu0 %v2888
        %4117 = vmatprep.subr.bf16.mxu0 %v2885
        %4118 = vmatpush1.bf16.msra.mxu0 %v2884
        %4119 = vmatprep.subr.bf16.mxu0 %v2945
        %4120 = vmatpush2.bf16.msra.mxu0 %v2944
        %4121 = vmatprep.subr.bf16.mxu0 %v2941
        %4122 = vmatpush2.bf16.msra.mxu0 %v2940
        %4123 = vmatprep.subr.bf16.mxu0 %v2937
        %4124 = vmatpush2.bf16.msra.mxu0 %v2936
        %4125 = vmatprep.subr.bf16.mxu0 %v2933
        %4126 = vmatpush2.bf16.msra.mxu0 %v2932
        %4127 = vmatprep.subr.bf16.mxu0 %v2929
        %4128 = vmatpush2.bf16.msra.mxu0 %v2928
        %4129 = vmatprep.subr.bf16.mxu0 %v2925
        %4130 = vmatpush2.bf16.msra.mxu0 %v2924
        %4131 = vmatprep.subr.bf16.mxu0 %v2921
        %4132 = vmatpush2.bf16.msra.mxu0 %v2920
        %4133 = vmatprep.subr.bf16.mxu0 %v2917
        %4134 = vmatpush2.bf16.msra.mxu0 %v2916
        %4135 = vmatprep.mubr.bf16.mxu0 %v881
        %4136 = vmatmul.mubr.bf16.gmra.mxu0 %v880
        %v4137 = vpop.f32.mrf.mxu0
        %v4138 = vadd.f32 %v4095, %v4137
        %v4139 = vpop.f32.mrf.mxu0
        %v4140 = vadd.f32 %v4097, %v4139
        %v4141 = vpop.f32.mrf.mxu0
        %v4142 = vadd.f32 %v4099, %v4141
        %v4143 = vpop.f32.mrf.mxu0
        %v4144 = vadd.f32 %v4101, %v4143
        %4145 = vdwg.mxu0
        %4146 = vst [vmem:[%s258] sm:$0xff] %v3794
        %4147 = vst [vmem:[%s258 + $0x8] sm:$0xff] %v3796
        %4148 = vst [vmem:[%s258 + $0x10] sm:$0xff] %v4138
        %4149 = vst [vmem:[%s258 + $0x18] sm:$0xff] %v4140
        %4150 = vst [vmem:[%s258 + $0x20] sm:$0xff] %v3798
        %4151 = vst [vmem:[%s258 + $0x28] sm:$0xff] %v3800
        %4152 = vst [vmem:[%s258 + $0x30] sm:$0xff] %v4142
        %4153 = vst [vmem:[%s258 + $0x38] sm:$0xff] %v4144
        %s4154 = sand.u32 %s123, 1
        %s4155 = scalar_lea.sflag [#allocation4], %s4154
        %s4156 = sand.u32 %s123, 1
        %s4157 = smul.addr %s4156, 64
        %s4158 = scalar_lea.vmem [#allocation7], %s4157
        // Predicated region
        $region41: #{_forward_impl.3} parent=31 // pred_check
          %p4159 = pneg %p133
        $region42: #{_forward_impl.3} parent=31 // pred_check_branch
          %4161 = sbr.rel (%p4159) target = $region44
        $region43: #{_forward_impl.3} parent=31 // pred_region
          %s4162 = smul.u32 2, %s28
          %s4163 = smul.u32 4, %s27
          %s4165 = ssub.s32 1024, 1024
          %4166 = vsyncadd %s4155, %s4165
          %s4167 = smul.addr %s4162, 8
          %s4168 = sadd.s32 %s4163, %s4167
          %s4169 = smul.addr %s4168, 128
          %s4170 = scalar_lea.hbm %s3, %s4169
          %s4171 = sshll.u32 %s4158, 4
          %s4172 = int_to_ptr.vmem [resolvable:$true] %s4171
          %4177 = dma.vmem_to_hbm [thread:$0]  %s4172, 1024, %s4170, %s4155, 512, 1024, 32
        $region44: #{_forward_impl.3} parent=31 // pred_fallthru
          _
      $region32: #{_forward_impl.3} parent=5 // pred_fallthru
        _
      %p4178 = scmp.le.s32.totalorder 2, %s18
      // Predicated region
      $region45: #{_forward_impl.3} parent=5 // pred_check
        %p4179 = pneg %p4178
      $region46: #{_forward_impl.3} parent=5 // pred_check_branch
        %4181 = sbr.rel (%p4179) target = $region48
      $region47: #{_forward_impl.3} parent=5 // pred_region
        %s4182 = ssub.s32 %s18, 2
        // Predicated region
        $region49: #{_forward_impl.3} parent=47 // pred_check
          %p4183 = pneg %p139
        $region50: #{_forward_impl.3} parent=47 // pred_check_branch
          %4185 = sbr.rel (%p4183) target = $region52
        $region51: #{_forward_impl.3} parent=47 // pred_region
          %s4186 = sand.u32 %s124, 1
          %s4187 = scalar_lea.sflag [#allocation4], %s4186
          %s4188 = sand.u32 %s124, 1
          %s4189 = smul.addr %s4188, 64
          %s4190 = scalar_lea.vmem [#allocation7], %s4189
          %4191 = dma.done %s4187, 1024
        $region52: #{_forward_impl.3} parent=47 // pred_fallthru
          _
      $region48: #{_forward_impl.3} parent=5 // pred_fallthru
        _
    $region6: #{_forward_impl.3} parent=1 // loop_footer
      %s22 = sadd.s32 1, %s18
    $region7: #{_forward_impl.3} parent=1 // loop_footer_branch
      %17 = sbr.rel target = $region3
    $region8: #{_forward_impl.3} parent=1 // loop_exit
      _
    %4192 = vsyncpa [#allocation3], 1
    %s4193 = scalar_lea.sflag [#allocation3], 1
    %4194 = vsyncpa %s4193, 1
    %4195 = vsyncpa [#allocation6], 1
    %s4196 = scalar_lea.sflag [#allocation6], 1
    %4197 = vsyncpa %s4196, 1
    %4198 = vsyncpa [#allocation4], 1
    %s4199 = scalar_lea.sflag [#allocation4], 1
    %4200 = vsyncpa %s4199, 1

// kernel: _forward_impl.2
$region0: #{_forward_impl.2}
  #allocation0 [shape = 'u32[]', space=smem, size = 0x4, offset = 0x4, fixed_abs, tag = 'smem constant byte address 0x4 - core index']
  #allocation1 [shape = 'u32[144,128]{1,0:T(1,128)}', space=vmem, size = 0x12000, scoped, tag = 'internal scratch']
  %s0 = inlined_call_operand.hbm [shape: f32[16,32], index: 0, kind: input, shape index: {}]
  %s1 = inlined_call_operand.hbm [shape: bf16[32,256], index: 1, kind: input, shape index: {}]
  %s2 = inlined_call_operand.hbm [shape: f32[1,256], index: 2, kind: input, shape index: {}]
  %s3 = inlined_call_operand.hbm [shape: bf16[256,512], index: 3, kind: input, shape index: {}]
  %s4 = inlined_call_operand.hbm [shape: f32[1,512], index: 4, kind: input, shape index: {}]
  %s5 = inlined_call_operand.hbm [shape: bf16[512,2048], index: 5, kind: input, shape index: {}]
  %s6 = inlined_call_operand.hbm [shape: f32[1,2048], index: 6, kind: input, shape index: {}]
  %s7 = inlined_call_operand.vmem [shape: bf16[16,2048], index: 7, kind: output, shape index: {}]
  %s8 = sld [smem:[#allocation0]]
  $region66: #{_forward_impl.2} parent=0
    _
  %s10 = ssub.s32 1, %s8
  %s11 = scalar_select 0, %s10, %s8
  $region1: #{_forward_impl.2} parent=0
    #allocation2 [shape = 'u8[8192]{0}', space=vmem, size = 0x2000, scoped, tag = 'input window, operand 0, single buffered']
    #allocation3 [shape = 's32[1]{0}', space=sflag, size = 0x4, scoped, tag = 'scoped memory for _forward_impl.2']
    #allocation4 [shape = 'u8[16384]{0}', space=vmem, size = 0x4000, scoped, tag = 'input window, operand 1, single buffered']
    #allocation5 [shape = 's32[1]{0}', space=sflag, size = 0x4, scoped, tag = 'scoped memory for _forward_impl.2']
    #allocation6 [shape = 'u8[1024]{0}', space=vmem, size = 0x400, scoped, tag = 'input window, operand 2, single buffered']
    #allocation7 [shape = 'u8[262144]{0}', space=vmem, size = 0x40000, scoped, tag = 'input window, operand 3, single buffered']
    #allocation8 [shape = 's32[1]{0}', space=sflag, size = 0x4, scoped, tag = 'scoped memory for _forward_impl.2']
    #allocation9 [shape = 'u8[2048]{0}', space=vmem, size = 0x800, scoped, tag = 'input window, operand 4, single buffered']
    #allocation10 [shape = 'u8[2097152]{0}', space=vmem, size = 0x200000, scoped, tag = 'input window, operand 5, single buffered']
    #allocation11 [shape = 's32[1]{0}', space=sflag, size = 0x4, scoped, tag = 'scoped memory for _forward_impl.2']
    #allocation12 [shape = 'u8[8192]{0}', space=vmem, size = 0x2000, scoped, tag = 'input window, operand 6, single buffered']
    %12 = vsyncpa [#allocation3], 0
    %13 = vsyncpa [#allocation5], 0
    %14 = vsyncpa [#allocation8], 0
    %15 = vsyncpa [#allocation11], 0
    // Predicated region
    $region2: #{_forward_impl.2} parent=1 // pred_check
      _
    $region3: #{_forward_impl.2} parent=1 // pred_check_branch
      %17 = sbr.rel (0) target = $region5
    $region4: #{_forward_impl.2} parent=1 // pred_region
      %s19 = ssub.s32 256, 256
      %20 = vsyncadd [#allocation3], %s19
      %s21 = sshll.u32 [#allocation2], 4
      %s22 = int_to_ptr.vmem [resolvable:$true] %s21
      %27 = dma.hbm_to_vmem [thread:$0]  %s0, 256, %s22, [#allocation3], 128, 128, 8
    $region5: #{_forward_impl.2} parent=1 // pred_fallthru
      _
    // Predicated region
    $region6: #{_forward_impl.2} parent=1 // pred_check
      _
    $region7: #{_forward_impl.2} parent=1 // pred_check_branch
      %29 = sbr.rel (0) target = $region9
    $region8: #{_forward_impl.2} parent=1 // pred_region
      %s31 = ssub.s32 512, 512
      %32 = vsyncadd [#allocation5], %s31
      %s33 = sshll.u32 [#allocation4], 4
      %s34 = int_to_ptr.vmem [resolvable:$true] %s33
      %39 = dma.hbm_to_vmem [thread:$0]  %s1, 512, %s34, [#allocation5], 128, 128, 8
    $region9: #{_forward_impl.2} parent=1 // pred_fallthru
      _
    // Predicated region
    $region10: #{_forward_impl.2} parent=1 // pred_check
      _
    $region11: #{_forward_impl.2} parent=1 // pred_check_branch
      %41 = sbr.rel (0) target = $region13
    $region12: #{_forward_impl.2} parent=1 // pred_region
      %s43 = ssub.s32 32, 32
      %44 = vsyncadd [#allocation5], %s43
      %s46 = sshll.u32 [#allocation6], 4
      %s47 = int_to_ptr.vmem [resolvable:$true] %s46
      %49 = dma.hbm_to_vmem [thread:$0]  %s2, 32, %s47, [#allocation5]
    $region13: #{_forward_impl.2} parent=1 // pred_fallthru
      _
    // Predicated region
    $region14: #{_forward_impl.2} parent=1 // pred_check
      _
    $region15: #{_forward_impl.2} parent=1 // pred_check_branch
      %51 = sbr.rel (0) target = $region17
    $region16: #{_forward_impl.2} parent=1 // pred_region
      %s53 = ssub.s32 8192, 8192
      %54 = vsyncadd [#allocation8], %s53
      %s55 = sshll.u32 [#allocation7], 4
      %s56 = int_to_ptr.vmem [resolvable:$true] %s55
      %61 = dma.hbm_to_vmem [thread:$0]  %s3, 8192, %s56, [#allocation8], 256, 256, 16
    $region17: #{_forward_impl.2} parent=1 // pred_fallthru
      _
    // Predicated region
    $region18: #{_forward_impl.2} parent=1 // pred_check
      _
    $region19: #{_forward_impl.2} parent=1 // pred_check_branch
      %63 = sbr.rel (0) target = $region21
    $region20: #{_forward_impl.2} parent=1 // pred_region
      %s65 = ssub.s32 64, 64
      %66 = vsyncadd [#allocation8], %s65
      %s68 = sshll.u32 [#allocation9], 4
      %s69 = int_to_ptr.vmem [resolvable:$true] %s68
      %71 = dma.hbm_to_vmem [thread:$0]  %s4, 64, %s69, [#allocation8]
    $region21: #{_forward_impl.2} parent=1 // pred_fallthru
      _
    // Predicated region
    $region22: #{_forward_impl.2} parent=1 // pred_check
      _
    $region23: #{_forward_impl.2} parent=1 // pred_check_branch
      %73 = sbr.rel (0) target = $region25
    $region24: #{_forward_impl.2} parent=1 // pred_region
      %s75 = ssub.s32 65536, 65536
      %76 = vsyncadd [#allocation11], %s75
      %s77 = sshll.u32 [#allocation10], 4
      %s78 = int_to_ptr.vmem [resolvable:$true] %s77
      %83 = dma.hbm_to_vmem [thread:$0]  %s5, 65536, %s78, [#allocation11], 1024, 1024, 64
    $region25: #{_forward_impl.2} parent=1 // pred_fallthru
      _
    // Predicated region
    $region26: #{_forward_impl.2} parent=1 // pred_check
      _
    $region27: #{_forward_impl.2} parent=1 // pred_check_branch
      %85 = sbr.rel (0) target = $region29
    $region28: #{_forward_impl.2} parent=1 // pred_region
      %s87 = ssub.s32 256, 256
      %88 = vsyncadd [#allocation11], %s87
      %s90 = sshll.u32 [#allocation12], 4
      %s91 = int_to_ptr.vmem [resolvable:$true] %s90
      %93 = dma.hbm_to_vmem [thread:$0]  %s6, 256, %s91, [#allocation11]
    $region29: #{_forward_impl.2} parent=1 // pred_fallthru
      _
    // Predicated region
    $region30: #{_forward_impl.2} parent=1 // pred_check
      _
    $region31: #{_forward_impl.2} parent=1 // pred_check_branch
      %95 = sbr.rel (0) target = $region33
    $region32: #{_forward_impl.2} parent=1 // pred_region
      %96 = dma.done [#allocation3], 256
    $region33: #{_forward_impl.2} parent=1 // pred_fallthru
      _
    // Predicated region
    $region34: #{_forward_impl.2} parent=1 // pred_check
      _
    $region35: #{_forward_impl.2} parent=1 // pred_check_branch
      %98 = sbr.rel (0) target = $region37
    $region36: #{_forward_impl.2} parent=1 // pred_region
      %99 = dma.done [#allocation5], 512
    $region37: #{_forward_impl.2} parent=1 // pred_fallthru
      _
    // Predicated region
    $region38: #{_forward_impl.2} parent=1 // pred_check
      _
    $region39: #{_forward_impl.2} parent=1 // pred_check_branch
      %101 = sbr.rel (0) target = $region41
    $region40: #{_forward_impl.2} parent=1 // pred_region
      %102 = dma.done [#allocation5], 32
    $region41: #{_forward_impl.2} parent=1 // pred_fallthru
      _
    // Predicated region
    $region42: #{_forward_impl.2} parent=1 // pred_check
      _
    $region43: #{_forward_impl.2} parent=1 // pred_check_branch
      %104 = sbr.rel (0) target = $region45
    $region44: #{_forward_impl.2} parent=1 // pred_region
      %105 = dma.done [#allocation8], 8192
    $region45: #{_forward_impl.2} parent=1 // pred_fallthru
      _
    // Predicated region
    $region46: #{_forward_impl.2} parent=1 // pred_check
      _
    $region47: #{_forward_impl.2} parent=1 // pred_check_branch
      %107 = sbr.rel (0) target = $region49
    $region48: #{_forward_impl.2} parent=1 // pred_region
      %108 = dma.done [#allocation8], 64
    $region49: #{_forward_impl.2} parent=1 // pred_fallthru
      _
    // Predicated region
    $region50: #{_forward_impl.2} parent=1 // pred_check
      _
    $region51: #{_forward_impl.2} parent=1 // pred_check_branch
      %110 = sbr.rel (0) target = $region53
    $region52: #{_forward_impl.2} parent=1 // pred_region
      %111 = dma.done [#allocation11], 65536
    $region53: #{_forward_impl.2} parent=1 // pred_fallthru
      _
    // Predicated region
    $region54: #{_forward_impl.2} parent=1 // pred_check
      _
    $region55: #{_forward_impl.2} parent=1 // pred_check_branch
      %113 = sbr.rel (0) target = $region57
    $region56: #{_forward_impl.2} parent=1 // pred_region
      %114 = dma.done [#allocation11], 256
    $region57: #{_forward_impl.2} parent=1 // pred_fallthru
      _
    %v116 = vld [vmem:[#allocation2] sm:$0xff]
    %v117 = vld [vmem:[#allocation2 + $0x8] sm:$0xff]
    %v118 = vpack.c.bf16 %v117, %v116
    %v119 = vld [vmem:[#allocation4] sm:$0xff]
    %v120 = vld [vmem:[#allocation4 + $0x8] sm:$0xff]
    %v121 = vld [vmem:[#allocation4 + $0x10] sm:$0xff]
    %v122 = vld [vmem:[#allocation4 + $0x18] sm:$0xff]
    %v123 = vld [vmem:[#allocation6] sm:$0x3]
    %v125 = vlaneseq
    %v126 = vshrl.u32 %v125, 7
    %v127 = vsub.s32 0, %v126
    %v128 = vrot.slane %v123, %v127
    %v129 = vlaneseq
    %v130 = vshrl.u32 %v129, 7
    %v131 = vsub.s32 1, %v130
    %v132 = vrot.slane %v123, %v131
    %v139 = vunpack.c.l.b16 %v119
    %v140 = vunpack.c.h.b16 %v119
    %v141 = vunpack.c.l.b16 %v120
    %v142 = vunpack.c.h.b16 %v120
    %v143 = vunpack.c.l.b16 %v121
    %v144 = vunpack.c.h.b16 %v121
    %v145 = vunpack.c.l.b16 %v122
    %v146 = vunpack.c.h.b16 %v122
    %v147 = vpack.c.b16 %v141, %v139
    %v148 = vpack.c.b16 %v142, %v140
    %v149 = vpack.c.b16 %v145, %v143
    %v150 = vpack.c.b16 %v146, %v144
    %vm155 = vcmask 261120
    %v157 = vsel %vm155, %v118, 0
    %159 = vmatprep.subr.bf16.mxu0 0
    %160 = vmatpush1.bf16.msra.mxu0 0
    %161 = vmatprep.subr.bf16.mxu0 0
    %162 = vmatpush1.bf16.msra.mxu0 0
    %163 = vmatprep.subr.bf16.mxu0 0
    %164 = vmatpush1.bf16.msra.mxu0 0
    %165 = vmatprep.subr.bf16.mxu0 0
    %166 = vmatpush1.bf16.msra.mxu0 0
    %167 = vmatprep.subr.bf16.mxu0 0
    %168 = vmatpush1.bf16.msra.mxu0 0
    %169 = vmatprep.subr.bf16.mxu0 0
    %170 = vmatpush1.bf16.msra.mxu0 0
    %171 = vmatprep.subr.bf16.mxu0 %v150
    %172 = vmatpush1.bf16.msra.mxu0 %v149
    %173 = vmatprep.subr.bf16.mxu0 %v148
    %174 = vmatpush1.bf16.msra.mxu0 %v147
    %175 = vmatprep.subr.bf16.mxu0 0
    %176 = vmatpush2.bf16.msra.mxu0 0
    %177 = vmatprep.subr.bf16.mxu0 0
    %178 = vmatpush2.bf16.msra.mxu0 0
    %179 = vmatprep.subr.bf16.mxu0 0
    %180 = vmatpush2.bf16.msra.mxu0 0
    %181 = vmatprep.subr.bf16.mxu0 0
    %182 = vmatpush2.bf16.msra.mxu0 0
    %183 = vmatprep.subr.bf16.mxu0 0
    %184 = vmatpush2.bf16.msra.mxu0 0
    %185 = vmatprep.subr.bf16.mxu0 0
    %186 = vmatpush2.bf16.msra.mxu0 0
    %187 = vmatprep.subr.bf16.mxu0 0
    %188 = vmatpush2.bf16.msra.mxu0 0
    %189 = vmatprep.subr.bf16.mxu0 0
    %190 = vmatpush2.bf16.msra.mxu0 0
    %191 = vmatprep.mubr.bf16.mxu0 0
    %192 = vmatmul.mubr.bf16.gmra.mxu0 %v157
    %v193 = vpop.f32.mrf.mxu0
    %v194 = vadd.f32 %v128, %v193
    %v195 = vpop.f32.mrf.mxu0
    %v196 = vadd.f32 %v132, %v195
    %v197 = vpop.f32.mrf.mxu0
    %v198 = vadd.f32 %v128, %v197
    %v199 = vpop.f32.mrf.mxu0
    %v200 = vadd.f32 %v132, %v199
    %201 = vdwg.mxu0
    %v202 = vmax.f32 %v194, 0.0
    %v203 = vmax.f32 %v196, 0.0
    %v204 = vmax.f32 %v198, 0.0
    %v205 = vmax.f32 %v200, 0.0
    %v206 = vpack.c.bf16 %v204, %v202
    %v207 = vpack.c.bf16 %v205, %v203
    %v208 = vld [vmem:[#allocation7] sm:$0xff]
    %v209 = vld [vmem:[#allocation7 + $0x8] sm:$0xff]
    %v210 = vld [vmem:[#allocation7 + $0x10] sm:$0xff]
    %v211 = vld [vmem:[#allocation7 + $0x18] sm:$0xff]
    %v212 = vld [vmem:[#allocation7 + $0x20] sm:$0xff]
    %v213 = vld [vmem:[#allocation7 + $0x28] sm:$0xff]
    %v214 = vld [vmem:[#allocation7 + $0x30] sm:$0xff]
    %v215 = vld [vmem:[#allocation7 + $0x38] sm:$0xff]
    %v216 = vld [vmem:[#allocation7 + $0x40] sm:$0xff]
    %v217 = vld [vmem:[#allocation7 + $0x48] sm:$0xff]
    %v218 = vld [vmem:[#allocation7 + $0x50] sm:$0xff]
    %v219 = vld [vmem:[#allocation7 + $0x58] sm:$0xff]
    %v220 = vld [vmem:[#allocation7 + $0x60] sm:$0xff]
    %v221 = vld [vmem:[#allocation7 + $0x68] sm:$0xff]
    %v222 = vld [vmem:[#allocation7 + $0x70] sm:$0xff]
    %v223 = vld [vmem:[#allocation7 + $0x78] sm:$0xff]
    %v224 = vld [vmem:[#allocation7 + $0x80] sm:$0xff]
    %v225 = vld [vmem:[#allocation7 + $0x88] sm:$0xff]
    %v226 = vld [vmem:[#allocation7 + $0x90] sm:$0xff]
    %v227 = vld [vmem:[#allocation7 + $0x98] sm:$0xff]
    %v228 = vld [vmem:[#allocation7 + $0xa0] sm:$0xff]
    %v229 = vld [vmem:[#allocation7 + $0xa8] sm:$0xff]
    %v230 = vld [vmem:[#allocation7 + $0xb0] sm:$0xff]
    %v231 = vld [vmem:[#allocation7 + $0xb8] sm:$0xff]
    %v232 = vld [vmem:[#allocation7 + $0xc0] sm:$0xff]
    %v233 = vld [vmem:[#allocation7 + $0xc8] sm:$0xff]
    %v234 = vld [vmem:[#allocation7 + $0xd0] sm:$0xff]
    %v235 = vld [vmem:[#allocation7 + $0xd8] sm:$0xff]
    %v236 = vld [vmem:[#allocation7 + $0xe0] sm:$0xff]
    %v237 = vld [vmem:[#allocation7 + $0xe8] sm:$0xff]
    %v238 = vld [vmem:[#allocation7 + $0xf0] sm:$0xff]
    %v239 = vld [vmem:[#allocation7 + $0xf8] sm:$0xff]
    %v240 = vld [vmem:[#allocation7 + $0x100] sm:$0xff]
    %v241 = vld [vmem:[#allocation7 + $0x108] sm:$0xff]
    %v242 = vld [vmem:[#allocation7 + $0x110] sm:$0xff]
    %v243 = vld [vmem:[#allocation7 + $0x118] sm:$0xff]
    %v244 = vld [vmem:[#allocation7 + $0x120] sm:$0xff]
    %v245 = vld [vmem:[#allocation7 + $0x128] sm:$0xff]
    %v246 = vld [vmem:[#allocation7 + $0x130] sm:$0xff]
    %v247 = vld [vmem:[#allocation7 + $0x138] sm:$0xff]
    %v248 = vld [vmem:[#allocation7 + $0x140] sm:$0xff]
    %v249 = vld [vmem:[#allocation7 + $0x148] sm:$0xff]
    %v250 = vld [vmem:[#allocation7 + $0x150] sm:$0xff]
    %v251 = vld [vmem:[#allocation7 + $0x158] sm:$0xff]
    %v252 = vld [vmem:[#allocation7 + $0x160] sm:$0xff]
    %v253 = vld [vmem:[#allocation7 + $0x168] sm:$0xff]
    %v254 = vld [vmem:[#allocation7 + $0x170] sm:$0xff]
    %v255 = vld [vmem:[#allocation7 + $0x178] sm:$0xff]
    %v256 = vld [vmem:[#allocation7 + $0x180] sm:$0xff]
    %v257 = vld [vmem:[#allocation7 + $0x188] sm:$0xff]
    %v258 = vld [vmem:[#allocation7 + $0x190] sm:$0xff]
    %v259 = vld [vmem:[#allocation7 + $0x198] sm:$0xff]
    %v260 = vld [vmem:[#allocation7 + $0x1a0] sm:$0xff]
    %v261 = vld [vmem:[#allocation7 + $0x1a8] sm:$0xff]
    %v262 = vld [vmem:[#allocation7 + $0x1b0] sm:$0xff]
    %v263 = vld [vmem:[#allocation7 + $0x1b8] sm:$0xff]
    %v264 = vld [vmem:[#allocation7 + $0x1c0] sm:$0xff]
    %v265 = vld [vmem:[#allocation7 + $0x1c8] sm:$0xff]
    %v266 = vld [vmem:[#allocation7 + $0x1d0] sm:$0xff]
    %v267 = vld [vmem:[#allocation7 + $0x1d8] sm:$0xff]
    %v268 = vld [vmem:[#allocation7 + $0x1e0] sm:$0xff]
    %v269 = vld [vmem:[#allocation7 + $0x1e8] sm:$0xff]
    %v270 = vld [vmem:[#allocation7 + $0x1f0] sm:$0xff]
    %v271 = vld [vmem:[#allocation7 + $0x1f8] sm:$0xff]
    %v272 = vld [vmem:[#allocation9] sm:$0xf]
    %v274 = vlaneseq
    %v275 = vshrl.u32 %v274, 7
    %v276 = vsub.s32 0, %v275
    %v277 = vrot.slane %v272, %v276
    %v278 = vlaneseq
    %v279 = vshrl.u32 %v278, 7
    %v280 = vsub.s32 1, %v279
    %v281 = vrot.slane %v272, %v280
    %v282 = vlaneseq
    %v283 = vshrl.u32 %v282, 7
    %v284 = vsub.s32 2, %v283
    %v285 = vrot.slane %v272, %v284
    %v286 = vlaneseq
    %v287 = vshrl.u32 %v286, 7
    %v288 = vsub.s32 3, %v287
    %v289 = vrot.slane %v272, %v288
    %v358 = vunpack.c.l.b16 %v208
    %v359 = vunpack.c.h.b16 %v208
    %v360 = vunpack.c.l.b16 %v209
    %v361 = vunpack.c.h.b16 %v209
    %v362 = vunpack.c.l.b16 %v210
    %v363 = vunpack.c.h.b16 %v210
    %v364 = vunpack.c.l.b16 %v211
    %v365 = vunpack.c.h.b16 %v211
    %v366 = vunpack.c.l.b16 %v212
    %v367 = vunpack.c.h.b16 %v212
    %v368 = vunpack.c.l.b16 %v213
    %v369 = vunpack.c.h.b16 %v213
    %v370 = vunpack.c.l.b16 %v214
    %v371 = vunpack.c.h.b16 %v214
    %v372 = vunpack.c.l.b16 %v215
    %v373 = vunpack.c.h.b16 %v215
    %v374 = vunpack.c.l.b16 %v216
    %v375 = vunpack.c.h.b16 %v216
    %v376 = vunpack.c.l.b16 %v217
    %v377 = vunpack.c.h.b16 %v217
    %v378 = vunpack.c.l.b16 %v218
    %v379 = vunpack.c.h.b16 %v218
    %v380 = vunpack.c.l.b16 %v219
    %v381 = vunpack.c.h.b16 %v219
    %v382 = vunpack.c.l.b16 %v220
    %v383 = vunpack.c.h.b16 %v220
    %v384 = vunpack.c.l.b16 %v221
    %v385 = vunpack.c.h.b16 %v221
    %v386 = vunpack.c.l.b16 %v222
    %v387 = vunpack.c.h.b16 %v222
    %v388 = vunpack.c.l.b16 %v223
    %v389 = vunpack.c.h.b16 %v223
    %v390 = vunpack.c.l.b16 %v224
    %v391 = vunpack.c.h.b16 %v224
    %v392 = vunpack.c.l.b16 %v225
    %v393 = vunpack.c.h.b16 %v225
    %v394 = vunpack.c.l.b16 %v226
    %v395 = vunpack.c.h.b16 %v226
    %v396 = vunpack.c.l.b16 %v227
    %v397 = vunpack.c.h.b16 %v227
    %v398 = vunpack.c.l.b16 %v228
    %v399 = vunpack.c.h.b16 %v228
    %v400 = vunpack.c.l.b16 %v229
    %v401 = vunpack.c.h.b16 %v229
    %v402 = vunpack.c.l.b16 %v230
    %v403 = vunpack.c.h.b16 %v230
    %v404 = vunpack.c.l.b16 %v231
    %v405 = vunpack.c.h.b16 %v231
    %v406 = vunpack.c.l.b16 %v232
    %v407 = vunpack.c.h.b16 %v232
    %v408 = vunpack.c.l.b16 %v233
    %v409 = vunpack.c.h.b16 %v233
    %v410 = vunpack.c.l.b16 %v234
    %v411 = vunpack.c.h.b16 %v234
    %v412 = vunpack.c.l.b16 %v235
    %v413 = vunpack.c.h.b16 %v235
    %v414 = vunpack.c.l.b16 %v236
    %v415 = vunpack.c.h.b16 %v236
    %v416 = vunpack.c.l.b16 %v237
    %v417 = vunpack.c.h.b16 %v237
    %v418 = vunpack.c.l.b16 %v238
    %v419 = vunpack.c.h.b16 %v238
    %v420 = vunpack.c.l.b16 %v239
    %v421 = vunpack.c.h.b16 %v239
    %v422 = vunpack.c.l.b16 %v240
    %v423 = vunpack.c.h.b16 %v240
    %v424 = vunpack.c.l.b16 %v241
    %v425 = vunpack.c.h.b16 %v241
    %v426 = vunpack.c.l.b16 %v242
    %v427 = vunpack.c.h.b16 %v242
    %v428 = vunpack.c.l.b16 %v243
    %v429 = vunpack.c.h.b16 %v243
    %v430 = vunpack.c.l.b16 %v244
    %v431 = vunpack.c.h.b16 %v244
    %v432 = vunpack.c.l.b16 %v245
    %v433 = vunpack.c.h.b16 %v245
    %v434 = vunpack.c.l.b16 %v246
    %v435 = vunpack.c.h.b16 %v246
    %v436 = vunpack.c.l.b16 %v247
    %v437 = vunpack.c.h.b16 %v247
    %v438 = vunpack.c.l.b16 %v248
    %v439 = vunpack.c.h.b16 %v248
    %v440 = vunpack.c.l.b16 %v249
    %v441 = vunpack.c.h.b16 %v249
    %v442 = vunpack.c.l.b16 %v250
    %v443 = vunpack.c.h.b16 %v250
    %v444 = vunpack.c.l.b16 %v251
    %v445 = vunpack.c.h.b16 %v251
    %v446 = vunpack.c.l.b16 %v252
    %v447 = vunpack.c.h.b16 %v252
    %v448 = vunpack.c.l.b16 %v253
    %v449 = vunpack.c.h.b16 %v253
    %v450 = vunpack.c.l.b16 %v254
    %v451 = vunpack.c.h.b16 %v254
    %v452 = vunpack.c.l.b16 %v255
    %v453 = vunpack.c.h.b16 %v255
    %v454 = vunpack.c.l.b16 %v256
    %v455 = vunpack.c.h.b16 %v256
    %v456 = vunpack.c.l.b16 %v257
    %v457 = vunpack.c.h.b16 %v257
    %v458 = vunpack.c.l.b16 %v258
    %v459 = vunpack.c.h.b16 %v258
    %v460 = vunpack.c.l.b16 %v259
    %v461 = vunpack.c.h.b16 %v259
    %v462 = vunpack.c.l.b16 %v260
    %v463 = vunpack.c.h.b16 %v260
    %v464 = vunpack.c.l.b16 %v261
    %v465 = vunpack.c.h.b16 %v261
    %v466 = vunpack.c.l.b16 %v262
    %v467 = vunpack.c.h.b16 %v262
    %v468 = vunpack.c.l.b16 %v263
    %v469 = vunpack.c.h.b16 %v263
    %v470 = vunpack.c.l.b16 %v264
    %v471 = vunpack.c.h.b16 %v264
    %v472 = vunpack.c.l.b16 %v265
    %v473 = vunpack.c.h.b16 %v265
    %v474 = vunpack.c.l.b16 %v266
    %v475 = vunpack.c.h.b16 %v266
    %v476 = vunpack.c.l.b16 %v267
    %v477 = vunpack.c.h.b16 %v267
    %v478 = vunpack.c.l.b16 %v268
    %v479 = vunpack.c.h.b16 %v268
    %v480 = vunpack.c.l.b16 %v269
    %v481 = vunpack.c.h.b16 %v269
    %v482 = vunpack.c.l.b16 %v270
    %v483 = vunpack.c.h.b16 %v270
    %v484 = vunpack.c.l.b16 %v271
    %v485 = vunpack.c.h.b16 %v271
    %v486 = vpack.c.b16 %v362, %v358
    %v487 = vpack.c.b16 %v363, %v359
    %v488 = vpack.c.b16 %v364, %v360
    %v489 = vpack.c.b16 %v365, %v361
    %v490 = vpack.c.b16 %v370, %v366
    %v491 = vpack.c.b16 %v371, %v367
    %v492 = vpack.c.b16 %v372, %v368
    %v493 = vpack.c.b16 %v373, %v369
    %v494 = vpack.c.b16 %v378, %v374
    %v495 = vpack.c.b16 %v379, %v375
    %v496 = vpack.c.b16 %v380, %v376
    %v497 = vpack.c.b16 %v381, %v377
    %v498 = vpack.c.b16 %v386, %v382
    %v499 = vpack.c.b16 %v387, %v383
    %v500 = vpack.c.b16 %v388, %v384
    %v501 = vpack.c.b16 %v389, %v385
    %v502 = vpack.c.b16 %v394, %v390
    %v503 = vpack.c.b16 %v395, %v391
    %v504 = vpack.c.b16 %v396, %v392
    %v505 = vpack.c.b16 %v397, %v393
    %v506 = vpack.c.b16 %v402, %v398
    %v507 = vpack.c.b16 %v403, %v399
    %v508 = vpack.c.b16 %v404, %v400
    %v509 = vpack.c.b16 %v405, %v401
    %v510 = vpack.c.b16 %v410, %v406
    %v511 = vpack.c.b16 %v411, %v407
    %v512 = vpack.c.b16 %v412, %v408
    %v513 = vpack.c.b16 %v413, %v409
    %v514 = vpack.c.b16 %v418, %v414
    %v515 = vpack.c.b16 %v419, %v415
    %v516 = vpack.c.b16 %v420, %v416
    %v517 = vpack.c.b16 %v421, %v417
    %v518 = vpack.c.b16 %v426, %v422
    %v519 = vpack.c.b16 %v427, %v423
    %v520 = vpack.c.b16 %v428, %v424
    %v521 = vpack.c.b16 %v429, %v425
    %v522 = vpack.c.b16 %v434, %v430
    %v523 = vpack.c.b16 %v435, %v431
    %v524 = vpack.c.b16 %v436, %v432
    %v525 = vpack.c.b16 %v437, %v433
    %v526 = vpack.c.b16 %v442, %v438
    %v527 = vpack.c.b16 %v443, %v439
    %v528 = vpack.c.b16 %v444, %v440
    %v529 = vpack.c.b16 %v445, %v441
    %v530 = vpack.c.b16 %v450, %v446
    %v531 = vpack.c.b16 %v451, %v447
    %v532 = vpack.c.b16 %v452, %v448
    %v533 = vpack.c.b16 %v453, %v449
    %v534 = vpack.c.b16 %v458, %v454
    %v535 = vpack.c.b16 %v459, %v455
    %v536 = vpack.c.b16 %v460, %v456
    %v537 = vpack.c.b16 %v461, %v457
    %v538 = vpack.c.b16 %v466, %v462
    %v539 = vpack.c.b16 %v467, %v463
    %v540 = vpack.c.b16 %v468, %v464
    %v541 = vpack.c.b16 %v469, %v465
    %v542 = vpack.c.b16 %v474, %v470
    %v543 = vpack.c.b16 %v475, %v471
    %v544 = vpack.c.b16 %v476, %v472
    %v545 = vpack.c.b16 %v477, %v473
    %v546 = vpack.c.b16 %v482, %v478
    %v547 = vpack.c.b16 %v483, %v479
    %v548 = vpack.c.b16 %v484, %v480
    %v549 = vpack.c.b16 %v485, %v481
    %614 = vmatprep.subr.bf16.mxu0 %v515
    %615 = vmatpush1.bf16.msra.mxu0 %v514
    %616 = vmatprep.subr.bf16.mxu0 %v511
    %617 = vmatpush1.bf16.msra.mxu0 %v510
    %618 = vmatprep.subr.bf16.mxu0 %v507
    %619 = vmatpush1.bf16.msra.mxu0 %v506
    %620 = vmatprep.subr.bf16.mxu0 %v503
    %621 = vmatpush1.bf16.msra.mxu0 %v502
    %622 = vmatprep.subr.bf16.mxu0 %v499
    %623 = vmatpush1.bf16.msra.mxu0 %v498
    %624 = vmatprep.subr.bf16.mxu0 %v495
    %625 = vmatpush1.bf16.msra.mxu0 %v494
    %626 = vmatprep.subr.bf16.mxu0 %v491
    %627 = vmatpush1.bf16.msra.mxu0 %v490
    %628 = vmatprep.subr.bf16.mxu0 %v487
    %629 = vmatpush1.bf16.msra.mxu0 %v486
    %630 = vmatprep.subr.bf16.mxu0 %v547
    %631 = vmatpush2.bf16.msra.mxu0 %v546
    %632 = vmatprep.subr.bf16.mxu0 %v543
    %633 = vmatpush2.bf16.msra.mxu0 %v542
    %634 = vmatprep.subr.bf16.mxu0 %v539
    %635 = vmatpush2.bf16.msra.mxu0 %v538
    %636 = vmatprep.subr.bf16.mxu0 %v535
    %637 = vmatpush2.bf16.msra.mxu0 %v534
    %638 = vmatprep.subr.bf16.mxu0 %v531
    %639 = vmatpush2.bf16.msra.mxu0 %v530
    %640 = vmatprep.subr.bf16.mxu0 %v527
    %641 = vmatpush2.bf16.msra.mxu0 %v526
    %642 = vmatprep.subr.bf16.mxu0 %v523
    %643 = vmatpush2.bf16.msra.mxu0 %v522
    %644 = vmatprep.subr.bf16.mxu0 %v519
    %645 = vmatpush2.bf16.msra.mxu0 %v518
    %646 = vmatprep.mubr.bf16.mxu0 %v207
    %647 = vmatmul.mubr.bf16.gmra.mxu0 %v206
    %v648 = vpop.f32.mrf.mxu0
    %v649 = vadd.f32 %v277, %v648
    %v650 = vpop.f32.mrf.mxu0
    %v651 = vadd.f32 %v281, %v650
    %v652 = vpop.f32.mrf.mxu0
    %v653 = vadd.f32 %v277, %v652
    %v654 = vpop.f32.mrf.mxu0
    %v655 = vadd.f32 %v281, %v654
    %656 = vdwg.mxu0
    %657 = vmatprep.subr.bf16.mxu0 %v517
    %658 = vmatpush1.bf16.msra.mxu0 %v516
    %659 = vmatprep.subr.bf16.mxu0 %v513
    %660 = vmatpush1.bf16.msra.mxu0 %v512
    %661 = vmatprep.subr.bf16.mxu0 %v509
    %662 = vmatpush1.bf16.msra.mxu0 %v508
    %663 = vmatprep.subr.bf16.mxu0 %v505
    %664 = vmatpush1.bf16.msra.mxu0 %v504
    %665 = vmatprep.subr.bf16.mxu0 %v501
    %666 = vmatpush1.bf16.msra.mxu0 %v500
    %667 = vmatprep.subr.bf16.mxu0 %v497
    %668 = vmatpush1.bf16.msra.mxu0 %v496
    %669 = vmatprep.subr.bf16.mxu0 %v493
    %670 = vmatpush1.bf16.msra.mxu0 %v492
    %671 = vmatprep.subr.bf16.mxu0 %v489
    %672 = vmatpush1.bf16.msra.mxu0 %v488
    %673 = vmatprep.subr.bf16.mxu0 %v549
    %674 = vmatpush2.bf16.msra.mxu0 %v548
    %675 = vmatprep.subr.bf16.mxu0 %v545
    %676 = vmatpush2.bf16.msra.mxu0 %v544
    %677 = vmatprep.subr.bf16.mxu0 %v541
    %678 = vmatpush2.bf16.msra.mxu0 %v540
    %679 = vmatprep.subr.bf16.mxu0 %v537
    %680 = vmatpush2.bf16.msra.mxu0 %v536
    %681 = vmatprep.subr.bf16.mxu0 %v533
    %682 = vmatpush2.bf16.msra.mxu0 %v532
    %683 = vmatprep.subr.bf16.mxu0 %v529
    %684 = vmatpush2.bf16.msra.mxu0 %v528
    %685 = vmatprep.subr.bf16.mxu0 %v525
    %686 = vmatpush2.bf16.msra.mxu0 %v524
    %687 = vmatprep.subr.bf16.mxu0 %v521
    %688 = vmatpush2.bf16.msra.mxu0 %v520
    %689 = vmatprep.mubr.bf16.mxu0 %v207
    %690 = vmatmul.mubr.bf16.gmra.mxu0 %v206
    %v691 = vpop.f32.mrf.mxu0
    %v692 = vadd.f32 %v285, %v691
    %v693 = vpop.f32.mrf.mxu0
    %v694 = vadd.f32 %v289, %v693
    %v695 = vpop.f32.mrf.mxu0
    %v696 = vadd.f32 %v285, %v695
    %v697 = vpop.f32.mrf.mxu0
    %v698 = vadd.f32 %v289, %v697
    %699 = vdwg.mxu0
    %v700 = vmax.f32 %v649, 0.0
    %v701 = vmax.f32 %v651, 0.0
    %v702 = vmax.f32 %v692, 0.0
    %v703 = vmax.f32 %v694, 0.0
    %v704 = vmax.f32 %v653, 0.0
    %v705 = vmax.f32 %v655, 0.0
    %v706 = vmax.f32 %v696, 0.0
    %v707 = vmax.f32 %v698, 0.0
    %v708 = vpack.c.bf16 %v704, %v700
    %v709 = vpack.c.bf16 %v705, %v701
    %v710 = vpack.c.bf16 %v706, %v702
    %v711 = vpack.c.bf16 %v707, %v703
    %v712 = vld [vmem:[#allocation10] sm:$0xff]
    %v713 = vld [vmem:[#allocation10 + $0x8] sm:$0xff]
    %v714 = vld [vmem:[#allocation10 + $0x10] sm:$0xff]
    %v715 = vld [vmem:[#allocation10 + $0x18] sm:$0xff]
    %v716 = vld [vmem:[#allocation10 + $0x20] sm:$0xff]
    %v717 = vld [vmem:[#allocation10 + $0x28] sm:$0xff]
    %v718 = vld [vmem:[#allocation10 + $0x30] sm:$0xff]
    %v719 = vld [vmem:[#allocation10 + $0x38] sm:$0xff]
    %v720 = vld [vmem:[#allocation10 + $0x40] sm:$0xff]
    %v721 = vld [vmem:[#allocation10 + $0x48] sm:$0xff]
    %v722 = vld [vmem:[#allocation10 + $0x50] sm:$0xff]
    %v723 = vld [vmem:[#allocation10 + $0x58] sm:$0xff]
    %v724 = vld [vmem:[#allocation10 + $0x60] sm:$0xff]
    %v725 = vld [vmem:[#allocation10 + $0x68] sm:$0xff]
    %v726 = vld [vmem:[#allocation10 + $0x70] sm:$0xff]
    %v727 = vld [vmem:[#allocation10 + $0x78] sm:$0xff]
    %v728 = vld [vmem:[#allocation10 + $0x80] sm:$0xff]
    %v729 = vld [vmem:[#allocation10 + $0x88] sm:$0xff]
    %v730 = vld [vmem:[#allocation10 + $0x90] sm:$0xff]
    %v731 = vld [vmem:[#allocation10 + $0x98] sm:$0xff]
    %v732 = vld [vmem:[#allocation10 + $0xa0] sm:$0xff]
    %v733 = vld [vmem:[#allocation10 + $0xa8] sm:$0xff]
    %v734 = vld [vmem:[#allocation10 + $0xb0] sm:$0xff]
    %v735 = vld [vmem:[#allocation10 + $0xb8] sm:$0xff]
    %v736 = vld [vmem:[#allocation10 + $0xc0] sm:$0xff]
    %v737 = vld [vmem:[#allocation10 + $0xc8] sm:$0xff]
    %v738 = vld [vmem:[#allocation10 + $0xd0] sm:$0xff]
    %v739 = vld [vmem:[#allocation10 + $0xd8] sm:$0xff]
    %v740 = vld [vmem:[#allocation10 + $0xe0] sm:$0xff]
    %v741 = vld [vmem:[#allocation10 + $0xe8] sm:$0xff]
    %v742 = vld [vmem:[#allocation10 + $0xf0] sm:$0xff]
    %v743 = vld [vmem:[#allocation10 + $0xf8] sm:$0xff]
    %v744 = vld [vmem:[#allocation10 + $0x100] sm:$0xff]
    %v745 = vld [vmem:[#allocation10 + $0x108] sm:$0xff]
    %v746 = vld [vmem:[#allocation10 + $0x110] sm:$0xff]
    %v747 = vld [vmem:[#allocation10 + $0x118] sm:$0xff]
    %v748 = vld [vmem:[#allocation10 + $0x120] sm:$0xff]
    %v749 = vld [vmem:[#allocation10 + $0x128] sm:$0xff]
    %v750 = vld [vmem:[#allocation10 + $0x130] sm:$0xff]
    %v751 = vld [vmem:[#allocation10 + $0x138] sm:$0xff]
    %v752 = vld [vmem:[#allocation10 + $0x140] sm:$0xff]
    %v753 = vld [vmem:[#allocation10 + $0x148] sm:$0xff]
    %v754 = vld [vmem:[#allocation10 + $0x150] sm:$0xff]
    %v755 = vld [vmem:[#allocation10 + $0x158] sm:$0xff]
    %v756 = vld [vmem:[#allocation10 + $0x160] sm:$0xff]
    %v757 = vld [vmem:[#allocation10 + $0x168] sm:$0xff]
    %v758 = vld [vmem:[#allocation10 + $0x170] sm:$0xff]
    %v759 = vld [vmem:[#allocation10 + $0x178] sm:$0xff]
    %v760 = vld [vmem:[#allocation10 + $0x180] sm:$0xff]
    %v761 = vld [vmem:[#allocation10 + $0x188] sm:$0xff]
    %v762 = vld [vmem:[#allocation10 + $0x190] sm:$0xff]
    %v763 = vld [vmem:[#allocation10 + $0x198] sm:$0xff]
    %v764 = vld [vmem:[#allocation10 + $0x1a0] sm:$0xff]
    %v765 = vld [vmem:[#allocation10 + $0x1a8] sm:$0xff]
    %v766 = vld [vmem:[#allocation10 + $0x1b0] sm:$0xff]
    %v767 = vld [vmem:[#allocation10 + $0x1b8] sm:$0xff]
    %v768 = vld [vmem:[#allocation10 + $0x1c0] sm:$0xff]
    %v769 = vld [vmem:[#allocation10 + $0x1c8] sm:$0xff]
    %v770 = vld [vmem:[#allocation10 + $0x1d0] sm:$0xff]
    %v771 = vld [vmem:[#allocation10 + $0x1d8] sm:$0xff]
    %v772 = vld [vmem:[#allocation10 + $0x1e0] sm:$0xff]
    %v773 = vld [vmem:[#allocation10 + $0x1e8] sm:$0xff]
    %v774 = vld [vmem:[#allocation10 + $0x1f0] sm:$0xff]
    %v775 = vld [vmem:[#allocation10 + $0x1f8] sm:$0xff]
    %v776 = vld [vmem:[#allocation10 + $0x200] sm:$0xff]
    %v777 = vld [vmem:[#allocation10 + $0x208] sm:$0xff]
    %v778 = vld [vmem:[#allocation10 + $0x210] sm:$0xff]
    %v779 = vld [vmem:[#allocation10 + $0x218] sm:$0xff]
    %v780 = vld [vmem:[#allocation10 + $0x220] sm:$0xff]
    %v781 = vld [vmem:[#allocation10 + $0x228] sm:$0xff]
    %v782 = vld [vmem:[#allocation10 + $0x230] sm:$0xff]
    %v783 = vld [vmem:[#allocation10 + $0x238] sm:$0xff]
    %v784 = vld [vmem:[#allocation10 + $0x240] sm:$0xff]
    %v785 = vld [vmem:[#allocation10 + $0x248] sm:$0xff]
    %v786 = vld [vmem:[#allocation10 + $0x250] sm:$0xff]
    %v787 = vld [vmem:[#allocation10 + $0x258] sm:$0xff]
    %v788 = vld [vmem:[#allocation10 + $0x260] sm:$0xff]
    %v789 = vld [vmem:[#allocation10 + $0x268] sm:$0xff]
    %v790 = vld [vmem:[#allocation10 + $0x270] sm:$0xff]
    %v791 = vld [vmem:[#allocation10 + $0x278] sm:$0xff]
    %v792 = vld [vmem:[#allocation10 + $0x280] sm:$0xff]
    %v793 = vld [vmem:[#allocation10 + $0x288] sm:$0xff]
    %v794 = vld [vmem:[#allocation10 + $0x290] sm:$0xff]
    %v795 = vld [vmem:[#allocation10 + $0x298] sm:$0xff]
    %v796 = vld [vmem:[#allocation10 + $0x2a0] sm:$0xff]
    %v797 = vld [vmem:[#allocation10 + $0x2a8] sm:$0xff]
    %v798 = vld [vmem:[#allocation10 + $0x2b0] sm:$0xff]
    %v799 = vld [vmem:[#allocation10 + $0x2b8] sm:$0xff]
    %v800 = vld [vmem:[#allocation10 + $0x2c0] sm:$0xff]
    %v801 = vld [vmem:[#allocation10 + $0x2c8] sm:$0xff]
    %v802 = vld [vmem:[#allocation10 + $0x2d0] sm:$0xff]
    %v803 = vld [vmem:[#allocation10 + $0x2d8] sm:$0xff]
    %v804 = vld [vmem:[#allocation10 + $0x2e0] sm:$0xff]
    %v805 = vld [vmem:[#allocation10 + $0x2e8] sm:$0xff]
    %v806 = vld [vmem:[#allocation10 + $0x2f0] sm:$0xff]
    %v807 = vld [vmem:[#allocation10 + $0x2f8] sm:$0xff]
    %v808 = vld [vmem:[#allocation10 + $0x300] sm:$0xff]
    %v809 = vld [vmem:[#allocation10 + $0x308] sm:$0xff]
    %v810 = vld [vmem:[#allocation10 + $0x310] sm:$0xff]
    %v811 = vld [vmem:[#allocation10 + $0x318] sm:$0xff]
    %v812 = vld [vmem:[#allocation10 + $0x320] sm:$0xff]
    %v813 = vld [vmem:[#allocation10 + $0x328] sm:$0xff]
    %v814 = vld [vmem:[#allocation10 + $0x330] sm:$0xff]
    %v815 = vld [vmem:[#allocation10 + $0x338] sm:$0xff]
    %v816 = vld [vmem:[#allocation10 + $0x340] sm:$0xff]
    %v817 = vld [vmem:[#allocation10 + $0x348] sm:$0xff]
    %v818 = vld [vmem:[#allocation10 + $0x350] sm:$0xff]
    %v819 = vld [vmem:[#allocation10 + $0x358] sm:$0xff]
    %v820 = vld [vmem:[#allocation10 + $0x360] sm:$0xff]
    %v821 = vld [vmem:[#allocation10 + $0x368] sm:$0xff]
    %v822 = vld [vmem:[#allocation10 + $0x370] sm:$0xff]
    %v823 = vld [vmem:[#allocation10 + $0x378] sm:$0xff]
    %v824 = vld [vmem:[#allocation10 + $0x380] sm:$0xff]
    %v825 = vld [vmem:[#allocation10 + $0x388] sm:$0xff]
    %v826 = vld [vmem:[#allocation10 + $0x390] sm:$0xff]
    %v827 = vld [vmem:[#allocation10 + $0x398] sm:$0xff]
    %v828 = vld [vmem:[#allocation10 + $0x3a0] sm:$0xff]
    %v829 = vld [vmem:[#allocation10 + $0x3a8] sm:$0xff]
    %v830 = vld [vmem:[#allocation10 + $0x3b0] sm:$0xff]
    %v831 = vld [vmem:[#allocation10 + $0x3b8] sm:$0xff]
    %v832 = vld [vmem:[#allocation10 + $0x3c0] sm:$0xff]
    %v833 = vld [vmem:[#allocation10 + $0x3c8] sm:$0xff]
    %v834 = vld [vmem:[#allocation10 + $0x3d0] sm:$0xff]
    %v835 = vld [vmem:[#allocation10 + $0x3d8] sm:$0xff]
    %v836 = vld [vmem:[#allocation10 + $0x3e0] sm:$0xff]
    %v837 = vld [vmem:[#allocation10 + $0x3e8] sm:$0xff]
    %v838 = vld [vmem:[#allocation10 + $0x3f0] sm:$0xff]
    %v839 = vld [vmem:[#allocation10 + $0x3f8] sm:$0xff]
    %v840 = vld [vmem:[#allocation10 + $0x400] sm:$0xff]
    %v841 = vld [vmem:[#allocation10 + $0x408] sm:$0xff]
    %v842 = vld [vmem:[#allocation10 + $0x410] sm:$0xff]
    %v843 = vld [vmem:[#allocation10 + $0x418] sm:$0xff]
    %v844 = vld [vmem:[#allocation10 + $0x420] sm:$0xff]
    %v845 = vld [vmem:[#allocation10 + $0x428] sm:$0xff]
    %v846 = vld [vmem:[#allocation10 + $0x430] sm:$0xff]
    %v847 = vld [vmem:[#allocation10 + $0x438] sm:$0xff]
    %v848 = vld [vmem:[#allocation10 + $0x440] sm:$0xff]
    %v849 = vld [vmem:[#allocation10 + $0x448] sm:$0xff]
    %v850 = vld [vmem:[#allocation10 + $0x450] sm:$0xff]
    %v851 = vld [vmem:[#allocation10 + $0x458] sm:$0xff]
    %v852 = vld [vmem:[#allocation10 + $0x460] sm:$0xff]
    %v853 = vld [vmem:[#allocation10 + $0x468] sm:$0xff]
    %v854 = vld [vmem:[#allocation10 + $0x470] sm:$0xff]
    %v855 = vld [vmem:[#allocation10 + $0x478] sm:$0xff]
    %v856 = vld [vmem:[#allocation10 + $0x480] sm:$0xff]
    %v857 = vld [vmem:[#allocation10 + $0x488] sm:$0xff]
    %v858 = vld [vmem:[#allocation10 + $0x490] sm:$0xff]
    %v859 = vld [vmem:[#allocation10 + $0x498] sm:$0xff]
    %v860 = vld [vmem:[#allocation10 + $0x4a0] sm:$0xff]
    %v861 = vld [vmem:[#allocation10 + $0x4a8] sm:$0xff]
    %v862 = vld [vmem:[#allocation10 + $0x4b0] sm:$0xff]
    %v863 = vld [vmem:[#allocation10 + $0x4b8] sm:$0xff]
    %v864 = vld [vmem:[#allocation10 + $0x4c0] sm:$0xff]
    %v865 = vld [vmem:[#allocation10 + $0x4c8] sm:$0xff]
    %v866 = vld [vmem:[#allocation10 + $0x4d0] sm:$0xff]
    %v867 = vld [vmem:[#allocation10 + $0x4d8] sm:$0xff]
    %v868 = vld [vmem:[#allocation10 + $0x4e0] sm:$0xff]
    %v869 = vld [vmem:[#allocation10 + $0x4e8] sm:$0xff]
    %v870 = vld [vmem:[#allocation10 + $0x4f0] sm:$0xff]
    %v871 = vld [vmem:[#allocation10 + $0x4f8] sm:$0xff]
    %v872 = vld [vmem:[#allocation10 + $0x500] sm:$0xff]
    %v873 = vld [vmem:[#allocation10 + $0x508] sm:$0xff]
    %v874 = vld [vmem:[#allocation10 + $0x510] sm:$0xff]
    %v875 = vld [vmem:[#allocation10 + $0x518] sm:$0xff]
    %v876 = vld [vmem:[#allocation10 + $0x520] sm:$0xff]
    %v877 = vld [vmem:[#allocation10 + $0x528] sm:$0xff]
    %v878 = vld [vmem:[#allocation10 + $0x530] sm:$0xff]
    %v879 = vld [vmem:[#allocation10 + $0x538] sm:$0xff]
    %v880 = vld [vmem:[#allocation10 + $0x540] sm:$0xff]
    %v881 = vld [vmem:[#allocation10 + $0x548] sm:$0xff]
    %v882 = vld [vmem:[#allocation10 + $0x550] sm:$0xff]
    %v883 = vld [vmem:[#allocation10 + $0x558] sm:$0xff]
    %v884 = vld [vmem:[#allocation10 + $0x560] sm:$0xff]
    %v885 = vld [vmem:[#allocation10 + $0x568] sm:$0xff]
    %v886 = vld [vmem:[#allocation10 + $0x570] sm:$0xff]
    %v887 = vld [vmem:[#allocation10 + $0x578] sm:$0xff]
    %v888 = vld [vmem:[#allocation10 + $0x580] sm:$0xff]
    %v889 = vld [vmem:[#allocation10 + $0x588] sm:$0xff]
    %v890 = vld [vmem:[#allocation10 + $0x590] sm:$0xff]
    %v891 = vld [vmem:[#allocation10 + $0x598] sm:$0xff]
    %v892 = vld [vmem:[#allocation10 + $0x5a0] sm:$0xff]
    %v893 = vld [vmem:[#allocation10 + $0x5a8] sm:$0xff]
    %v894 = vld [vmem:[#allocation10 + $0x5b0] sm:$0xff]
    %v895 = vld [vmem:[#allocation10 + $0x5b8] sm:$0xff]
    %v896 = vld [vmem:[#allocation10 + $0x5c0] sm:$0xff]
    %v897 = vld [vmem:[#allocation10 + $0x5c8] sm:$0xff]
    %v898 = vld [vmem:[#allocation10 + $0x5d0] sm:$0xff]
    %v899 = vld [vmem:[#allocation10 + $0x5d8] sm:$0xff]
    %v900 = vld [vmem:[#allocation10 + $0x5e0] sm:$0xff]
    %v901 = vld [vmem:[#allocation10 + $0x5e8] sm:$0xff]
    %v902 = vld [vmem:[#allocation10 + $0x5f0] sm:$0xff]
    %v903 = vld [vmem:[#allocation10 + $0x5f8] sm:$0xff]
    %v904 = vld [vmem:[#allocation10 + $0x600] sm:$0xff]
    %v905 = vld [vmem:[#allocation10 + $0x608] sm:$0xff]
    %v906 = vld [vmem:[#allocation10 + $0x610] sm:$0xff]
    %v907 = vld [vmem:[#allocation10 + $0x618] sm:$0xff]
    %v908 = vld [vmem:[#allocation10 + $0x620] sm:$0xff]
    %v909 = vld [vmem:[#allocation10 + $0x628] sm:$0xff]
    %v910 = vld [vmem:[#allocation10 + $0x630] sm:$0xff]
    %v911 = vld [vmem:[#allocation10 + $0x638] sm:$0xff]
    %v912 = vld [vmem:[#allocation10 + $0x640] sm:$0xff]
    %v913 = vld [vmem:[#allocation10 + $0x648] sm:$0xff]
    %v914 = vld [vmem:[#allocation10 + $0x650] sm:$0xff]
    %v915 = vld [vmem:[#allocation10 + $0x658] sm:$0xff]
    %v916 = vld [vmem:[#allocation10 + $0x660] sm:$0xff]
    %v917 = vld [vmem:[#allocation10 + $0x668] sm:$0xff]
    %v918 = vld [vmem:[#allocation10 + $0x670] sm:$0xff]
    %v919 = vld [vmem:[#allocation10 + $0x678] sm:$0xff]
    %v920 = vld [vmem:[#allocation10 + $0x680] sm:$0xff]
    %v921 = vld [vmem:[#allocation10 + $0x688] sm:$0xff]
    %v922 = vld [vmem:[#allocation10 + $0x690] sm:$0xff]
    %v923 = vld [vmem:[#allocation10 + $0x698] sm:$0xff]
    %v924 = vld [vmem:[#allocation10 + $0x6a0] sm:$0xff]
    %v925 = vld [vmem:[#allocation10 + $0x6a8] sm:$0xff]
    %v926 = vld [vmem:[#allocation10 + $0x6b0] sm:$0xff]
    %v927 = vld [vmem:[#allocation10 + $0x6b8] sm:$0xff]
    %v928 = vld [vmem:[#allocation10 + $0x6c0] sm:$0xff]
    %v929 = vld [vmem:[#allocation10 + $0x6c8] sm:$0xff]
    %v930 = vld [vmem:[#allocation10 + $0x6d0] sm:$0xff]
    %v931 = vld [vmem:[#allocation10 + $0x6d8] sm:$0xff]
    %v932 = vld [vmem:[#allocation10 + $0x6e0] sm:$0xff]
    %v933 = vld [vmem:[#allocation10 + $0x6e8] sm:$0xff]
    %v934 = vld [vmem:[#allocation10 + $0x6f0] sm:$0xff]
    %v935 = vld [vmem:[#allocation10 + $0x6f8] sm:$0xff]
    %v936 = vld [vmem:[#allocation10 + $0x700] sm:$0xff]
    %v937 = vld [vmem:[#allocation10 + $0x708] sm:$0xff]
    %v938 = vld [vmem:[#allocation10 + $0x710] sm:$0xff]
    %v939 = vld [vmem:[#allocation10 + $0x718] sm:$0xff]
    %v940 = vld [vmem:[#allocation10 + $0x720] sm:$0xff]
    %v941 = vld [vmem:[#allocation10 + $0x728] sm:$0xff]
    %v942 = vld [vmem:[#allocation10 + $0x730] sm:$0xff]
    %v943 = vld [vmem:[#allocation10 + $0x738] sm:$0xff]
    %v944 = vld [vmem:[#allocation10 + $0x740] sm:$0xff]
    %v945 = vld [vmem:[#allocation10 + $0x748] sm:$0xff]
    %v946 = vld [vmem:[#allocation10 + $0x750] sm:$0xff]
    %v947 = vld [vmem:[#allocation10 + $0x758] sm:$0xff]
    %v948 = vld [vmem:[#allocation10 + $0x760] sm:$0xff]
    %v949 = vld [vmem:[#allocation10 + $0x768] sm:$0xff]
    %v950 = vld [vmem:[#allocation10 + $0x770] sm:$0xff]
    %v951 = vld [vmem:[#allocation10 + $0x778] sm:$0xff]
    %v952 = vld [vmem:[#allocation10 + $0x780] sm:$0xff]
    %v953 = vld [vmem:[#allocation10 + $0x788] sm:$0xff]
    %v954 = vld [vmem:[#allocation10 + $0x790] sm:$0xff]
    %v955 = vld [vmem:[#allocation10 + $0x798] sm:$0xff]
    %v956 = vld [vmem:[#allocation10 + $0x7a0] sm:$0xff]
    %v957 = vld [vmem:[#allocation10 + $0x7a8] sm:$0xff]
    %v958 = vld [vmem:[#allocation10 + $0x7b0] sm:$0xff]
    %v959 = vld [vmem:[#allocation10 + $0x7b8] sm:$0xff]
    %v960 = vld [vmem:[#allocation10 + $0x7c0] sm:$0xff]
    %v961 = vld [vmem:[#allocation10 + $0x7c8] sm:$0xff]
    %v962 = vld [vmem:[#allocation10 + $0x7d0] sm:$0xff]
    %v963 = vld [vmem:[#allocation10 + $0x7d8] sm:$0xff]
    %v964 = vld [vmem:[#allocation10 + $0x7e0] sm:$0xff]
    %v965 = vld [vmem:[#allocation10 + $0x7e8] sm:$0xff]
    %v966 = vld [vmem:[#allocation10 + $0x7f0] sm:$0xff]
    %v967 = vld [vmem:[#allocation10 + $0x7f8] sm:$0xff]
    %v968 = vld [vmem:[#allocation10 + $0x800] sm:$0xff]
    %v969 = vld [vmem:[#allocation10 + $0x808] sm:$0xff]
    %v970 = vld [vmem:[#allocation10 + $0x810] sm:$0xff]
    %v971 = vld [vmem:[#allocation10 + $0x818] sm:$0xff]
    %v972 = vld [vmem:[#allocation10 + $0x820] sm:$0xff]
    %v973 = vld [vmem:[#allocation10 + $0x828] sm:$0xff]
    %v974 = vld [vmem:[#allocation10 + $0x830] sm:$0xff]
    %v975 = vld [vmem:[#allocation10 + $0x838] sm:$0xff]
    %v976 = vld [vmem:[#allocation10 + $0x840] sm:$0xff]
    %v977 = vld [vmem:[#allocation10 + $0x848] sm:$0xff]
    %v978 = vld [vmem:[#allocation10 + $0x850] sm:$0xff]
    %v979 = vld [vmem:[#allocation10 + $0x858] sm:$0xff]
    %v980 = vld [vmem:[#allocation10 + $0x860] sm:$0xff]
    %v981 = vld [vmem:[#allocation10 + $0x868] sm:$0xff]
    %v982 = vld [vmem:[#allocation10 + $0x870] sm:$0xff]
    %v983 = vld [vmem:[#allocation10 + $0x878] sm:$0xff]
    %v984 = vld [vmem:[#allocation10 + $0x880] sm:$0xff]
    %v985 = vld [vmem:[#allocation10 + $0x888] sm:$0xff]
    %v986 = vld [vmem:[#allocation10 + $0x890] sm:$0xff]
    %v987 = vld [vmem:[#allocation10 + $0x898] sm:$0xff]
    %v988 = vld [vmem:[#allocation10 + $0x8a0] sm:$0xff]
    %v989 = vld [vmem:[#allocation10 + $0x8a8] sm:$0xff]
    %v990 = vld [vmem:[#allocation10 + $0x8b0] sm:$0xff]
    %v991 = vld [vmem:[#allocation10 + $0x8b8] sm:$0xff]
    %v992 = vld [vmem:[#allocation10 + $0x8c0] sm:$0xff]
    %v993 = vld [vmem:[#allocation10 + $0x8c8] sm:$0xff]
    %v994 = vld [vmem:[#allocation10 + $0x8d0] sm:$0xff]
    %v995 = vld [vmem:[#allocation10 + $0x8d8] sm:$0xff]
    %v996 = vld [vmem:[#allocation10 + $0x8e0] sm:$0xff]
    %v997 = vld [vmem:[#allocation10 + $0x8e8] sm:$0xff]
    %v998 = vld [vmem:[#allocation10 + $0x8f0] sm:$0xff]
    %v999 = vld [vmem:[#allocation10 + $0x8f8] sm:$0xff]
    %v1000 = vld [vmem:[#allocation10 + $0x900] sm:$0xff]
    %v1001 = vld [vmem:[#allocation10 + $0x908] sm:$0xff]
    %v1002 = vld [vmem:[#allocation10 + $0x910] sm:$0xff]
    %v1003 = vld [vmem:[#allocation10 + $0x918] sm:$0xff]
    %v1004 = vld [vmem:[#allocation10 + $0x920] sm:$0xff]
    %v1005 = vld [vmem:[#allocation10 + $0x928] sm:$0xff]
    %v1006 = vld [vmem:[#allocation10 + $0x930] sm:$0xff]
    %v1007 = vld [vmem:[#allocation10 + $0x938] sm:$0xff]
    %v1008 = vld [vmem:[#allocation10 + $0x940] sm:$0xff]
    %v1009 = vld [vmem:[#allocation10 + $0x948] sm:$0xff]
    %v1010 = vld [vmem:[#allocation10 + $0x950] sm:$0xff]
    %v1011 = vld [vmem:[#allocation10 + $0x958] sm:$0xff]
    %v1012 = vld [vmem:[#allocation10 + $0x960] sm:$0xff]
    %v1013 = vld [vmem:[#allocation10 + $0x968] sm:$0xff]
    %v1014 = vld [vmem:[#allocation10 + $0x970] sm:$0xff]
    %v1015 = vld [vmem:[#allocation10 + $0x978] sm:$0xff]
    %v1016 = vld [vmem:[#allocation10 + $0x980] sm:$0xff]
    %v1017 = vld [vmem:[#allocation10 + $0x988] sm:$0xff]
    %v1018 = vld [vmem:[#allocation10 + $0x990] sm:$0xff]
    %v1019 = vld [vmem:[#allocation10 + $0x998] sm:$0xff]
    %v1020 = vld [vmem:[#allocation10 + $0x9a0] sm:$0xff]
    %v1021 = vld [vmem:[#allocation10 + $0x9a8] sm:$0xff]
    %v1022 = vld [vmem:[#allocation10 + $0x9b0] sm:$0xff]
    %v1023 = vld [vmem:[#allocation10 + $0x9b8] sm:$0xff]
    %v1024 = vld [vmem:[#allocation10 + $0x9c0] sm:$0xff]
    %v1025 = vld [vmem:[#allocation10 + $0x9c8] sm:$0xff]
    %v1026 = vld [vmem:[#allocation10 + $0x9d0] sm:$0xff]
    %v1027 = vld [vmem:[#allocation10 + $0x9d8] sm:$0xff]
    %v1028 = vld [vmem:[#allocation10 + $0x9e0] sm:$0xff]
    %v1029 = vld [vmem:[#allocation10 + $0x9e8] sm:$0xff]
    %v1030 = vld [vmem:[#allocation10 + $0x9f0] sm:$0xff]
    %v1031 = vld [vmem:[#allocation10 + $0x9f8] sm:$0xff]
    %v1032 = vld [vmem:[#allocation10 + $0xa00] sm:$0xff]
    %v1033 = vld [vmem:[#allocation10 + $0xa08] sm:$0xff]
    %v1034 = vld [vmem:[#allocation10 + $0xa10] sm:$0xff]
    %v1035 = vld [vmem:[#allocation10 + $0xa18] sm:$0xff]
    %v1036 = vld [vmem:[#allocation10 + $0xa20] sm:$0xff]
    %v1037 = vld [vmem:[#allocation10 + $0xa28] sm:$0xff]
    %v1038 = vld [vmem:[#allocation10 + $0xa30] sm:$0xff]
    %v1039 = vld [vmem:[#allocation10 + $0xa38] sm:$0xff]
    %v1040 = vld [vmem:[#allocation10 + $0xa40] sm:$0xff]
    %v1041 = vld [vmem:[#allocation10 + $0xa48] sm:$0xff]
    %v1042 = vld [vmem:[#allocation10 + $0xa50] sm:$0xff]
    %v1043 = vld [vmem:[#allocation10 + $0xa58] sm:$0xff]
    %v1044 = vld [vmem:[#allocation10 + $0xa60] sm:$0xff]
    %v1045 = vld [vmem:[#allocation10 + $0xa68] sm:$0xff]
    %v1046 = vld [vmem:[#allocation10 + $0xa70] sm:$0xff]
    %v1047 = vld [vmem:[#allocation10 + $0xa78] sm:$0xff]
    %v1048 = vld [vmem:[#allocation10 + $0xa80] sm:$0xff]
    %v1049 = vld [vmem:[#allocation10 + $0xa88] sm:$0xff]
    %v1050 = vld [vmem:[#allocation10 + $0xa90] sm:$0xff]
    %v1051 = vld [vmem:[#allocation10 + $0xa98] sm:$0xff]
    %v1052 = vld [vmem:[#allocation10 + $0xaa0] sm:$0xff]
    %v1053 = vld [vmem:[#allocation10 + $0xaa8] sm:$0xff]
    %v1054 = vld [vmem:[#allocation10 + $0xab0] sm:$0xff]
    %v1055 = vld [vmem:[#allocation10 + $0xab8] sm:$0xff]
    %v1056 = vld [vmem:[#allocation10 + $0xac0] sm:$0xff]
    %v1057 = vld [vmem:[#allocation10 + $0xac8] sm:$0xff]
    %v1058 = vld [vmem:[#allocation10 + $0xad0] sm:$0xff]
    %v1059 = vld [vmem:[#allocation10 + $0xad8] sm:$0xff]
    %v1060 = vld [vmem:[#allocation10 + $0xae0] sm:$0xff]
    %v1061 = vld [vmem:[#allocation10 + $0xae8] sm:$0xff]
    %v1062 = vld [vmem:[#allocation10 + $0xaf0] sm:$0xff]
    %v1063 = vld [vmem:[#allocation10 + $0xaf8] sm:$0xff]
    %v1064 = vld [vmem:[#allocation10 + $0xb00] sm:$0xff]
    %v1065 = vld [vmem:[#allocation10 + $0xb08] sm:$0xff]
    %v1066 = vld [vmem:[#allocation10 + $0xb10] sm:$0xff]
    %v1067 = vld [vmem:[#allocation10 + $0xb18] sm:$0xff]
    %v1068 = vld [vmem:[#allocation10 + $0xb20] sm:$0xff]
    %v1069 = vld [vmem:[#allocation10 + $0xb28] sm:$0xff]
    %v1070 = vld [vmem:[#allocation10 + $0xb30] sm:$0xff]
    %v1071 = vld [vmem:[#allocation10 + $0xb38] sm:$0xff]
    %v1072 = vld [vmem:[#allocation10 + $0xb40] sm:$0xff]
    %v1073 = vld [vmem:[#allocation10 + $0xb48] sm:$0xff]
    %v1074 = vld [vmem:[#allocation10 + $0xb50] sm:$0xff]
    %v1075 = vld [vmem:[#allocation10 + $0xb58] sm:$0xff]
    %v1076 = vld [vmem:[#allocation10 + $0xb60] sm:$0xff]
    %v1077 = vld [vmem:[#allocation10 + $0xb68] sm:$0xff]
    %v1078 = vld [vmem:[#allocation10 + $0xb70] sm:$0xff]
    %v1079 = vld [vmem:[#allocation10 + $0xb78] sm:$0xff]
    %v1080 = vld [vmem:[#allocation10 + $0xb80] sm:$0xff]
    %v1081 = vld [vmem:[#allocation10 + $0xb88] sm:$0xff]
    %v1082 = vld [vmem:[#allocation10 + $0xb90] sm:$0xff]
    %v1083 = vld [vmem:[#allocation10 + $0xb98] sm:$0xff]
    %v1084 = vld [vmem:[#allocation10 + $0xba0] sm:$0xff]
    %v1085 = vld [vmem:[#allocation10 + $0xba8] sm:$0xff]
    %v1086 = vld [vmem:[#allocation10 + $0xbb0] sm:$0xff]
    %v1087 = vld [vmem:[#allocation10 + $0xbb8] sm:$0xff]
    %v1088 = vld [vmem:[#allocation10 + $0xbc0] sm:$0xff]
    %v1089 = vld [vmem:[#allocation10 + $0xbc8] sm:$0xff]
    %v1090 = vld [vmem:[#allocation10 + $0xbd0] sm:$0xff]
    %v1091 = vld [vmem:[#allocation10 + $0xbd8] sm:$0xff]
    %v1092 = vld [vmem:[#allocation10 + $0xbe0] sm:$0xff]
    %v1093 = vld [vmem:[#allocation10 + $0xbe8] sm:$0xff]
    %v1094 = vld [vmem:[#allocation10 + $0xbf0] sm:$0xff]
    %v1095 = vld [vmem:[#allocation10 + $0xbf8] sm:$0xff]
    %v1096 = vld [vmem:[#allocation10 + $0xc00] sm:$0xff]
    %v1097 = vld [vmem:[#allocation10 + $0xc08] sm:$0xff]
    %v1098 = vld [vmem:[#allocation10 + $0xc10] sm:$0xff]
    %v1099 = vld [vmem:[#allocation10 + $0xc18] sm:$0xff]
    %v1100 = vld [vmem:[#allocation10 + $0xc20] sm:$0xff]
    %v1101 = vld [vmem:[#allocation10 + $0xc28] sm:$0xff]
    %v1102 = vld [vmem:[#allocation10 + $0xc30] sm:$0xff]
    %v1103 = vld [vmem:[#allocation10 + $0xc38] sm:$0xff]
    %v1104 = vld [vmem:[#allocation10 + $0xc40] sm:$0xff]
    %v1105 = vld [vmem:[#allocation10 + $0xc48] sm:$0xff]
    %v1106 = vld [vmem:[#allocation10 + $0xc50] sm:$0xff]
    %v1107 = vld [vmem:[#allocation10 + $0xc58] sm:$0xff]
    %v1108 = vld [vmem:[#allocation10 + $0xc60] sm:$0xff]
    %v1109 = vld [vmem:[#allocation10 + $0xc68] sm:$0xff]
    %v1110 = vld [vmem:[#allocation10 + $0xc70] sm:$0xff]
    %v1111 = vld [vmem:[#allocation10 + $0xc78] sm:$0xff]
    %v1112 = vld [vmem:[#allocation10 + $0xc80] sm:$0xff]
    %v1113 = vld [vmem:[#allocation10 + $0xc88] sm:$0xff]
    %v1114 = vld [vmem:[#allocation10 + $0xc90] sm:$0xff]
    %v1115 = vld [vmem:[#allocation10 + $0xc98] sm:$0xff]
    %v1116 = vld [vmem:[#allocation10 + $0xca0] sm:$0xff]
    %v1117 = vld [vmem:[#allocation10 + $0xca8] sm:$0xff]
    %v1118 = vld [vmem:[#allocation10 + $0xcb0] sm:$0xff]
    %v1119 = vld [vmem:[#allocation10 + $0xcb8] sm:$0xff]
    %v1120 = vld [vmem:[#allocation10 + $0xcc0] sm:$0xff]
    %v1121 = vld [vmem:[#allocation10 + $0xcc8] sm:$0xff]
    %v1122 = vld [vmem:[#allocation10 + $0xcd0] sm:$0xff]
    %v1123 = vld [vmem:[#allocation10 + $0xcd8] sm:$0xff]
    %v1124 = vld [vmem:[#allocation10 + $0xce0] sm:$0xff]
    %v1125 = vld [vmem:[#allocation10 + $0xce8] sm:$0xff]
    %v1126 = vld [vmem:[#allocation10 + $0xcf0] sm:$0xff]
    %v1127 = vld [vmem:[#allocation10 + $0xcf8] sm:$0xff]
    %v1128 = vld [vmem:[#allocation10 + $0xd00] sm:$0xff]
    %v1129 = vld [vmem:[#allocation10 + $0xd08] sm:$0xff]
    %v1130 = vld [vmem:[#allocation10 + $0xd10] sm:$0xff]
    %v1131 = vld [vmem:[#allocation10 + $0xd18] sm:$0xff]
    %v1132 = vld [vmem:[#allocation10 + $0xd20] sm:$0xff]
    %v1133 = vld [vmem:[#allocation10 + $0xd28] sm:$0xff]
    %v1134 = vld [vmem:[#allocation10 + $0xd30] sm:$0xff]
    %v1135 = vld [vmem:[#allocation10 + $0xd38] sm:$0xff]
    %v1136 = vld [vmem:[#allocation10 + $0xd40] sm:$0xff]
    %v1137 = vld [vmem:[#allocation10 + $0xd48] sm:$0xff]
    %v1138 = vld [vmem:[#allocation10 + $0xd50] sm:$0xff]
    %v1139 = vld [vmem:[#allocation10 + $0xd58] sm:$0xff]
    %v1140 = vld [vmem:[#allocation10 + $0xd60] sm:$0xff]
    %v1141 = vld [vmem:[#allocation10 + $0xd68] sm:$0xff]
    %v1142 = vld [vmem:[#allocation10 + $0xd70] sm:$0xff]
    %v1143 = vld [vmem:[#allocation10 + $0xd78] sm:$0xff]
    %v1144 = vld [vmem:[#allocation10 + $0xd80] sm:$0xff]
    %v1145 = vld [vmem:[#allocation10 + $0xd88] sm:$0xff]
    %v1146 = vld [vmem:[#allocation10 + $0xd90] sm:$0xff]
    %v1147 = vld [vmem:[#allocation10 + $0xd98] sm:$0xff]
    %v1148 = vld [vmem:[#allocation10 + $0xda0] sm:$0xff]
    %v1149 = vld [vmem:[#allocation10 + $0xda8] sm:$0xff]
    %v1150 = vld [vmem:[#allocation10 + $0xdb0] sm:$0xff]
    %v1151 = vld [vmem:[#allocation10 + $0xdb8] sm:$0xff]
    %v1152 = vld [vmem:[#allocation10 + $0xdc0] sm:$0xff]
    %v1153 = vld [vmem:[#allocation10 + $0xdc8] sm:$0xff]
    %v1154 = vld [vmem:[#allocation10 + $0xdd0] sm:$0xff]
    %v1155 = vld [vmem:[#allocation10 + $0xdd8] sm:$0xff]
    %v1156 = vld [vmem:[#allocation10 + $0xde0] sm:$0xff]
    %v1157 = vld [vmem:[#allocation10 + $0xde8] sm:$0xff]
    %v1158 = vld [vmem:[#allocation10 + $0xdf0] sm:$0xff]
    %v1159 = vld [vmem:[#allocation10 + $0xdf8] sm:$0xff]
    %v1160 = vld [vmem:[#allocation10 + $0xe00] sm:$0xff]
    %v1161 = vld [vmem:[#allocation10 + $0xe08] sm:$0xff]
    %v1162 = vld [vmem:[#allocation10 + $0xe10] sm:$0xff]
    %v1163 = vld [vmem:[#allocation10 + $0xe18] sm:$0xff]
    %v1164 = vld [vmem:[#allocation10 + $0xe20] sm:$0xff]
    %v1165 = vld [vmem:[#allocation10 + $0xe28] sm:$0xff]
    %v1166 = vld [vmem:[#allocation10 + $0xe30] sm:$0xff]
    %v1167 = vld [vmem:[#allocation10 + $0xe38] sm:$0xff]
    %v1168 = vld [vmem:[#allocation10 + $0xe40] sm:$0xff]
    %v1169 = vld [vmem:[#allocation10 + $0xe48] sm:$0xff]
    %v1170 = vld [vmem:[#allocation10 + $0xe50] sm:$0xff]
    %v1171 = vld [vmem:[#allocation10 + $0xe58] sm:$0xff]
    %v1172 = vld [vmem:[#allocation10 + $0xe60] sm:$0xff]
    %v1173 = vld [vmem:[#allocation10 + $0xe68] sm:$0xff]
    %v1174 = vld [vmem:[#allocation10 + $0xe70] sm:$0xff]
    %v1175 = vld [vmem:[#allocation10 + $0xe78] sm:$0xff]
    %v1176 = vld [vmem:[#allocation10 + $0xe80] sm:$0xff]
    %v1177 = vld [vmem:[#allocation10 + $0xe88] sm:$0xff]
    %v1178 = vld [vmem:[#allocation10 + $0xe90] sm:$0xff]
    %v1179 = vld [vmem:[#allocation10 + $0xe98] sm:$0xff]
    %v1180 = vld [vmem:[#allocation10 + $0xea0] sm:$0xff]
    %v1181 = vld [vmem:[#allocation10 + $0xea8] sm:$0xff]
    %v1182 = vld [vmem:[#allocation10 + $0xeb0] sm:$0xff]
    %v1183 = vld [vmem:[#allocation10 + $0xeb8] sm:$0xff]
    %v1184 = vld [vmem:[#allocation10 + $0xec0] sm:$0xff]
    %v1185 = vld [vmem:[#allocation10 + $0xec8] sm:$0xff]
    %v1186 = vld [vmem:[#allocation10 + $0xed0] sm:$0xff]
    %v1187 = vld [vmem:[#allocation10 + $0xed8] sm:$0xff]
    %v1188 = vld [vmem:[#allocation10 + $0xee0] sm:$0xff]
    %v1189 = vld [vmem:[#allocation10 + $0xee8] sm:$0xff]
    %v1190 = vld [vmem:[#allocation10 + $0xef0] sm:$0xff]
    %v1191 = vld [vmem:[#allocation10 + $0xef8] sm:$0xff]
    %v1192 = vld [vmem:[#allocation10 + $0xf00] sm:$0xff]
    %v1193 = vld [vmem:[#allocation10 + $0xf08] sm:$0xff]
    %v1194 = vld [vmem:[#allocation10 + $0xf10] sm:$0xff]
    %v1195 = vld [vmem:[#allocation10 + $0xf18] sm:$0xff]
    %v1196 = vld [vmem:[#allocation10 + $0xf20] sm:$0xff]
    %v1197 = vld [vmem:[#allocation10 + $0xf28] sm:$0xff]
    %v1198 = vld [vmem:[#allocation10 + $0xf30] sm:$0xff]
    %v1199 = vld [vmem:[#allocation10 + $0xf38] sm:$0xff]
    %v1200 = vld [vmem:[#allocation10 + $0xf40] sm:$0xff]
    %v1201 = vld [vmem:[#allocation10 + $0xf48] sm:$0xff]
    %v1202 = vld [vmem:[#allocation10 + $0xf50] sm:$0xff]
    %v1203 = vld [vmem:[#allocation10 + $0xf58] sm:$0xff]
    %v1204 = vld [vmem:[#allocation10 + $0xf60] sm:$0xff]
    %v1205 = vld [vmem:[#allocation10 + $0xf68] sm:$0xff]
    %v1206 = vld [vmem:[#allocation10 + $0xf70] sm:$0xff]
    %v1207 = vld [vmem:[#allocation10 + $0xf78] sm:$0xff]
    %v1208 = vld [vmem:[#allocation10 + $0xf80] sm:$0xff]
    %v1209 = vld [vmem:[#allocation10 + $0xf88] sm:$0xff]
    %v1210 = vld [vmem:[#allocation10 + $0xf90] sm:$0xff]
    %v1211 = vld [vmem:[#allocation10 + $0xf98] sm:$0xff]
    %v1212 = vld [vmem:[#allocation10 + $0xfa0] sm:$0xff]
    %v1213 = vld [vmem:[#allocation10 + $0xfa8] sm:$0xff]
    %v1214 = vld [vmem:[#allocation10 + $0xfb0] sm:$0xff]
    %v1215 = vld [vmem:[#allocation10 + $0xfb8] sm:$0xff]
    %v1216 = vld [vmem:[#allocation10 + $0xfc0] sm:$0xff]
    %v1217 = vld [vmem:[#allocation10 + $0xfc8] sm:$0xff]
    %v1218 = vld [vmem:[#allocation10 + $0xfd0] sm:$0xff]
    %v1219 = vld [vmem:[#allocation10 + $0xfd8] sm:$0xff]
    %v1220 = vld [vmem:[#allocation10 + $0xfe0] sm:$0xff]
    %v1221 = vld [vmem:[#allocation10 + $0xfe8] sm:$0xff]
    %v1222 = vld [vmem:[#allocation10 + $0xff0] sm:$0xff]
    %v1223 = vld [vmem:[#allocation10 + $0xff8] sm:$0xff]
    %v1224 = vld [vmem:[#allocation12] sm:$0xff]
    %v1225 = vld [vmem:[#allocation12 + $0x8] sm:$0xff]
    %v1228 = vlaneseq
    %v1229 = vshrl.u32 %v1228, 7
    %v1230 = vsub.s32 0, %v1229
    %v1231 = vrot.slane %v1224, %v1230
    %v1232 = vlaneseq
    %v1233 = vshrl.u32 %v1232, 7
    %v1234 = vsub.s32 1, %v1233
    %v1235 = vrot.slane %v1224, %v1234
    %v1236 = vlaneseq
    %v1237 = vshrl.u32 %v1236, 7
    %v1238 = vsub.s32 2, %v1237
    %v1239 = vrot.slane %v1224, %v1238
    %v1240 = vlaneseq
    %v1241 = vshrl.u32 %v1240, 7
    %v1242 = vsub.s32 3, %v1241
    %v1243 = vrot.slane %v1224, %v1242
    %v1244 = vlaneseq
    %v1245 = vshrl.u32 %v1244, 7
    %v1246 = vsub.s32 4, %v1245
    %v1247 = vrot.slane %v1224, %v1246
    %v1248 = vlaneseq
    %v1249 = vshrl.u32 %v1248, 7
    %v1250 = vsub.s32 5, %v1249
    %v1251 = vrot.slane %v1224, %v1250
    %v1252 = vlaneseq
    %v1253 = vshrl.u32 %v1252, 7
    %v1254 = vsub.s32 6, %v1253
    %v1255 = vrot.slane %v1224, %v1254
    %v1256 = vlaneseq
    %v1257 = vshrl.u32 %v1256, 7
    %v1258 = vsub.s32 7, %v1257
    %v1259 = vrot.slane %v1224, %v1258
    %v1260 = vlaneseq
    %v1261 = vshrl.u32 %v1260, 7
    %v1262 = vsub.s32 0, %v1261
    %v1263 = vrot.slane %v1225, %v1262
    %v1264 = vlaneseq
    %v1265 = vshrl.u32 %v1264, 7
    %v1266 = vsub.s32 1, %v1265
    %v1267 = vrot.slane %v1225, %v1266
    %v1268 = vlaneseq
    %v1269 = vshrl.u32 %v1268, 7
    %v1270 = vsub.s32 2, %v1269
    %v1271 = vrot.slane %v1225, %v1270
    %v1272 = vlaneseq
    %v1273 = vshrl.u32 %v1272, 7
    %v1274 = vsub.s32 3, %v1273
    %v1275 = vrot.slane %v1225, %v1274
    %v1276 = vlaneseq
    %v1277 = vshrl.u32 %v1276, 7
    %v1278 = vsub.s32 4, %v1277
    %v1279 = vrot.slane %v1225, %v1278
    %v1280 = vlaneseq
    %v1281 = vshrl.u32 %v1280, 7
    %v1282 = vsub.s32 5, %v1281
    %v1283 = vrot.slane %v1225, %v1282
    %v1284 = vlaneseq
    %v1285 = vshrl.u32 %v1284, 7
    %v1286 = vsub.s32 6, %v1285
    %v1287 = vrot.slane %v1225, %v1286
    %v1288 = vlaneseq
    %v1289 = vshrl.u32 %v1288, 7
    %v1290 = vsub.s32 7, %v1289
    %v1291 = vrot.slane %v1225, %v1290
    %v1820 = vunpack.c.l.b16 %v712
    %v1821 = vunpack.c.h.b16 %v712
    %v1822 = vunpack.c.l.b16 %v713
    %v1823 = vunpack.c.h.b16 %v713
    %v1824 = vunpack.c.l.b16 %v714
    %v1825 = vunpack.c.h.b16 %v714
    %v1826 = vunpack.c.l.b16 %v715
    %v1827 = vunpack.c.h.b16 %v715
    %v1828 = vunpack.c.l.b16 %v716
    %v1829 = vunpack.c.h.b16 %v716
    %v1830 = vunpack.c.l.b16 %v717
    %v1831 = vunpack.c.h.b16 %v717
    %v1832 = vunpack.c.l.b16 %v718
    %v1833 = vunpack.c.h.b16 %v718
    %v1834 = vunpack.c.l.b16 %v719
    %v1835 = vunpack.c.h.b16 %v719
    %v1836 = vunpack.c.l.b16 %v720
    %v1837 = vunpack.c.h.b16 %v720
    %v1838 = vunpack.c.l.b16 %v721
    %v1839 = vunpack.c.h.b16 %v721
    %v1840 = vunpack.c.l.b16 %v722
    %v1841 = vunpack.c.h.b16 %v722
    %v1842 = vunpack.c.l.b16 %v723
    %v1843 = vunpack.c.h.b16 %v723
    %v1844 = vunpack.c.l.b16 %v724
    %v1845 = vunpack.c.h.b16 %v724
    %v1846 = vunpack.c.l.b16 %v725
    %v1847 = vunpack.c.h.b16 %v725
    %v1848 = vunpack.c.l.b16 %v726
    %v1849 = vunpack.c.h.b16 %v726
    %v1850 = vunpack.c.l.b16 %v727
    %v1851 = vunpack.c.h.b16 %v727
    %v1852 = vunpack.c.l.b16 %v728
    %v1853 = vunpack.c.h.b16 %v728
    %v1854 = vunpack.c.l.b16 %v729
    %v1855 = vunpack.c.h.b16 %v729
    %v1856 = vunpack.c.l.b16 %v730
    %v1857 = vunpack.c.h.b16 %v730
    %v1858 = vunpack.c.l.b16 %v731
    %v1859 = vunpack.c.h.b16 %v731
    %v1860 = vunpack.c.l.b16 %v732
    %v1861 = vunpack.c.h.b16 %v732
    %v1862 = vunpack.c.l.b16 %v733
    %v1863 = vunpack.c.h.b16 %v733
    %v1864 = vunpack.c.l.b16 %v734
    %v1865 = vunpack.c.h.b16 %v734
    %v1866 = vunpack.c.l.b16 %v735
    %v1867 = vunpack.c.h.b16 %v735
    %v1868 = vunpack.c.l.b16 %v736
    %v1869 = vunpack.c.h.b16 %v736
    %v1870 = vunpack.c.l.b16 %v737
    %v1871 = vunpack.c.h.b16 %v737
    %v1872 = vunpack.c.l.b16 %v738
    %v1873 = vunpack.c.h.b16 %v738
    %v1874 = vunpack.c.l.b16 %v739
    %v1875 = vunpack.c.h.b16 %v739
    %v1876 = vunpack.c.l.b16 %v740
    %v1877 = vunpack.c.h.b16 %v740
    %v1878 = vunpack.c.l.b16 %v741
    %v1879 = vunpack.c.h.b16 %v741
    %v1880 = vunpack.c.l.b16 %v742
    %v1881 = vunpack.c.h.b16 %v742
    %v1882 = vunpack.c.l.b16 %v743
    %v1883 = vunpack.c.h.b16 %v743
    %v1884 = vunpack.c.l.b16 %v744
    %v1885 = vunpack.c.h.b16 %v744
    %v1886 = vunpack.c.l.b16 %v745
    %v1887 = vunpack.c.h.b16 %v745
    %v1888 = vunpack.c.l.b16 %v746
    %v1889 = vunpack.c.h.b16 %v746
    %v1890 = vunpack.c.l.b16 %v747
    %v1891 = vunpack.c.h.b16 %v747
    %v1892 = vunpack.c.l.b16 %v748
    %v1893 = vunpack.c.h.b16 %v748
    %v1894 = vunpack.c.l.b16 %v749
    %v1895 = vunpack.c.h.b16 %v749
    %v1896 = vunpack.c.l.b16 %v750
    %v1897 = vunpack.c.h.b16 %v750
    %v1898 = vunpack.c.l.b16 %v751
    %v1899 = vunpack.c.h.b16 %v751
    %v1900 = vunpack.c.l.b16 %v752
    %v1901 = vunpack.c.h.b16 %v752
    %v1902 = vunpack.c.l.b16 %v753
    %v1903 = vunpack.c.h.b16 %v753
    %v1904 = vunpack.c.l.b16 %v754
    %v1905 = vunpack.c.h.b16 %v754
    %v1906 = vunpack.c.l.b16 %v755
    %v1907 = vunpack.c.h.b16 %v755
    %v1908 = vunpack.c.l.b16 %v756
    %v1909 = vunpack.c.h.b16 %v756
    %v1910 = vunpack.c.l.b16 %v757
    %v1911 = vunpack.c.h.b16 %v757
    %v1912 = vunpack.c.l.b16 %v758
    %v1913 = vunpack.c.h.b16 %v758
    %v1914 = vunpack.c.l.b16 %v759
    %v1915 = vunpack.c.h.b16 %v759
    %v1916 = vunpack.c.l.b16 %v760
    %v1917 = vunpack.c.h.b16 %v760
    %v1918 = vunpack.c.l.b16 %v761
    %v1919 = vunpack.c.h.b16 %v761
    %v1920 = vunpack.c.l.b16 %v762
    %v1921 = vunpack.c.h.b16 %v762
    %v1922 = vunpack.c.l.b16 %v763
    %v1923 = vunpack.c.h.b16 %v763
    %v1924 = vunpack.c.l.b16 %v764
    %v1925 = vunpack.c.h.b16 %v764
    %v1926 = vunpack.c.l.b16 %v765
    %v1927 = vunpack.c.h.b16 %v765
    %v1928 = vunpack.c.l.b16 %v766
    %v1929 = vunpack.c.h.b16 %v766
    %v1930 = vunpack.c.l.b16 %v767
    %v1931 = vunpack.c.h.b16 %v767
    %v1932 = vunpack.c.l.b16 %v768
    %v1933 = vunpack.c.h.b16 %v768
    %v1934 = vunpack.c.l.b16 %v769
    %v1935 = vunpack.c.h.b16 %v769
    %v1936 = vunpack.c.l.b16 %v770
    %v1937 = vunpack.c.h.b16 %v770
    %v1938 = vunpack.c.l.b16 %v771
    %v1939 = vunpack.c.h.b16 %v771
    %v1940 = vunpack.c.l.b16 %v772
    %v1941 = vunpack.c.h.b16 %v772
    %v1942 = vunpack.c.l.b16 %v773
    %v1943 = vunpack.c.h.b16 %v773
    %v1944 = vunpack.c.l.b16 %v774
    %v1945 = vunpack.c.h.b16 %v774
    %v1946 = vunpack.c.l.b16 %v775
    %v1947 = vunpack.c.h.b16 %v775
    %v1948 = vunpack.c.l.b16 %v776
    %v1949 = vunpack.c.h.b16 %v776
    %v1950 = vunpack.c.l.b16 %v777
    %v1951 = vunpack.c.h.b16 %v777
    %v1952 = vunpack.c.l.b16 %v778
    %v1953 = vunpack.c.h.b16 %v778
    %v1954 = vunpack.c.l.b16 %v779
    %v1955 = vunpack.c.h.b16 %v779
    %v1956 = vunpack.c.l.b16 %v780
    %v1957 = vunpack.c.h.b16 %v780
    %v1958 = vunpack.c.l.b16 %v781
    %v1959 = vunpack.c.h.b16 %v781
    %v1960 = vunpack.c.l.b16 %v782
    %v1961 = vunpack.c.h.b16 %v782
    %v1962 = vunpack.c.l.b16 %v783
    %v1963 = vunpack.c.h.b16 %v783
    %v1964 = vunpack.c.l.b16 %v784
    %v1965 = vunpack.c.h.b16 %v784
    %v1966 = vunpack.c.l.b16 %v785
    %v1967 = vunpack.c.h.b16 %v785
    %v1968 = vunpack.c.l.b16 %v786
    %v1969 = vunpack.c.h.b16 %v786
    %v1970 = vunpack.c.l.b16 %v787
    %v1971 = vunpack.c.h.b16 %v787
    %v1972 = vunpack.c.l.b16 %v788
    %v1973 = vunpack.c.h.b16 %v788
    %v1974 = vunpack.c.l.b16 %v789
    %v1975 = vunpack.c.h.b16 %v789
    %v1976 = vunpack.c.l.b16 %v790
    %v1977 = vunpack.c.h.b16 %v790
    %v1978 = vunpack.c.l.b16 %v791
    %v1979 = vunpack.c.h.b16 %v791
    %v1980 = vunpack.c.l.b16 %v792
    %v1981 = vunpack.c.h.b16 %v792
    %v1982 = vunpack.c.l.b16 %v793
    %v1983 = vunpack.c.h.b16 %v793
    %v1984 = vunpack.c.l.b16 %v794
    %v1985 = vunpack.c.h.b16 %v794
    %v1986 = vunpack.c.l.b16 %v795
    %v1987 = vunpack.c.h.b16 %v795
    %v1988 = vunpack.c.l.b16 %v796
    %v1989 = vunpack.c.h.b16 %v796
    %v1990 = vunpack.c.l.b16 %v797
    %v1991 = vunpack.c.h.b16 %v797
    %v1992 = vunpack.c.l.b16 %v798
    %v1993 = vunpack.c.h.b16 %v798
    %v1994 = vunpack.c.l.b16 %v799
    %v1995 = vunpack.c.h.b16 %v799
    %v1996 = vunpack.c.l.b16 %v800
    %v1997 = vunpack.c.h.b16 %v800
    %v1998 = vunpack.c.l.b16 %v801
    %v1999 = vunpack.c.h.b16 %v801
    %v2000 = vunpack.c.l.b16 %v802
    %v2001 = vunpack.c.h.b16 %v802
    %v2002 = vunpack.c.l.b16 %v803
    %v2003 = vunpack.c.h.b16 %v803
    %v2004 = vunpack.c.l.b16 %v804
    %v2005 = vunpack.c.h.b16 %v804
    %v2006 = vunpack.c.l.b16 %v805
    %v2007 = vunpack.c.h.b16 %v805
    %v2008 = vunpack.c.l.b16 %v806
    %v2009 = vunpack.c.h.b16 %v806
    %v2010 = vunpack.c.l.b16 %v807
    %v2011 = vunpack.c.h.b16 %v807
    %v2012 = vunpack.c.l.b16 %v808
    %v2013 = vunpack.c.h.b16 %v808
    %v2014 = vunpack.c.l.b16 %v809
    %v2015 = vunpack.c.h.b16 %v809
    %v2016 = vunpack.c.l.b16 %v810
    %v2017 = vunpack.c.h.b16 %v810
    %v2018 = vunpack.c.l.b16 %v811
    %v2019 = vunpack.c.h.b16 %v811
    %v2020 = vunpack.c.l.b16 %v812
    %v2021 = vunpack.c.h.b16 %v812
    %v2022 = vunpack.c.l.b16 %v813
    %v2023 = vunpack.c.h.b16 %v813
    %v2024 = vunpack.c.l.b16 %v814
    %v2025 = vunpack.c.h.b16 %v814
    %v2026 = vunpack.c.l.b16 %v815
    %v2027 = vunpack.c.h.b16 %v815
    %v2028 = vunpack.c.l.b16 %v816
    %v2029 = vunpack.c.h.b16 %v816
    %v2030 = vunpack.c.l.b16 %v817
    %v2031 = vunpack.c.h.b16 %v817
    %v2032 = vunpack.c.l.b16 %v818
    %v2033 = vunpack.c.h.b16 %v818
    %v2034 = vunpack.c.l.b16 %v819
    %v2035 = vunpack.c.h.b16 %v819
    %v2036 = vunpack.c.l.b16 %v820
    %v2037 = vunpack.c.h.b16 %v820
    %v2038 = vunpack.c.l.b16 %v821
    %v2039 = vunpack.c.h.b16 %v821
    %v2040 = vunpack.c.l.b16 %v822
    %v2041 = vunpack.c.h.b16 %v822
    %v2042 = vunpack.c.l.b16 %v823
    %v2043 = vunpack.c.h.b16 %v823
    %v2044 = vunpack.c.l.b16 %v824
    %v2045 = vunpack.c.h.b16 %v824
    %v2046 = vunpack.c.l.b16 %v825
    %v2047 = vunpack.c.h.b16 %v825
    %v2048 = vunpack.c.l.b16 %v826
    %v2049 = vunpack.c.h.b16 %v826
    %v2050 = vunpack.c.l.b16 %v827
    %v2051 = vunpack.c.h.b16 %v827
    %v2052 = vunpack.c.l.b16 %v828
    %v2053 = vunpack.c.h.b16 %v828
    %v2054 = vunpack.c.l.b16 %v829
    %v2055 = vunpack.c.h.b16 %v829
    %v2056 = vunpack.c.l.b16 %v830
    %v2057 = vunpack.c.h.b16 %v830
    %v2058 = vunpack.c.l.b16 %v831
    %v2059 = vunpack.c.h.b16 %v831
    %v2060 = vunpack.c.l.b16 %v832
    %v2061 = vunpack.c.h.b16 %v832
    %v2062 = vunpack.c.l.b16 %v833
    %v2063 = vunpack.c.h.b16 %v833
    %v2064 = vunpack.c.l.b16 %v834
    %v2065 = vunpack.c.h.b16 %v834
    %v2066 = vunpack.c.l.b16 %v835
    %v2067 = vunpack.c.h.b16 %v835
    %v2068 = vunpack.c.l.b16 %v836
    %v2069 = vunpack.c.h.b16 %v836
    %v2070 = vunpack.c.l.b16 %v837
    %v2071 = vunpack.c.h.b16 %v837
    %v2072 = vunpack.c.l.b16 %v838
    %v2073 = vunpack.c.h.b16 %v838
    %v2074 = vunpack.c.l.b16 %v839
    %v2075 = vunpack.c.h.b16 %v839
    %v2076 = vunpack.c.l.b16 %v840
    %v2077 = vunpack.c.h.b16 %v840
    %v2078 = vunpack.c.l.b16 %v841
    %v2079 = vunpack.c.h.b16 %v841
    %v2080 = vunpack.c.l.b16 %v842
    %v2081 = vunpack.c.h.b16 %v842
    %v2082 = vunpack.c.l.b16 %v843
    %v2083 = vunpack.c.h.b16 %v843
    %v2084 = vunpack.c.l.b16 %v844
    %v2085 = vunpack.c.h.b16 %v844
    %v2086 = vunpack.c.l.b16 %v845
    %v2087 = vunpack.c.h.b16 %v845
    %v2088 = vunpack.c.l.b16 %v846
    %v2089 = vunpack.c.h.b16 %v846
    %v2090 = vunpack.c.l.b16 %v847
    %v2091 = vunpack.c.h.b16 %v847
    %v2092 = vunpack.c.l.b16 %v848
    %v2093 = vunpack.c.h.b16 %v848
    %v2094 = vunpack.c.l.b16 %v849
    %v2095 = vunpack.c.h.b16 %v849
    %v2096 = vunpack.c.l.b16 %v850
    %v2097 = vunpack.c.h.b16 %v850
    %v2098 = vunpack.c.l.b16 %v851
    %v2099 = vunpack.c.h.b16 %v851
    %v2100 = vunpack.c.l.b16 %v852
    %v2101 = vunpack.c.h.b16 %v852
    %v2102 = vunpack.c.l.b16 %v853
    %v2103 = vunpack.c.h.b16 %v853
    %v2104 = vunpack.c.l.b16 %v854
    %v2105 = vunpack.c.h.b16 %v854
    %v2106 = vunpack.c.l.b16 %v855
    %v2107 = vunpack.c.h.b16 %v855
    %v2108 = vunpack.c.l.b16 %v856
    %v2109 = vunpack.c.h.b16 %v856
    %v2110 = vunpack.c.l.b16 %v857
    %v2111 = vunpack.c.h.b16 %v857
    %v2112 = vunpack.c.l.b16 %v858
    %v2113 = vunpack.c.h.b16 %v858
    %v2114 = vunpack.c.l.b16 %v859
    %v2115 = vunpack.c.h.b16 %v859
    %v2116 = vunpack.c.l.b16 %v860
    %v2117 = vunpack.c.h.b16 %v860
    %v2118 = vunpack.c.l.b16 %v861
    %v2119 = vunpack.c.h.b16 %v861
    %v2120 = vunpack.c.l.b16 %v862
    %v2121 = vunpack.c.h.b16 %v862
    %v2122 = vunpack.c.l.b16 %v863
    %v2123 = vunpack.c.h.b16 %v863
    %v2124 = vunpack.c.l.b16 %v864
    %v2125 = vunpack.c.h.b16 %v864
    %v2126 = vunpack.c.l.b16 %v865
    %v2127 = vunpack.c.h.b16 %v865
    %v2128 = vunpack.c.l.b16 %v866
    %v2129 = vunpack.c.h.b16 %v866
    %v2130 = vunpack.c.l.b16 %v867
    %v2131 = vunpack.c.h.b16 %v867
    %v2132 = vunpack.c.l.b16 %v868
    %v2133 = vunpack.c.h.b16 %v868
    %v2134 = vunpack.c.l.b16 %v869
    %v2135 = vunpack.c.h.b16 %v869
    %v2136 = vunpack.c.l.b16 %v870
    %v2137 = vunpack.c.h.b16 %v870
    %v2138 = vunpack.c.l.b16 %v871
    %v2139 = vunpack.c.h.b16 %v871
    %v2140 = vunpack.c.l.b16 %v872
    %v2141 = vunpack.c.h.b16 %v872
    %v2142 = vunpack.c.l.b16 %v873
    %v2143 = vunpack.c.h.b16 %v873
    %v2144 = vunpack.c.l.b16 %v874
    %v2145 = vunpack.c.h.b16 %v874
    %v2146 = vunpack.c.l.b16 %v875
    %v2147 = vunpack.c.h.b16 %v875
    %v2148 = vunpack.c.l.b16 %v876
    %v2149 = vunpack.c.h.b16 %v876
    %v2150 = vunpack.c.l.b16 %v877
    %v2151 = vunpack.c.h.b16 %v877
    %v2152 = vunpack.c.l.b16 %v878
    %v2153 = vunpack.c.h.b16 %v878
    %v2154 = vunpack.c.l.b16 %v879
    %v2155 = vunpack.c.h.b16 %v879
    %v2156 = vunpack.c.l.b16 %v880
    %v2157 = vunpack.c.h.b16 %v880
    %v2158 = vunpack.c.l.b16 %v881
    %v2159 = vunpack.c.h.b16 %v881
    %v2160 = vunpack.c.l.b16 %v882
    %v2161 = vunpack.c.h.b16 %v882
    %v2162 = vunpack.c.l.b16 %v883
    %v2163 = vunpack.c.h.b16 %v883
    %v2164 = vunpack.c.l.b16 %v884
    %v2165 = vunpack.c.h.b16 %v884
    %v2166 = vunpack.c.l.b16 %v885
    %v2167 = vunpack.c.h.b16 %v885
    %v2168 = vunpack.c.l.b16 %v886
    %v2169 = vunpack.c.h.b16 %v886
    %v2170 = vunpack.c.l.b16 %v887
    %v2171 = vunpack.c.h.b16 %v887
    %v2172 = vunpack.c.l.b16 %v888
    %v2173 = vunpack.c.h.b16 %v888
    %v2174 = vunpack.c.l.b16 %v889
    %v2175 = vunpack.c.h.b16 %v889
    %v2176 = vunpack.c.l.b16 %v890
    %v2177 = vunpack.c.h.b16 %v890
    %v2178 = vunpack.c.l.b16 %v891
    %v2179 = vunpack.c.h.b16 %v891
    %v2180 = vunpack.c.l.b16 %v892
    %v2181 = vunpack.c.h.b16 %v892
    %v2182 = vunpack.c.l.b16 %v893
    %v2183 = vunpack.c.h.b16 %v893
    %v2184 = vunpack.c.l.b16 %v894
    %v2185 = vunpack.c.h.b16 %v894
    %v2186 = vunpack.c.l.b16 %v895
    %v2187 = vunpack.c.h.b16 %v895
    %v2188 = vunpack.c.l.b16 %v896
    %v2189 = vunpack.c.h.b16 %v896
    %v2190 = vunpack.c.l.b16 %v897
    %v2191 = vunpack.c.h.b16 %v897
    %v2192 = vunpack.c.l.b16 %v898
    %v2193 = vunpack.c.h.b16 %v898
    %v2194 = vunpack.c.l.b16 %v899
    %v2195 = vunpack.c.h.b16 %v899
    %v2196 = vunpack.c.l.b16 %v900
    %v2197 = vunpack.c.h.b16 %v900
    %v2198 = vunpack.c.l.b16 %v901
    %v2199 = vunpack.c.h.b16 %v901
    %v2200 = vunpack.c.l.b16 %v902
    %v2201 = vunpack.c.h.b16 %v902
    %v2202 = vunpack.c.l.b16 %v903
    %v2203 = vunpack.c.h.b16 %v903
    %v2204 = vunpack.c.l.b16 %v904
    %v2205 = vunpack.c.h.b16 %v904
    %v2206 = vunpack.c.l.b16 %v905
    %v2207 = vunpack.c.h.b16 %v905
    %v2208 = vunpack.c.l.b16 %v906
    %v2209 = vunpack.c.h.b16 %v906
    %v2210 = vunpack.c.l.b16 %v907
    %v2211 = vunpack.c.h.b16 %v907
    %v2212 = vunpack.c.l.b16 %v908
    %v2213 = vunpack.c.h.b16 %v908
    %v2214 = vunpack.c.l.b16 %v909
    %v2215 = vunpack.c.h.b16 %v909
    %v2216 = vunpack.c.l.b16 %v910
    %v2217 = vunpack.c.h.b16 %v910
    %v2218 = vunpack.c.l.b16 %v911
    %v2219 = vunpack.c.h.b16 %v911
    %v2220 = vunpack.c.l.b16 %v912
    %v2221 = vunpack.c.h.b16 %v912
    %v2222 = vunpack.c.l.b16 %v913
    %v2223 = vunpack.c.h.b16 %v913
    %v2224 = vunpack.c.l.b16 %v914
    %v2225 = vunpack.c.h.b16 %v914
    %v2226 = vunpack.c.l.b16 %v915
    %v2227 = vunpack.c.h.b16 %v915
    %v2228 = vunpack.c.l.b16 %v916
    %v2229 = vunpack.c.h.b16 %v916
    %v2230 = vunpack.c.l.b16 %v917
    %v2231 = vunpack.c.h.b16 %v917
    %v2232 = vunpack.c.l.b16 %v918
    %v2233 = vunpack.c.h.b16 %v918
    %v2234 = vunpack.c.l.b16 %v919
    %v2235 = vunpack.c.h.b16 %v919
    %v2236 = vunpack.c.l.b16 %v920
    %v2237 = vunpack.c.h.b16 %v920
    %v2238 = vunpack.c.l.b16 %v921
    %v2239 = vunpack.c.h.b16 %v921
    %v2240 = vunpack.c.l.b16 %v922
    %v2241 = vunpack.c.h.b16 %v922
    %v2242 = vunpack.c.l.b16 %v923
    %v2243 = vunpack.c.h.b16 %v923
    %v2244 = vunpack.c.l.b16 %v924
    %v2245 = vunpack.c.h.b16 %v924
    %v2246 = vunpack.c.l.b16 %v925
    %v2247 = vunpack.c.h.b16 %v925
    %v2248 = vunpack.c.l.b16 %v926
    %v2249 = vunpack.c.h.b16 %v926
    %v2250 = vunpack.c.l.b16 %v927
    %v2251 = vunpack.c.h.b16 %v927
    %v2252 = vunpack.c.l.b16 %v928
    %v2253 = vunpack.c.h.b16 %v928
    %v2254 = vunpack.c.l.b16 %v929
    %v2255 = vunpack.c.h.b16 %v929
    %v2256 = vunpack.c.l.b16 %v930
    %v2257 = vunpack.c.h.b16 %v930
    %v2258 = vunpack.c.l.b16 %v931
    %v2259 = vunpack.c.h.b16 %v931
    %v2260 = vunpack.c.l.b16 %v932
    %v2261 = vunpack.c.h.b16 %v932
    %v2262 = vunpack.c.l.b16 %v933
    %v2263 = vunpack.c.h.b16 %v933
    %v2264 = vunpack.c.l.b16 %v934
    %v2265 = vunpack.c.h.b16 %v934
    %v2266 = vunpack.c.l.b16 %v935
    %v2267 = vunpack.c.h.b16 %v935
    %v2268 = vunpack.c.l.b16 %v936
    %v2269 = vunpack.c.h.b16 %v936
    %v2270 = vunpack.c.l.b16 %v937
    %v2271 = vunpack.c.h.b16 %v937
    %v2272 = vunpack.c.l.b16 %v938
    %v2273 = vunpack.c.h.b16 %v938
    %v2274 = vunpack.c.l.b16 %v939
    %v2275 = vunpack.c.h.b16 %v939
    %v2276 = vunpack.c.l.b16 %v940
    %v2277 = vunpack.c.h.b16 %v940
    %v2278 = vunpack.c.l.b16 %v941
    %v2279 = vunpack.c.h.b16 %v941
    %v2280 = vunpack.c.l.b16 %v942
    %v2281 = vunpack.c.h.b16 %v942
    %v2282 = vunpack.c.l.b16 %v943
    %v2283 = vunpack.c.h.b16 %v943
    %v2284 = vunpack.c.l.b16 %v944
    %v2285 = vunpack.c.h.b16 %v944
    %v2286 = vunpack.c.l.b16 %v945
    %v2287 = vunpack.c.h.b16 %v945
    %v2288 = vunpack.c.l.b16 %v946
    %v2289 = vunpack.c.h.b16 %v946
    %v2290 = vunpack.c.l.b16 %v947
    %v2291 = vunpack.c.h.b16 %v947
    %v2292 = vunpack.c.l.b16 %v948
    %v2293 = vunpack.c.h.b16 %v948
    %v2294 = vunpack.c.l.b16 %v949
    %v2295 = vunpack.c.h.b16 %v949
    %v2296 = vunpack.c.l.b16 %v950
    %v2297 = vunpack.c.h.b16 %v950
    %v2298 = vunpack.c.l.b16 %v951
    %v2299 = vunpack.c.h.b16 %v951
    %v2300 = vunpack.c.l.b16 %v952
    %v2301 = vunpack.c.h.b16 %v952
    %v2302 = vunpack.c.l.b16 %v953
    %v2303 = vunpack.c.h.b16 %v953
    %v2304 = vunpack.c.l.b16 %v954
    %v2305 = vunpack.c.h.b16 %v954
    %v2306 = vunpack.c.l.b16 %v955
    %v2307 = vunpack.c.h.b16 %v955
    %v2308 = vunpack.c.l.b16 %v956
    %v2309 = vunpack.c.h.b16 %v956
    %v2310 = vunpack.c.l.b16 %v957
    %v2311 = vunpack.c.h.b16 %v957
    %v2312 = vunpack.c.l.b16 %v958
    %v2313 = vunpack.c.h.b16 %v958
    %v2314 = vunpack.c.l.b16 %v959
    %v2315 = vunpack.c.h.b16 %v959
    %v2316 = vunpack.c.l.b16 %v960
    %v2317 = vunpack.c.h.b16 %v960
    %v2318 = vunpack.c.l.b16 %v961
    %v2319 = vunpack.c.h.b16 %v961
    %v2320 = vunpack.c.l.b16 %v962
    %v2321 = vunpack.c.h.b16 %v962
    %v2322 = vunpack.c.l.b16 %v963
    %v2323 = vunpack.c.h.b16 %v963
    %v2324 = vunpack.c.l.b16 %v964
    %v2325 = vunpack.c.h.b16 %v964
    %v2326 = vunpack.c.l.b16 %v965
    %v2327 = vunpack.c.h.b16 %v965
    %v2328 = vunpack.c.l.b16 %v966
    %v2329 = vunpack.c.h.b16 %v966
    %v2330 = vunpack.c.l.b16 %v967
    %v2331 = vunpack.c.h.b16 %v967
    %v2332 = vunpack.c.l.b16 %v968
    %v2333 = vunpack.c.h.b16 %v968
    %v2334 = vunpack.c.l.b16 %v969
    %v2335 = vunpack.c.h.b16 %v969
    %v2336 = vunpack.c.l.b16 %v970
    %v2337 = vunpack.c.h.b16 %v970
    %v2338 = vunpack.c.l.b16 %v971
    %v2339 = vunpack.c.h.b16 %v971
    %v2340 = vunpack.c.l.b16 %v972
    %v2341 = vunpack.c.h.b16 %v972
    %v2342 = vunpack.c.l.b16 %v973
    %v2343 = vunpack.c.h.b16 %v973
    %v2344 = vunpack.c.l.b16 %v974
    %v2345 = vunpack.c.h.b16 %v974
    %v2346 = vunpack.c.l.b16 %v975
    %v2347 = vunpack.c.h.b16 %v975
    %v2348 = vunpack.c.l.b16 %v976
    %v2349 = vunpack.c.h.b16 %v976
    %v2350 = vunpack.c.l.b16 %v977
    %v2351 = vunpack.c.h.b16 %v977
    %v2352 = vunpack.c.l.b16 %v978
    %v2353 = vunpack.c.h.b16 %v978
    %v2354 = vunpack.c.l.b16 %v979
    %v2355 = vunpack.c.h.b16 %v979
    %v2356 = vunpack.c.l.b16 %v980
    %v2357 = vunpack.c.h.b16 %v980
    %v2358 = vunpack.c.l.b16 %v981
    %v2359 = vunpack.c.h.b16 %v981
    %v2360 = vunpack.c.l.b16 %v982
    %v2361 = vunpack.c.h.b16 %v982
    %v2362 = vunpack.c.l.b16 %v983
    %v2363 = vunpack.c.h.b16 %v983
    %v2364 = vunpack.c.l.b16 %v984
    %v2365 = vunpack.c.h.b16 %v984
    %v2366 = vunpack.c.l.b16 %v985
    %v2367 = vunpack.c.h.b16 %v985
    %v2368 = vunpack.c.l.b16 %v986
    %v2369 = vunpack.c.h.b16 %v986
    %v2370 = vunpack.c.l.b16 %v987
    %v2371 = vunpack.c.h.b16 %v987
    %v2372 = vunpack.c.l.b16 %v988
    %v2373 = vunpack.c.h.b16 %v988
    %v2374 = vunpack.c.l.b16 %v989
    %v2375 = vunpack.c.h.b16 %v989
    %v2376 = vunpack.c.l.b16 %v990
    %v2377 = vunpack.c.h.b16 %v990
    %v2378 = vunpack.c.l.b16 %v991
    %v2379 = vunpack.c.h.b16 %v991
    %v2380 = vunpack.c.l.b16 %v992
    %v2381 = vunpack.c.h.b16 %v992
    %v2382 = vunpack.c.l.b16 %v993
    %v2383 = vunpack.c.h.b16 %v993
    %v2384 = vunpack.c.l.b16 %v994
    %v2385 = vunpack.c.h.b16 %v994
    %v2386 = vunpack.c.l.b16 %v995
    %v2387 = vunpack.c.h.b16 %v995
    %v2388 = vunpack.c.l.b16 %v996
    %v2389 = vunpack.c.h.b16 %v996
    %v2390 = vunpack.c.l.b16 %v997
    %v2391 = vunpack.c.h.b16 %v997
    %v2392 = vunpack.c.l.b16 %v998
    %v2393 = vunpack.c.h.b16 %v998
    %v2394 = vunpack.c.l.b16 %v999
    %v2395 = vunpack.c.h.b16 %v999
    %v2396 = vunpack.c.l.b16 %v1000
    %v2397 = vunpack.c.h.b16 %v1000
    %v2398 = vunpack.c.l.b16 %v1001
    %v2399 = vunpack.c.h.b16 %v1001
    %v2400 = vunpack.c.l.b16 %v1002
    %v2401 = vunpack.c.h.b16 %v1002
    %v2402 = vunpack.c.l.b16 %v1003
    %v2403 = vunpack.c.h.b16 %v1003
    %v2404 = vunpack.c.l.b16 %v1004
    %v2405 = vunpack.c.h.b16 %v1004
    %v2406 = vunpack.c.l.b16 %v1005
    %v2407 = vunpack.c.h.b16 %v1005
    %v2408 = vunpack.c.l.b16 %v1006
    %v2409 = vunpack.c.h.b16 %v1006
    %v2410 = vunpack.c.l.b16 %v1007
    %v2411 = vunpack.c.h.b16 %v1007
    %v2412 = vunpack.c.l.b16 %v1008
    %v2413 = vunpack.c.h.b16 %v1008
    %v2414 = vunpack.c.l.b16 %v1009
    %v2415 = vunpack.c.h.b16 %v1009
    %v2416 = vunpack.c.l.b16 %v1010
    %v2417 = vunpack.c.h.b16 %v1010
    %v2418 = vunpack.c.l.b16 %v1011
    %v2419 = vunpack.c.h.b16 %v1011
    %v2420 = vunpack.c.l.b16 %v1012
    %v2421 = vunpack.c.h.b16 %v1012
    %v2422 = vunpack.c.l.b16 %v1013
    %v2423 = vunpack.c.h.b16 %v1013
    %v2424 = vunpack.c.l.b16 %v1014
    %v2425 = vunpack.c.h.b16 %v1014
    %v2426 = vunpack.c.l.b16 %v1015
    %v2427 = vunpack.c.h.b16 %v1015
    %v2428 = vunpack.c.l.b16 %v1016
    %v2429 = vunpack.c.h.b16 %v1016
    %v2430 = vunpack.c.l.b16 %v1017
    %v2431 = vunpack.c.h.b16 %v1017
    %v2432 = vunpack.c.l.b16 %v1018
    %v2433 = vunpack.c.h.b16 %v1018
    %v2434 = vunpack.c.l.b16 %v1019
    %v2435 = vunpack.c.h.b16 %v1019
    %v2436 = vunpack.c.l.b16 %v1020
    %v2437 = vunpack.c.h.b16 %v1020
    %v2438 = vunpack.c.l.b16 %v1021
    %v2439 = vunpack.c.h.b16 %v1021
    %v2440 = vunpack.c.l.b16 %v1022
    %v2441 = vunpack.c.h.b16 %v1022
    %v2442 = vunpack.c.l.b16 %v1023
    %v2443 = vunpack.c.h.b16 %v1023
    %v2444 = vunpack.c.l.b16 %v1024
    %v2445 = vunpack.c.h.b16 %v1024
    %v2446 = vunpack.c.l.b16 %v1025
    %v2447 = vunpack.c.h.b16 %v1025
    %v2448 = vunpack.c.l.b16 %v1026
    %v2449 = vunpack.c.h.b16 %v1026
    %v2450 = vunpack.c.l.b16 %v1027
    %v2451 = vunpack.c.h.b16 %v1027
    %v2452 = vunpack.c.l.b16 %v1028
    %v2453 = vunpack.c.h.b16 %v1028
    %v2454 = vunpack.c.l.b16 %v1029
    %v2455 = vunpack.c.h.b16 %v1029
    %v2456 = vunpack.c.l.b16 %v1030
    %v2457 = vunpack.c.h.b16 %v1030
    %v2458 = vunpack.c.l.b16 %v1031
    %v2459 = vunpack.c.h.b16 %v1031
    %v2460 = vunpack.c.l.b16 %v1032
    %v2461 = vunpack.c.h.b16 %v1032
    %v2462 = vunpack.c.l.b16 %v1033
    %v2463 = vunpack.c.h.b16 %v1033
    %v2464 = vunpack.c.l.b16 %v1034
    %v2465 = vunpack.c.h.b16 %v1034
    %v2466 = vunpack.c.l.b16 %v1035
    %v2467 = vunpack.c.h.b16 %v1035
    %v2468 = vunpack.c.l.b16 %v1036
    %v2469 = vunpack.c.h.b16 %v1036
    %v2470 = vunpack.c.l.b16 %v1037
    %v2471 = vunpack.c.h.b16 %v1037
    %v2472 = vunpack.c.l.b16 %v1038
    %v2473 = vunpack.c.h.b16 %v1038
    %v2474 = vunpack.c.l.b16 %v1039
    %v2475 = vunpack.c.h.b16 %v1039
    %v2476 = vunpack.c.l.b16 %v1040
    %v2477 = vunpack.c.h.b16 %v1040
    %v2478 = vunpack.c.l.b16 %v1041
    %v2479 = vunpack.c.h.b16 %v1041
    %v2480 = vunpack.c.l.b16 %v1042
    %v2481 = vunpack.c.h.b16 %v1042
    %v2482 = vunpack.c.l.b16 %v1043
    %v2483 = vunpack.c.h.b16 %v1043
    %v2484 = vunpack.c.l.b16 %v1044
    %v2485 = vunpack.c.h.b16 %v1044
    %v2486 = vunpack.c.l.b16 %v1045
    %v2487 = vunpack.c.h.b16 %v1045
    %v2488 = vunpack.c.l.b16 %v1046
    %v2489 = vunpack.c.h.b16 %v1046
    %v2490 = vunpack.c.l.b16 %v1047
    %v2491 = vunpack.c.h.b16 %v1047
    %v2492 = vunpack.c.l.b16 %v1048
    %v2493 = vunpack.c.h.b16 %v1048
    %v2494 = vunpack.c.l.b16 %v1049
    %v2495 = vunpack.c.h.b16 %v1049
    %v2496 = vunpack.c.l.b16 %v1050
    %v2497 = vunpack.c.h.b16 %v1050
    %v2498 = vunpack.c.l.b16 %v1051
    %v2499 = vunpack.c.h.b16 %v1051
    %v2500 = vunpack.c.l.b16 %v1052
    %v2501 = vunpack.c.h.b16 %v1052
    %v2502 = vunpack.c.l.b16 %v1053
    %v2503 = vunpack.c.h.b16 %v1053
    %v2504 = vunpack.c.l.b16 %v1054
    %v2505 = vunpack.c.h.b16 %v1054
    %v2506 = vunpack.c.l.b16 %v1055
    %v2507 = vunpack.c.h.b16 %v1055
    %v2508 = vunpack.c.l.b16 %v1056
    %v2509 = vunpack.c.h.b16 %v1056
    %v2510 = vunpack.c.l.b16 %v1057
    %v2511 = vunpack.c.h.b16 %v1057
    %v2512 = vunpack.c.l.b16 %v1058
    %v2513 = vunpack.c.h.b16 %v1058
    %v2514 = vunpack.c.l.b16 %v1059
    %v2515 = vunpack.c.h.b16 %v1059
    %v2516 = vunpack.c.l.b16 %v1060
    %v2517 = vunpack.c.h.b16 %v1060
    %v2518 = vunpack.c.l.b16 %v1061
    %v2519 = vunpack.c.h.b16 %v1061
    %v2520 = vunpack.c.l.b16 %v1062
    %v2521 = vunpack.c.h.b16 %v1062
    %v2522 = vunpack.c.l.b16 %v1063
    %v2523 = vunpack.c.h.b16 %v1063
    %v2524 = vunpack.c.l.b16 %v1064
    %v2525 = vunpack.c.h.b16 %v1064
    %v2526 = vunpack.c.l.b16 %v1065
    %v2527 = vunpack.c.h.b16 %v1065
    %v2528 = vunpack.c.l.b16 %v1066
    %v2529 = vunpack.c.h.b16 %v1066
    %v2530 = vunpack.c.l.b16 %v1067
    %v2531 = vunpack.c.h.b16 %v1067
    %v2532 = vunpack.c.l.b16 %v1068
    %v2533 = vunpack.c.h.b16 %v1068
    %v2534 = vunpack.c.l.b16 %v1069
    %v2535 = vunpack.c.h.b16 %v1069
    %v2536 = vunpack.c.l.b16 %v1070
    %v2537 = vunpack.c.h.b16 %v1070
    %v2538 = vunpack.c.l.b16 %v1071
    %v2539 = vunpack.c.h.b16 %v1071
    %v2540 = vunpack.c.l.b16 %v1072
    %v2541 = vunpack.c.h.b16 %v1072
    %v2542 = vunpack.c.l.b16 %v1073
    %v2543 = vunpack.c.h.b16 %v1073
    %v2544 = vunpack.c.l.b16 %v1074
    %v2545 = vunpack.c.h.b16 %v1074
    %v2546 = vunpack.c.l.b16 %v1075
    %v2547 = vunpack.c.h.b16 %v1075
    %v2548 = vunpack.c.l.b16 %v1076
    %v2549 = vunpack.c.h.b16 %v1076
    %v2550 = vunpack.c.l.b16 %v1077
    %v2551 = vunpack.c.h.b16 %v1077
    %v2552 = vunpack.c.l.b16 %v1078
    %v2553 = vunpack.c.h.b16 %v1078
    %v2554 = vunpack.c.l.b16 %v1079
    %v2555 = vunpack.c.h.b16 %v1079
    %v2556 = vunpack.c.l.b16 %v1080
    %v2557 = vunpack.c.h.b16 %v1080
    %v2558 = vunpack.c.l.b16 %v1081
    %v2559 = vunpack.c.h.b16 %v1081
    %v2560 = vunpack.c.l.b16 %v1082
    %v2561 = vunpack.c.h.b16 %v1082
    %v2562 = vunpack.c.l.b16 %v1083
    %v2563 = vunpack.c.h.b16 %v1083
    %v2564 = vunpack.c.l.b16 %v1084
    %v2565 = vunpack.c.h.b16 %v1084
    %v2566 = vunpack.c.l.b16 %v1085
    %v2567 = vunpack.c.h.b16 %v1085
    %v2568 = vunpack.c.l.b16 %v1086
    %v2569 = vunpack.c.h.b16 %v1086
    %v2570 = vunpack.c.l.b16 %v1087
    %v2571 = vunpack.c.h.b16 %v1087
    %v2572 = vunpack.c.l.b16 %v1088
    %v2573 = vunpack.c.h.b16 %v1088
    %v2574 = vunpack.c.l.b16 %v1089
    %v2575 = vunpack.c.h.b16 %v1089
    %v2576 = vunpack.c.l.b16 %v1090
    %v2577 = vunpack.c.h.b16 %v1090
    %v2578 = vunpack.c.l.b16 %v1091
    %v2579 = vunpack.c.h.b16 %v1091
    %v2580 = vunpack.c.l.b16 %v1092
    %v2581 = vunpack.c.h.b16 %v1092
    %v2582 = vunpack.c.l.b16 %v1093
    %v2583 = vunpack.c.h.b16 %v1093
    %v2584 = vunpack.c.l.b16 %v1094
    %v2585 = vunpack.c.h.b16 %v1094
    %v2586 = vunpack.c.l.b16 %v1095
    %v2587 = vunpack.c.h.b16 %v1095
    %v2588 = vunpack.c.l.b16 %v1096
    %v2589 = vunpack.c.h.b16 %v1096
    %v2590 = vunpack.c.l.b16 %v1097
    %v2591 = vunpack.c.h.b16 %v1097
    %v2592 = vunpack.c.l.b16 %v1098
    %v2593 = vunpack.c.h.b16 %v1098
    %v2594 = vunpack.c.l.b16 %v1099
    %v2595 = vunpack.c.h.b16 %v1099
    %v2596 = vunpack.c.l.b16 %v1100
    %v2597 = vunpack.c.h.b16 %v1100
    %v2598 = vunpack.c.l.b16 %v1101
    %v2599 = vunpack.c.h.b16 %v1101
    %v2600 = vunpack.c.l.b16 %v1102
    %v2601 = vunpack.c.h.b16 %v1102
    %v2602 = vunpack.c.l.b16 %v1103
    %v2603 = vunpack.c.h.b16 %v1103
    %v2604 = vunpack.c.l.b16 %v1104
    %v2605 = vunpack.c.h.b16 %v1104
    %v2606 = vunpack.c.l.b16 %v1105
    %v2607 = vunpack.c.h.b16 %v1105
    %v2608 = vunpack.c.l.b16 %v1106
    %v2609 = vunpack.c.h.b16 %v1106
    %v2610 = vunpack.c.l.b16 %v1107
    %v2611 = vunpack.c.h.b16 %v1107
    %v2612 = vunpack.c.l.b16 %v1108
    %v2613 = vunpack.c.h.b16 %v1108
    %v2614 = vunpack.c.l.b16 %v1109
    %v2615 = vunpack.c.h.b16 %v1109
    %v2616 = vunpack.c.l.b16 %v1110
    %v2617 = vunpack.c.h.b16 %v1110
    %v2618 = vunpack.c.l.b16 %v1111
    %v2619 = vunpack.c.h.b16 %v1111
    %v2620 = vunpack.c.l.b16 %v1112
    %v2621 = vunpack.c.h.b16 %v1112
    %v2622 = vunpack.c.l.b16 %v1113
    %v2623 = vunpack.c.h.b16 %v1113
    %v2624 = vunpack.c.l.b16 %v1114
    %v2625 = vunpack.c.h.b16 %v1114
    %v2626 = vunpack.c.l.b16 %v1115
    %v2627 = vunpack.c.h.b16 %v1115
    %v2628 = vunpack.c.l.b16 %v1116
    %v2629 = vunpack.c.h.b16 %v1116
    %v2630 = vunpack.c.l.b16 %v1117
    %v2631 = vunpack.c.h.b16 %v1117
    %v2632 = vunpack.c.l.b16 %v1118
    %v2633 = vunpack.c.h.b16 %v1118
    %v2634 = vunpack.c.l.b16 %v1119
    %v2635 = vunpack.c.h.b16 %v1119
    %v2636 = vunpack.c.l.b16 %v1120
    %v2637 = vunpack.c.h.b16 %v1120
    %v2638 = vunpack.c.l.b16 %v1121
    %v2639 = vunpack.c.h.b16 %v1121
    %v2640 = vunpack.c.l.b16 %v1122
    %v2641 = vunpack.c.h.b16 %v1122
    %v2642 = vunpack.c.l.b16 %v1123
    %v2643 = vunpack.c.h.b16 %v1123
    %v2644 = vunpack.c.l.b16 %v1124
    %v2645 = vunpack.c.h.b16 %v1124
    %v2646 = vunpack.c.l.b16 %v1125
    %v2647 = vunpack.c.h.b16 %v1125
    %v2648 = vunpack.c.l.b16 %v1126
    %v2649 = vunpack.c.h.b16 %v1126
    %v2650 = vunpack.c.l.b16 %v1127
    %v2651 = vunpack.c.h.b16 %v1127
    %v2652 = vunpack.c.l.b16 %v1128
    %v2653 = vunpack.c.h.b16 %v1128
    %v2654 = vunpack.c.l.b16 %v1129
    %v2655 = vunpack.c.h.b16 %v1129
    %v2656 = vunpack.c.l.b16 %v1130
    %v2657 = vunpack.c.h.b16 %v1130
    %v2658 = vunpack.c.l.b16 %v1131
    %v2659 = vunpack.c.h.b16 %v1131
    %v2660 = vunpack.c.l.b16 %v1132
    %v2661 = vunpack.c.h.b16 %v1132
    %v2662 = vunpack.c.l.b16 %v1133
    %v2663 = vunpack.c.h.b16 %v1133
    %v2664 = vunpack.c.l.b16 %v1134
    %v2665 = vunpack.c.h.b16 %v1134
    %v2666 = vunpack.c.l.b16 %v1135
    %v2667 = vunpack.c.h.b16 %v1135
    %v2668 = vunpack.c.l.b16 %v1136
    %v2669 = vunpack.c.h.b16 %v1136
    %v2670 = vunpack.c.l.b16 %v1137
    %v2671 = vunpack.c.h.b16 %v1137
    %v2672 = vunpack.c.l.b16 %v1138
    %v2673 = vunpack.c.h.b16 %v1138
    %v2674 = vunpack.c.l.b16 %v1139
    %v2675 = vunpack.c.h.b16 %v1139
    %v2676 = vunpack.c.l.b16 %v1140
    %v2677 = vunpack.c.h.b16 %v1140
    %v2678 = vunpack.c.l.b16 %v1141
    %v2679 = vunpack.c.h.b16 %v1141
    %v2680 = vunpack.c.l.b16 %v1142
    %v2681 = vunpack.c.h.b16 %v1142
    %v2682 = vunpack.c.l.b16 %v1143
    %v2683 = vunpack.c.h.b16 %v1143
    %v2684 = vunpack.c.l.b16 %v1144
    %v2685 = vunpack.c.h.b16 %v1144
    %v2686 = vunpack.c.l.b16 %v1145
    %v2687 = vunpack.c.h.b16 %v1145
    %v2688 = vunpack.c.l.b16 %v1146
    %v2689 = vunpack.c.h.b16 %v1146
    %v2690 = vunpack.c.l.b16 %v1147
    %v2691 = vunpack.c.h.b16 %v1147
    %v2692 = vunpack.c.l.b16 %v1148
    %v2693 = vunpack.c.h.b16 %v1148
    %v2694 = vunpack.c.l.b16 %v1149
    %v2695 = vunpack.c.h.b16 %v1149
    %v2696 = vunpack.c.l.b16 %v1150
    %v2697 = vunpack.c.h.b16 %v1150
    %v2698 = vunpack.c.l.b16 %v1151
    %v2699 = vunpack.c.h.b16 %v1151
    %v2700 = vunpack.c.l.b16 %v1152
    %v2701 = vunpack.c.h.b16 %v1152
    %v2702 = vunpack.c.l.b16 %v1153
    %v2703 = vunpack.c.h.b16 %v1153
    %v2704 = vunpack.c.l.b16 %v1154
    %v2705 = vunpack.c.h.b16 %v1154
    %v2706 = vunpack.c.l.b16 %v1155
    %v2707 = vunpack.c.h.b16 %v1155
    %v2708 = vunpack.c.l.b16 %v1156
    %v2709 = vunpack.c.h.b16 %v1156
    %v2710 = vunpack.c.l.b16 %v1157
    %v2711 = vunpack.c.h.b16 %v1157
    %v2712 = vunpack.c.l.b16 %v1158
    %v2713 = vunpack.c.h.b16 %v1158
    %v2714 = vunpack.c.l.b16 %v1159
    %v2715 = vunpack.c.h.b16 %v1159
    %v2716 = vunpack.c.l.b16 %v1160
    %v2717 = vunpack.c.h.b16 %v1160
    %v2718 = vunpack.c.l.b16 %v1161
    %v2719 = vunpack.c.h.b16 %v1161
    %v2720 = vunpack.c.l.b16 %v1162
    %v2721 = vunpack.c.h.b16 %v1162
    %v2722 = vunpack.c.l.b16 %v1163
    %v2723 = vunpack.c.h.b16 %v1163
    %v2724 = vunpack.c.l.b16 %v1164
    %v2725 = vunpack.c.h.b16 %v1164
    %v2726 = vunpack.c.l.b16 %v1165
    %v2727 = vunpack.c.h.b16 %v1165
    %v2728 = vunpack.c.l.b16 %v1166
    %v2729 = vunpack.c.h.b16 %v1166
    %v2730 = vunpack.c.l.b16 %v1167
    %v2731 = vunpack.c.h.b16 %v1167
    %v2732 = vunpack.c.l.b16 %v1168
    %v2733 = vunpack.c.h.b16 %v1168
    %v2734 = vunpack.c.l.b16 %v1169
    %v2735 = vunpack.c.h.b16 %v1169
    %v2736 = vunpack.c.l.b16 %v1170
    %v2737 = vunpack.c.h.b16 %v1170
    %v2738 = vunpack.c.l.b16 %v1171
    %v2739 = vunpack.c.h.b16 %v1171
    %v2740 = vunpack.c.l.b16 %v1172
    %v2741 = vunpack.c.h.b16 %v1172
    %v2742 = vunpack.c.l.b16 %v1173
    %v2743 = vunpack.c.h.b16 %v1173
    %v2744 = vunpack.c.l.b16 %v1174
    %v2745 = vunpack.c.h.b16 %v1174
    %v2746 = vunpack.c.l.b16 %v1175
    %v2747 = vunpack.c.h.b16 %v1175
    %v2748 = vunpack.c.l.b16 %v1176
    %v2749 = vunpack.c.h.b16 %v1176
    %v2750 = vunpack.c.l.b16 %v1177
    %v2751 = vunpack.c.h.b16 %v1177
    %v2752 = vunpack.c.l.b16 %v1178
    %v2753 = vunpack.c.h.b16 %v1178
    %v2754 = vunpack.c.l.b16 %v1179
    %v2755 = vunpack.c.h.b16 %v1179
    %v2756 = vunpack.c.l.b16 %v1180
    %v2757 = vunpack.c.h.b16 %v1180
    %v2758 = vunpack.c.l.b16 %v1181
    %v2759 = vunpack.c.h.b16 %v1181
    %v2760 = vunpack.c.l.b16 %v1182
    %v2761 = vunpack.c.h.b16 %v1182
    %v2762 = vunpack.c.l.b16 %v1183
    %v2763 = vunpack.c.h.b16 %v1183
    %v2764 = vunpack.c.l.b16 %v1184
    %v2765 = vunpack.c.h.b16 %v1184
    %v2766 = vunpack.c.l.b16 %v1185
    %v2767 = vunpack.c.h.b16 %v1185
    %v2768 = vunpack.c.l.b16 %v1186
    %v2769 = vunpack.c.h.b16 %v1186
    %v2770 = vunpack.c.l.b16 %v1187
    %v2771 = vunpack.c.h.b16 %v1187
    %v2772 = vunpack.c.l.b16 %v1188
    %v2773 = vunpack.c.h.b16 %v1188
    %v2774 = vunpack.c.l.b16 %v1189
    %v2775 = vunpack.c.h.b16 %v1189
    %v2776 = vunpack.c.l.b16 %v1190
    %v2777 = vunpack.c.h.b16 %v1190
    %v2778 = vunpack.c.l.b16 %v1191
    %v2779 = vunpack.c.h.b16 %v1191
    %v2780 = vunpack.c.l.b16 %v1192
    %v2781 = vunpack.c.h.b16 %v1192
    %v2782 = vunpack.c.l.b16 %v1193
    %v2783 = vunpack.c.h.b16 %v1193
    %v2784 = vunpack.c.l.b16 %v1194
    %v2785 = vunpack.c.h.b16 %v1194
    %v2786 = vunpack.c.l.b16 %v1195
    %v2787 = vunpack.c.h.b16 %v1195
    %v2788 = vunpack.c.l.b16 %v1196
    %v2789 = vunpack.c.h.b16 %v1196
    %v2790 = vunpack.c.l.b16 %v1197
    %v2791 = vunpack.c.h.b16 %v1197
    %v2792 = vunpack.c.l.b16 %v1198
    %v2793 = vunpack.c.h.b16 %v1198
    %v2794 = vunpack.c.l.b16 %v1199
    %v2795 = vunpack.c.h.b16 %v1199
    %v2796 = vunpack.c.l.b16 %v1200
    %v2797 = vunpack.c.h.b16 %v1200
    %v2798 = vunpack.c.l.b16 %v1201
    %v2799 = vunpack.c.h.b16 %v1201
    %v2800 = vunpack.c.l.b16 %v1202
    %v2801 = vunpack.c.h.b16 %v1202
    %v2802 = vunpack.c.l.b16 %v1203
    %v2803 = vunpack.c.h.b16 %v1203
    %v2804 = vunpack.c.l.b16 %v1204
    %v2805 = vunpack.c.h.b16 %v1204
    %v2806 = vunpack.c.l.b16 %v1205
    %v2807 = vunpack.c.h.b16 %v1205
    %v2808 = vunpack.c.l.b16 %v1206
    %v2809 = vunpack.c.h.b16 %v1206
    %v2810 = vunpack.c.l.b16 %v1207
    %v2811 = vunpack.c.h.b16 %v1207
    %v2812 = vunpack.c.l.b16 %v1208
    %v2813 = vunpack.c.h.b16 %v1208
    %v2814 = vunpack.c.l.b16 %v1209
    %v2815 = vunpack.c.h.b16 %v1209
    %v2816 = vunpack.c.l.b16 %v1210
    %v2817 = vunpack.c.h.b16 %v1210
    %v2818 = vunpack.c.l.b16 %v1211
    %v2819 = vunpack.c.h.b16 %v1211
    %v2820 = vunpack.c.l.b16 %v1212
    %v2821 = vunpack.c.h.b16 %v1212
    %v2822 = vunpack.c.l.b16 %v1213
    %v2823 = vunpack.c.h.b16 %v1213
    %v2824 = vunpack.c.l.b16 %v1214
    %v2825 = vunpack.c.h.b16 %v1214
    %v2826 = vunpack.c.l.b16 %v1215
    %v2827 = vunpack.c.h.b16 %v1215
    %v2828 = vunpack.c.l.b16 %v1216
    %v2829 = vunpack.c.h.b16 %v1216
    %v2830 = vunpack.c.l.b16 %v1217
    %v2831 = vunpack.c.h.b16 %v1217
    %v2832 = vunpack.c.l.b16 %v1218
    %v2833 = vunpack.c.h.b16 %v1218
    %v2834 = vunpack.c.l.b16 %v1219
    %v2835 = vunpack.c.h.b16 %v1219
    %v2836 = vunpack.c.l.b16 %v1220
    %v2837 = vunpack.c.h.b16 %v1220
    %v2838 = vunpack.c.l.b16 %v1221
    %v2839 = vunpack.c.h.b16 %v1221
    %v2840 = vunpack.c.l.b16 %v1222
    %v2841 = vunpack.c.h.b16 %v1222
    %v2842 = vunpack.c.l.b16 %v1223
    %v2843 = vunpack.c.h.b16 %v1223
    %v2844 = vpack.c.b16 %v1836, %v1820
    %v2845 = vpack.c.b16 %v1837, %v1821
    %v2846 = vpack.c.b16 %v1838, %v1822
    %v2847 = vpack.c.b16 %v1839, %v1823
    %v2848 = vpack.c.b16 %v1840, %v1824
    %v2849 = vpack.c.b16 %v1841, %v1825
    %v2850 = vpack.c.b16 %v1842, %v1826
    %v2851 = vpack.c.b16 %v1843, %v1827
    %v2852 = vpack.c.b16 %v1844, %v1828
    %v2853 = vpack.c.b16 %v1845, %v1829
    %v2854 = vpack.c.b16 %v1846, %v1830
    %v2855 = vpack.c.b16 %v1847, %v1831
    %v2856 = vpack.c.b16 %v1848, %v1832
    %v2857 = vpack.c.b16 %v1849, %v1833
    %v2858 = vpack.c.b16 %v1850, %v1834
    %v2859 = vpack.c.b16 %v1851, %v1835
    %v2860 = vpack.c.b16 %v1868, %v1852
    %v2861 = vpack.c.b16 %v1869, %v1853
    %v2862 = vpack.c.b16 %v1870, %v1854
    %v2863 = vpack.c.b16 %v1871, %v1855
    %v2864 = vpack.c.b16 %v1872, %v1856
    %v2865 = vpack.c.b16 %v1873, %v1857
    %v2866 = vpack.c.b16 %v1874, %v1858
    %v2867 = vpack.c.b16 %v1875, %v1859
    %v2868 = vpack.c.b16 %v1876, %v1860
    %v2869 = vpack.c.b16 %v1877, %v1861
    %v2870 = vpack.c.b16 %v1878, %v1862
    %v2871 = vpack.c.b16 %v1879, %v1863
    %v2872 = vpack.c.b16 %v1880, %v1864
    %v2873 = vpack.c.b16 %v1881, %v1865
    %v2874 = vpack.c.b16 %v1882, %v1866
    %v2875 = vpack.c.b16 %v1883, %v1867
    %v2876 = vpack.c.b16 %v1900, %v1884
    %v2877 = vpack.c.b16 %v1901, %v1885
    %v2878 = vpack.c.b16 %v1902, %v1886
    %v2879 = vpack.c.b16 %v1903, %v1887
    %v2880 = vpack.c.b16 %v1904, %v1888
    %v2881 = vpack.c.b16 %v1905, %v1889
    %v2882 = vpack.c.b16 %v1906, %v1890
    %v2883 = vpack.c.b16 %v1907, %v1891
    %v2884 = vpack.c.b16 %v1908, %v1892
    %v2885 = vpack.c.b16 %v1909, %v1893
    %v2886 = vpack.c.b16 %v1910, %v1894
    %v2887 = vpack.c.b16 %v1911, %v1895
    %v2888 = vpack.c.b16 %v1912, %v1896
    %v2889 = vpack.c.b16 %v1913, %v1897
    %v2890 = vpack.c.b16 %v1914, %v1898
    %v2891 = vpack.c.b16 %v1915, %v1899
    %v2892 = vpack.c.b16 %v1932, %v1916
    %v2893 = vpack.c.b16 %v1933, %v1917
    %v2894 = vpack.c.b16 %v1934, %v1918
    %v2895 = vpack.c.b16 %v1935, %v1919
    %v2896 = vpack.c.b16 %v1936, %v1920
    %v2897 = vpack.c.b16 %v1937, %v1921
    %v2898 = vpack.c.b16 %v1938, %v1922
    %v2899 = vpack.c.b16 %v1939, %v1923
    %v2900 = vpack.c.b16 %v1940, %v1924
    %v2901 = vpack.c.b16 %v1941, %v1925
    %v2902 = vpack.c.b16 %v1942, %v1926
    %v2903 = vpack.c.b16 %v1943, %v1927
    %v2904 = vpack.c.b16 %v1944, %v1928
    %v2905 = vpack.c.b16 %v1945, %v1929
    %v2906 = vpack.c.b16 %v1946, %v1930
    %v2907 = vpack.c.b16 %v1947, %v1931
    %v2908 = vpack.c.b16 %v1964, %v1948
    %v2909 = vpack.c.b16 %v1965, %v1949
    %v2910 = vpack.c.b16 %v1966, %v1950
    %v2911 = vpack.c.b16 %v1967, %v1951
    %v2912 = vpack.c.b16 %v1968, %v1952
    %v2913 = vpack.c.b16 %v1969, %v1953
    %v2914 = vpack.c.b16 %v1970, %v1954
    %v2915 = vpack.c.b16 %v1971, %v1955
    %v2916 = vpack.c.b16 %v1972, %v1956
    %v2917 = vpack.c.b16 %v1973, %v1957
    %v2918 = vpack.c.b16 %v1974, %v1958
    %v2919 = vpack.c.b16 %v1975, %v1959
    %v2920 = vpack.c.b16 %v1976, %v1960
    %v2921 = vpack.c.b16 %v1977, %v1961
    %v2922 = vpack.c.b16 %v1978, %v1962
    %v2923 = vpack.c.b16 %v1979, %v1963
    %v2924 = vpack.c.b16 %v1996, %v1980
    %v2925 = vpack.c.b16 %v1997, %v1981
    %v2926 = vpack.c.b16 %v1998, %v1982
    %v2927 = vpack.c.b16 %v1999, %v1983
    %v2928 = vpack.c.b16 %v2000, %v1984
    %v2929 = vpack.c.b16 %v2001, %v1985
    %v2930 = vpack.c.b16 %v2002, %v1986
    %v2931 = vpack.c.b16 %v2003, %v1987
    %v2932 = vpack.c.b16 %v2004, %v1988
    %v2933 = vpack.c.b16 %v2005, %v1989
    %v2934 = vpack.c.b16 %v2006, %v1990
    %v2935 = vpack.c.b16 %v2007, %v1991
    %v2936 = vpack.c.b16 %v2008, %v1992
    %v2937 = vpack.c.b16 %v2009, %v1993
    %v2938 = vpack.c.b16 %v2010, %v1994
    %v2939 = vpack.c.b16 %v2011, %v1995
    %v2940 = vpack.c.b16 %v2028, %v2012
    %v2941 = vpack.c.b16 %v2029, %v2013
    %v2942 = vpack.c.b16 %v2030, %v2014
    %v2943 = vpack.c.b16 %v2031, %v2015
    %v2944 = vpack.c.b16 %v2032, %v2016
    %v2945 = vpack.c.b16 %v2033, %v2017
    %v2946 = vpack.c.b16 %v2034, %v2018
    %v2947 = vpack.c.b16 %v2035, %v2019
    %v2948 = vpack.c.b16 %v2036, %v2020
    %v2949 = vpack.c.b16 %v2037, %v2021
    %v2950 = vpack.c.b16 %v2038, %v2022
    %v2951 = vpack.c.b16 %v2039, %v2023
    %v2952 = vpack.c.b16 %v2040, %v2024
    %v2953 = vpack.c.b16 %v2041, %v2025
    %v2954 = vpack.c.b16 %v2042, %v2026
    %v2955 = vpack.c.b16 %v2043, %v2027
    %v2956 = vpack.c.b16 %v2060, %v2044
    %v2957 = vpack.c.b16 %v2061, %v2045
    %v2958 = vpack.c.b16 %v2062, %v2046
    %v2959 = vpack.c.b16 %v2063, %v2047
    %v2960 = vpack.c.b16 %v2064, %v2048
    %v2961 = vpack.c.b16 %v2065, %v2049
    %v2962 = vpack.c.b16 %v2066, %v2050
    %v2963 = vpack.c.b16 %v2067, %v2051
    %v2964 = vpack.c.b16 %v2068, %v2052
    %v2965 = vpack.c.b16 %v2069, %v2053
    %v2966 = vpack.c.b16 %v2070, %v2054
    %v2967 = vpack.c.b16 %v2071, %v2055
    %v2968 = vpack.c.b16 %v2072, %v2056
    %v2969 = vpack.c.b16 %v2073, %v2057
    %v2970 = vpack.c.b16 %v2074, %v2058
    %v2971 = vpack.c.b16 %v2075, %v2059
    %v2972 = vpack.c.b16 %v2092, %v2076
    %v2973 = vpack.c.b16 %v2093, %v2077
    %v2974 = vpack.c.b16 %v2094, %v2078
    %v2975 = vpack.c.b16 %v2095, %v2079
    %v2976 = vpack.c.b16 %v2096, %v2080
    %v2977 = vpack.c.b16 %v2097, %v2081
    %v2978 = vpack.c.b16 %v2098, %v2082
    %v2979 = vpack.c.b16 %v2099, %v2083
    %v2980 = vpack.c.b16 %v2100, %v2084
    %v2981 = vpack.c.b16 %v2101, %v2085
    %v2982 = vpack.c.b16 %v2102, %v2086
    %v2983 = vpack.c.b16 %v2103, %v2087
    %v2984 = vpack.c.b16 %v2104, %v2088
    %v2985 = vpack.c.b16 %v2105, %v2089
    %v2986 = vpack.c.b16 %v2106, %v2090
    %v2987 = vpack.c.b16 %v2107, %v2091
    %v2988 = vpack.c.b16 %v2124, %v2108
    %v2989 = vpack.c.b16 %v2125, %v2109
    %v2990 = vpack.c.b16 %v2126, %v2110
    %v2991 = vpack.c.b16 %v2127, %v2111
    %v2992 = vpack.c.b16 %v2128, %v2112
    %v2993 = vpack.c.b16 %v2129, %v2113
    %v2994 = vpack.c.b16 %v2130, %v2114
    %v2995 = vpack.c.b16 %v2131, %v2115
    %v2996 = vpack.c.b16 %v2132, %v2116
    %v2997 = vpack.c.b16 %v2133, %v2117
    %v2998 = vpack.c.b16 %v2134, %v2118
    %v2999 = vpack.c.b16 %v2135, %v2119
    %v3000 = vpack.c.b16 %v2136, %v2120
    %v3001 = vpack.c.b16 %v2137, %v2121
    %v3002 = vpack.c.b16 %v2138, %v2122
    %v3003 = vpack.c.b16 %v2139, %v2123
    %v3004 = vpack.c.b16 %v2156, %v2140
    %v3005 = vpack.c.b16 %v2157, %v2141
    %v3006 = vpack.c.b16 %v2158, %v2142
    %v3007 = vpack.c.b16 %v2159, %v2143
    %v3008 = vpack.c.b16 %v2160, %v2144
    %v3009 = vpack.c.b16 %v2161, %v2145
    %v3010 = vpack.c.b16 %v2162, %v2146
    %v3011 = vpack.c.b16 %v2163, %v2147
    %v3012 = vpack.c.b16 %v2164, %v2148
    %v3013 = vpack.c.b16 %v2165, %v2149
    %v3014 = vpack.c.b16 %v2166, %v2150
    %v3015 = vpack.c.b16 %v2167, %v2151
    %v3016 = vpack.c.b16 %v2168, %v2152
    %v3017 = vpack.c.b16 %v2169, %v2153
    %v3018 = vpack.c.b16 %v2170, %v2154
    %v3019 = vpack.c.b16 %v2171, %v2155
    %v3020 = vpack.c.b16 %v2188, %v2172
    %v3021 = vpack.c.b16 %v2189, %v2173
    %v3022 = vpack.c.b16 %v2190, %v2174
    %v3023 = vpack.c.b16 %v2191, %v2175
    %v3024 = vpack.c.b16 %v2192, %v2176
    %v3025 = vpack.c.b16 %v2193, %v2177
    %v3026 = vpack.c.b16 %v2194, %v2178
    %v3027 = vpack.c.b16 %v2195, %v2179
    %v3028 = vpack.c.b16 %v2196, %v2180
    %v3029 = vpack.c.b16 %v2197, %v2181
    %v3030 = vpack.c.b16 %v2198, %v2182
    %v3031 = vpack.c.b16 %v2199, %v2183
    %v3032 = vpack.c.b16 %v2200, %v2184
    %v3033 = vpack.c.b16 %v2201, %v2185
    %v3034 = vpack.c.b16 %v2202, %v2186
    %v3035 = vpack.c.b16 %v2203, %v2187
    %v3036 = vpack.c.b16 %v2220, %v2204
    %v3037 = vpack.c.b16 %v2221, %v2205
    %v3038 = vpack.c.b16 %v2222, %v2206
    %v3039 = vpack.c.b16 %v2223, %v2207
    %v3040 = vpack.c.b16 %v2224, %v2208
    %v3041 = vpack.c.b16 %v2225, %v2209
    %v3042 = vpack.c.b16 %v2226, %v2210
    %v3043 = vpack.c.b16 %v2227, %v2211
    %v3044 = vpack.c.b16 %v2228, %v2212
    %v3045 = vpack.c.b16 %v2229, %v2213
    %v3046 = vpack.c.b16 %v2230, %v2214
    %v3047 = vpack.c.b16 %v2231, %v2215
    %v3048 = vpack.c.b16 %v2232, %v2216
    %v3049 = vpack.c.b16 %v2233, %v2217
    %v3050 = vpack.c.b16 %v2234, %v2218
    %v3051 = vpack.c.b16 %v2235, %v2219
    %v3052 = vpack.c.b16 %v2252, %v2236
    %v3053 = vpack.c.b16 %v2253, %v2237
    %v3054 = vpack.c.b16 %v2254, %v2238
    %v3055 = vpack.c.b16 %v2255, %v2239
    %v3056 = vpack.c.b16 %v2256, %v2240
    %v3057 = vpack.c.b16 %v2257, %v2241
    %v3058 = vpack.c.b16 %v2258, %v2242
    %v3059 = vpack.c.b16 %v2259, %v2243
    %v3060 = vpack.c.b16 %v2260, %v2244
    %v3061 = vpack.c.b16 %v2261, %v2245
    %v3062 = vpack.c.b16 %v2262, %v2246
    %v3063 = vpack.c.b16 %v2263, %v2247
    %v3064 = vpack.c.b16 %v2264, %v2248
    %v3065 = vpack.c.b16 %v2265, %v2249
    %v3066 = vpack.c.b16 %v2266, %v2250
    %v3067 = vpack.c.b16 %v2267, %v2251
    %v3068 = vpack.c.b16 %v2284, %v2268
    %v3069 = vpack.c.b16 %v2285, %v2269
    %v3070 = vpack.c.b16 %v2286, %v2270
    %v3071 = vpack.c.b16 %v2287, %v2271
    %v3072 = vpack.c.b16 %v2288, %v2272
    %v3073 = vpack.c.b16 %v2289, %v2273
    %v3074 = vpack.c.b16 %v2290, %v2274
    %v3075 = vpack.c.b16 %v2291, %v2275
    %v3076 = vpack.c.b16 %v2292, %v2276
    %v3077 = vpack.c.b16 %v2293, %v2277
    %v3078 = vpack.c.b16 %v2294, %v2278
    %v3079 = vpack.c.b16 %v2295, %v2279
    %v3080 = vpack.c.b16 %v2296, %v2280
    %v3081 = vpack.c.b16 %v2297, %v2281
    %v3082 = vpack.c.b16 %v2298, %v2282
    %v3083 = vpack.c.b16 %v2299, %v2283
    %v3084 = vpack.c.b16 %v2316, %v2300
    %v3085 = vpack.c.b16 %v2317, %v2301
    %v3086 = vpack.c.b16 %v2318, %v2302
    %v3087 = vpack.c.b16 %v2319, %v2303
    %v3088 = vpack.c.b16 %v2320, %v2304
    %v3089 = vpack.c.b16 %v2321, %v2305
    %v3090 = vpack.c.b16 %v2322, %v2306
    %v3091 = vpack.c.b16 %v2323, %v2307
    %v3092 = vpack.c.b16 %v2324, %v2308
    %v3093 = vpack.c.b16 %v2325, %v2309
    %v3094 = vpack.c.b16 %v2326, %v2310
    %v3095 = vpack.c.b16 %v2327, %v2311
    %v3096 = vpack.c.b16 %v2328, %v2312
    %v3097 = vpack.c.b16 %v2329, %v2313
    %v3098 = vpack.c.b16 %v2330, %v2314
    %v3099 = vpack.c.b16 %v2331, %v2315
    %v3100 = vpack.c.b16 %v2348, %v2332
    %v3101 = vpack.c.b16 %v2349, %v2333
    %v3102 = vpack.c.b16 %v2350, %v2334
    %v3103 = vpack.c.b16 %v2351, %v2335
    %v3104 = vpack.c.b16 %v2352, %v2336
    %v3105 = vpack.c.b16 %v2353, %v2337
    %v3106 = vpack.c.b16 %v2354, %v2338
    %v3107 = vpack.c.b16 %v2355, %v2339
    %v3108 = vpack.c.b16 %v2356, %v2340
    %v3109 = vpack.c.b16 %v2357, %v2341
    %v3110 = vpack.c.b16 %v2358, %v2342
    %v3111 = vpack.c.b16 %v2359, %v2343
    %v3112 = vpack.c.b16 %v2360, %v2344
    %v3113 = vpack.c.b16 %v2361, %v2345
    %v3114 = vpack.c.b16 %v2362, %v2346
    %v3115 = vpack.c.b16 %v2363, %v2347
    %v3116 = vpack.c.b16 %v2380, %v2364
    %v3117 = vpack.c.b16 %v2381, %v2365
    %v3118 = vpack.c.b16 %v2382, %v2366
    %v3119 = vpack.c.b16 %v2383, %v2367
    %v3120 = vpack.c.b16 %v2384, %v2368
    %v3121 = vpack.c.b16 %v2385, %v2369
    %v3122 = vpack.c.b16 %v2386, %v2370
    %v3123 = vpack.c.b16 %v2387, %v2371
    %v3124 = vpack.c.b16 %v2388, %v2372
    %v3125 = vpack.c.b16 %v2389, %v2373
    %v3126 = vpack.c.b16 %v2390, %v2374
    %v3127 = vpack.c.b16 %v2391, %v2375
    %v3128 = vpack.c.b16 %v2392, %v2376
    %v3129 = vpack.c.b16 %v2393, %v2377
    %v3130 = vpack.c.b16 %v2394, %v2378
    %v3131 = vpack.c.b16 %v2395, %v2379
    %v3132 = vpack.c.b16 %v2412, %v2396
    %v3133 = vpack.c.b16 %v2413, %v2397
    %v3134 = vpack.c.b16 %v2414, %v2398
    %v3135 = vpack.c.b16 %v2415, %v2399
    %v3136 = vpack.c.b16 %v2416, %v2400
    %v3137 = vpack.c.b16 %v2417, %v2401
    %v3138 = vpack.c.b16 %v2418, %v2402
    %v3139 = vpack.c.b16 %v2419, %v2403
    %v3140 = vpack.c.b16 %v2420, %v2404
    %v3141 = vpack.c.b16 %v2421, %v2405
    %v3142 = vpack.c.b16 %v2422, %v2406
    %v3143 = vpack.c.b16 %v2423, %v2407
    %v3144 = vpack.c.b16 %v2424, %v2408
    %v3145 = vpack.c.b16 %v2425, %v2409
    %v3146 = vpack.c.b16 %v2426, %v2410
    %v3147 = vpack.c.b16 %v2427, %v2411
    %v3148 = vpack.c.b16 %v2444, %v2428
    %v3149 = vpack.c.b16 %v2445, %v2429
    %v3150 = vpack.c.b16 %v2446, %v2430
    %v3151 = vpack.c.b16 %v2447, %v2431
    %v3152 = vpack.c.b16 %v2448, %v2432
    %v3153 = vpack.c.b16 %v2449, %v2433
    %v3154 = vpack.c.b16 %v2450, %v2434
    %v3155 = vpack.c.b16 %v2451, %v2435
    %v3156 = vpack.c.b16 %v2452, %v2436
    %v3157 = vpack.c.b16 %v2453, %v2437
    %v3158 = vpack.c.b16 %v2454, %v2438
    %v3159 = vpack.c.b16 %v2455, %v2439
    %v3160 = vpack.c.b16 %v2456, %v2440
    %v3161 = vpack.c.b16 %v2457, %v2441
    %v3162 = vpack.c.b16 %v2458, %v2442
    %v3163 = vpack.c.b16 %v2459, %v2443
    %v3164 = vpack.c.b16 %v2476, %v2460
    %v3165 = vpack.c.b16 %v2477, %v2461
    %v3166 = vpack.c.b16 %v2478, %v2462
    %v3167 = vpack.c.b16 %v2479, %v2463
    %v3168 = vpack.c.b16 %v2480, %v2464
    %v3169 = vpack.c.b16 %v2481, %v2465
    %v3170 = vpack.c.b16 %v2482, %v2466
    %v3171 = vpack.c.b16 %v2483, %v2467
    %v3172 = vpack.c.b16 %v2484, %v2468
    %v3173 = vpack.c.b16 %v2485, %v2469
    %v3174 = vpack.c.b16 %v2486, %v2470
    %v3175 = vpack.c.b16 %v2487, %v2471
    %v3176 = vpack.c.b16 %v2488, %v2472
    %v3177 = vpack.c.b16 %v2489, %v2473
    %v3178 = vpack.c.b16 %v2490, %v2474
    %v3179 = vpack.c.b16 %v2491, %v2475
    %v3180 = vpack.c.b16 %v2508, %v2492
    %v3181 = vpack.c.b16 %v2509, %v2493
    %v3182 = vpack.c.b16 %v2510, %v2494
    %v3183 = vpack.c.b16 %v2511, %v2495
    %v3184 = vpack.c.b16 %v2512, %v2496
    %v3185 = vpack.c.b16 %v2513, %v2497
    %v3186 = vpack.c.b16 %v2514, %v2498
    %v3187 = vpack.c.b16 %v2515, %v2499
    %v3188 = vpack.c.b16 %v2516, %v2500
    %v3189 = vpack.c.b16 %v2517, %v2501
    %v3190 = vpack.c.b16 %v2518, %v2502
    %v3191 = vpack.c.b16 %v2519, %v2503
    %v3192 = vpack.c.b16 %v2520, %v2504
    %v3193 = vpack.c.b16 %v2521, %v2505
    %v3194 = vpack.c.b16 %v2522, %v2506
    %v3195 = vpack.c.b16 %v2523, %v2507
    %v3196 = vpack.c.b16 %v2540, %v2524
    %v3197 = vpack.c.b16 %v2541, %v2525
    %v3198 = vpack.c.b16 %v2542, %v2526
    %v3199 = vpack.c.b16 %v2543, %v2527
    %v3200 = vpack.c.b16 %v2544, %v2528
    %v3201 = vpack.c.b16 %v2545, %v2529
    %v3202 = vpack.c.b16 %v2546, %v2530
    %v3203 = vpack.c.b16 %v2547, %v2531
    %v3204 = vpack.c.b16 %v2548, %v2532
    %v3205 = vpack.c.b16 %v2549, %v2533
    %v3206 = vpack.c.b16 %v2550, %v2534
    %v3207 = vpack.c.b16 %v2551, %v2535
    %v3208 = vpack.c.b16 %v2552, %v2536
    %v3209 = vpack.c.b16 %v2553, %v2537
    %v3210 = vpack.c.b16 %v2554, %v2538
    %v3211 = vpack.c.b16 %v2555, %v2539
    %v3212 = vpack.c.b16 %v2572, %v2556
    %v3213 = vpack.c.b16 %v2573, %v2557
    %v3214 = vpack.c.b16 %v2574, %v2558
    %v3215 = vpack.c.b16 %v2575, %v2559
    %v3216 = vpack.c.b16 %v2576, %v2560
    %v3217 = vpack.c.b16 %v2577, %v2561
    %v3218 = vpack.c.b16 %v2578, %v2562
    %v3219 = vpack.c.b16 %v2579, %v2563
    %v3220 = vpack.c.b16 %v2580, %v2564
    %v3221 = vpack.c.b16 %v2581, %v2565
    %v3222 = vpack.c.b16 %v2582, %v2566
    %v3223 = vpack.c.b16 %v2583, %v2567
    %v3224 = vpack.c.b16 %v2584, %v2568
    %v3225 = vpack.c.b16 %v2585, %v2569
    %v3226 = vpack.c.b16 %v2586, %v2570
    %v3227 = vpack.c.b16 %v2587, %v2571
    %v3228 = vpack.c.b16 %v2604, %v2588
    %v3229 = vpack.c.b16 %v2605, %v2589
    %v3230 = vpack.c.b16 %v2606, %v2590
    %v3231 = vpack.c.b16 %v2607, %v2591
    %v3232 = vpack.c.b16 %v2608, %v2592
    %v3233 = vpack.c.b16 %v2609, %v2593
    %v3234 = vpack.c.b16 %v2610, %v2594
    %v3235 = vpack.c.b16 %v2611, %v2595
    %v3236 = vpack.c.b16 %v2612, %v2596
    %v3237 = vpack.c.b16 %v2613, %v2597
    %v3238 = vpack.c.b16 %v2614, %v2598
    %v3239 = vpack.c.b16 %v2615, %v2599
    %v3240 = vpack.c.b16 %v2616, %v2600
    %v3241 = vpack.c.b16 %v2617, %v2601
    %v3242 = vpack.c.b16 %v2618, %v2602
    %v3243 = vpack.c.b16 %v2619, %v2603
    %v3244 = vpack.c.b16 %v2636, %v2620
    %v3245 = vpack.c.b16 %v2637, %v2621
    %v3246 = vpack.c.b16 %v2638, %v2622
    %v3247 = vpack.c.b16 %v2639, %v2623
    %v3248 = vpack.c.b16 %v2640, %v2624
    %v3249 = vpack.c.b16 %v2641, %v2625
    %v3250 = vpack.c.b16 %v2642, %v2626
    %v3251 = vpack.c.b16 %v2643, %v2627
    %v3252 = vpack.c.b16 %v2644, %v2628
    %v3253 = vpack.c.b16 %v2645, %v2629
    %v3254 = vpack.c.b16 %v2646, %v2630
    %v3255 = vpack.c.b16 %v2647, %v2631
    %v3256 = vpack.c.b16 %v2648, %v2632
    %v3257 = vpack.c.b16 %v2649, %v2633
    %v3258 = vpack.c.b16 %v2650, %v2634
    %v3259 = vpack.c.b16 %v2651, %v2635
    %v3260 = vpack.c.b16 %v2668, %v2652
    %v3261 = vpack.c.b16 %v2669, %v2653
    %v3262 = vpack.c.b16 %v2670, %v2654
    %v3263 = vpack.c.b16 %v2671, %v2655
    %v3264 = vpack.c.b16 %v2672, %v2656
    %v3265 = vpack.c.b16 %v2673, %v2657
    %v3266 = vpack.c.b16 %v2674, %v2658
    %v3267 = vpack.c.b16 %v2675, %v2659
    %v3268 = vpack.c.b16 %v2676, %v2660
    %v3269 = vpack.c.b16 %v2677, %v2661
    %v3270 = vpack.c.b16 %v2678, %v2662
    %v3271 = vpack.c.b16 %v2679, %v2663
    %v3272 = vpack.c.b16 %v2680, %v2664
    %v3273 = vpack.c.b16 %v2681, %v2665
    %v3274 = vpack.c.b16 %v2682, %v2666
    %v3275 = vpack.c.b16 %v2683, %v2667
    %v3276 = vpack.c.b16 %v2700, %v2684
    %v3277 = vpack.c.b16 %v2701, %v2685
    %v3278 = vpack.c.b16 %v2702, %v2686
    %v3279 = vpack.c.b16 %v2703, %v2687
    %v3280 = vpack.c.b16 %v2704, %v2688
    %v3281 = vpack.c.b16 %v2705, %v2689
    %v3282 = vpack.c.b16 %v2706, %v2690
    %v3283 = vpack.c.b16 %v2707, %v2691
    %v3284 = vpack.c.b16 %v2708, %v2692
    %v3285 = vpack.c.b16 %v2709, %v2693
    %v3286 = vpack.c.b16 %v2710, %v2694
    %v3287 = vpack.c.b16 %v2711, %v2695
    %v3288 = vpack.c.b16 %v2712, %v2696
    %v3289 = vpack.c.b16 %v2713, %v2697
    %v3290 = vpack.c.b16 %v2714, %v2698
    %v3291 = vpack.c.b16 %v2715, %v2699
    %v3292 = vpack.c.b16 %v2732, %v2716
    %v3293 = vpack.c.b16 %v2733, %v2717
    %v3294 = vpack.c.b16 %v2734, %v2718
    %v3295 = vpack.c.b16 %v2735, %v2719
    %v3296 = vpack.c.b16 %v2736, %v2720
    %v3297 = vpack.c.b16 %v2737, %v2721
    %v3298 = vpack.c.b16 %v2738, %v2722
    %v3299 = vpack.c.b16 %v2739, %v2723
    %v3300 = vpack.c.b16 %v2740, %v2724
    %v3301 = vpack.c.b16 %v2741, %v2725
    %v3302 = vpack.c.b16 %v2742, %v2726
    %v3303 = vpack.c.b16 %v2743, %v2727
    %v3304 = vpack.c.b16 %v2744, %v2728
    %v3305 = vpack.c.b16 %v2745, %v2729
    %v3306 = vpack.c.b16 %v2746, %v2730
    %v3307 = vpack.c.b16 %v2747, %v2731
    %v3308 = vpack.c.b16 %v2764, %v2748
    %v3309 = vpack.c.b16 %v2765, %v2749
    %v3310 = vpack.c.b16 %v2766, %v2750
    %v3311 = vpack.c.b16 %v2767, %v2751
    %v3312 = vpack.c.b16 %v2768, %v2752
    %v3313 = vpack.c.b16 %v2769, %v2753
    %v3314 = vpack.c.b16 %v2770, %v2754
    %v3315 = vpack.c.b16 %v2771, %v2755
    %v3316 = vpack.c.b16 %v2772, %v2756
    %v3317 = vpack.c.b16 %v2773, %v2757
    %v3318 = vpack.c.b16 %v2774, %v2758
    %v3319 = vpack.c.b16 %v2775, %v2759
    %v3320 = vpack.c.b16 %v2776, %v2760
    %v3321 = vpack.c.b16 %v2777, %v2761
    %v3322 = vpack.c.b16 %v2778, %v2762
    %v3323 = vpack.c.b16 %v2779, %v2763
    %v3324 = vpack.c.b16 %v2796, %v2780
    %v3325 = vpack.c.b16 %v2797, %v2781
    %v3326 = vpack.c.b16 %v2798, %v2782
    %v3327 = vpack.c.b16 %v2799, %v2783
    %v3328 = vpack.c.b16 %v2800, %v2784
    %v3329 = vpack.c.b16 %v2801, %v2785
    %v3330 = vpack.c.b16 %v2802, %v2786
    %v3331 = vpack.c.b16 %v2803, %v2787
    %v3332 = vpack.c.b16 %v2804, %v2788
    %v3333 = vpack.c.b16 %v2805, %v2789
    %v3334 = vpack.c.b16 %v2806, %v2790
    %v3335 = vpack.c.b16 %v2807, %v2791
    %v3336 = vpack.c.b16 %v2808, %v2792
    %v3337 = vpack.c.b16 %v2809, %v2793
    %v3338 = vpack.c.b16 %v2810, %v2794
    %v3339 = vpack.c.b16 %v2811, %v2795
    %v3340 = vpack.c.b16 %v2828, %v2812
    %v3341 = vpack.c.b16 %v2829, %v2813
    %v3342 = vpack.c.b16 %v2830, %v2814
    %v3343 = vpack.c.b16 %v2831, %v2815
    %v3344 = vpack.c.b16 %v2832, %v2816
    %v3345 = vpack.c.b16 %v2833, %v2817
    %v3346 = vpack.c.b16 %v2834, %v2818
    %v3347 = vpack.c.b16 %v2835, %v2819
    %v3348 = vpack.c.b16 %v2836, %v2820
    %v3349 = vpack.c.b16 %v2837, %v2821
    %v3350 = vpack.c.b16 %v2838, %v2822
    %v3351 = vpack.c.b16 %v2839, %v2823
    %v3352 = vpack.c.b16 %v2840, %v2824
    %v3353 = vpack.c.b16 %v2841, %v2825
    %v3354 = vpack.c.b16 %v2842, %v2826
    %v3355 = vpack.c.b16 %v2843, %v2827
    %3868 = vmatprep.subr.bf16.mxu0 %v2957
    %3869 = vmatpush1.bf16.msra.mxu0 %v2956
    %3870 = vmatprep.subr.bf16.mxu0 %v2941
    %3871 = vmatpush1.bf16.msra.mxu0 %v2940
    %3872 = vmatprep.subr.bf16.mxu0 %v2925
    %3873 = vmatpush1.bf16.msra.mxu0 %v2924
    %3874 = vmatprep.subr.bf16.mxu0 %v2909
    %3875 = vmatpush1.bf16.msra.mxu0 %v2908
    %3876 = vmatprep.subr.bf16.mxu0 %v2893
    %3877 = vmatpush1.bf16.msra.mxu0 %v2892
    %3878 = vmatprep.subr.bf16.mxu0 %v2877
    %3879 = vmatpush1.bf16.msra.mxu0 %v2876
    %3880 = vmatprep.subr.bf16.mxu0 %v2861
    %3881 = vmatpush1.bf16.msra.mxu0 %v2860
    %3882 = vmatprep.subr.bf16.mxu0 %v2845
    %3883 = vmatpush1.bf16.msra.mxu0 %v2844
    %3884 = vmatprep.subr.bf16.mxu0 %v3085
    %3885 = vmatpush2.bf16.msra.mxu0 %v3084
    %3886 = vmatprep.subr.bf16.mxu0 %v3069
    %3887 = vmatpush2.bf16.msra.mxu0 %v3068
    %3888 = vmatprep.subr.bf16.mxu0 %v3053
    %3889 = vmatpush2.bf16.msra.mxu0 %v3052
    %3890 = vmatprep.subr.bf16.mxu0 %v3037
    %3891 = vmatpush2.bf16.msra.mxu0 %v3036
    %3892 = vmatprep.subr.bf16.mxu0 %v3021
    %3893 = vmatpush2.bf16.msra.mxu0 %v3020
    %3894 = vmatprep.subr.bf16.mxu0 %v3005
    %3895 = vmatpush2.bf16.msra.mxu0 %v3004
    %3896 = vmatprep.subr.bf16.mxu0 %v2989
    %3897 = vmatpush2.bf16.msra.mxu0 %v2988
    %3898 = vmatprep.subr.bf16.mxu0 %v2973
    %3899 = vmatpush2.bf16.msra.mxu0 %v2972
    %3900 = vmatprep.mubr.bf16.mxu0 %v709
    %3901 = vmatmul.mubr.bf16.gmra.mxu0 %v708
    %v3902 = vpop.f32.mrf.mxu0
    %v3903 = vadd.f32 %v1231, %v3902
    %v3904 = vpop.f32.mrf.mxu0
    %v3905 = vadd.f32 %v1235, %v3904
    %v3906 = vpop.f32.mrf.mxu0
    %v3907 = vadd.f32 %v1231, %v3906
    %v3908 = vpop.f32.mrf.mxu0
    %v3909 = vadd.f32 %v1235, %v3908
    %3910 = vdwg.mxu0
    %3911 = vmatprep.subr.bf16.mxu0 %v3213
    %3912 = vmatpush1.bf16.msra.mxu0 %v3212
    %3913 = vmatprep.subr.bf16.mxu0 %v3197
    %3914 = vmatpush1.bf16.msra.mxu0 %v3196
    %3915 = vmatprep.subr.bf16.mxu0 %v3181
    %3916 = vmatpush1.bf16.msra.mxu0 %v3180
    %3917 = vmatprep.subr.bf16.mxu0 %v3165
    %3918 = vmatpush1.bf16.msra.mxu0 %v3164
    %3919 = vmatprep.subr.bf16.mxu0 %v3149
    %3920 = vmatpush1.bf16.msra.mxu0 %v3148
    %3921 = vmatprep.subr.bf16.mxu0 %v3133
    %3922 = vmatpush1.bf16.msra.mxu0 %v3132
    %3923 = vmatprep.subr.bf16.mxu0 %v3117
    %3924 = vmatpush1.bf16.msra.mxu0 %v3116
    %3925 = vmatprep.subr.bf16.mxu0 %v3101
    %3926 = vmatpush1.bf16.msra.mxu0 %v3100
    %3927 = vmatprep.subr.bf16.mxu0 %v3341
    %3928 = vmatpush2.bf16.msra.mxu0 %v3340
    %3929 = vmatprep.subr.bf16.mxu0 %v3325
    %3930 = vmatpush2.bf16.msra.mxu0 %v3324
    %3931 = vmatprep.subr.bf16.mxu0 %v3309
    %3932 = vmatpush2.bf16.msra.mxu0 %v3308
    %3933 = vmatprep.subr.bf16.mxu0 %v3293
    %3934 = vmatpush2.bf16.msra.mxu0 %v3292
    %3935 = vmatprep.subr.bf16.mxu0 %v3277
    %3936 = vmatpush2.bf16.msra.mxu0 %v3276
    %3937 = vmatprep.subr.bf16.mxu0 %v3261
    %3938 = vmatpush2.bf16.msra.mxu0 %v3260
    %3939 = vmatprep.subr.bf16.mxu0 %v3245
    %3940 = vmatpush2.bf16.msra.mxu0 %v3244
    %3941 = vmatprep.subr.bf16.mxu0 %v3229
    %3942 = vmatpush2.bf16.msra.mxu0 %v3228
    %3943 = vmatprep.mubr.bf16.mxu0 %v711
    %3944 = vmatmul.mubr.bf16.gmra.mxu0 %v710
    %v3945 = vpop.f32.mrf.mxu0
    %v3946 = vadd.f32 %v3903, %v3945
    %v3947 = vpop.f32.mrf.mxu0
    %v3948 = vadd.f32 %v3905, %v3947
    %v3949 = vpop.f32.mrf.mxu0
    %v3950 = vadd.f32 %v3907, %v3949
    %v3951 = vpop.f32.mrf.mxu0
    %v3952 = vadd.f32 %v3909, %v3951
    %3953 = vdwg.mxu0
    %3954 = vmatprep.subr.bf16.mxu0 %v2959
    %3955 = vmatpush1.bf16.msra.mxu0 %v2958
    %3956 = vmatprep.subr.bf16.mxu0 %v2943
    %3957 = vmatpush1.bf16.msra.mxu0 %v2942
    %3958 = vmatprep.subr.bf16.mxu0 %v2927
    %3959 = vmatpush1.bf16.msra.mxu0 %v2926
    %3960 = vmatprep.subr.bf16.mxu0 %v2911
    %3961 = vmatpush1.bf16.msra.mxu0 %v2910
    %3962 = vmatprep.subr.bf16.mxu0 %v2895
    %3963 = vmatpush1.bf16.msra.mxu0 %v2894
    %3964 = vmatprep.subr.bf16.mxu0 %v2879
    %3965 = vmatpush1.bf16.msra.mxu0 %v2878
    %3966 = vmatprep.subr.bf16.mxu0 %v2863
    %3967 = vmatpush1.bf16.msra.mxu0 %v2862
    %3968 = vmatprep.subr.bf16.mxu0 %v2847
    %3969 = vmatpush1.bf16.msra.mxu0 %v2846
    %3970 = vmatprep.subr.bf16.mxu0 %v3087
    %3971 = vmatpush2.bf16.msra.mxu0 %v3086
    %3972 = vmatprep.subr.bf16.mxu0 %v3071
    %3973 = vmatpush2.bf16.msra.mxu0 %v3070
    %3974 = vmatprep.subr.bf16.mxu0 %v3055
    %3975 = vmatpush2.bf16.msra.mxu0 %v3054
    %3976 = vmatprep.subr.bf16.mxu0 %v3039
    %3977 = vmatpush2.bf16.msra.mxu0 %v3038
    %3978 = vmatprep.subr.bf16.mxu0 %v3023
    %3979 = vmatpush2.bf16.msra.mxu0 %v3022
    %3980 = vmatprep.subr.bf16.mxu0 %v3007
    %3981 = vmatpush2.bf16.msra.mxu0 %v3006
    %3982 = vmatprep.subr.bf16.mxu0 %v2991
    %3983 = vmatpush2.bf16.msra.mxu0 %v2990
    %3984 = vmatprep.subr.bf16.mxu0 %v2975
    %3985 = vmatpush2.bf16.msra.mxu0 %v2974
    %3986 = vmatprep.mubr.bf16.mxu0 %v709
    %3987 = vmatmul.mubr.bf16.gmra.mxu0 %v708
    %v3988 = vpop.f32.mrf.mxu0
    %v3989 = vadd.f32 %v1239, %v3988
    %v3990 = vpop.f32.mrf.mxu0
    %v3991 = vadd.f32 %v1243, %v3990
    %v3992 = vpop.f32.mrf.mxu0
    %v3993 = vadd.f32 %v1239, %v3992
    %v3994 = vpop.f32.mrf.mxu0
    %v3995 = vadd.f32 %v1243, %v3994
    %3996 = vdwg.mxu0
    %3997 = vmatprep.subr.bf16.mxu0 %v3215
    %3998 = vmatpush1.bf16.msra.mxu0 %v3214
    %3999 = vmatprep.subr.bf16.mxu0 %v3199
    %4000 = vmatpush1.bf16.msra.mxu0 %v3198
    %4001 = vmatprep.subr.bf16.mxu0 %v3183
    %4002 = vmatpush1.bf16.msra.mxu0 %v3182
    %4003 = vmatprep.subr.bf16.mxu0 %v3167
    %4004 = vmatpush1.bf16.msra.mxu0 %v3166
    %4005 = vmatprep.subr.bf16.mxu0 %v3151
    %4006 = vmatpush1.bf16.msra.mxu0 %v3150
    %4007 = vmatprep.subr.bf16.mxu0 %v3135
    %4008 = vmatpush1.bf16.msra.mxu0 %v3134
    %4009 = vmatprep.subr.bf16.mxu0 %v3119
    %4010 = vmatpush1.bf16.msra.mxu0 %v3118
    %4011 = vmatprep.subr.bf16.mxu0 %v3103
    %4012 = vmatpush1.bf16.msra.mxu0 %v3102
    %4013 = vmatprep.subr.bf16.mxu0 %v3343
    %4014 = vmatpush2.bf16.msra.mxu0 %v3342
    %4015 = vmatprep.subr.bf16.mxu0 %v3327
    %4016 = vmatpush2.bf16.msra.mxu0 %v3326
    %4017 = vmatprep.subr.bf16.mxu0 %v3311
    %4018 = vmatpush2.bf16.msra.mxu0 %v3310
    %4019 = vmatprep.subr.bf16.mxu0 %v3295
    %4020 = vmatpush2.bf16.msra.mxu0 %v3294
    %4021 = vmatprep.subr.bf16.mxu0 %v3279
    %4022 = vmatpush2.bf16.msra.mxu0 %v3278
    %4023 = vmatprep.subr.bf16.mxu0 %v3263
    %4024 = vmatpush2.bf16.msra.mxu0 %v3262
    %4025 = vmatprep.subr.bf16.mxu0 %v3247
    %4026 = vmatpush2.bf16.msra.mxu0 %v3246
    %4027 = vmatprep.subr.bf16.mxu0 %v3231
    %4028 = vmatpush2.bf16.msra.mxu0 %v3230
    %4029 = vmatprep.mubr.bf16.mxu0 %v711
    %4030 = vmatmul.mubr.bf16.gmra.mxu0 %v710
    %v4031 = vpop.f32.mrf.mxu0
    %v4032 = vadd.f32 %v3989, %v4031
    %v4033 = vpop.f32.mrf.mxu0
    %v4034 = vadd.f32 %v3991, %v4033
    %v4035 = vpop.f32.mrf.mxu0
    %v4036 = vadd.f32 %v3993, %v4035
    %v4037 = vpop.f32.mrf.mxu0
    %v4038 = vadd.f32 %v3995, %v4037
    %4039 = vdwg.mxu0
    %4040 = vmatprep.subr.bf16.mxu0 %v2961
    %4041 = vmatpush1.bf16.msra.mxu0 %v2960
    %4042 = vmatprep.subr.bf16.mxu0 %v2945
    %4043 = vmatpush1.bf16.msra.mxu0 %v2944
    %4044 = vmatprep.subr.bf16.mxu0 %v2929
    %4045 = vmatpush1.bf16.msra.mxu0 %v2928
    %4046 = vmatprep.subr.bf16.mxu0 %v2913
    %4047 = vmatpush1.bf16.msra.mxu0 %v2912
    %4048 = vmatprep.subr.bf16.mxu0 %v2897
    %4049 = vmatpush1.bf16.msra.mxu0 %v2896
    %4050 = vmatprep.subr.bf16.mxu0 %v2881
    %4051 = vmatpush1.bf16.msra.mxu0 %v2880
    %4052 = vmatprep.subr.bf16.mxu0 %v2865
    %4053 = vmatpush1.bf16.msra.mxu0 %v2864
    %4054 = vmatprep.subr.bf16.mxu0 %v2849
    %4055 = vmatpush1.bf16.msra.mxu0 %v2848
    %4056 = vmatprep.subr.bf16.mxu0 %v3089
    %4057 = vmatpush2.bf16.msra.mxu0 %v3088
    %4058 = vmatprep.subr.bf16.mxu0 %v3073
    %4059 = vmatpush2.bf16.msra.mxu0 %v3072
    %4060 = vmatprep.subr.bf16.mxu0 %v3057
    %4061 = vmatpush2.bf16.msra.mxu0 %v3056
    %4062 = vmatprep.subr.bf16.mxu0 %v3041
    %4063 = vmatpush2.bf16.msra.mxu0 %v3040
    %4064 = vmatprep.subr.bf16.mxu0 %v3025
    %4065 = vmatpush2.bf16.msra.mxu0 %v3024
    %4066 = vmatprep.subr.bf16.mxu0 %v3009
    %4067 = vmatpush2.bf16.msra.mxu0 %v3008
    %4068 = vmatprep.subr.bf16.mxu0 %v2993
    %4069 = vmatpush2.bf16.msra.mxu0 %v2992
    %4070 = vmatprep.subr.bf16.mxu0 %v2977
    %4071 = vmatpush2.bf16.msra.mxu0 %v2976
    %4072 = vmatprep.mubr.bf16.mxu0 %v709
    %4073 = vmatmul.mubr.bf16.gmra.mxu0 %v708
    %v4074 = vpop.f32.mrf.mxu0
    %v4075 = vadd.f32 %v1247, %v4074
    %v4076 = vpop.f32.mrf.mxu0
    %v4077 = vadd.f32 %v1251, %v4076
    %v4078 = vpop.f32.mrf.mxu0
    %v4079 = vadd.f32 %v1247, %v4078
    %v4080 = vpop.f32.mrf.mxu0
    %v4081 = vadd.f32 %v1251, %v4080
    %4082 = vdwg.mxu0
    %4083 = vmatprep.subr.bf16.mxu0 %v3217
    %4084 = vmatpush1.bf16.msra.mxu0 %v3216
    %4085 = vmatprep.subr.bf16.mxu0 %v3201
    %4086 = vmatpush1.bf16.msra.mxu0 %v3200
    %4087 = vmatprep.subr.bf16.mxu0 %v3185
    %4088 = vmatpush1.bf16.msra.mxu0 %v3184
    %4089 = vmatprep.subr.bf16.mxu0 %v3169
    %4090 = vmatpush1.bf16.msra.mxu0 %v3168
    %4091 = vmatprep.subr.bf16.mxu0 %v3153
    %4092 = vmatpush1.bf16.msra.mxu0 %v3152
    %4093 = vmatprep.subr.bf16.mxu0 %v3137
    %4094 = vmatpush1.bf16.msra.mxu0 %v3136
    %4095 = vmatprep.subr.bf16.mxu0 %v3121
    %4096 = vmatpush1.bf16.msra.mxu0 %v3120
    %4097 = vmatprep.subr.bf16.mxu0 %v3105
    %4098 = vmatpush1.bf16.msra.mxu0 %v3104
    %4099 = vmatprep.subr.bf16.mxu0 %v3345
    %4100 = vmatpush2.bf16.msra.mxu0 %v3344
    %4101 = vmatprep.subr.bf16.mxu0 %v3329
    %4102 = vmatpush2.bf16.msra.mxu0 %v3328
    %4103 = vmatprep.subr.bf16.mxu0 %v3313
    %4104 = vmatpush2.bf16.msra.mxu0 %v3312
    %4105 = vmatprep.subr.bf16.mxu0 %v3297
    %4106 = vmatpush2.bf16.msra.mxu0 %v3296
    %4107 = vmatprep.subr.bf16.mxu0 %v3281
    %4108 = vmatpush2.bf16.msra.mxu0 %v3280
    %4109 = vmatprep.subr.bf16.mxu0 %v3265
    %4110 = vmatpush2.bf16.msra.mxu0 %v3264
    %4111 = vmatprep.subr.bf16.mxu0 %v3249
    %4112 = vmatpush2.bf16.msra.mxu0 %v3248
    %4113 = vmatprep.subr.bf16.mxu0 %v3233
    %4114 = vmatpush2.bf16.msra.mxu0 %v3232
    %4115 = vmatprep.mubr.bf16.mxu0 %v711
    %4116 = vmatmul.mubr.bf16.gmra.mxu0 %v710
    %v4117 = vpop.f32.mrf.mxu0
    %v4118 = vadd.f32 %v4075, %v4117
    %v4119 = vpop.f32.mrf.mxu0
    %v4120 = vadd.f32 %v4077, %v4119
    %v4121 = vpop.f32.mrf.mxu0
    %v4122 = vadd.f32 %v4079, %v4121
    %v4123 = vpop.f32.mrf.mxu0
    %v4124 = vadd.f32 %v4081, %v4123
    %4125 = vdwg.mxu0
    %4126 = vmatprep.subr.bf16.mxu0 %v2963
    %4127 = vmatpush1.bf16.msra.mxu0 %v2962
    %4128 = vmatprep.subr.bf16.mxu0 %v2947
    %4129 = vmatpush1.bf16.msra.mxu0 %v2946
    %4130 = vmatprep.subr.bf16.mxu0 %v2931
    %4131 = vmatpush1.bf16.msra.mxu0 %v2930
    %4132 = vmatprep.subr.bf16.mxu0 %v2915
    %4133 = vmatpush1.bf16.msra.mxu0 %v2914
    %4134 = vmatprep.subr.bf16.mxu0 %v2899
    %4135 = vmatpush1.bf16.msra.mxu0 %v2898
    %4136 = vmatprep.subr.bf16.mxu0 %v2883
    %4137 = vmatpush1.bf16.msra.mxu0 %v2882
    %4138 = vmatprep.subr.bf16.mxu0 %v2867
    %4139 = vmatpush1.bf16.msra.mxu0 %v2866
    %4140 = vmatprep.subr.bf16.mxu0 %v2851
    %4141 = vmatpush1.bf16.msra.mxu0 %v2850
    %4142 = vmatprep.subr.bf16.mxu0 %v3091
    %4143 = vmatpush2.bf16.msra.mxu0 %v3090
    %4144 = vmatprep.subr.bf16.mxu0 %v3075
    %4145 = vmatpush2.bf16.msra.mxu0 %v3074
    %4146 = vmatprep.subr.bf16.mxu0 %v3059
    %4147 = vmatpush2.bf16.msra.mxu0 %v3058
    %4148 = vmatprep.subr.bf16.mxu0 %v3043
    %4149 = vmatpush2.bf16.msra.mxu0 %v3042
    %4150 = vmatprep.subr.bf16.mxu0 %v3027
    %4151 = vmatpush2.bf16.msra.mxu0 %v3026
    %4152 = vmatprep.subr.bf16.mxu0 %v3011
    %4153 = vmatpush2.bf16.msra.mxu0 %v3010
    %4154 = vmatprep.subr.bf16.mxu0 %v2995
    %4155 = vmatpush2.bf16.msra.mxu0 %v2994
    %4156 = vmatprep.subr.bf16.mxu0 %v2979
    %4157 = vmatpush2.bf16.msra.mxu0 %v2978
    %4158 = vmatprep.mubr.bf16.mxu0 %v709
    %4159 = vmatmul.mubr.bf16.gmra.mxu0 %v708
    %v4160 = vpop.f32.mrf.mxu0
    %v4161 = vadd.f32 %v1255, %v4160
    %v4162 = vpop.f32.mrf.mxu0
    %v4163 = vadd.f32 %v1259, %v4162
    %v4164 = vpop.f32.mrf.mxu0
    %v4165 = vadd.f32 %v1255, %v4164
    %v4166 = vpop.f32.mrf.mxu0
    %v4167 = vadd.f32 %v1259, %v4166
    %4168 = vdwg.mxu0
    %4169 = vmatprep.subr.bf16.mxu0 %v3219
    %4170 = vmatpush1.bf16.msra.mxu0 %v3218
    %4171 = vmatprep.subr.bf16.mxu0 %v3203
    %4172 = vmatpush1.bf16.msra.mxu0 %v3202
    %4173 = vmatprep.subr.bf16.mxu0 %v3187
    %4174 = vmatpush1.bf16.msra.mxu0 %v3186
    %4175 = vmatprep.subr.bf16.mxu0 %v3171
    %4176 = vmatpush1.bf16.msra.mxu0 %v3170
    %4177 = vmatprep.subr.bf16.mxu0 %v3155
    %4178 = vmatpush1.bf16.msra.mxu0 %v3154
    %4179 = vmatprep.subr.bf16.mxu0 %v3139
    %4180 = vmatpush1.bf16.msra.mxu0 %v3138
    %4181 = vmatprep.subr.bf16.mxu0 %v3123
    %4182 = vmatpush1.bf16.msra.mxu0 %v3122
    %4183 = vmatprep.subr.bf16.mxu0 %v3107
    %4184 = vmatpush1.bf16.msra.mxu0 %v3106
    %4185 = vmatprep.subr.bf16.mxu0 %v3347
    %4186 = vmatpush2.bf16.msra.mxu0 %v3346
    %4187 = vmatprep.subr.bf16.mxu0 %v3331
    %4188 = vmatpush2.bf16.msra.mxu0 %v3330
    %4189 = vmatprep.subr.bf16.mxu0 %v3315
    %4190 = vmatpush2.bf16.msra.mxu0 %v3314
    %4191 = vmatprep.subr.bf16.mxu0 %v3299
    %4192 = vmatpush2.bf16.msra.mxu0 %v3298
    %4193 = vmatprep.subr.bf16.mxu0 %v3283
    %4194 = vmatpush2.bf16.msra.mxu0 %v3282
    %4195 = vmatprep.subr.bf16.mxu0 %v3267
    %4196 = vmatpush2.bf16.msra.mxu0 %v3266
    %4197 = vmatprep.subr.bf16.mxu0 %v3251
    %4198 = vmatpush2.bf16.msra.mxu0 %v3250
    %4199 = vmatprep.subr.bf16.mxu0 %v3235
    %4200 = vmatpush2.bf16.msra.mxu0 %v3234
    %4201 = vmatprep.mubr.bf16.mxu0 %v711
    %4202 = vmatmul.mubr.bf16.gmra.mxu0 %v710
    %v4203 = vpop.f32.mrf.mxu0
    %v4204 = vadd.f32 %v4161, %v4203
    %v4205 = vpop.f32.mrf.mxu0
    %v4206 = vadd.f32 %v4163, %v4205
    %v4207 = vpop.f32.mrf.mxu0
    %v4208 = vadd.f32 %v4165, %v4207
    %v4209 = vpop.f32.mrf.mxu0
    %v4210 = vadd.f32 %v4167, %v4209
    %4211 = vdwg.mxu0
    %4212 = vmatprep.subr.bf16.mxu0 %v2965
    %4213 = vmatpush1.bf16.msra.mxu0 %v2964
    %4214 = vmatprep.subr.bf16.mxu0 %v2949
    %4215 = vmatpush1.bf16.msra.mxu0 %v2948
    %4216 = vmatprep.subr.bf16.mxu0 %v2933
    %4217 = vmatpush1.bf16.msra.mxu0 %v2932
    %4218 = vmatprep.subr.bf16.mxu0 %v2917
    %4219 = vmatpush1.bf16.msra.mxu0 %v2916
    %4220 = vmatprep.subr.bf16.mxu0 %v2901
    %4221 = vmatpush1.bf16.msra.mxu0 %v2900
    %4222 = vmatprep.subr.bf16.mxu0 %v2885
    %4223 = vmatpush1.bf16.msra.mxu0 %v2884
    %4224 = vmatprep.subr.bf16.mxu0 %v2869
    %4225 = vmatpush1.bf16.msra.mxu0 %v2868
    %4226 = vmatprep.subr.bf16.mxu0 %v2853
    %4227 = vmatpush1.bf16.msra.mxu0 %v2852
    %4228 = vmatprep.subr.bf16.mxu0 %v3093
    %4229 = vmatpush2.bf16.msra.mxu0 %v3092
    %4230 = vmatprep.subr.bf16.mxu0 %v3077
    %4231 = vmatpush2.bf16.msra.mxu0 %v3076
    %4232 = vmatprep.subr.bf16.mxu0 %v3061
    %4233 = vmatpush2.bf16.msra.mxu0 %v3060
    %4234 = vmatprep.subr.bf16.mxu0 %v3045
    %4235 = vmatpush2.bf16.msra.mxu0 %v3044
    %4236 = vmatprep.subr.bf16.mxu0 %v3029
    %4237 = vmatpush2.bf16.msra.mxu0 %v3028
    %4238 = vmatprep.subr.bf16.mxu0 %v3013
    %4239 = vmatpush2.bf16.msra.mxu0 %v3012
    %4240 = vmatprep.subr.bf16.mxu0 %v2997
    %4241 = vmatpush2.bf16.msra.mxu0 %v2996
    %4242 = vmatprep.subr.bf16.mxu0 %v2981
    %4243 = vmatpush2.bf16.msra.mxu0 %v2980
    %4244 = vmatprep.mubr.bf16.mxu0 %v709
    %4245 = vmatmul.mubr.bf16.gmra.mxu0 %v708
    %v4246 = vpop.f32.mrf.mxu0
    %v4247 = vadd.f32 %v1263, %v4246
    %v4248 = vpop.f32.mrf.mxu0
    %v4249 = vadd.f32 %v1267, %v4248
    %v4250 = vpop.f32.mrf.mxu0
    %v4251 = vadd.f32 %v1263, %v4250
    %v4252 = vpop.f32.mrf.mxu0
    %v4253 = vadd.f32 %v1267, %v4252
    %4254 = vdwg.mxu0
    %4255 = vmatprep.subr.bf16.mxu0 %v3221
    %4256 = vmatpush1.bf16.msra.mxu0 %v3220
    %4257 = vmatprep.subr.bf16.mxu0 %v3205
    %4258 = vmatpush1.bf16.msra.mxu0 %v3204
    %4259 = vmatprep.subr.bf16.mxu0 %v3189
    %4260 = vmatpush1.bf16.msra.mxu0 %v3188
    %4261 = vmatprep.subr.bf16.mxu0 %v3173
    %4262 = vmatpush1.bf16.msra.mxu0 %v3172
    %4263 = vmatprep.subr.bf16.mxu0 %v3157
    %4264 = vmatpush1.bf16.msra.mxu0 %v3156
    %4265 = vmatprep.subr.bf16.mxu0 %v3141
    %4266 = vmatpush1.bf16.msra.mxu0 %v3140
    %4267 = vmatprep.subr.bf16.mxu0 %v3125
    %4268 = vmatpush1.bf16.msra.mxu0 %v3124
    %4269 = vmatprep.subr.bf16.mxu0 %v3109
    %4270 = vmatpush1.bf16.msra.mxu0 %v3108
    %4271 = vmatprep.subr.bf16.mxu0 %v3349
    %4272 = vmatpush2.bf16.msra.mxu0 %v3348
    %4273 = vmatprep.subr.bf16.mxu0 %v3333
    %4274 = vmatpush2.bf16.msra.mxu0 %v3332
    %4275 = vmatprep.subr.bf16.mxu0 %v3317
    %4276 = vmatpush2.bf16.msra.mxu0 %v3316
    %4277 = vmatprep.subr.bf16.mxu0 %v3301
    %4278 = vmatpush2.bf16.msra.mxu0 %v3300
    %4279 = vmatprep.subr.bf16.mxu0 %v3285
    %4280 = vmatpush2.bf16.msra.mxu0 %v3284
    %4281 = vmatprep.subr.bf16.mxu0 %v3269
    %4282 = vmatpush2.bf16.msra.mxu0 %v3268
    %4283 = vmatprep.subr.bf16.mxu0 %v3253
    %4284 = vmatpush2.bf16.msra.mxu0 %v3252
    %4285 = vmatprep.subr.bf16.mxu0 %v3237
    %4286 = vmatpush2.bf16.msra.mxu0 %v3236
    %4287 = vmatprep.mubr.bf16.mxu0 %v711
    %4288 = vmatmul.mubr.bf16.gmra.mxu0 %v710
    %v4289 = vpop.f32.mrf.mxu0
    %v4290 = vadd.f32 %v4247, %v4289
    %v4291 = vpop.f32.mrf.mxu0
    %v4292 = vadd.f32 %v4249, %v4291
    %v4293 = vpop.f32.mrf.mxu0
    %v4294 = vadd.f32 %v4251, %v4293
    %v4295 = vpop.f32.mrf.mxu0
    %v4296 = vadd.f32 %v4253, %v4295
    %4297 = vdwg.mxu0
    %4298 = vmatprep.subr.bf16.mxu0 %v2967
    %4299 = vmatpush1.bf16.msra.mxu0 %v2966
    %4300 = vmatprep.subr.bf16.mxu0 %v2951
    %4301 = vmatpush1.bf16.msra.mxu0 %v2950
    %4302 = vmatprep.subr.bf16.mxu0 %v2935
    %4303 = vmatpush1.bf16.msra.mxu0 %v2934
    %4304 = vmatprep.subr.bf16.mxu0 %v2919
    %4305 = vmatpush1.bf16.msra.mxu0 %v2918
    %4306 = vmatprep.subr.bf16.mxu0 %v2903
    %4307 = vmatpush1.bf16.msra.mxu0 %v2902
    %4308 = vmatprep.subr.bf16.mxu0 %v2887
    %4309 = vmatpush1.bf16.msra.mxu0 %v2886
    %4310 = vmatprep.subr.bf16.mxu0 %v2871
    %4311 = vmatpush1.bf16.msra.mxu0 %v2870
    %4312 = vmatprep.subr.bf16.mxu0 %v2855
    %4313 = vmatpush1.bf16.msra.mxu0 %v2854
    %4314 = vmatprep.subr.bf16.mxu0 %v3095
    %4315 = vmatpush2.bf16.msra.mxu0 %v3094
    %4316 = vmatprep.subr.bf16.mxu0 %v3079
    %4317 = vmatpush2.bf16.msra.mxu0 %v3078
    %4318 = vmatprep.subr.bf16.mxu0 %v3063
    %4319 = vmatpush2.bf16.msra.mxu0 %v3062
    %4320 = vmatprep.subr.bf16.mxu0 %v3047
    %4321 = vmatpush2.bf16.msra.mxu0 %v3046
    %4322 = vmatprep.subr.bf16.mxu0 %v3031
    %4323 = vmatpush2.bf16.msra.mxu0 %v3030
    %4324 = vmatprep.subr.bf16.mxu0 %v3015
    %4325 = vmatpush2.bf16.msra.mxu0 %v3014
    %4326 = vmatprep.subr.bf16.mxu0 %v2999
    %4327 = vmatpush2.bf16.msra.mxu0 %v2998
    %4328 = vmatprep.subr.bf16.mxu0 %v2983
    %4329 = vmatpush2.bf16.msra.mxu0 %v2982
    %4330 = vmatprep.mubr.bf16.mxu0 %v709
    %4331 = vmatmul.mubr.bf16.gmra.mxu0 %v708
    %v4332 = vpop.f32.mrf.mxu0
    %v4333 = vadd.f32 %v1271, %v4332
    %v4334 = vpop.f32.mrf.mxu0
    %v4335 = vadd.f32 %v1275, %v4334
    %v4336 = vpop.f32.mrf.mxu0
    %v4337 = vadd.f32 %v1271, %v4336
    %v4338 = vpop.f32.mrf.mxu0
    %v4339 = vadd.f32 %v1275, %v4338
    %4340 = vdwg.mxu0
    %4341 = vmatprep.subr.bf16.mxu0 %v3223
    %4342 = vmatpush1.bf16.msra.mxu0 %v3222
    %4343 = vmatprep.subr.bf16.mxu0 %v3207
    %4344 = vmatpush1.bf16.msra.mxu0 %v3206
    %4345 = vmatprep.subr.bf16.mxu0 %v3191
    %4346 = vmatpush1.bf16.msra.mxu0 %v3190
    %4347 = vmatprep.subr.bf16.mxu0 %v3175
    %4348 = vmatpush1.bf16.msra.mxu0 %v3174
    %4349 = vmatprep.subr.bf16.mxu0 %v3159
    %4350 = vmatpush1.bf16.msra.mxu0 %v3158
    %4351 = vmatprep.subr.bf16.mxu0 %v3143
    %4352 = vmatpush1.bf16.msra.mxu0 %v3142
    %4353 = vmatprep.subr.bf16.mxu0 %v3127
    %4354 = vmatpush1.bf16.msra.mxu0 %v3126
    %4355 = vmatprep.subr.bf16.mxu0 %v3111
    %4356 = vmatpush1.bf16.msra.mxu0 %v3110
    %4357 = vmatprep.subr.bf16.mxu0 %v3351
    %4358 = vmatpush2.bf16.msra.mxu0 %v3350
    %4359 = vmatprep.subr.bf16.mxu0 %v3335
    %4360 = vmatpush2.bf16.msra.mxu0 %v3334
    %4361 = vmatprep.subr.bf16.mxu0 %v3319
    %4362 = vmatpush2.bf16.msra.mxu0 %v3318
    %4363 = vmatprep.subr.bf16.mxu0 %v3303
    %4364 = vmatpush2.bf16.msra.mxu0 %v3302
    %4365 = vmatprep.subr.bf16.mxu0 %v3287
    %4366 = vmatpush2.bf16.msra.mxu0 %v3286
    %4367 = vmatprep.subr.bf16.mxu0 %v3271
    %4368 = vmatpush2.bf16.msra.mxu0 %v3270
    %4369 = vmatprep.subr.bf16.mxu0 %v3255
    %4370 = vmatpush2.bf16.msra.mxu0 %v3254
    %4371 = vmatprep.subr.bf16.mxu0 %v3239
    %4372 = vmatpush2.bf16.msra.mxu0 %v3238
    %4373 = vmatprep.mubr.bf16.mxu0 %v711
    %4374 = vmatmul.mubr.bf16.gmra.mxu0 %v710
    %v4375 = vpop.f32.mrf.mxu0
    %v4376 = vadd.f32 %v4333, %v4375
    %v4377 = vpop.f32.mrf.mxu0
    %v4378 = vadd.f32 %v4335, %v4377
    %v4379 = vpop.f32.mrf.mxu0
    %v4380 = vadd.f32 %v4337, %v4379
    %v4381 = vpop.f32.mrf.mxu0
    %v4382 = vadd.f32 %v4339, %v4381
    %4383 = vdwg.mxu0
    %4384 = vmatprep.subr.bf16.mxu0 %v2969
    %4385 = vmatpush1.bf16.msra.mxu0 %v2968
    %4386 = vmatprep.subr.bf16.mxu0 %v2953
    %4387 = vmatpush1.bf16.msra.mxu0 %v2952
    %4388 = vmatprep.subr.bf16.mxu0 %v2937
    %4389 = vmatpush1.bf16.msra.mxu0 %v2936
    %4390 = vmatprep.subr.bf16.mxu0 %v2921
    %4391 = vmatpush1.bf16.msra.mxu0 %v2920
    %4392 = vmatprep.subr.bf16.mxu0 %v2905
    %4393 = vmatpush1.bf16.msra.mxu0 %v2904
    %4394 = vmatprep.subr.bf16.mxu0 %v2889
    %4395 = vmatpush1.bf16.msra.mxu0 %v2888
    %4396 = vmatprep.subr.bf16.mxu0 %v2873
    %4397 = vmatpush1.bf16.msra.mxu0 %v2872
    %4398 = vmatprep.subr.bf16.mxu0 %v2857
    %4399 = vmatpush1.bf16.msra.mxu0 %v2856
    %4400 = vmatprep.subr.bf16.mxu0 %v3097
    %4401 = vmatpush2.bf16.msra.mxu0 %v3096
    %4402 = vmatprep.subr.bf16.mxu0 %v3081
    %4403 = vmatpush2.bf16.msra.mxu0 %v3080
    %4404 = vmatprep.subr.bf16.mxu0 %v3065
    %4405 = vmatpush2.bf16.msra.mxu0 %v3064
    %4406 = vmatprep.subr.bf16.mxu0 %v3049
    %4407 = vmatpush2.bf16.msra.mxu0 %v3048
    %4408 = vmatprep.subr.bf16.mxu0 %v3033
    %4409 = vmatpush2.bf16.msra.mxu0 %v3032
    %4410 = vmatprep.subr.bf16.mxu0 %v3017
    %4411 = vmatpush2.bf16.msra.mxu0 %v3016
    %4412 = vmatprep.subr.bf16.mxu0 %v3001
    %4413 = vmatpush2.bf16.msra.mxu0 %v3000
    %4414 = vmatprep.subr.bf16.mxu0 %v2985
    %4415 = vmatpush2.bf16.msra.mxu0 %v2984
    %4416 = vmatprep.mubr.bf16.mxu0 %v709
    %4417 = vmatmul.mubr.bf16.gmra.mxu0 %v708
    %v4418 = vpop.f32.mrf.mxu0
    %v4419 = vadd.f32 %v1279, %v4418
    %v4420 = vpop.f32.mrf.mxu0
    %v4421 = vadd.f32 %v1283, %v4420
    %v4422 = vpop.f32.mrf.mxu0
    %v4423 = vadd.f32 %v1279, %v4422
    %v4424 = vpop.f32.mrf.mxu0
    %v4425 = vadd.f32 %v1283, %v4424
    %4426 = vdwg.mxu0
    %4427 = vmatprep.subr.bf16.mxu0 %v3225
    %4428 = vmatpush1.bf16.msra.mxu0 %v3224
    %4429 = vmatprep.subr.bf16.mxu0 %v3209
    %4430 = vmatpush1.bf16.msra.mxu0 %v3208
    %4431 = vmatprep.subr.bf16.mxu0 %v3193
    %4432 = vmatpush1.bf16.msra.mxu0 %v3192
    %4433 = vmatprep.subr.bf16.mxu0 %v3177
    %4434 = vmatpush1.bf16.msra.mxu0 %v3176
    %4435 = vmatprep.subr.bf16.mxu0 %v3161
    %4436 = vmatpush1.bf16.msra.mxu0 %v3160
    %4437 = vmatprep.subr.bf16.mxu0 %v3145
    %4438 = vmatpush1.bf16.msra.mxu0 %v3144
    %4439 = vmatprep.subr.bf16.mxu0 %v3129
    %4440 = vmatpush1.bf16.msra.mxu0 %v3128
    %4441 = vmatprep.subr.bf16.mxu0 %v3113
    %4442 = vmatpush1.bf16.msra.mxu0 %v3112
    %4443 = vmatprep.subr.bf16.mxu0 %v3353
    %4444 = vmatpush2.bf16.msra.mxu0 %v3352
    %4445 = vmatprep.subr.bf16.mxu0 %v3337
    %4446 = vmatpush2.bf16.msra.mxu0 %v3336
    %4447 = vmatprep.subr.bf16.mxu0 %v3321
    %4448 = vmatpush2.bf16.msra.mxu0 %v3320
    %4449 = vmatprep.subr.bf16.mxu0 %v3305
    %4450 = vmatpush2.bf16.msra.mxu0 %v3304
    %4451 = vmatprep.subr.bf16.mxu0 %v3289
    %4452 = vmatpush2.bf16.msra.mxu0 %v3288
    %4453 = vmatprep.subr.bf16.mxu0 %v3273
    %4454 = vmatpush2.bf16.msra.mxu0 %v3272
    %4455 = vmatprep.subr.bf16.mxu0 %v3257
    %4456 = vmatpush2.bf16.msra.mxu0 %v3256
    %4457 = vmatprep.subr.bf16.mxu0 %v3241
    %4458 = vmatpush2.bf16.msra.mxu0 %v3240
    %4459 = vmatprep.mubr.bf16.mxu0 %v711
    %4460 = vmatmul.mubr.bf16.gmra.mxu0 %v710
    %v4461 = vpop.f32.mrf.mxu0
    %v4462 = vadd.f32 %v4419, %v4461
    %v4463 = vpop.f32.mrf.mxu0
    %v4464 = vadd.f32 %v4421, %v4463
    %v4465 = vpop.f32.mrf.mxu0
    %v4466 = vadd.f32 %v4423, %v4465
    %v4467 = vpop.f32.mrf.mxu0
    %v4468 = vadd.f32 %v4425, %v4467
    %4469 = vdwg.mxu0
    %4470 = vmatprep.subr.bf16.mxu0 %v2971
    %4471 = vmatpush1.bf16.msra.mxu0 %v2970
    %4472 = vmatprep.subr.bf16.mxu0 %v2955
    %4473 = vmatpush1.bf16.msra.mxu0 %v2954
    %4474 = vmatprep.subr.bf16.mxu0 %v2939
    %4475 = vmatpush1.bf16.msra.mxu0 %v2938
    %4476 = vmatprep.subr.bf16.mxu0 %v2923
    %4477 = vmatpush1.bf16.msra.mxu0 %v2922
    %4478 = vmatprep.subr.bf16.mxu0 %v2907
    %4479 = vmatpush1.bf16.msra.mxu0 %v2906
    %4480 = vmatprep.subr.bf16.mxu0 %v2891
    %4481 = vmatpush1.bf16.msra.mxu0 %v2890
    %4482 = vmatprep.subr.bf16.mxu0 %v2875
    %4483 = vmatpush1.bf16.msra.mxu0 %v2874
    %4484 = vmatprep.subr.bf16.mxu0 %v2859
    %4485 = vmatpush1.bf16.msra.mxu0 %v2858
    %4486 = vmatprep.subr.bf16.mxu0 %v3099
    %4487 = vmatpush2.bf16.msra.mxu0 %v3098
    %4488 = vmatprep.subr.bf16.mxu0 %v3083
    %4489 = vmatpush2.bf16.msra.mxu0 %v3082
    %4490 = vmatprep.subr.bf16.mxu0 %v3067
    %4491 = vmatpush2.bf16.msra.mxu0 %v3066
    %4492 = vmatprep.subr.bf16.mxu0 %v3051
    %4493 = vmatpush2.bf16.msra.mxu0 %v3050
    %4494 = vmatprep.subr.bf16.mxu0 %v3035
    %4495 = vmatpush2.bf16.msra.mxu0 %v3034
    %4496 = vmatprep.subr.bf16.mxu0 %v3019
    %4497 = vmatpush2.bf16.msra.mxu0 %v3018
    %4498 = vmatprep.subr.bf16.mxu0 %v3003
    %4499 = vmatpush2.bf16.msra.mxu0 %v3002
    %4500 = vmatprep.subr.bf16.mxu0 %v2987
    %4501 = vmatpush2.bf16.msra.mxu0 %v2986
    %4502 = vmatprep.mubr.bf16.mxu0 %v709
    %4503 = vmatmul.mubr.bf16.gmra.mxu0 %v708
    %v4504 = vpop.f32.mrf.mxu0
    %v4505 = vadd.f32 %v1287, %v4504
    %v4506 = vpop.f32.mrf.mxu0
    %v4507 = vadd.f32 %v1291, %v4506
    %v4508 = vpop.f32.mrf.mxu0
    %v4509 = vadd.f32 %v1287, %v4508
    %v4510 = vpop.f32.mrf.mxu0
    %v4511 = vadd.f32 %v1291, %v4510
    %4512 = vdwg.mxu0
    %4513 = vmatprep.subr.bf16.mxu0 %v3227
    %4514 = vmatpush1.bf16.msra.mxu0 %v3226
    %4515 = vmatprep.subr.bf16.mxu0 %v3211
    %4516 = vmatpush1.bf16.msra.mxu0 %v3210
    %4517 = vmatprep.subr.bf16.mxu0 %v3195
    %4518 = vmatpush1.bf16.msra.mxu0 %v3194
    %4519 = vmatprep.subr.bf16.mxu0 %v3179
    %4520 = vmatpush1.bf16.msra.mxu0 %v3178
    %4521 = vmatprep.subr.bf16.mxu0 %v3163
    %4522 = vmatpush1.bf16.msra.mxu0 %v3162
    %4523 = vmatprep.subr.bf16.mxu0 %v3147
    %4524 = vmatpush1.bf16.msra.mxu0 %v3146
    %4525 = vmatprep.subr.bf16.mxu0 %v3131
    %4526 = vmatpush1.bf16.msra.mxu0 %v3130
    %4527 = vmatprep.subr.bf16.mxu0 %v3115
    %4528 = vmatpush1.bf16.msra.mxu0 %v3114
    %4529 = vmatprep.subr.bf16.mxu0 %v3355
    %4530 = vmatpush2.bf16.msra.mxu0 %v3354
    %4531 = vmatprep.subr.bf16.mxu0 %v3339
    %4532 = vmatpush2.bf16.msra.mxu0 %v3338
    %4533 = vmatprep.subr.bf16.mxu0 %v3323
    %4534 = vmatpush2.bf16.msra.mxu0 %v3322
    %4535 = vmatprep.subr.bf16.mxu0 %v3307
    %4536 = vmatpush2.bf16.msra.mxu0 %v3306
    %4537 = vmatprep.subr.bf16.mxu0 %v3291
    %4538 = vmatpush2.bf16.msra.mxu0 %v3290
    %4539 = vmatprep.subr.bf16.mxu0 %v3275
    %4540 = vmatpush2.bf16.msra.mxu0 %v3274
    %4541 = vmatprep.subr.bf16.mxu0 %v3259
    %4542 = vmatpush2.bf16.msra.mxu0 %v3258
    %4543 = vmatprep.subr.bf16.mxu0 %v3243
    %4544 = vmatpush2.bf16.msra.mxu0 %v3242
    %4545 = vmatprep.mubr.bf16.mxu0 %v711
    %4546 = vmatmul.mubr.bf16.gmra.mxu0 %v710
    %v4547 = vpop.f32.mrf.mxu0
    %v4548 = vadd.f32 %v4505, %v4547
    %v4549 = vpop.f32.mrf.mxu0
    %v4550 = vadd.f32 %v4507, %v4549
    %v4551 = vpop.f32.mrf.mxu0
    %v4552 = vadd.f32 %v4509, %v4551
    %v4553 = vpop.f32.mrf.mxu0
    %v4554 = vadd.f32 %v4511, %v4553
    %4555 = vdwg.mxu0
    %v4556 = vmax.f32 %v3946, 0.0
    %v4557 = vmax.f32 %v3948, 0.0
    %v4558 = vmax.f32 %v4032, 0.0
    %v4559 = vmax.f32 %v4034, 0.0
    %v4560 = vmax.f32 %v4118, 0.0
    %v4561 = vmax.f32 %v4120, 0.0
    %v4562 = vmax.f32 %v4204, 0.0
    %v4563 = vmax.f32 %v4206, 0.0
    %v4564 = vmax.f32 %v4290, 0.0
    %v4565 = vmax.f32 %v4292, 0.0
    %v4566 = vmax.f32 %v4376, 0.0
    %v4567 = vmax.f32 %v4378, 0.0
    %v4568 = vmax.f32 %v4462, 0.0
    %v4569 = vmax.f32 %v4464, 0.0
    %v4570 = vmax.f32 %v4548, 0.0
    %v4571 = vmax.f32 %v4550, 0.0
    %v4572 = vmax.f32 %v3950, 0.0
    %v4573 = vmax.f32 %v3952, 0.0
    %v4574 = vmax.f32 %v4036, 0.0
    %v4575 = vmax.f32 %v4038, 0.0
    %v4576 = vmax.f32 %v4122, 0.0
    %v4577 = vmax.f32 %v4124, 0.0
    %v4578 = vmax.f32 %v4208, 0.0
    %v4579 = vmax.f32 %v4210, 0.0
    %v4580 = vmax.f32 %v4294, 0.0
    %v4581 = vmax.f32 %v4296, 0.0
    %v4582 = vmax.f32 %v4380, 0.0
    %v4583 = vmax.f32 %v4382, 0.0
    %v4584 = vmax.f32 %v4466, 0.0
    %v4585 = vmax.f32 %v4468, 0.0
    %v4586 = vmax.f32 %v4552, 0.0
    %v4587 = vmax.f32 %v4554, 0.0
    %v4588 = vpack.c.bf16 %v4572, %v4556
    %v4589 = vpack.c.bf16 %v4573, %v4557
    %v4590 = vpack.c.bf16 %v4574, %v4558
    %v4591 = vpack.c.bf16 %v4575, %v4559
    %v4592 = vpack.c.bf16 %v4576, %v4560
    %v4593 = vpack.c.bf16 %v4577, %v4561
    %v4594 = vpack.c.bf16 %v4578, %v4562
    %v4595 = vpack.c.bf16 %v4579, %v4563
    %v4596 = vpack.c.bf16 %v4580, %v4564
    %v4597 = vpack.c.bf16 %v4581, %v4565
    %v4598 = vpack.c.bf16 %v4582, %v4566
    %v4599 = vpack.c.bf16 %v4583, %v4567
    %v4600 = vpack.c.bf16 %v4584, %v4568
    %v4601 = vpack.c.bf16 %v4585, %v4569
    %v4602 = vpack.c.bf16 %v4586, %v4570
    %v4603 = vpack.c.bf16 %v4587, %v4571
    %v4620 = vunpack.c.l.b16 %v4588
    %v4621 = vunpack.c.l.b16 %v4589
    %v4622 = vunpack.c.l.b16 %v4590
    %v4623 = vunpack.c.l.b16 %v4591
    %v4624 = vunpack.c.l.b16 %v4592
    %v4625 = vunpack.c.l.b16 %v4593
    %v4626 = vunpack.c.l.b16 %v4594
    %v4627 = vunpack.c.l.b16 %v4595
    %v4628 = vunpack.c.l.b16 %v4596
    %v4629 = vunpack.c.l.b16 %v4597
    %v4630 = vunpack.c.l.b16 %v4598
    %v4631 = vunpack.c.l.b16 %v4599
    %v4632 = vunpack.c.l.b16 %v4600
    %v4633 = vunpack.c.l.b16 %v4601
    %v4634 = vunpack.c.l.b16 %v4602
    %v4635 = vunpack.c.l.b16 %v4603
    %v4636 = vunpack.c.h.b16 %v4588
    %v4637 = vunpack.c.h.b16 %v4589
    %v4638 = vunpack.c.h.b16 %v4590
    %v4639 = vunpack.c.h.b16 %v4591
    %v4640 = vunpack.c.h.b16 %v4592
    %v4641 = vunpack.c.h.b16 %v4593
    %v4642 = vunpack.c.h.b16 %v4594
    %v4643 = vunpack.c.h.b16 %v4595
    %v4644 = vunpack.c.h.b16 %v4596
    %v4645 = vunpack.c.h.b16 %v4597
    %v4646 = vunpack.c.h.b16 %v4598
    %v4647 = vunpack.c.h.b16 %v4599
    %v4648 = vunpack.c.h.b16 %v4600
    %v4649 = vunpack.c.h.b16 %v4601
    %v4650 = vunpack.c.h.b16 %v4602
    %v4651 = vunpack.c.h.b16 %v4603
    %v4652 = vpack.c.b16 %v4621, %v4620
    %v4653 = vpack.c.b16 %v4623, %v4622
    %v4654 = vpack.c.b16 %v4625, %v4624
    %v4655 = vpack.c.b16 %v4627, %v4626
    %v4656 = vpack.c.b16 %v4629, %v4628
    %v4657 = vpack.c.b16 %v4631, %v4630
    %v4658 = vpack.c.b16 %v4633, %v4632
    %v4659 = vpack.c.b16 %v4635, %v4634
    %v4660 = vpack.c.b16 %v4637, %v4636
    %v4661 = vpack.c.b16 %v4639, %v4638
    %v4662 = vpack.c.b16 %v4641, %v4640
    %v4663 = vpack.c.b16 %v4643, %v4642
    %v4664 = vpack.c.b16 %v4645, %v4644
    %v4665 = vpack.c.b16 %v4647, %v4646
    %v4666 = vpack.c.b16 %v4649, %v4648
    %v4667 = vpack.c.b16 %v4651, %v4650
    %4684 = vst [vmem:[%s7] sm:$0xff] %v4652
    %4685 = vst [vmem:[%s7 + $0x8] sm:$0xff] %v4653
    %4686 = vst [vmem:[%s7 + $0x10] sm:$0xff] %v4654
    %4687 = vst [vmem:[%s7 + $0x18] sm:$0xff] %v4655
    %4688 = vst [vmem:[%s7 + $0x20] sm:$0xff] %v4656
    %4689 = vst [vmem:[%s7 + $0x28] sm:$0xff] %v4657
    %4690 = vst [vmem:[%s7 + $0x30] sm:$0xff] %v4658
    %4691 = vst [vmem:[%s7 + $0x38] sm:$0xff] %v4659
    %4692 = vst [vmem:[%s7 + $0x40] sm:$0xff] %v4660
    %4693 = vst [vmem:[%s7 + $0x48] sm:$0xff] %v4661
    %4694 = vst [vmem:[%s7 + $0x50] sm:$0xff] %v4662
    %4695 = vst [vmem:[%s7 + $0x58] sm:$0xff] %v4663
    %4696 = vst [vmem:[%s7 + $0x60] sm:$0xff] %v4664
    %4697 = vst [vmem:[%s7 + $0x68] sm:$0xff] %v4665
    %4698 = vst [vmem:[%s7 + $0x70] sm:$0xff] %v4666
    %4699 = vst [vmem:[%s7 + $0x78] sm:$0xff] %v4667
    // Predicated region
    $region58: #{_forward_impl.2} parent=1 // pred_check
      _
    $region59: #{_forward_impl.2} parent=1 // pred_check_branch
      %4701 = sbr.rel (0) target = $region61
    $region60: #{_forward_impl.2} parent=1 // pred_region
      _
    $region61: #{_forward_impl.2} parent=1 // pred_fallthru
      _
    // Predicated region
    $region62: #{_forward_impl.2} parent=1 // pred_check
      _
    $region63: #{_forward_impl.2} parent=1 // pred_check_branch
      %4703 = sbr.rel (0) target = $region65
    $region64: #{_forward_impl.2} parent=1 // pred_region
      _
    $region65: #{_forward_impl.2} parent=1 // pred_fallthru
      _
    %4704 = vsyncpa [#allocation3], 1
    %4705 = vsyncpa [#allocation5], 1
    %4706 = vsyncpa [#allocation8], 1
    %4707 = vsyncpa [#allocation11], 1

</llo_original>
